<compile_context>
chip_gen: v6e
topology: v6e:2x2x1
jax: 0.10.0
libtpu: 0.0.40
codegen_flags: <defaults>
</compile_context>

<pallas_src>
import jax
import jax.numpy as jnp
from jax.experimental import pallas as pl
from jax.experimental.pallas import tpu as pltpu

D = 50          # hidden size, as in the PyTorch module
GP = 128        # padded per-gate lane stride
G4 = 4 * GP     # padded gate width


def sequence_kernel(xw1_ref, whh1_ref, w1f_ref, b1f_ref, w2s_ref, b2_ref,
                    wlin_ref, blin_ref, out_ref):
    """All refs live in VMEM.

    xw1_ref:  (B, T, 4*GP)   precomputed x @ Wih1 + b1 (observed phase, gate-padded)
    whh1_ref: (GP, 4*GP)     lstm1 recurrent weights (observed phase)
    w1f_ref:  (2*GP, 4*GP)   stacked [Wlin@Wih1 ; Whh1] (future-phase fused lstm1)
    b1f_ref:  (1, 4*GP)      b1 + blin @ Wih1 (future-phase fused bias)
    w2s_ref:  (2*GP, 4*GP)   stacked [Wih2; Whh2] for the fused lstm2 matmul
    b2_ref:   (1, 4*GP)      lstm2 bias (bih+bhh)
    wlin_ref: (GP, GP)       output head weights (only [:D, :2] nonzero)
    blin_ref: (1, GP)        output head bias (only [:2] nonzero)
    out_ref:  (B, T_total, GP)
    """
    B = xw1_ref.shape[0]
    T = xw1_ref.shape[1]
    T_total = out_ref.shape[1]

    # Hoist the small bias vectors once; large weight slabs are re-read per step
    # (pinning them across the unrolled loop would blow the vreg budget).
    b1f_v = b1f_ref[...]
    b2_v = b2_ref[...]
    blin_v = blin_ref[...]

    def lstm_gates(pre, c):
        # PyTorch LSTMCell gate order [i, f, g, o]; 128-aligned lane slices.
        i = jax.nn.sigmoid(pre[:, 0 * GP:1 * GP])
        f = jax.nn.sigmoid(pre[:, 1 * GP:2 * GP])
        g = jnp.tanh(pre[:, 2 * GP:3 * GP])
        o = jax.nn.sigmoid(pre[:, 3 * GP:4 * GP])
        c_new = f * c + i * g
        h_new = o * jnp.tanh(c_new)
        return h_new, c_new

    def tail(h1n, h2, c2):
        # lstm2: fused (B, 256) @ (256, 512) matmul over [h1n | h2], then the
        # output head (which never gates the next step's recurrence).
        gates2 = (jnp.dot(jnp.concatenate([h1n, h2], axis=-1), w2s_ref[...],
                          preferred_element_type=jnp.float32) + b2_v)
        h2n, c2n = lstm_gates(gates2, c2)
        out = (jnp.dot(h2n, wlin_ref[...], preferred_element_type=jnp.float32)
               + blin_v)
        return h2n, c2n, out

    z = jnp.zeros((B, GP), jnp.float32)
    h1, c1, h2, c2 = z, z, z, z

    # ---- Observed phase: the input projection is precomputed, so only the
    # recurrent matmul h1 @ Whh1 sits inside the serial chain.
    for t in range(T):
        gates1 = xw1_ref[:, t, :] + jnp.dot(h1, whh1_ref[...],
                                            preferred_element_type=jnp.float32)
        h1, c1 = lstm_gates(gates1, c1)
        h2, c2, out = tail(h1, h2, c2)
        out_ref[:, t, :] = out

    # ---- Future phase: output-head feedback folded into the weights.
    # gates1(t+1) = [h2(t) | h1(t)] @ [Wlin@Wih1 ; Whh1] + (b1 + blin@Wih1)
    for t in range(T, T_total):
        gates1 = (jnp.dot(jnp.concatenate([h2, h1], axis=-1), w1f_ref[...],
                          preferred_element_type=jnp.float32) + b1f_v)
        h1, c1 = lstm_gates(gates1, c1)
        h2, c2, out = tail(h1, h2, c2)
        out_ref[:, t, :] = out


# -------------------- weight packing (wrapper side, done once) --------------------

def _pack_gate_weight(w, in_pad):
    """w: PyTorch layout (4*d, in_dim) -> (in_pad, 4*GP); gate g in lanes [g*GP, g*GP+d)."""
    d = w.shape[0] // 4
    in_dim = w.shape[1]
    wt = w.T.astype(jnp.float32)                       # (in_dim, 4*d)
    out = jnp.zeros((in_pad, G4), jnp.float32)
    for g in range(4):
        out = out.at[:in_dim, g * GP:g * GP + d].set(wt[:, g * d:(g + 1) * d])
    return out


def _pack_gate_bias(b):
    d = b.shape[0] // 4
    out = jnp.zeros((1, G4), jnp.float32)
    for g in range(4):
        out = out.at[0, g * GP:g * GP + d].set(b[g * d:(g + 1) * d].astype(jnp.float32))
    return out


def init_params(key, dtype=jnp.float32):
    """Deterministic init mirroring PyTorch shapes (LSTMCell / Linear)."""
    d = D
    ks = jax.random.split(key, 10)
    bound = 1.0 / (d ** 0.5)

    def u(k, shape):
        return jax.random.uniform(k, shape, dtype, -bound, bound)

    return dict(
        wih1=u(ks[0], (4 * d, 2)),
        whh1=u(ks[1], (4 * d, d)),
        bih1=u(ks[2], (4 * d,)),
        bhh1=u(ks[3], (4 * d,)),
        wih2=u(ks[4], (4 * d, d)),
        whh2=u(ks[5], (4 * d, d)),
        bih2=u(ks[6], (4 * d,)),
        bhh2=u(ks[7], (4 * d,)),
        wlin=u(ks[8], (2, d)),
        blin=u(ks[9], (2,)),
    )


def sequence_forward(x, params, future=0):
    """x: (batch, seq, 2) -> (batch, seq + future, 2)."""
    B, T, F = x.shape
    assert F == 2
    T_total = T + future

    # Gate-padded (128-lane stride) weights.
    wih1_p = _pack_gate_weight(params["wih1"], GP)        # (128, 512); rows 0:2 valid
    whh1_p = _pack_gate_weight(params["whh1"], GP)        # (128, 512); rows 0:50 valid
    b1_p = _pack_gate_bias(params["bih1"] + params["bhh1"])
    wih2_p = _pack_gate_weight(params["wih2"], GP)
    whh2_p = _pack_gate_weight(params["whh2"], GP)
    w2s = jnp.concatenate([wih2_p, whh2_p], axis=0)       # (256, 512) stacked for fusion
    b2_p = _pack_gate_bias(params["bih2"] + params["bhh2"])

    wlin_p = jnp.zeros((GP, GP), jnp.float32).at[:D, :2].set(
        params["wlin"].T.astype(jnp.float32))
    blin_p = jnp.zeros((1, GP), jnp.float32).at[0, :2].set(
        params["blin"].astype(jnp.float32))

    # Future-phase fused lstm1 weights: fold the output head into Wih1 so the
    # feedback path is a single K=256 matmul and the Linear head leaves the
    # recurrent critical path.
    wc = wlin_p @ wih1_p                                  # (128, 512); rows 0:50 valid
    w1f = jnp.concatenate([wc, whh1_p], axis=0)           # (256, 512)
    b1f = b1_p + blin_p @ wih1_p                          # (1, 512)

    # Observed-phase input projection hoisted out of the recurrence:
    # one batched matmul (bias folded in) instead of T sliver matmuls per step.
    xw1 = (jnp.einsum("btf,fg->btg", x.astype(jnp.float32), wih1_p[:F, :])
           + b1_p)                                        # (B, T, 512)

    vmem = pl.BlockSpec(memory_space=pltpu.MemorySpace.VMEM)
    out_padded = pl.pallas_call(
        sequence_kernel,
        out_shape=jax.ShapeDtypeStruct((B, T_total, GP), jnp.float32),
        in_specs=[vmem] * 8,
        out_specs=vmem,
    )(xw1, whh1_p, w1f, b1f, w2s, b2_p, wlin_p, blin_p)

    return out_padded[:, :, :2]                           # (B, T+future, 2)


def sequence_forward_ref(x, params, future=0):
    """Pure-JAX reference with identical semantics (for verification)."""
    B, T, _ = x.shape
    d = D
    h1 = jnp.zeros((B, d)); c1 = jnp.zeros((B, d))
    h2 = jnp.zeros((B, d)); c2 = jnp.zeros((B, d))

    def cell(x_t, h, c, wih, whh, bih, bhh):
        g = x_t @ wih.T + bih + h @ whh.T + bhh
        i, f, gg, o = jnp.split(g, 4, axis=1)
        c_new = jax.nn.sigmoid(f) * c + jax.nn.sigmoid(i) * jnp.tanh(gg)
        h_new = jax.nn.sigmoid(o) * jnp.tanh(c_new)
        return h_new, c_new

    outputs = []
    out = jnp.zeros((B, 2))
    for t in range(T + future):
        x_t = x[:, t, :] if t < T else out
        h1, c1 = cell(x_t, h1, c1, params["wih1"], params["whh1"],
                      params["bih1"], params["bhh1"])
        h2, c2 = cell(h1, h2, c2, params["wih2"], params["whh2"],
                      params["bih2"], params["bhh2"])
        out = h2 @ params["wlin"].T + params["blin"]
        outputs.append(out)
    return jnp.stack(outputs, axis=1)


if __name__ == "__main__":
    key = jax.random.PRNGKey(0)
    k_param, k_x = jax.random.split(key)

    B, T, FUTURE = 2, 8, 4
    params = init_params(k_param)
    x = jax.random.normal(k_x, (B, T, 2), dtype=jnp.float32)

    out = sequence_forward(x, params, future=FUTURE)
    out = jax.block_until_ready(out)

    ref = sequence_forward_ref(x, params, future=FUTURE)
    assert out.shape == (B, T + FUTURE, 2), out.shape
    err = float(jnp.max(jnp.abs(out - ref)))
    assert jnp.allclose(out, ref, atol=2e-5, rtol=2e-5), err

    print("KERNEL_OK")
</pallas_src>

<mosaic_0001>
module attributes {stable_mosaic.version = 11 : i64} {
  func.func @sequence_kernel(%arg0: memref<2x8x512xf32, #tpu.memory_space<vmem>>, %arg1: memref<128x512xf32, #tpu.memory_space<vmem>>, %arg2: memref<256x512xf32, #tpu.memory_space<vmem>>, %arg3: memref<1x512xf32, #tpu.memory_space<vmem>>, %arg4: memref<256x512xf32, #tpu.memory_space<vmem>>, %arg5: memref<1x512xf32, #tpu.memory_space<vmem>>, %arg6: memref<128x128xf32, #tpu.memory_space<vmem>>, %arg7: memref<1x128xf32, #tpu.memory_space<vmem>>, %arg8: memref<2x12x128xf32, #tpu.memory_space<vmem>>) attributes {dimension_semantics = [], scalar_prefetch = 0 : i64, scratch_operands = 0 : i64, tpu.core_type = #tpu.core_type<tc>} {
    %c0 = arith.constant 0 : index
    %c0_0 = arith.constant 0 : index
    %0 = vector.load %arg3[%c0, %c0_0] : memref<1x512xf32, #tpu.memory_space<vmem>>, vector<1x512xf32>
    %c0_1 = arith.constant 0 : index
    %c0_2 = arith.constant 0 : index
    %1 = vector.load %arg5[%c0_1, %c0_2] : memref<1x512xf32, #tpu.memory_space<vmem>>, vector<1x512xf32>
    %c0_3 = arith.constant 0 : index
    %c0_4 = arith.constant 0 : index
    %2 = vector.load %arg7[%c0_3, %c0_4] : memref<1x128xf32, #tpu.memory_space<vmem>>, vector<1x128xf32>
    %cst = arith.constant 0.000000e+00 : f32
    %3 = vector.broadcast %cst : f32 to vector<2x128xf32>
    %c0_5 = arith.constant 0 : index
    %c0_6 = arith.constant 0 : index
    %c0_7 = arith.constant 0 : index
    %4 = vector.load %arg0[%c0_5, %c0_6, %c0_7] : memref<2x8x512xf32, #tpu.memory_space<vmem>>, vector<2x1x512xf32>
    %5 = vector.shape_cast %4 : vector<2x1x512xf32> to vector<2x512xf32>
    %c0_8 = arith.constant 0 : index
    %c0_9 = arith.constant 0 : index
    %6 = vector.load %arg1[%c0_8, %c0_9] : memref<128x512xf32, #tpu.memory_space<vmem>>, vector<128x512xf32>
    %cst_10 = arith.constant dense<0.000000e+00> : vector<2x512xf32>
    %7 = tpu.matmul %3, %6, %cst_10 {dimension_numbers = #tpu.dot_dimension_numbers<[1], [0], [0], [1], [0, 0, 1, 1], [], []>} : vector<2x128xf32>, vector<128x512xf32>, vector<2x512xf32> -> vector<2x512xf32>
    %8 = arith.addf %5, %7 : vector<2x512xf32>
    %9 = vector.extract_strided_slice %8 {offsets = [0, 0], sizes = [2, 128], strides = [1, 1]} : vector<2x512xf32> to vector<2x128xf32>
    %10 = arith.negf %9 : vector<2x128xf32>
    %11 = math.exp %10 : vector<2x128xf32>
    %cst_11 = arith.constant 1.000000e+00 : f32
    %12 = vector.broadcast %cst_11 : f32 to vector<2x128xf32>
    %13 = arith.addf %12, %11 : vector<2x128xf32>
    %14 = arith.divf %12, %13 : vector<2x128xf32>
    %15 = vector.extract_strided_slice %8 {offsets = [0, 128], sizes = [2, 128], strides = [1, 1]} : vector<2x512xf32> to vector<2x128xf32>
    %16 = arith.negf %15 : vector<2x128xf32>
    %17 = math.exp %16 : vector<2x128xf32>
    %cst_12 = arith.constant 1.000000e+00 : f32
    %18 = vector.broadcast %cst_12 : f32 to vector<2x128xf32>
    %19 = arith.addf %18, %17 : vector<2x128xf32>
    %20 = arith.divf %18, %19 : vector<2x128xf32>
    %21 = vector.extract_strided_slice %8 {offsets = [0, 256], sizes = [2, 128], strides = [1, 1]} : vector<2x512xf32> to vector<2x128xf32>
    %22 = math.tanh %21 : vector<2x128xf32>
    %23 = vector.extract_strided_slice %8 {offsets = [0, 384], sizes = [2, 128], strides = [1, 1]} : vector<2x512xf32> to vector<2x128xf32>
    %24 = arith.negf %23 : vector<2x128xf32>
    %25 = math.exp %24 : vector<2x128xf32>
    %cst_13 = arith.constant 1.000000e+00 : f32
    %26 = vector.broadcast %cst_13 : f32 to vector<2x128xf32>
    %27 = arith.addf %26, %25 : vector<2x128xf32>
    %28 = arith.divf %26, %27 : vector<2x128xf32>
    %29 = arith.mulf %20, %3 : vector<2x128xf32>
    %30 = arith.mulf %14, %22 : vector<2x128xf32>
    %31 = arith.addf %29, %30 : vector<2x128xf32>
    %32 = math.tanh %31 : vector<2x128xf32>
    %33 = arith.mulf %28, %32 : vector<2x128xf32>
    %34 = tpu.concatenate %33, %3 in 1 : vector<2x128xf32>, vector<2x128xf32> -> vector<2x256xf32>
    %c0_14 = arith.constant 0 : index
    %c0_15 = arith.constant 0 : index
    %35 = vector.load %arg4[%c0_14, %c0_15] : memref<256x512xf32, #tpu.memory_space<vmem>>, vector<256x512xf32>
    %cst_16 = arith.constant dense<0.000000e+00> : vector<2x512xf32>
    %36 = tpu.matmul %34, %35, %cst_16 {dimension_numbers = #tpu.dot_dimension_numbers<[1], [0], [0], [1], [0, 0, 1, 1], [], []>} : vector<2x256xf32>, vector<256x512xf32>, vector<2x512xf32> -> vector<2x512xf32>
    %37 = vector.broadcast %1 : vector<1x512xf32> to vector<2x512xf32>
    %38 = arith.addf %36, %37 : vector<2x512xf32>
    %39 = vector.extract_strided_slice %38 {offsets = [0, 0], sizes = [2, 128], strides = [1, 1]} : vector<2x512xf32> to vector<2x128xf32>
    %40 = arith.negf %39 : vector<2x128xf32>
    %41 = math.exp %40 : vector<2x128xf32>
    %cst_17 = arith.constant 1.000000e+00 : f32
    %42 = vector.broadcast %cst_17 : f32 to vector<2x128xf32>
    %43 = arith.addf %42, %41 : vector<2x128xf32>
    %44 = arith.divf %42, %43 : vector<2x128xf32>
    %45 = vector.extract_strided_slice %38 {offsets = [0, 128], sizes = [2, 128], strides = [1, 1]} : vector<2x512xf32> to vector<2x128xf32>
    %46 = arith.negf %45 : vector<2x128xf32>
    %47 = math.exp %46 : vector<2x128xf32>
    %cst_18 = arith.constant 1.000000e+00 : f32
    %48 = vector.broadcast %cst_18 : f32 to vector<2x128xf32>
    %49 = arith.addf %48, %47 : vector<2x128xf32>
    %50 = arith.divf %48, %49 : vector<2x128xf32>
    %51 = vector.extract_strided_slice %38 {offsets = [0, 256], sizes = [2, 128], strides = [1, 1]} : vector<2x512xf32> to vector<2x128xf32>
    %52 = math.tanh %51 : vector<2x128xf32>
    %53 = vector.extract_strided_slice %38 {offsets = [0, 384], sizes = [2, 128], strides = [1, 1]} : vector<2x512xf32> to vector<2x128xf32>
    %54 = arith.negf %53 : vector<2x128xf32>
    %55 = math.exp %54 : vector<2x128xf32>
    %cst_19 = arith.constant 1.000000e+00 : f32
    %56 = vector.broadcast %cst_19 : f32 to vector<2x128xf32>
    %57 = arith.addf %56, %55 : vector<2x128xf32>
    %58 = arith.divf %56, %57 : vector<2x128xf32>
    %59 = arith.mulf %50, %3 : vector<2x128xf32>
    %60 = arith.mulf %44, %52 : vector<2x128xf32>
    %61 = arith.addf %59, %60 : vector<2x128xf32>
    %62 = math.tanh %61 : vector<2x128xf32>
    %63 = arith.mulf %58, %62 : vector<2x128xf32>
    %c0_20 = arith.constant 0 : index
    %c0_21 = arith.constant 0 : index
    %64 = vector.load %arg6[%c0_20, %c0_21] : memref<128x128xf32, #tpu.memory_space<vmem>>, vector<128x128xf32>
    %cst_22 = arith.constant dense<0.000000e+00> : vector<2x128xf32>
    %65 = tpu.matmul %63, %64, %cst_22 {dimension_numbers = #tpu.dot_dimension_numbers<[1], [0], [0], [1], [0, 0, 1, 1], [], []>} : vector<2x128xf32>, vector<128x128xf32>, vector<2x128xf32> -> vector<2x128xf32>
    %66 = vector.broadcast %2 : vector<1x128xf32> to vector<2x128xf32>
    %67 = arith.addf %65, %66 : vector<2x128xf32>
    %c0_23 = arith.constant 0 : index
    %c0_24 = arith.constant 0 : index
    %c0_25 = arith.constant 0 : index
    %68 = vector.load %arg8[%c0_23, %c0_24, %c0_25] : memref<2x12x128xf32, #tpu.memory_space<vmem>>, vector<2x1x128xf32>
    %69 = vector.shape_cast %68 : vector<2x1x128xf32> to vector<2x128xf32>
    %70 = vector.shape_cast %67 : vector<2x128xf32> to vector<2x1x128xf32>
    tpu.vector_store %arg8[%c0_23, %c0_24, %c0_25], %70 {strides = array<i32>} : memref<2x12x128xf32, #tpu.memory_space<vmem>>, vector<2x1x128xf32>,
    %c0_26 = arith.constant 0 : index
    %c1 = arith.constant 1 : index
    %c0_27 = arith.constant 0 : index
    %71 = vector.load %arg0[%c0_26, %c1, %c0_27] : memref<2x8x512xf32, #tpu.memory_space<vmem>>, vector<2x1x512xf32>
    %72 = vector.shape_cast %71 : vector<2x1x512xf32> to vector<2x512xf32>
    %c0_28 = arith.constant 0 : index
    %c0_29 = arith.constant 0 : index
    %73 = vector.load %arg1[%c0_28, %c0_29] : memref<128x512xf32, #tpu.memory_space<vmem>>, vector<128x512xf32>
    %cst_30 = arith.constant dense<0.000000e+00> : vector<2x512xf32>
    %74 = tpu.matmul %33, %73, %cst_30 {dimension_numbers = #tpu.dot_dimension_numbers<[1], [0], [0], [1], [0, 0, 1, 1], [], []>} : vector<2x128xf32>, vector<128x512xf32>, vector<2x512xf32> -> vector<2x512xf32>
    %75 = arith.addf %72, %74 : vector<2x512xf32>
    %76 = vector.extract_strided_slice %75 {offsets = [0, 0], sizes = [2, 128], strides = [1, 1]} : vector<2x512xf32> to vector<2x128xf32>
    %77 = arith.negf %76 : vector<2x128xf32>
    %78 = math.exp %77 : vector<2x128xf32>
    %cst_31 = arith.constant 1.000000e+00 : f32
    %79 = vector.broadcast %cst_31 : f32 to vector<2x128xf32>
    %80 = arith.addf %79, %78 : vector<2x128xf32>
    %81 = arith.divf %79, %80 : vector<2x128xf32>
    %82 = vector.extract_strided_slice %75 {offsets = [0, 128], sizes = [2, 128], strides = [1, 1]} : vector<2x512xf32> to vector<2x128xf32>
    %83 = arith.negf %82 : vector<2x128xf32>
    %84 = math.exp %83 : vector<2x128xf32>
    %cst_32 = arith.constant 1.000000e+00 : f32
    %85 = vector.broadcast %cst_32 : f32 to vector<2x128xf32>
    %86 = arith.addf %85, %84 : vector<2x128xf32>
    %87 = arith.divf %85, %86 : vector<2x128xf32>
    %88 = vector.extract_strided_slice %75 {offsets = [0, 256], sizes = [2, 128], strides = [1, 1]} : vector<2x512xf32> to vector<2x128xf32>
    %89 = math.tanh %88 : vector<2x128xf32>
    %90 = vector.extract_strided_slice %75 {offsets = [0, 384], sizes = [2, 128], strides = [1, 1]} : vector<2x512xf32> to vector<2x128xf32>
    %91 = arith.negf %90 : vector<2x128xf32>
    %92 = math.exp %91 : vector<2x128xf32>
    %cst_33 = arith.constant 1.000000e+00 : f32
    %93 = vector.broadcast %cst_33 : f32 to vector<2x128xf32>
    %94 = arith.addf %93, %92 : vector<2x128xf32>
    %95 = arith.divf %93, %94 : vector<2x128xf32>
    %96 = arith.mulf %87, %31 : vector<2x128xf32>
    %97 = arith.mulf %81, %89 : vector<2x128xf32>
    %98 = arith.addf %96, %97 : vector<2x128xf32>
    %99 = math.tanh %98 : vector<2x128xf32>
    %100 = arith.mulf %95, %99 : vector<2x128xf32>
    %101 = tpu.concatenate %100, %63 in 1 : vector<2x128xf32>, vector<2x128xf32> -> vector<2x256xf32>
    %c0_34 = arith.constant 0 : index
    %c0_35 = arith.constant 0 : index
    %102 = vector.load %arg4[%c0_34, %c0_35] : memref<256x512xf32, #tpu.memory_space<vmem>>, vector<256x512xf32>
    %cst_36 = arith.constant dense<0.000000e+00> : vector<2x512xf32>
    %103 = tpu.matmul %101, %102, %cst_36 {dimension_numbers = #tpu.dot_dimension_numbers<[1], [0], [0], [1], [0, 0, 1, 1], [], []>} : vector<2x256xf32>, vector<256x512xf32>, vector<2x512xf32> -> vector<2x512xf32>
    %104 = vector.broadcast %1 : vector<1x512xf32> to vector<2x512xf32>
    %105 = arith.addf %103, %104 : vector<2x512xf32>
    %106 = vector.extract_strided_slice %105 {offsets = [0, 0], sizes = [2, 128], strides = [1, 1]} : vector<2x512xf32> to vector<2x128xf32>
    %107 = arith.negf %106 : vector<2x128xf32>
    %108 = math.exp %107 : vector<2x128xf32>
    %cst_37 = arith.constant 1.000000e+00 : f32
    %109 = vector.broadcast %cst_37 : f32 to vector<2x128xf32>
    %110 = arith.addf %109, %108 : vector<2x128xf32>
    %111 = arith.divf %109, %110 : vector<2x128xf32>
    %112 = vector.extract_strided_slice %105 {offsets = [0, 128], sizes = [2, 128], strides = [1, 1]} : vector<2x512xf32> to vector<2x128xf32>
    %113 = arith.negf %112 : vector<2x128xf32>
    %114 = math.exp %113 : vector<2x128xf32>
    %cst_38 = arith.constant 1.000000e+00 : f32
    %115 = vector.broadcast %cst_38 : f32 to vector<2x128xf32>
    %116 = arith.addf %115, %114 : vector<2x128xf32>
    %117 = arith.divf %115, %116 : vector<2x128xf32>
    %118 = vector.extract_strided_slice %105 {offsets = [0, 256], sizes = [2, 128], strides = [1, 1]} : vector<2x512xf32> to vector<2x128xf32>
    %119 = math.tanh %118 : vector<2x128xf32>
    %120 = vector.extract_strided_slice %105 {offsets = [0, 384], sizes = [2, 128], strides = [1, 1]} : vector<2x512xf32> to vector<2x128xf32>
    %121 = arith.negf %120 : vector<2x128xf32>
    %122 = math.exp %121 : vector<2x128xf32>
    %cst_39 = arith.constant 1.000000e+00 : f32
    %123 = vector.broadcast %cst_39 : f32 to vector<2x128xf32>
    %124 = arith.addf %123, %122 : vector<2x128xf32>
    %125 = arith.divf %123, %124 : vector<2x128xf32>
    %126 = arith.mulf %117, %61 : vector<2x128xf32>
    %127 = arith.mulf %111, %119 : vector<2x128xf32>
    %128 = arith.addf %126, %127 : vector<2x128xf32>
    %129 = math.tanh %128 : vector<2x128xf32>
    %130 = arith.mulf %125, %129 : vector<2x128xf32>
    %c0_40 = arith.constant 0 : index
    %c0_41 = arith.constant 0 : index
    %131 = vector.load %arg6[%c0_40, %c0_41] : memref<128x128xf32, #tpu.memory_space<vmem>>, vector<128x128xf32>
    %cst_42 = arith.constant dense<0.000000e+00> : vector<2x128xf32>
    %132 = tpu.matmul %130, %131, %cst_42 {dimension_numbers = #tpu.dot_dimension_numbers<[1], [0], [0], [1], [0, 0, 1, 1], [], []>} : vector<2x128xf32>, vector<128x128xf32>, vector<2x128xf32> -> vector<2x128xf32>
    %133 = vector.broadcast %2 : vector<1x128xf32> to vector<2x128xf32>
    %134 = arith.addf %132, %133 : vector<2x128xf32>
    %c0_43 = arith.constant 0 : index
    %c1_44 = arith.constant 1 : index
    %c0_45 = arith.constant 0 : index
    %135 = vector.load %arg8[%c0_43, %c1_44, %c0_45] : memref<2x12x128xf32, #tpu.memory_space<vmem>>, vector<2x1x128xf32>
    %136 = vector.shape_cast %135 : vector<2x1x128xf32> to vector<2x128xf32>
    %137 = vector.shape_cast %134 : vector<2x128xf32> to vector<2x1x128xf32>
    tpu.vector_store %arg8[%c0_43, %c1_44, %c0_45], %137 {strides = array<i32>} : memref<2x12x128xf32, #tpu.memory_space<vmem>>, vector<2x1x128xf32>,
    %c0_46 = arith.constant 0 : index
    %c2 = arith.constant 2 : index
    %c0_47 = arith.constant 0 : index
    %138 = vector.load %arg0[%c0_46, %c2, %c0_47] : memref<2x8x512xf32, #tpu.memory_space<vmem>>, vector<2x1x512xf32>
    %139 = vector.shape_cast %138 : vector<2x1x512xf32> to vector<2x512xf32>
    %c0_48 = arith.constant 0 : index
    %c0_49 = arith.constant 0 : index
    %140 = vector.load %arg1[%c0_48, %c0_49] : memref<128x512xf32, #tpu.memory_space<vmem>>, vector<128x512xf32>
    %cst_50 = arith.constant dense<0.000000e+00> : vector<2x512xf32>
    %141 = tpu.matmul %100, %140, %cst_50 {dimension_numbers = #tpu.dot_dimension_numbers<[1], [0], [0], [1], [0, 0, 1, 1], [], []>} : vector<2x128xf32>, vector<128x512xf32>, vector<2x512xf32> -> vector<2x512xf32>
    %142 = arith.addf %139, %141 : vector<2x512xf32>
    %143 = vector.extract_strided_slice %142 {offsets = [0, 0], sizes = [2, 128], strides = [1, 1]} : vector<2x512xf32> to vector<2x128xf32>
    %144 = arith.negf %143 : vector<2x128xf32>
    %145 = math.exp %144 : vector<2x128xf32>
    %cst_51 = arith.constant 1.000000e+00 : f32
    %146 = vector.broadcast %cst_51 : f32 to vector<2x128xf32>
    %147 = arith.addf %146, %145 : vector<2x128xf32>
    %148 = arith.divf %146, %147 : vector<2x128xf32>
    %149 = vector.extract_strided_slice %142 {offsets = [0, 128], sizes = [2, 128], strides = [1, 1]} : vector<2x512xf32> to vector<2x128xf32>
    %150 = arith.negf %149 : vector<2x128xf32>
    %151 = math.exp %150 : vector<2x128xf32>
    %cst_52 = arith.constant 1.000000e+00 : f32
    %152 = vector.broadcast %cst_52 : f32 to vector<2x128xf32>
    %153 = arith.addf %152, %151 : vector<2x128xf32>
    %154 = arith.divf %152, %153 : vector<2x128xf32>
    %155 = vector.extract_strided_slice %142 {offsets = [0, 256], sizes = [2, 128], strides = [1, 1]} : vector<2x512xf32> to vector<2x128xf32>
    %156 = math.tanh %155 : vector<2x128xf32>
    %157 = vector.extract_strided_slice %142 {offsets = [0, 384], sizes = [2, 128], strides = [1, 1]} : vector<2x512xf32> to vector<2x128xf32>
    %158 = arith.negf %157 : vector<2x128xf32>
    %159 = math.exp %158 : vector<2x128xf32>
    %cst_53 = arith.constant 1.000000e+00 : f32
    %160 = vector.broadcast %cst_53 : f32 to vector<2x128xf32>
    %161 = arith.addf %160, %159 : vector<2x128xf32>
    %162 = arith.divf %160, %161 : vector<2x128xf32>
    %163 = arith.mulf %154, %98 : vector<2x128xf32>
    %164 = arith.mulf %148, %156 : vector<2x128xf32>
    %165 = arith.addf %163, %164 : vector<2x128xf32>
    %166 = math.tanh %165 : vector<2x128xf32>
    %167 = arith.mulf %162, %166 : vector<2x128xf32>
    %168 = tpu.concatenate %167, %130 in 1 : vector<2x128xf32>, vector<2x128xf32> -> vector<2x256xf32>
    %c0_54 = arith.constant 0 : index
    %c0_55 = arith.constant 0 : index
    %169 = vector.load %arg4[%c0_54, %c0_55] : memref<256x512xf32, #tpu.memory_space<vmem>>, vector<256x512xf32>
    %cst_56 = arith.constant dense<0.000000e+00> : vector<2x512xf32>
    %170 = tpu.matmul %168, %169, %cst_56 {dimension_numbers = #tpu.dot_dimension_numbers<[1], [0], [0], [1], [0, 0, 1, 1], [], []>} : vector<2x256xf32>, vector<256x512xf32>, vector<2x512xf32> -> vector<2x512xf32>
    %171 = vector.broadcast %1 : vector<1x512xf32> to vector<2x512xf32>
    %172 = arith.addf %170, %171 : vector<2x512xf32>
    %173 = vector.extract_strided_slice %172 {offsets = [0, 0], sizes = [2, 128], strides = [1, 1]} : vector<2x512xf32> to vector<2x128xf32>
    %174 = arith.negf %173 : vector<2x128xf32>
    %175 = math.exp %174 : vector<2x128xf32>
    %cst_57 = arith.constant 1.000000e+00 : f32
    %176 = vector.broadcast %cst_57 : f32 to vector<2x128xf32>
    %177 = arith.addf %176, %175 : vector<2x128xf32>
    %178 = arith.divf %176, %177 : vector<2x128xf32>
    %179 = vector.extract_strided_slice %172 {offsets = [0, 128], sizes = [2, 128], strides = [1, 1]} : vector<2x512xf32> to vector<2x128xf32>
    %180 = arith.negf %179 : vector<2x128xf32>
    %181 = math.exp %180 : vector<2x128xf32>
    %cst_58 = arith.constant 1.000000e+00 : f32
    %182 = vector.broadcast %cst_58 : f32 to vector<2x128xf32>
    %183 = arith.addf %182, %181 : vector<2x128xf32>
    %184 = arith.divf %182, %183 : vector<2x128xf32>
    %185 = vector.extract_strided_slice %172 {offsets = [0, 256], sizes = [2, 128], strides = [1, 1]} : vector<2x512xf32> to vector<2x128xf32>
    %186 = math.tanh %185 : vector<2x128xf32>
    %187 = vector.extract_strided_slice %172 {offsets = [0, 384], sizes = [2, 128], strides = [1, 1]} : vector<2x512xf32> to vector<2x128xf32>
    %188 = arith.negf %187 : vector<2x128xf32>
    %189 = math.exp %188 : vector<2x128xf32>
    %cst_59 = arith.constant 1.000000e+00 : f32
    %190 = vector.broadcast %cst_59 : f32 to vector<2x128xf32>
    %191 = arith.addf %190, %189 : vector<2x128xf32>
    %192 = arith.divf %190, %191 : vector<2x128xf32>
    %193 = arith.mulf %184, %128 : vector<2x128xf32>
    %194 = arith.mulf %178, %186 : vector<2x128xf32>
    %195 = arith.addf %193, %194 : vector<2x128xf32>
    %196 = math.tanh %195 : vector<2x128xf32>
    %197 = arith.mulf %192, %196 : vector<2x128xf32>
    %c0_60 = arith.constant 0 : index
    %c0_61 = arith.constant 0 : index
    %198 = vector.load %arg6[%c0_60, %c0_61] : memref<128x128xf32, #tpu.memory_space<vmem>>, vector<128x128xf32>
    %cst_62 = arith.constant dense<0.000000e+00> : vector<2x128xf32>
    %199 = tpu.matmul %197, %198, %cst_62 {dimension_numbers = #tpu.dot_dimension_numbers<[1], [0], [0], [1], [0, 0, 1, 1], [], []>} : vector<2x128xf32>, vector<128x128xf32>, vector<2x128xf32> -> vector<2x128xf32>
    %200 = vector.broadcast %2 : vector<1x128xf32> to vector<2x128xf32>
    %201 = arith.addf %199, %200 : vector<2x128xf32>
    %c0_63 = arith.constant 0 : index
    %c2_64 = arith.constant 2 : index
    %c0_65 = arith.constant 0 : index
    %202 = vector.load %arg8[%c0_63, %c2_64, %c0_65] : memref<2x12x128xf32, #tpu.memory_space<vmem>>, vector<2x1x128xf32>
    %203 = vector.shape_cast %202 : vector<2x1x128xf32> to vector<2x128xf32>
    %204 = vector.shape_cast %201 : vector<2x128xf32> to vector<2x1x128xf32>
    tpu.vector_store %arg8[%c0_63, %c2_64, %c0_65], %204 {strides = array<i32>} : memref<2x12x128xf32, #tpu.memory_space<vmem>>, vector<2x1x128xf32>,
    %c0_66 = arith.constant 0 : index
    %c3 = arith.constant 3 : index
    %c0_67 = arith.constant 0 : index
    %205 = vector.load %arg0[%c0_66, %c3, %c0_67] : memref<2x8x512xf32, #tpu.memory_space<vmem>>, vector<2x1x512xf32>
    %206 = vector.shape_cast %205 : vector<2x1x512xf32> to vector<2x512xf32>
    %c0_68 = arith.constant 0 : index
    %c0_69 = arith.constant 0 : index
    %207 = vector.load %arg1[%c0_68, %c0_69] : memref<128x512xf32, #tpu.memory_space<vmem>>, vector<128x512xf32>
    %cst_70 = arith.constant dense<0.000000e+00> : vector<2x512xf32>
    %208 = tpu.matmul %167, %207, %cst_70 {dimension_numbers = #tpu.dot_dimension_numbers<[1], [0], [0], [1], [0, 0, 1, 1], [], []>} : vector<2x128xf32>, vector<128x512xf32>, vector<2x512xf32> -> vector<2x512xf32>
    %209 = arith.addf %206, %208 : vector<2x512xf32>
    %210 = vector.extract_strided_slice %209 {offsets = [0, 0], sizes = [2, 128], strides = [1, 1]} : vector<2x512xf32> to vector<2x128xf32>
    %211 = arith.negf %210 : vector<2x128xf32>
    %212 = math.exp %211 : vector<2x128xf32>
    %cst_71 = arith.constant 1.000000e+00 : f32
    %213 = vector.broadcast %cst_71 : f32 to vector<2x128xf32>
    %214 = arith.addf %213, %212 : vector<2x128xf32>
    %215 = arith.divf %213, %214 : vector<2x128xf32>
    %216 = vector.extract_strided_slice %209 {offsets = [0, 128], sizes = [2, 128], strides = [1, 1]} : vector<2x512xf32> to vector<2x128xf32>
    %217 = arith.negf %216 : vector<2x128xf32>
    %218 = math.exp %217 : vector<2x128xf32>
    %cst_72 = arith.constant 1.000000e+00 : f32
    %219 = vector.broadcast %cst_72 : f32 to vector<2x128xf32>
    %220 = arith.addf %219, %218 : vector<2x128xf32>
    %221 = arith.divf %219, %220 : vector<2x128xf32>
    %222 = vector.extract_strided_slice %209 {offsets = [0, 256], sizes = [2, 128], strides = [1, 1]} : vector<2x512xf32> to vector<2x128xf32>
    %223 = math.tanh %222 : vector<2x128xf32>
    %224 = vector.extract_strided_slice %209 {offsets = [0, 384], sizes = [2, 128], strides = [1, 1]} : vector<2x512xf32> to vector<2x128xf32>
    %225 = arith.negf %224 : vector<2x128xf32>
    %226 = math.exp %225 : vector<2x128xf32>
    %cst_73 = arith.constant 1.000000e+00 : f32
    %227 = vector.broadcast %cst_73 : f32 to vector<2x128xf32>
    %228 = arith.addf %227, %226 : vector<2x128xf32>
    %229 = arith.divf %227, %228 : vector<2x128xf32>
    %230 = arith.mulf %221, %165 : vector<2x128xf32>
    %231 = arith.mulf %215, %223 : vector<2x128xf32>
    %232 = arith.addf %230, %231 : vector<2x128xf32>
    %233 = math.tanh %232 : vector<2x128xf32>
    %234 = arith.mulf %229, %233 : vector<2x128xf32>
    %235 = tpu.concatenate %234, %197 in 1 : vector<2x128xf32>, vector<2x128xf32> -> vector<2x256xf32>
    %c0_74 = arith.constant 0 : index
    %c0_75 = arith.constant 0 : index
    %236 = vector.load %arg4[%c0_74, %c0_75] : memref<256x512xf32, #tpu.memory_space<vmem>>, vector<256x512xf32>
    %cst_76 = arith.constant dense<0.000000e+00> : vector<2x512xf32>
    %237 = tpu.matmul %235, %236, %cst_76 {dimension_numbers = #tpu.dot_dimension_numbers<[1], [0], [0], [1], [0, 0, 1, 1], [], []>} : vector<2x256xf32>, vector<256x512xf32>, vector<2x512xf32> -> vector<2x512xf32>
    %238 = vector.broadcast %1 : vector<1x512xf32> to vector<2x512xf32>
    %239 = arith.addf %237, %238 : vector<2x512xf32>
    %240 = vector.extract_strided_slice %239 {offsets = [0, 0], sizes = [2, 128], strides = [1, 1]} : vector<2x512xf32> to vector<2x128xf32>
    %241 = arith.negf %240 : vector<2x128xf32>
    %242 = math.exp %241 : vector<2x128xf32>
    %cst_77 = arith.constant 1.000000e+00 : f32
    %243 = vector.broadcast %cst_77 : f32 to vector<2x128xf32>
    %244 = arith.addf %243, %242 : vector<2x128xf32>
    %245 = arith.divf %243, %244 : vector<2x128xf32>
    %246 = vector.extract_strided_slice %239 {offsets = [0, 128], sizes = [2, 128], strides = [1, 1]} : vector<2x512xf32> to vector<2x128xf32>
    %247 = arith.negf %246 : vector<2x128xf32>
    %248 = math.exp %247 : vector<2x128xf32>
    %cst_78 = arith.constant 1.000000e+00 : f32
    %249 = vector.broadcast %cst_78 : f32 to vector<2x128xf32>
    %250 = arith.addf %249, %248 : vector<2x128xf32>
    %251 = arith.divf %249, %250 : vector<2x128xf32>
    %252 = vector.extract_strided_slice %239 {offsets = [0, 256], sizes = [2, 128], strides = [1, 1]} : vector<2x512xf32> to vector<2x128xf32>
    %253 = math.tanh %252 : vector<2x128xf32>
    %254 = vector.extract_strided_slice %239 {offsets = [0, 384], sizes = [2, 128], strides = [1, 1]} : vector<2x512xf32> to vector<2x128xf32>
    %255 = arith.negf %254 : vector<2x128xf32>
    %256 = math.exp %255 : vector<2x128xf32>
    %cst_79 = arith.constant 1.000000e+00 : f32
    %257 = vector.broadcast %cst_79 : f32 to vector<2x128xf32>
    %258 = arith.addf %257, %256 : vector<2x128xf32>
    %259 = arith.divf %257, %258 : vector<2x128xf32>
    %260 = arith.mulf %251, %195 : vector<2x128xf32>
    %261 = arith.mulf %245, %253 : vector<2x128xf32>
    %262 = arith.addf %260, %261 : vector<2x128xf32>
    %263 = math.tanh %262 : vector<2x128xf32>
    %264 = arith.mulf %259, %263 : vector<2x128xf32>
    %c0_80 = arith.constant 0 : index
    %c0_81 = arith.constant 0 : index
    %265 = vector.load %arg6[%c0_80, %c0_81] : memref<128x128xf32, #tpu.memory_space<vmem>>, vector<128x128xf32>
    %cst_82 = arith.constant dense<0.000000e+00> : vector<2x128xf32>
    %266 = tpu.matmul %264, %265, %cst_82 {dimension_numbers = #tpu.dot_dimension_numbers<[1], [0], [0], [1], [0, 0, 1, 1], [], []>} : vector<2x128xf32>, vector<128x128xf32>, vector<2x128xf32> -> vector<2x128xf32>
    %267 = vector.broadcast %2 : vector<1x128xf32> to vector<2x128xf32>
    %268 = arith.addf %266, %267 : vector<2x128xf32>
    %c0_83 = arith.constant 0 : index
    %c3_84 = arith.constant 3 : index
    %c0_85 = arith.constant 0 : index
    %269 = vector.load %arg8[%c0_83, %c3_84, %c0_85] : memref<2x12x128xf32, #tpu.memory_space<vmem>>, vector<2x1x128xf32>
    %270 = vector.shape_cast %269 : vector<2x1x128xf32> to vector<2x128xf32>
    %271 = vector.shape_cast %268 : vector<2x128xf32> to vector<2x1x128xf32>
    tpu.vector_store %arg8[%c0_83, %c3_84, %c0_85], %271 {strides = array<i32>} : memref<2x12x128xf32, #tpu.memory_space<vmem>>, vector<2x1x128xf32>,
    %c0_86 = arith.constant 0 : index
    %c4 = arith.constant 4 : index
    %c0_87 = arith.constant 0 : index
    %272 = vector.load %arg0[%c0_86, %c4, %c0_87] : memref<2x8x512xf32, #tpu.memory_space<vmem>>, vector<2x1x512xf32>
    %273 = vector.shape_cast %272 : vector<2x1x512xf32> to vector<2x512xf32>
    %c0_88 = arith.constant 0 : index
    %c0_89 = arith.constant 0 : index
    %274 = vector.load %arg1[%c0_88, %c0_89] : memref<128x512xf32, #tpu.memory_space<vmem>>, vector<128x512xf32>
    %cst_90 = arith.constant dense<0.000000e+00> : vector<2x512xf32>
    %275 = tpu.matmul %234, %274, %cst_90 {dimension_numbers = #tpu.dot_dimension_numbers<[1], [0], [0], [1], [0, 0, 1, 1], [], []>} : vector<2x128xf32>, vector<128x512xf32>, vector<2x512xf32> -> vector<2x512xf32>
    %276 = arith.addf %273, %275 : vector<2x512xf32>
    %277 = vector.extract_strided_slice %276 {offsets = [0, 0], sizes = [2, 128], strides = [1, 1]} : vector<2x512xf32> to vector<2x128xf32>
    %278 = arith.negf %277 : vector<2x128xf32>
    %279 = math.exp %278 : vector<2x128xf32>
    %cst_91 = arith.constant 1.000000e+00 : f32
    %280 = vector.broadcast %cst_91 : f32 to vector<2x128xf32>
    %281 = arith.addf %280, %279 : vector<2x128xf32>
    %282 = arith.divf %280, %281 : vector<2x128xf32>
    %283 = vector.extract_strided_slice %276 {offsets = [0, 128], sizes = [2, 128], strides = [1, 1]} : vector<2x512xf32> to vector<2x128xf32>
    %284 = arith.negf %283 : vector<2x128xf32>
    %285 = math.exp %284 : vector<2x128xf32>
    %cst_92 = arith.constant 1.000000e+00 : f32
    %286 = vector.broadcast %cst_92 : f32 to vector<2x128xf32>
    %287 = arith.addf %286, %285 : vector<2x128xf32>
    %288 = arith.divf %286, %287 : vector<2x128xf32>
    %289 = vector.extract_strided_slice %276 {offsets = [0, 256], sizes = [2, 128], strides = [1, 1]} : vector<2x512xf32> to vector<2x128xf32>
    %290 = math.tanh %289 : vector<2x128xf32>
    %291 = vector.extract_strided_slice %276 {offsets = [0, 384], sizes = [2, 128], strides = [1, 1]} : vector<2x512xf32> to vector<2x128xf32>
    %292 = arith.negf %291 : vector<2x128xf32>
    %293 = math.exp %292 : vector<2x128xf32>
    %cst_93 = arith.constant 1.000000e+00 : f32
    %294 = vector.broadcast %cst_93 : f32 to vector<2x128xf32>
    %295 = arith.addf %294, %293 : vector<2x128xf32>
    %296 = arith.divf %294, %295 : vector<2x128xf32>
    %297 = arith.mulf %288, %232 : vector<2x128xf32>
    %298 = arith.mulf %282, %290 : vector<2x128xf32>
    %299 = arith.addf %297, %298 : vector<2x128xf32>
    %300 = math.tanh %299 : vector<2x128xf32>
    %301 = arith.mulf %296, %300 : vector<2x128xf32>
    %302 = tpu.concatenate %301, %264 in 1 : vector<2x128xf32>, vector<2x128xf32> -> vector<2x256xf32>
    %c0_94 = arith.constant 0 : index
    %c0_95 = arith.constant 0 : index
    %303 = vector.load %arg4[%c0_94, %c0_95] : memref<256x512xf32, #tpu.memory_space<vmem>>, vector<256x512xf32>
    %cst_96 = arith.constant dense<0.000000e+00> : vector<2x512xf32>
    %304 = tpu.matmul %302, %303, %cst_96 {dimension_numbers = #tpu.dot_dimension_numbers<[1], [0], [0], [1], [0, 0, 1, 1], [], []>} : vector<2x256xf32>, vector<256x512xf32>, vector<2x512xf32> -> vector<2x512xf32>
    %305 = vector.broadcast %1 : vector<1x512xf32> to vector<2x512xf32>
    %306 = arith.addf %304, %305 : vector<2x512xf32>
    %307 = vector.extract_strided_slice %306 {offsets = [0, 0], sizes = [2, 128], strides = [1, 1]} : vector<2x512xf32> to vector<2x128xf32>
    %308 = arith.negf %307 : vector<2x128xf32>
    %309 = math.exp %308 : vector<2x128xf32>
    %cst_97 = arith.constant 1.000000e+00 : f32
    %310 = vector.broadcast %cst_97 : f32 to vector<2x128xf32>
    %311 = arith.addf %310, %309 : vector<2x128xf32>
    %312 = arith.divf %310, %311 : vector<2x128xf32>
    %313 = vector.extract_strided_slice %306 {offsets = [0, 128], sizes = [2, 128], strides = [1, 1]} : vector<2x512xf32> to vector<2x128xf32>
    %314 = arith.negf %313 : vector<2x128xf32>
    %315 = math.exp %314 : vector<2x128xf32>
    %cst_98 = arith.constant 1.000000e+00 : f32
    %316 = vector.broadcast %cst_98 : f32 to vector<2x128xf32>
    %317 = arith.addf %316, %315 : vector<2x128xf32>
    %318 = arith.divf %316, %317 : vector<2x128xf32>
    %319 = vector.extract_strided_slice %306 {offsets = [0, 256], sizes = [2, 128], strides = [1, 1]} : vector<2x512xf32> to vector<2x128xf32>
    %320 = math.tanh %319 : vector<2x128xf32>
    %321 = vector.extract_strided_slice %306 {offsets = [0, 384], sizes = [2, 128], strides = [1, 1]} : vector<2x512xf32> to vector<2x128xf32>
    %322 = arith.negf %321 : vector<2x128xf32>
    %323 = math.exp %322 : vector<2x128xf32>
    %cst_99 = arith.constant 1.000000e+00 : f32
    %324 = vector.broadcast %cst_99 : f32 to vector<2x128xf32>
    %325 = arith.addf %324, %323 : vector<2x128xf32>
    %326 = arith.divf %324, %325 : vector<2x128xf32>
    %327 = arith.mulf %318, %262 : vector<2x128xf32>
    %328 = arith.mulf %312, %320 : vector<2x128xf32>
    %329 = arith.addf %327, %328 : vector<2x128xf32>
    %330 = math.tanh %329 : vector<2x128xf32>
    %331 = arith.mulf %326, %330 : vector<2x128xf32>
    %c0_100 = arith.constant 0 : index
    %c0_101 = arith.constant 0 : index
    %332 = vector.load %arg6[%c0_100, %c0_101] : memref<128x128xf32, #tpu.memory_space<vmem>>, vector<128x128xf32>
    %cst_102 = arith.constant dense<0.000000e+00> : vector<2x128xf32>
    %333 = tpu.matmul %331, %332, %cst_102 {dimension_numbers = #tpu.dot_dimension_numbers<[1], [0], [0], [1], [0, 0, 1, 1], [], []>} : vector<2x128xf32>, vector<128x128xf32>, vector<2x128xf32> -> vector<2x128xf32>
    %334 = vector.broadcast %2 : vector<1x128xf32> to vector<2x128xf32>
    %335 = arith.addf %333, %334 : vector<2x128xf32>
    %c0_103 = arith.constant 0 : index
    %c4_104 = arith.constant 4 : index
    %c0_105 = arith.constant 0 : index
    %336 = vector.load %arg8[%c0_103, %c4_104, %c0_105] : memref<2x12x128xf32, #tpu.memory_space<vmem>>, vector<2x1x128xf32>
    %337 = vector.shape_cast %336 : vector<2x1x128xf32> to vector<2x128xf32>
    %338 = vector.shape_cast %335 : vector<2x128xf32> to vector<2x1x128xf32>
    tpu.vector_store %arg8[%c0_103, %c4_104, %c0_105], %338 {strides = array<i32>} : memref<2x12x128xf32, #tpu.memory_space<vmem>>, vector<2x1x128xf32>,
    %c0_106 = arith.constant 0 : index
    %c5 = arith.constant 5 : index
    %c0_107 = arith.constant 0 : index
    %339 = vector.load %arg0[%c0_106, %c5, %c0_107] : memref<2x8x512xf32, #tpu.memory_space<vmem>>, vector<2x1x512xf32>
    %340 = vector.shape_cast %339 : vector<2x1x512xf32> to vector<2x512xf32>
    %c0_108 = arith.constant 0 : index
    %c0_109 = arith.constant 0 : index
    %341 = vector.load %arg1[%c0_108, %c0_109] : memref<128x512xf32, #tpu.memory_space<vmem>>, vector<128x512xf32>
    %cst_110 = arith.constant dense<0.000000e+00> : vector<2x512xf32>
    %342 = tpu.matmul %301, %341, %cst_110 {dimension_numbers = #tpu.dot_dimension_numbers<[1], [0], [0], [1], [0, 0, 1, 1], [], []>} : vector<2x128xf32>, vector<128x512xf32>, vector<2x512xf32> -> vector<2x512xf32>
    %343 = arith.addf %340, %342 : vector<2x512xf32>
    %344 = vector.extract_strided_slice %343 {offsets = [0, 0], sizes = [2, 128], strides = [1, 1]} : vector<2x512xf32> to vector<2x128xf32>
    %345 = arith.negf %344 : vector<2x128xf32>
    %346 = math.exp %345 : vector<2x128xf32>
    %cst_111 = arith.constant 1.000000e+00 : f32
    %347 = vector.broadcast %cst_111 : f32 to vector<2x128xf32>
    %348 = arith.addf %347, %346 : vector<2x128xf32>
    %349 = arith.divf %347, %348 : vector<2x128xf32>
    %350 = vector.extract_strided_slice %343 {offsets = [0, 128], sizes = [2, 128], strides = [1, 1]} : vector<2x512xf32> to vector<2x128xf32>
    %351 = arith.negf %350 : vector<2x128xf32>
    %352 = math.exp %351 : vector<2x128xf32>
    %cst_112 = arith.constant 1.000000e+00 : f32
    %353 = vector.broadcast %cst_112 : f32 to vector<2x128xf32>
    %354 = arith.addf %353, %352 : vector<2x128xf32>
    %355 = arith.divf %353, %354 : vector<2x128xf32>
    %356 = vector.extract_strided_slice %343 {offsets = [0, 256], sizes = [2, 128], strides = [1, 1]} : vector<2x512xf32> to vector<2x128xf32>
    %357 = math.tanh %356 : vector<2x128xf32>
    %358 = vector.extract_strided_slice %343 {offsets = [0, 384], sizes = [2, 128], strides = [1, 1]} : vector<2x512xf32> to vector<2x128xf32>
    %359 = arith.negf %358 : vector<2x128xf32>
    %360 = math.exp %359 : vector<2x128xf32>
    %cst_113 = arith.constant 1.000000e+00 : f32
    %361 = vector.broadcast %cst_113 : f32 to vector<2x128xf32>
    %362 = arith.addf %361, %360 : vector<2x128xf32>
    %363 = arith.divf %361, %362 : vector<2x128xf32>
    %364 = arith.mulf %355, %299 : vector<2x128xf32>
    %365 = arith.mulf %349, %357 : vector<2x128xf32>
    %366 = arith.addf %364, %365 : vector<2x128xf32>
    %367 = math.tanh %366 : vector<2x128xf32>
    %368 = arith.mulf %363, %367 : vector<2x128xf32>
    %369 = tpu.concatenate %368, %331 in 1 : vector<2x128xf32>, vector<2x128xf32> -> vector<2x256xf32>
    %c0_114 = arith.constant 0 : index
    %c0_115 = arith.constant 0 : index
    %370 = vector.load %arg4[%c0_114, %c0_115] : memref<256x512xf32, #tpu.memory_space<vmem>>, vector<256x512xf32>
    %cst_116 = arith.constant dense<0.000000e+00> : vector<2x512xf32>
    %371 = tpu.matmul %369, %370, %cst_116 {dimension_numbers = #tpu.dot_dimension_numbers<[1], [0], [0], [1], [0, 0, 1, 1], [], []>} : vector<2x256xf32>, vector<256x512xf32>, vector<2x512xf32> -> vector<2x512xf32>
    %372 = vector.broadcast %1 : vector<1x512xf32> to vector<2x512xf32>
    %373 = arith.addf %371, %372 : vector<2x512xf32>
    %374 = vector.extract_strided_slice %373 {offsets = [0, 0], sizes = [2, 128], strides = [1, 1]} : vector<2x512xf32> to vector<2x128xf32>
    %375 = arith.negf %374 : vector<2x128xf32>
    %376 = math.exp %375 : vector<2x128xf32>
    %cst_117 = arith.constant 1.000000e+00 : f32
    %377 = vector.broadcast %cst_117 : f32 to vector<2x128xf32>
    %378 = arith.addf %377, %376 : vector<2x128xf32>
    %379 = arith.divf %377, %378 : vector<2x128xf32>
    %380 = vector.extract_strided_slice %373 {offsets = [0, 128], sizes = [2, 128], strides = [1, 1]} : vector<2x512xf32> to vector<2x128xf32>
    %381 = arith.negf %380 : vector<2x128xf32>
    %382 = math.exp %381 : vector<2x128xf32>
    %cst_118 = arith.constant 1.000000e+00 : f32
    %383 = vector.broadcast %cst_118 : f32 to vector<2x128xf32>
    %384 = arith.addf %383, %382 : vector<2x128xf32>
    %385 = arith.divf %383, %384 : vector<2x128xf32>
    %386 = vector.extract_strided_slice %373 {offsets = [0, 256], sizes = [2, 128], strides = [1, 1]} : vector<2x512xf32> to vector<2x128xf32>
    %387 = math.tanh %386 : vector<2x128xf32>
    %388 = vector.extract_strided_slice %373 {offsets = [0, 384], sizes = [2, 128], strides = [1, 1]} : vector<2x512xf32> to vector<2x128xf32>
    %389 = arith.negf %388 : vector<2x128xf32>
    %390 = math.exp %389 : vector<2x128xf32>
    %cst_119 = arith.constant 1.000000e+00 : f32
    %391 = vector.broadcast %cst_119 : f32 to vector<2x128xf32>
    %392 = arith.addf %391, %390 : vector<2x128xf32>
    %393 = arith.divf %391, %392 : vector<2x128xf32>
    %394 = arith.mulf %385, %329 : vector<2x128xf32>
    %395 = arith.mulf %379, %387 : vector<2x128xf32>
    %396 = arith.addf %394, %395 : vector<2x128xf32>
    %397 = math.tanh %396 : vector<2x128xf32>
    %398 = arith.mulf %393, %397 : vector<2x128xf32>
    %c0_120 = arith.constant 0 : index
    %c0_121 = arith.constant 0 : index
    %399 = vector.load %arg6[%c0_120, %c0_121] : memref<128x128xf32, #tpu.memory_space<vmem>>, vector<128x128xf32>
    %cst_122 = arith.constant dense<0.000000e+00> : vector<2x128xf32>
    %400 = tpu.matmul %398, %399, %cst_122 {dimension_numbers = #tpu.dot_dimension_numbers<[1], [0], [0], [1], [0, 0, 1, 1], [], []>} : vector<2x128xf32>, vector<128x128xf32>, vector<2x128xf32> -> vector<2x128xf32>
    %401 = vector.broadcast %2 : vector<1x128xf32> to vector<2x128xf32>
    %402 = arith.addf %400, %401 : vector<2x128xf32>
    %c0_123 = arith.constant 0 : index
    %c5_124 = arith.constant 5 : index
    %c0_125 = arith.constant 0 : index
    %403 = vector.load %arg8[%c0_123, %c5_124, %c0_125] : memref<2x12x128xf32, #tpu.memory_space<vmem>>, vector<2x1x128xf32>
    %404 = vector.shape_cast %403 : vector<2x1x128xf32> to vector<2x128xf32>
    %405 = vector.shape_cast %402 : vector<2x128xf32> to vector<2x1x128xf32>
    tpu.vector_store %arg8[%c0_123, %c5_124, %c0_125], %405 {strides = array<i32>} : memref<2x12x128xf32, #tpu.memory_space<vmem>>, vector<2x1x128xf32>,
    %c0_126 = arith.constant 0 : index
    %c6 = arith.constant 6 : index
    %c0_127 = arith.constant 0 : index
    %406 = vector.load %arg0[%c0_126, %c6, %c0_127] : memref<2x8x512xf32, #tpu.memory_space<vmem>>, vector<2x1x512xf32>
    %407 = vector.shape_cast %406 : vector<2x1x512xf32> to vector<2x512xf32>
    %c0_128 = arith.constant 0 : index
    %c0_129 = arith.constant 0 : index
    %408 = vector.load %arg1[%c0_128, %c0_129] : memref<128x512xf32, #tpu.memory_space<vmem>>, vector<128x512xf32>
    %cst_130 = arith.constant dense<0.000000e+00> : vector<2x512xf32>
    %409 = tpu.matmul %368, %408, %cst_130 {dimension_numbers = #tpu.dot_dimension_numbers<[1], [0], [0], [1], [0, 0, 1, 1], [], []>} : vector<2x128xf32>, vector<128x512xf32>, vector<2x512xf32> -> vector<2x512xf32>
    %410 = arith.addf %407, %409 : vector<2x512xf32>
    %411 = vector.extract_strided_slice %410 {offsets = [0, 0], sizes = [2, 128], strides = [1, 1]} : vector<2x512xf32> to vector<2x128xf32>
    %412 = arith.negf %411 : vector<2x128xf32>
    %413 = math.exp %412 : vector<2x128xf32>
    %cst_131 = arith.constant 1.000000e+00 : f32
    %414 = vector.broadcast %cst_131 : f32 to vector<2x128xf32>
    %415 = arith.addf %414, %413 : vector<2x128xf32>
    %416 = arith.divf %414, %415 : vector<2x128xf32>
    %417 = vector.extract_strided_slice %410 {offsets = [0, 128], sizes = [2, 128], strides = [1, 1]} : vector<2x512xf32> to vector<2x128xf32>
    %418 = arith.negf %417 : vector<2x128xf32>
    %419 = math.exp %418 : vector<2x128xf32>
    %cst_132 = arith.constant 1.000000e+00 : f32
    %420 = vector.broadcast %cst_132 : f32 to vector<2x128xf32>
    %421 = arith.addf %420, %419 : vector<2x128xf32>
    %422 = arith.divf %420, %421 : vector<2x128xf32>
    %423 = vector.extract_strided_slice %410 {offsets = [0, 256], sizes = [2, 128], strides = [1, 1]} : vector<2x512xf32> to vector<2x128xf32>
    %424 = math.tanh %423 : vector<2x128xf32>
    %425 = vector.extract_strided_slice %410 {offsets = [0, 384], sizes = [2, 128], strides = [1, 1]} : vector<2x512xf32> to vector<2x128xf32>
    %426 = arith.negf %425 : vector<2x128xf32>
    %427 = math.exp %426 : vector<2x128xf32>
    %cst_133 = arith.constant 1.000000e+00 : f32
    %428 = vector.broadcast %cst_133 : f32 to vector<2x128xf32>
    %429 = arith.addf %428, %427 : vector<2x128xf32>
    %430 = arith.divf %428, %429 : vector<2x128xf32>
    %431 = arith.mulf %422, %366 : vector<2x128xf32>
    %432 = arith.mulf %416, %424 : vector<2x128xf32>
    %433 = arith.addf %431, %432 : vector<2x128xf32>
    %434 = math.tanh %433 : vector<2x128xf32>
    %435 = arith.mulf %430, %434 : vector<2x128xf32>
    %436 = tpu.concatenate %435, %398 in 1 : vector<2x128xf32>, vector<2x128xf32> -> vector<2x256xf32>
    %c0_134 = arith.constant 0 : index
    %c0_135 = arith.constant 0 : index
    %437 = vector.load %arg4[%c0_134, %c0_135] : memref<256x512xf32, #tpu.memory_space<vmem>>, vector<256x512xf32>
    %cst_136 = arith.constant dense<0.000000e+00> : vector<2x512xf32>
    %438 = tpu.matmul %436, %437, %cst_136 {dimension_numbers = #tpu.dot_dimension_numbers<[1], [0], [0], [1], [0, 0, 1, 1], [], []>} : vector<2x256xf32>, vector<256x512xf32>, vector<2x512xf32> -> vector<2x512xf32>
    %439 = vector.broadcast %1 : vector<1x512xf32> to vector<2x512xf32>
    %440 = arith.addf %438, %439 : vector<2x512xf32>
    %441 = vector.extract_strided_slice %440 {offsets = [0, 0], sizes = [2, 128], strides = [1, 1]} : vector<2x512xf32> to vector<2x128xf32>
    %442 = arith.negf %441 : vector<2x128xf32>
    %443 = math.exp %442 : vector<2x128xf32>
    %cst_137 = arith.constant 1.000000e+00 : f32
    %444 = vector.broadcast %cst_137 : f32 to vector<2x128xf32>
    %445 = arith.addf %444, %443 : vector<2x128xf32>
    %446 = arith.divf %444, %445 : vector<2x128xf32>
    %447 = vector.extract_strided_slice %440 {offsets = [0, 128], sizes = [2, 128], strides = [1, 1]} : vector<2x512xf32> to vector<2x128xf32>
    %448 = arith.negf %447 : vector<2x128xf32>
    %449 = math.exp %448 : vector<2x128xf32>
    %cst_138 = arith.constant 1.000000e+00 : f32
    %450 = vector.broadcast %cst_138 : f32 to vector<2x128xf32>
    %451 = arith.addf %450, %449 : vector<2x128xf32>
    %452 = arith.divf %450, %451 : vector<2x128xf32>
    %453 = vector.extract_strided_slice %440 {offsets = [0, 256], sizes = [2, 128], strides = [1, 1]} : vector<2x512xf32> to vector<2x128xf32>
    %454 = math.tanh %453 : vector<2x128xf32>
    %455 = vector.extract_strided_slice %440 {offsets = [0, 384], sizes = [2, 128], strides = [1, 1]} : vector<2x512xf32> to vector<2x128xf32>
    %456 = arith.negf %455 : vector<2x128xf32>
    %457 = math.exp %456 : vector<2x128xf32>
    %cst_139 = arith.constant 1.000000e+00 : f32
    %458 = vector.broadcast %cst_139 : f32 to vector<2x128xf32>
    %459 = arith.addf %458, %457 : vector<2x128xf32>
    %460 = arith.divf %458, %459 : vector<2x128xf32>
    %461 = arith.mulf %452, %396 : vector<2x128xf32>
    %462 = arith.mulf %446, %454 : vector<2x128xf32>
    %463 = arith.addf %461, %462 : vector<2x128xf32>
    %464 = math.tanh %463 : vector<2x128xf32>
    %465 = arith.mulf %460, %464 : vector<2x128xf32>
    %c0_140 = arith.constant 0 : index
    %c0_141 = arith.constant 0 : index
    %466 = vector.load %arg6[%c0_140, %c0_141] : memref<128x128xf32, #tpu.memory_space<vmem>>, vector<128x128xf32>
    %cst_142 = arith.constant dense<0.000000e+00> : vector<2x128xf32>
    %467 = tpu.matmul %465, %466, %cst_142 {dimension_numbers = #tpu.dot_dimension_numbers<[1], [0], [0], [1], [0, 0, 1, 1], [], []>} : vector<2x128xf32>, vector<128x128xf32>, vector<2x128xf32> -> vector<2x128xf32>
    %468 = vector.broadcast %2 : vector<1x128xf32> to vector<2x128xf32>
    %469 = arith.addf %467, %468 : vector<2x128xf32>
    %c0_143 = arith.constant 0 : index
    %c6_144 = arith.constant 6 : index
    %c0_145 = arith.constant 0 : index
    %470 = vector.load %arg8[%c0_143, %c6_144, %c0_145] : memref<2x12x128xf32, #tpu.memory_space<vmem>>, vector<2x1x128xf32>
    %471 = vector.shape_cast %470 : vector<2x1x128xf32> to vector<2x128xf32>
    %472 = vector.shape_cast %469 : vector<2x128xf32> to vector<2x1x128xf32>
    tpu.vector_store %arg8[%c0_143, %c6_144, %c0_145], %472 {strides = array<i32>} : memref<2x12x128xf32, #tpu.memory_space<vmem>>, vector<2x1x128xf32>,
    %c0_146 = arith.constant 0 : index
    %c7 = arith.constant 7 : index
    %c0_147 = arith.constant 0 : index
    %473 = vector.load %arg0[%c0_146, %c7, %c0_147] : memref<2x8x512xf32, #tpu.memory_space<vmem>>, vector<2x1x512xf32>
    %474 = vector.shape_cast %473 : vector<2x1x512xf32> to vector<2x512xf32>
    %c0_148 = arith.constant 0 : index
    %c0_149 = arith.constant 0 : index
    %475 = vector.load %arg1[%c0_148, %c0_149] : memref<128x512xf32, #tpu.memory_space<vmem>>, vector<128x512xf32>
    %cst_150 = arith.constant dense<0.000000e+00> : vector<2x512xf32>
    %476 = tpu.matmul %435, %475, %cst_150 {dimension_numbers = #tpu.dot_dimension_numbers<[1], [0], [0], [1], [0, 0, 1, 1], [], []>} : vector<2x128xf32>, vector<128x512xf32>, vector<2x512xf32> -> vector<2x512xf32>
    %477 = arith.addf %474, %476 : vector<2x512xf32>
    %478 = vector.extract_strided_slice %477 {offsets = [0, 0], sizes = [2, 128], strides = [1, 1]} : vector<2x512xf32> to vector<2x128xf32>
    %479 = arith.negf %478 : vector<2x128xf32>
    %480 = math.exp %479 : vector<2x128xf32>
    %cst_151 = arith.constant 1.000000e+00 : f32
    %481 = vector.broadcast %cst_151 : f32 to vector<2x128xf32>
    %482 = arith.addf %481, %480 : vector<2x128xf32>
    %483 = arith.divf %481, %482 : vector<2x128xf32>
    %484 = vector.extract_strided_slice %477 {offsets = [0, 128], sizes = [2, 128], strides = [1, 1]} : vector<2x512xf32> to vector<2x128xf32>
    %485 = arith.negf %484 : vector<2x128xf32>
    %486 = math.exp %485 : vector<2x128xf32>
    %cst_152 = arith.constant 1.000000e+00 : f32
    %487 = vector.broadcast %cst_152 : f32 to vector<2x128xf32>
    %488 = arith.addf %487, %486 : vector<2x128xf32>
    %489 = arith.divf %487, %488 : vector<2x128xf32>
    %490 = vector.extract_strided_slice %477 {offsets = [0, 256], sizes = [2, 128], strides = [1, 1]} : vector<2x512xf32> to vector<2x128xf32>
    %491 = math.tanh %490 : vector<2x128xf32>
    %492 = vector.extract_strided_slice %477 {offsets = [0, 384], sizes = [2, 128], strides = [1, 1]} : vector<2x512xf32> to vector<2x128xf32>
    %493 = arith.negf %492 : vector<2x128xf32>
    %494 = math.exp %493 : vector<2x128xf32>
    %cst_153 = arith.constant 1.000000e+00 : f32
    %495 = vector.broadcast %cst_153 : f32 to vector<2x128xf32>
    %496 = arith.addf %495, %494 : vector<2x128xf32>
    %497 = arith.divf %495, %496 : vector<2x128xf32>
    %498 = arith.mulf %489, %433 : vector<2x128xf32>
    %499 = arith.mulf %483, %491 : vector<2x128xf32>
    %500 = arith.addf %498, %499 : vector<2x128xf32>
    %501 = math.tanh %500 : vector<2x128xf32>
    %502 = arith.mulf %497, %501 : vector<2x128xf32>
    %503 = tpu.concatenate %502, %465 in 1 : vector<2x128xf32>, vector<2x128xf32> -> vector<2x256xf32>
    %c0_154 = arith.constant 0 : index
    %c0_155 = arith.constant 0 : index
    %504 = vector.load %arg4[%c0_154, %c0_155] : memref<256x512xf32, #tpu.memory_space<vmem>>, vector<256x512xf32>
    %cst_156 = arith.constant dense<0.000000e+00> : vector<2x512xf32>
    %505 = tpu.matmul %503, %504, %cst_156 {dimension_numbers = #tpu.dot_dimension_numbers<[1], [0], [0], [1], [0, 0, 1, 1], [], []>} : vector<2x256xf32>, vector<256x512xf32>, vector<2x512xf32> -> vector<2x512xf32>
    %506 = vector.broadcast %1 : vector<1x512xf32> to vector<2x512xf32>
    %507 = arith.addf %505, %506 : vector<2x512xf32>
    %508 = vector.extract_strided_slice %507 {offsets = [0, 0], sizes = [2, 128], strides = [1, 1]} : vector<2x512xf32> to vector<2x128xf32>
    %509 = arith.negf %508 : vector<2x128xf32>
    %510 = math.exp %509 : vector<2x128xf32>
    %cst_157 = arith.constant 1.000000e+00 : f32
    %511 = vector.broadcast %cst_157 : f32 to vector<2x128xf32>
    %512 = arith.addf %511, %510 : vector<2x128xf32>
    %513 = arith.divf %511, %512 : vector<2x128xf32>
    %514 = vector.extract_strided_slice %507 {offsets = [0, 128], sizes = [2, 128], strides = [1, 1]} : vector<2x512xf32> to vector<2x128xf32>
    %515 = arith.negf %514 : vector<2x128xf32>
    %516 = math.exp %515 : vector<2x128xf32>
    %cst_158 = arith.constant 1.000000e+00 : f32
    %517 = vector.broadcast %cst_158 : f32 to vector<2x128xf32>
    %518 = arith.addf %517, %516 : vector<2x128xf32>
    %519 = arith.divf %517, %518 : vector<2x128xf32>
    %520 = vector.extract_strided_slice %507 {offsets = [0, 256], sizes = [2, 128], strides = [1, 1]} : vector<2x512xf32> to vector<2x128xf32>
    %521 = math.tanh %520 : vector<2x128xf32>
    %522 = vector.extract_strided_slice %507 {offsets = [0, 384], sizes = [2, 128], strides = [1, 1]} : vector<2x512xf32> to vector<2x128xf32>
    %523 = arith.negf %522 : vector<2x128xf32>
    %524 = math.exp %523 : vector<2x128xf32>
    %cst_159 = arith.constant 1.000000e+00 : f32
    %525 = vector.broadcast %cst_159 : f32 to vector<2x128xf32>
    %526 = arith.addf %525, %524 : vector<2x128xf32>
    %527 = arith.divf %525, %526 : vector<2x128xf32>
    %528 = arith.mulf %519, %463 : vector<2x128xf32>
    %529 = arith.mulf %513, %521 : vector<2x128xf32>
    %530 = arith.addf %528, %529 : vector<2x128xf32>
    %531 = math.tanh %530 : vector<2x128xf32>
    %532 = arith.mulf %527, %531 : vector<2x128xf32>
    %c0_160 = arith.constant 0 : index
    %c0_161 = arith.constant 0 : index
    %533 = vector.load %arg6[%c0_160, %c0_161] : memref<128x128xf32, #tpu.memory_space<vmem>>, vector<128x128xf32>
    %cst_162 = arith.constant dense<0.000000e+00> : vector<2x128xf32>
    %534 = tpu.matmul %532, %533, %cst_162 {dimension_numbers = #tpu.dot_dimension_numbers<[1], [0], [0], [1], [0, 0, 1, 1], [], []>} : vector<2x128xf32>, vector<128x128xf32>, vector<2x128xf32> -> vector<2x128xf32>
    %535 = vector.broadcast %2 : vector<1x128xf32> to vector<2x128xf32>
    %536 = arith.addf %534, %535 : vector<2x128xf32>
    %c0_163 = arith.constant 0 : index
    %c7_164 = arith.constant 7 : index
    %c0_165 = arith.constant 0 : index
    %537 = vector.load %arg8[%c0_163, %c7_164, %c0_165] : memref<2x12x128xf32, #tpu.memory_space<vmem>>, vector<2x1x128xf32>
    %538 = vector.shape_cast %537 : vector<2x1x128xf32> to vector<2x128xf32>
    %539 = vector.shape_cast %536 : vector<2x128xf32> to vector<2x1x128xf32>
    tpu.vector_store %arg8[%c0_163, %c7_164, %c0_165], %539 {strides = array<i32>} : memref<2x12x128xf32, #tpu.memory_space<vmem>>, vector<2x1x128xf32>,
    %540 = tpu.concatenate %532, %502 in 1 : vector<2x128xf32>, vector<2x128xf32> -> vector<2x256xf32>
    %c0_166 = arith.constant 0 : index
    %c0_167 = arith.constant 0 : index
    %541 = vector.load %arg2[%c0_166, %c0_167] : memref<256x512xf32, #tpu.memory_space<vmem>>, vector<256x512xf32>
    %cst_168 = arith.constant dense<0.000000e+00> : vector<2x512xf32>
    %542 = tpu.matmul %540, %541, %cst_168 {dimension_numbers = #tpu.dot_dimension_numbers<[1], [0], [0], [1], [0, 0, 1, 1], [], []>} : vector<2x256xf32>, vector<256x512xf32>, vector<2x512xf32> -> vector<2x512xf32>
    %543 = vector.broadcast %0 : vector<1x512xf32> to vector<2x512xf32>
    %544 = arith.addf %542, %543 : vector<2x512xf32>
    %545 = vector.extract_strided_slice %544 {offsets = [0, 0], sizes = [2, 128], strides = [1, 1]} : vector<2x512xf32> to vector<2x128xf32>
    %546 = arith.negf %545 : vector<2x128xf32>
    %547 = math.exp %546 : vector<2x128xf32>
    %cst_169 = arith.constant 1.000000e+00 : f32
    %548 = vector.broadcast %cst_169 : f32 to vector<2x128xf32>
    %549 = arith.addf %548, %547 : vector<2x128xf32>
    %550 = arith.divf %548, %549 : vector<2x128xf32>
    %551 = vector.extract_strided_slice %544 {offsets = [0, 128], sizes = [2, 128], strides = [1, 1]} : vector<2x512xf32> to vector<2x128xf32>
    %552 = arith.negf %551 : vector<2x128xf32>
    %553 = math.exp %552 : vector<2x128xf32>
    %cst_170 = arith.constant 1.000000e+00 : f32
    %554 = vector.broadcast %cst_170 : f32 to vector<2x128xf32>
    %555 = arith.addf %554, %553 : vector<2x128xf32>
    %556 = arith.divf %554, %555 : vector<2x128xf32>
    %557 = vector.extract_strided_slice %544 {offsets = [0, 256], sizes = [2, 128], strides = [1, 1]} : vector<2x512xf32> to vector<2x128xf32>
    %558 = math.tanh %557 : vector<2x128xf32>
    %559 = vector.extract_strided_slice %544 {offsets = [0, 384], sizes = [2, 128], strides = [1, 1]} : vector<2x512xf32> to vector<2x128xf32>
    %560 = arith.negf %559 : vector<2x128xf32>
    %561 = math.exp %560 : vector<2x128xf32>
    %cst_171 = arith.constant 1.000000e+00 : f32
    %562 = vector.broadcast %cst_171 : f32 to vector<2x128xf32>
    %563 = arith.addf %562, %561 : vector<2x128xf32>
    %564 = arith.divf %562, %563 : vector<2x128xf32>
    %565 = arith.mulf %556, %500 : vector<2x128xf32>
    %566 = arith.mulf %550, %558 : vector<2x128xf32>
    %567 = arith.addf %565, %566 : vector<2x128xf32>
    %568 = math.tanh %567 : vector<2x128xf32>
    %569 = arith.mulf %564, %568 : vector<2x128xf32>
    %570 = tpu.concatenate %569, %532 in 1 : vector<2x128xf32>, vector<2x128xf32> -> vector<2x256xf32>
    %c0_172 = arith.constant 0 : index
    %c0_173 = arith.constant 0 : index
    %571 = vector.load %arg4[%c0_172, %c0_173] : memref<256x512xf32, #tpu.memory_space<vmem>>, vector<256x512xf32>
    %cst_174 = arith.constant dense<0.000000e+00> : vector<2x512xf32>
    %572 = tpu.matmul %570, %571, %cst_174 {dimension_numbers = #tpu.dot_dimension_numbers<[1], [0], [0], [1], [0, 0, 1, 1], [], []>} : vector<2x256xf32>, vector<256x512xf32>, vector<2x512xf32> -> vector<2x512xf32>
    %573 = vector.broadcast %1 : vector<1x512xf32> to vector<2x512xf32>
    %574 = arith.addf %572, %573 : vector<2x512xf32>
    %575 = vector.extract_strided_slice %574 {offsets = [0, 0], sizes = [2, 128], strides = [1, 1]} : vector<2x512xf32> to vector<2x128xf32>
    %576 = arith.negf %575 : vector<2x128xf32>
    %577 = math.exp %576 : vector<2x128xf32>
    %cst_175 = arith.constant 1.000000e+00 : f32
    %578 = vector.broadcast %cst_175 : f32 to vector<2x128xf32>
    %579 = arith.addf %578, %577 : vector<2x128xf32>
    %580 = arith.divf %578, %579 : vector<2x128xf32>
    %581 = vector.extract_strided_slice %574 {offsets = [0, 128], sizes = [2, 128], strides = [1, 1]} : vector<2x512xf32> to vector<2x128xf32>
    %582 = arith.negf %581 : vector<2x128xf32>
    %583 = math.exp %582 : vector<2x128xf32>
    %cst_176 = arith.constant 1.000000e+00 : f32
    %584 = vector.broadcast %cst_176 : f32 to vector<2x128xf32>
    %585 = arith.addf %584, %583 : vector<2x128xf32>
    %586 = arith.divf %584, %585 : vector<2x128xf32>
    %587 = vector.extract_strided_slice %574 {offsets = [0, 256], sizes = [2, 128], strides = [1, 1]} : vector<2x512xf32> to vector<2x128xf32>
    %588 = math.tanh %587 : vector<2x128xf32>
    %589 = vector.extract_strided_slice %574 {offsets = [0, 384], sizes = [2, 128], strides = [1, 1]} : vector<2x512xf32> to vector<2x128xf32>
    %590 = arith.negf %589 : vector<2x128xf32>
    %591 = math.exp %590 : vector<2x128xf32>
    %cst_177 = arith.constant 1.000000e+00 : f32
    %592 = vector.broadcast %cst_177 : f32 to vector<2x128xf32>
    %593 = arith.addf %592, %591 : vector<2x128xf32>
    %594 = arith.divf %592, %593 : vector<2x128xf32>
    %595 = arith.mulf %586, %530 : vector<2x128xf32>
    %596 = arith.mulf %580, %588 : vector<2x128xf32>
    %597 = arith.addf %595, %596 : vector<2x128xf32>
    %598 = math.tanh %597 : vector<2x128xf32>
    %599 = arith.mulf %594, %598 : vector<2x128xf32>
    %c0_178 = arith.constant 0 : index
    %c0_179 = arith.constant 0 : index
    %600 = vector.load %arg6[%c0_178, %c0_179] : memref<128x128xf32, #tpu.memory_space<vmem>>, vector<128x128xf32>
    %cst_180 = arith.constant dense<0.000000e+00> : vector<2x128xf32>
    %601 = tpu.matmul %599, %600, %cst_180 {dimension_numbers = #tpu.dot_dimension_numbers<[1], [0], [0], [1], [0, 0, 1, 1], [], []>} : vector<2x128xf32>, vector<128x128xf32>, vector<2x128xf32> -> vector<2x128xf32>
    %602 = vector.broadcast %2 : vector<1x128xf32> to vector<2x128xf32>
    %603 = arith.addf %601, %602 : vector<2x128xf32>
    %c0_181 = arith.constant 0 : index
    %c8 = arith.constant 8 : index
    %c0_182 = arith.constant 0 : index
    %604 = vector.load %arg8[%c0_181, %c8, %c0_182] : memref<2x12x128xf32, #tpu.memory_space<vmem>>, vector<2x1x128xf32>
    %605 = vector.shape_cast %604 : vector<2x1x128xf32> to vector<2x128xf32>
    %606 = vector.shape_cast %603 : vector<2x128xf32> to vector<2x1x128xf32>
    tpu.vector_store %arg8[%c0_181, %c8, %c0_182], %606 {strides = array<i32>} : memref<2x12x128xf32, #tpu.memory_space<vmem>>, vector<2x1x128xf32>,
    %607 = tpu.concatenate %599, %569 in 1 : vector<2x128xf32>, vector<2x128xf32> -> vector<2x256xf32>
    %c0_183 = arith.constant 0 : index
    %c0_184 = arith.constant 0 : index
    %608 = vector.load %arg2[%c0_183, %c0_184] : memref<256x512xf32, #tpu.memory_space<vmem>>, vector<256x512xf32>
    %cst_185 = arith.constant dense<0.000000e+00> : vector<2x512xf32>
    %609 = tpu.matmul %607, %608, %cst_185 {dimension_numbers = #tpu.dot_dimension_numbers<[1], [0], [0], [1], [0, 0, 1, 1], [], []>} : vector<2x256xf32>, vector<256x512xf32>, vector<2x512xf32> -> vector<2x512xf32>
    %610 = vector.broadcast %0 : vector<1x512xf32> to vector<2x512xf32>
    %611 = arith.addf %609, %610 : vector<2x512xf32>
    %612 = vector.extract_strided_slice %611 {offsets = [0, 0], sizes = [2, 128], strides = [1, 1]} : vector<2x512xf32> to vector<2x128xf32>
    %613 = arith.negf %612 : vector<2x128xf32>
    %614 = math.exp %613 : vector<2x128xf32>
    %cst_186 = arith.constant 1.000000e+00 : f32
    %615 = vector.broadcast %cst_186 : f32 to vector<2x128xf32>
    %616 = arith.addf %615, %614 : vector<2x128xf32>
    %617 = arith.divf %615, %616 : vector<2x128xf32>
    %618 = vector.extract_strided_slice %611 {offsets = [0, 128], sizes = [2, 128], strides = [1, 1]} : vector<2x512xf32> to vector<2x128xf32>
    %619 = arith.negf %618 : vector<2x128xf32>
    %620 = math.exp %619 : vector<2x128xf32>
    %cst_187 = arith.constant 1.000000e+00 : f32
    %621 = vector.broadcast %cst_187 : f32 to vector<2x128xf32>
    %622 = arith.addf %621, %620 : vector<2x128xf32>
    %623 = arith.divf %621, %622 : vector<2x128xf32>
    %624 = vector.extract_strided_slice %611 {offsets = [0, 256], sizes = [2, 128], strides = [1, 1]} : vector<2x512xf32> to vector<2x128xf32>
    %625 = math.tanh %624 : vector<2x128xf32>
    %626 = vector.extract_strided_slice %611 {offsets = [0, 384], sizes = [2, 128], strides = [1, 1]} : vector<2x512xf32> to vector<2x128xf32>
    %627 = arith.negf %626 : vector<2x128xf32>
    %628 = math.exp %627 : vector<2x128xf32>
    %cst_188 = arith.constant 1.000000e+00 : f32
    %629 = vector.broadcast %cst_188 : f32 to vector<2x128xf32>
    %630 = arith.addf %629, %628 : vector<2x128xf32>
    %631 = arith.divf %629, %630 : vector<2x128xf32>
    %632 = arith.mulf %623, %567 : vector<2x128xf32>
    %633 = arith.mulf %617, %625 : vector<2x128xf32>
    %634 = arith.addf %632, %633 : vector<2x128xf32>
    %635 = math.tanh %634 : vector<2x128xf32>
    %636 = arith.mulf %631, %635 : vector<2x128xf32>
    %637 = tpu.concatenate %636, %599 in 1 : vector<2x128xf32>, vector<2x128xf32> -> vector<2x256xf32>
    %c0_189 = arith.constant 0 : index
    %c0_190 = arith.constant 0 : index
    %638 = vector.load %arg4[%c0_189, %c0_190] : memref<256x512xf32, #tpu.memory_space<vmem>>, vector<256x512xf32>
    %cst_191 = arith.constant dense<0.000000e+00> : vector<2x512xf32>
    %639 = tpu.matmul %637, %638, %cst_191 {dimension_numbers = #tpu.dot_dimension_numbers<[1], [0], [0], [1], [0, 0, 1, 1], [], []>} : vector<2x256xf32>, vector<256x512xf32>, vector<2x512xf32> -> vector<2x512xf32>
    %640 = vector.broadcast %1 : vector<1x512xf32> to vector<2x512xf32>
    %641 = arith.addf %639, %640 : vector<2x512xf32>
    %642 = vector.extract_strided_slice %641 {offsets = [0, 0], sizes = [2, 128], strides = [1, 1]} : vector<2x512xf32> to vector<2x128xf32>
    %643 = arith.negf %642 : vector<2x128xf32>
    %644 = math.exp %643 : vector<2x128xf32>
    %cst_192 = arith.constant 1.000000e+00 : f32
    %645 = vector.broadcast %cst_192 : f32 to vector<2x128xf32>
    %646 = arith.addf %645, %644 : vector<2x128xf32>
    %647 = arith.divf %645, %646 : vector<2x128xf32>
    %648 = vector.extract_strided_slice %641 {offsets = [0, 128], sizes = [2, 128], strides = [1, 1]} : vector<2x512xf32> to vector<2x128xf32>
    %649 = arith.negf %648 : vector<2x128xf32>
    %650 = math.exp %649 : vector<2x128xf32>
    %cst_193 = arith.constant 1.000000e+00 : f32
    %651 = vector.broadcast %cst_193 : f32 to vector<2x128xf32>
    %652 = arith.addf %651, %650 : vector<2x128xf32>
    %653 = arith.divf %651, %652 : vector<2x128xf32>
    %654 = vector.extract_strided_slice %641 {offsets = [0, 256], sizes = [2, 128], strides = [1, 1]} : vector<2x512xf32> to vector<2x128xf32>
    %655 = math.tanh %654 : vector<2x128xf32>
    %656 = vector.extract_strided_slice %641 {offsets = [0, 384], sizes = [2, 128], strides = [1, 1]} : vector<2x512xf32> to vector<2x128xf32>
    %657 = arith.negf %656 : vector<2x128xf32>
    %658 = math.exp %657 : vector<2x128xf32>
    %cst_194 = arith.constant 1.000000e+00 : f32
    %659 = vector.broadcast %cst_194 : f32 to vector<2x128xf32>
    %660 = arith.addf %659, %658 : vector<2x128xf32>
    %661 = arith.divf %659, %660 : vector<2x128xf32>
    %662 = arith.mulf %653, %597 : vector<2x128xf32>
    %663 = arith.mulf %647, %655 : vector<2x128xf32>
    %664 = arith.addf %662, %663 : vector<2x128xf32>
    %665 = math.tanh %664 : vector<2x128xf32>
    %666 = arith.mulf %661, %665 : vector<2x128xf32>
    %c0_195 = arith.constant 0 : index
    %c0_196 = arith.constant 0 : index
    %667 = vector.load %arg6[%c0_195, %c0_196] : memref<128x128xf32, #tpu.memory_space<vmem>>, vector<128x128xf32>
    %cst_197 = arith.constant dense<0.000000e+00> : vector<2x128xf32>
    %668 = tpu.matmul %666, %667, %cst_197 {dimension_numbers = #tpu.dot_dimension_numbers<[1], [0], [0], [1], [0, 0, 1, 1], [], []>} : vector<2x128xf32>, vector<128x128xf32>, vector<2x128xf32> -> vector<2x128xf32>
    %669 = vector.broadcast %2 : vector<1x128xf32> to vector<2x128xf32>
    %670 = arith.addf %668, %669 : vector<2x128xf32>
    %c0_198 = arith.constant 0 : index
    %c9 = arith.constant 9 : index
    %c0_199 = arith.constant 0 : index
    %671 = vector.load %arg8[%c0_198, %c9, %c0_199] : memref<2x12x128xf32, #tpu.memory_space<vmem>>, vector<2x1x128xf32>
    %672 = vector.shape_cast %671 : vector<2x1x128xf32> to vector<2x128xf32>
    %673 = vector.shape_cast %670 : vector<2x128xf32> to vector<2x1x128xf32>
    tpu.vector_store %arg8[%c0_198, %c9, %c0_199], %673 {strides = array<i32>} : memref<2x12x128xf32, #tpu.memory_space<vmem>>, vector<2x1x128xf32>,
    %674 = tpu.concatenate %666, %636 in 1 : vector<2x128xf32>, vector<2x128xf32> -> vector<2x256xf32>
    %c0_200 = arith.constant 0 : index
    %c0_201 = arith.constant 0 : index
    %675 = vector.load %arg2[%c0_200, %c0_201] : memref<256x512xf32, #tpu.memory_space<vmem>>, vector<256x512xf32>
    %cst_202 = arith.constant dense<0.000000e+00> : vector<2x512xf32>
    %676 = tpu.matmul %674, %675, %cst_202 {dimension_numbers = #tpu.dot_dimension_numbers<[1], [0], [0], [1], [0, 0, 1, 1], [], []>} : vector<2x256xf32>, vector<256x512xf32>, vector<2x512xf32> -> vector<2x512xf32>
    %677 = vector.broadcast %0 : vector<1x512xf32> to vector<2x512xf32>
    %678 = arith.addf %676, %677 : vector<2x512xf32>
    %679 = vector.extract_strided_slice %678 {offsets = [0, 0], sizes = [2, 128], strides = [1, 1]} : vector<2x512xf32> to vector<2x128xf32>
    %680 = arith.negf %679 : vector<2x128xf32>
    %681 = math.exp %680 : vector<2x128xf32>
    %cst_203 = arith.constant 1.000000e+00 : f32
    %682 = vector.broadcast %cst_203 : f32 to vector<2x128xf32>
    %683 = arith.addf %682, %681 : vector<2x128xf32>
    %684 = arith.divf %682, %683 : vector<2x128xf32>
    %685 = vector.extract_strided_slice %678 {offsets = [0, 128], sizes = [2, 128], strides = [1, 1]} : vector<2x512xf32> to vector<2x128xf32>
    %686 = arith.negf %685 : vector<2x128xf32>
    %687 = math.exp %686 : vector<2x128xf32>
    %cst_204 = arith.constant 1.000000e+00 : f32
    %688 = vector.broadcast %cst_204 : f32 to vector<2x128xf32>
    %689 = arith.addf %688, %687 : vector<2x128xf32>
    %690 = arith.divf %688, %689 : vector<2x128xf32>
    %691 = vector.extract_strided_slice %678 {offsets = [0, 256], sizes = [2, 128], strides = [1, 1]} : vector<2x512xf32> to vector<2x128xf32>
    %692 = math.tanh %691 : vector<2x128xf32>
    %693 = vector.extract_strided_slice %678 {offsets = [0, 384], sizes = [2, 128], strides = [1, 1]} : vector<2x512xf32> to vector<2x128xf32>
    %694 = arith.negf %693 : vector<2x128xf32>
    %695 = math.exp %694 : vector<2x128xf32>
    %cst_205 = arith.constant 1.000000e+00 : f32
    %696 = vector.broadcast %cst_205 : f32 to vector<2x128xf32>
    %697 = arith.addf %696, %695 : vector<2x128xf32>
    %698 = arith.divf %696, %697 : vector<2x128xf32>
    %699 = arith.mulf %690, %634 : vector<2x128xf32>
    %700 = arith.mulf %684, %692 : vector<2x128xf32>
    %701 = arith.addf %699, %700 : vector<2x128xf32>
    %702 = math.tanh %701 : vector<2x128xf32>
    %703 = arith.mulf %698, %702 : vector<2x128xf32>
    %704 = tpu.concatenate %703, %666 in 1 : vector<2x128xf32>, vector<2x128xf32> -> vector<2x256xf32>
    %c0_206 = arith.constant 0 : index
    %c0_207 = arith.constant 0 : index
    %705 = vector.load %arg4[%c0_206, %c0_207] : memref<256x512xf32, #tpu.memory_space<vmem>>, vector<256x512xf32>
    %cst_208 = arith.constant dense<0.000000e+00> : vector<2x512xf32>
    %706 = tpu.matmul %704, %705, %cst_208 {dimension_numbers = #tpu.dot_dimension_numbers<[1], [0], [0], [1], [0, 0, 1, 1], [], []>} : vector<2x256xf32>, vector<256x512xf32>, vector<2x512xf32> -> vector<2x512xf32>
    %707 = vector.broadcast %1 : vector<1x512xf32> to vector<2x512xf32>
    %708 = arith.addf %706, %707 : vector<2x512xf32>
    %709 = vector.extract_strided_slice %708 {offsets = [0, 0], sizes = [2, 128], strides = [1, 1]} : vector<2x512xf32> to vector<2x128xf32>
    %710 = arith.negf %709 : vector<2x128xf32>
    %711 = math.exp %710 : vector<2x128xf32>
    %cst_209 = arith.constant 1.000000e+00 : f32
    %712 = vector.broadcast %cst_209 : f32 to vector<2x128xf32>
    %713 = arith.addf %712, %711 : vector<2x128xf32>
    %714 = arith.divf %712, %713 : vector<2x128xf32>
    %715 = vector.extract_strided_slice %708 {offsets = [0, 128], sizes = [2, 128], strides = [1, 1]} : vector<2x512xf32> to vector<2x128xf32>
    %716 = arith.negf %715 : vector<2x128xf32>
    %717 = math.exp %716 : vector<2x128xf32>
    %cst_210 = arith.constant 1.000000e+00 : f32
    %718 = vector.broadcast %cst_210 : f32 to vector<2x128xf32>
    %719 = arith.addf %718, %717 : vector<2x128xf32>
    %720 = arith.divf %718, %719 : vector<2x128xf32>
    %721 = vector.extract_strided_slice %708 {offsets = [0, 256], sizes = [2, 128], strides = [1, 1]} : vector<2x512xf32> to vector<2x128xf32>
    %722 = math.tanh %721 : vector<2x128xf32>
    %723 = vector.extract_strided_slice %708 {offsets = [0, 384], sizes = [2, 128], strides = [1, 1]} : vector<2x512xf32> to vector<2x128xf32>
    %724 = arith.negf %723 : vector<2x128xf32>
    %725 = math.exp %724 : vector<2x128xf32>
    %cst_211 = arith.constant 1.000000e+00 : f32
    %726 = vector.broadcast %cst_211 : f32 to vector<2x128xf32>
    %727 = arith.addf %726, %725 : vector<2x128xf32>
    %728 = arith.divf %726, %727 : vector<2x128xf32>
    %729 = arith.mulf %720, %664 : vector<2x128xf32>
    %730 = arith.mulf %714, %722 : vector<2x128xf32>
    %731 = arith.addf %729, %730 : vector<2x128xf32>
    %732 = math.tanh %731 : vector<2x128xf32>
    %733 = arith.mulf %728, %732 : vector<2x128xf32>
    %c0_212 = arith.constant 0 : index
    %c0_213 = arith.constant 0 : index
    %734 = vector.load %arg6[%c0_212, %c0_213] : memref<128x128xf32, #tpu.memory_space<vmem>>, vector<128x128xf32>
    %cst_214 = arith.constant dense<0.000000e+00> : vector<2x128xf32>
    %735 = tpu.matmul %733, %734, %cst_214 {dimension_numbers = #tpu.dot_dimension_numbers<[1], [0], [0], [1], [0, 0, 1, 1], [], []>} : vector<2x128xf32>, vector<128x128xf32>, vector<2x128xf32> -> vector<2x128xf32>
    %736 = vector.broadcast %2 : vector<1x128xf32> to vector<2x128xf32>
    %737 = arith.addf %735, %736 : vector<2x128xf32>
    %c0_215 = arith.constant 0 : index
    %c10 = arith.constant 10 : index
    %c0_216 = arith.constant 0 : index
    %738 = vector.load %arg8[%c0_215, %c10, %c0_216] : memref<2x12x128xf32, #tpu.memory_space<vmem>>, vector<2x1x128xf32>
    %739 = vector.shape_cast %738 : vector<2x1x128xf32> to vector<2x128xf32>
    %740 = vector.shape_cast %737 : vector<2x128xf32> to vector<2x1x128xf32>
    tpu.vector_store %arg8[%c0_215, %c10, %c0_216], %740 {strides = array<i32>} : memref<2x12x128xf32, #tpu.memory_space<vmem>>, vector<2x1x128xf32>,
    %741 = tpu.concatenate %733, %703 in 1 : vector<2x128xf32>, vector<2x128xf32> -> vector<2x256xf32>
    %c0_217 = arith.constant 0 : index
    %c0_218 = arith.constant 0 : index
    %742 = vector.load %arg2[%c0_217, %c0_218] : memref<256x512xf32, #tpu.memory_space<vmem>>, vector<256x512xf32>
    %cst_219 = arith.constant dense<0.000000e+00> : vector<2x512xf32>
    %743 = tpu.matmul %741, %742, %cst_219 {dimension_numbers = #tpu.dot_dimension_numbers<[1], [0], [0], [1], [0, 0, 1, 1], [], []>} : vector<2x256xf32>, vector<256x512xf32>, vector<2x512xf32> -> vector<2x512xf32>
    %744 = vector.broadcast %0 : vector<1x512xf32> to vector<2x512xf32>
    %745 = arith.addf %743, %744 : vector<2x512xf32>
    %746 = vector.extract_strided_slice %745 {offsets = [0, 0], sizes = [2, 128], strides = [1, 1]} : vector<2x512xf32> to vector<2x128xf32>
    %747 = arith.negf %746 : vector<2x128xf32>
    %748 = math.exp %747 : vector<2x128xf32>
    %cst_220 = arith.constant 1.000000e+00 : f32
    %749 = vector.broadcast %cst_220 : f32 to vector<2x128xf32>
    %750 = arith.addf %749, %748 : vector<2x128xf32>
    %751 = arith.divf %749, %750 : vector<2x128xf32>
    %752 = vector.extract_strided_slice %745 {offsets = [0, 128], sizes = [2, 128], strides = [1, 1]} : vector<2x512xf32> to vector<2x128xf32>
    %753 = arith.negf %752 : vector<2x128xf32>
    %754 = math.exp %753 : vector<2x128xf32>
    %cst_221 = arith.constant 1.000000e+00 : f32
    %755 = vector.broadcast %cst_221 : f32 to vector<2x128xf32>
    %756 = arith.addf %755, %754 : vector<2x128xf32>
    %757 = arith.divf %755, %756 : vector<2x128xf32>
    %758 = vector.extract_strided_slice %745 {offsets = [0, 256], sizes = [2, 128], strides = [1, 1]} : vector<2x512xf32> to vector<2x128xf32>
    %759 = math.tanh %758 : vector<2x128xf32>
    %760 = vector.extract_strided_slice %745 {offsets = [0, 384], sizes = [2, 128], strides = [1, 1]} : vector<2x512xf32> to vector<2x128xf32>
    %761 = arith.negf %760 : vector<2x128xf32>
    %762 = math.exp %761 : vector<2x128xf32>
    %cst_222 = arith.constant 1.000000e+00 : f32
    %763 = vector.broadcast %cst_222 : f32 to vector<2x128xf32>
    %764 = arith.addf %763, %762 : vector<2x128xf32>
    %765 = arith.divf %763, %764 : vector<2x128xf32>
    %766 = arith.mulf %757, %701 : vector<2x128xf32>
    %767 = arith.mulf %751, %759 : vector<2x128xf32>
    %768 = arith.addf %766, %767 : vector<2x128xf32>
    %769 = math.tanh %768 : vector<2x128xf32>
    %770 = arith.mulf %765, %769 : vector<2x128xf32>
    %771 = tpu.concatenate %770, %733 in 1 : vector<2x128xf32>, vector<2x128xf32> -> vector<2x256xf32>
    %c0_223 = arith.constant 0 : index
    %c0_224 = arith.constant 0 : index
    %772 = vector.load %arg4[%c0_223, %c0_224] : memref<256x512xf32, #tpu.memory_space<vmem>>, vector<256x512xf32>
    %cst_225 = arith.constant dense<0.000000e+00> : vector<2x512xf32>
    %773 = tpu.matmul %771, %772, %cst_225 {dimension_numbers = #tpu.dot_dimension_numbers<[1], [0], [0], [1], [0, 0, 1, 1], [], []>} : vector<2x256xf32>, vector<256x512xf32>, vector<2x512xf32> -> vector<2x512xf32>
    %774 = vector.broadcast %1 : vector<1x512xf32> to vector<2x512xf32>
    %775 = arith.addf %773, %774 : vector<2x512xf32>
    %776 = vector.extract_strided_slice %775 {offsets = [0, 0], sizes = [2, 128], strides = [1, 1]} : vector<2x512xf32> to vector<2x128xf32>
    %777 = arith.negf %776 : vector<2x128xf32>
    %778 = math.exp %777 : vector<2x128xf32>
    %cst_226 = arith.constant 1.000000e+00 : f32
    %779 = vector.broadcast %cst_226 : f32 to vector<2x128xf32>
    %780 = arith.addf %779, %778 : vector<2x128xf32>
    %781 = arith.divf %779, %780 : vector<2x128xf32>
    %782 = vector.extract_strided_slice %775 {offsets = [0, 128], sizes = [2, 128], strides = [1, 1]} : vector<2x512xf32> to vector<2x128xf32>
    %783 = arith.negf %782 : vector<2x128xf32>
    %784 = math.exp %783 : vector<2x128xf32>
    %cst_227 = arith.constant 1.000000e+00 : f32
    %785 = vector.broadcast %cst_227 : f32 to vector<2x128xf32>
    %786 = arith.addf %785, %784 : vector<2x128xf32>
    %787 = arith.divf %785, %786 : vector<2x128xf32>
    %788 = vector.extract_strided_slice %775 {offsets = [0, 256], sizes = [2, 128], strides = [1, 1]} : vector<2x512xf32> to vector<2x128xf32>
    %789 = math.tanh %788 : vector<2x128xf32>
    %790 = vector.extract_strided_slice %775 {offsets = [0, 384], sizes = [2, 128], strides = [1, 1]} : vector<2x512xf32> to vector<2x128xf32>
    %791 = arith.negf %790 : vector<2x128xf32>
    %792 = math.exp %791 : vector<2x128xf32>
    %cst_228 = arith.constant 1.000000e+00 : f32
    %793 = vector.broadcast %cst_228 : f32 to vector<2x128xf32>
    %794 = arith.addf %793, %792 : vector<2x128xf32>
    %795 = arith.divf %793, %794 : vector<2x128xf32>
    %796 = arith.mulf %787, %731 : vector<2x128xf32>
    %797 = arith.mulf %781, %789 : vector<2x128xf32>
    %798 = arith.addf %796, %797 : vector<2x128xf32>
    %799 = math.tanh %798 : vector<2x128xf32>
    %800 = arith.mulf %795, %799 : vector<2x128xf32>
    %c0_229 = arith.constant 0 : index
    %c0_230 = arith.constant 0 : index
    %801 = vector.load %arg6[%c0_229, %c0_230] : memref<128x128xf32, #tpu.memory_space<vmem>>, vector<128x128xf32>
    %cst_231 = arith.constant dense<0.000000e+00> : vector<2x128xf32>
    %802 = tpu.matmul %800, %801, %cst_231 {dimension_numbers = #tpu.dot_dimension_numbers<[1], [0], [0], [1], [0, 0, 1, 1], [], []>} : vector<2x128xf32>, vector<128x128xf32>, vector<2x128xf32> -> vector<2x128xf32>
    %803 = vector.broadcast %2 : vector<1x128xf32> to vector<2x128xf32>
    %804 = arith.addf %802, %803 : vector<2x128xf32>
    %c0_232 = arith.constant 0 : index
    %c11 = arith.constant 11 : index
    %c0_233 = arith.constant 0 : index
    %805 = vector.load %arg8[%c0_232, %c11, %c0_233] : memref<2x12x128xf32, #tpu.memory_space<vmem>>, vector<2x1x128xf32>
    %806 = vector.shape_cast %805 : vector<2x1x128xf32> to vector<2x128xf32>
    %807 = vector.shape_cast %804 : vector<2x128xf32> to vector<2x1x128xf32>
    tpu.vector_store %arg8[%c0_232, %c11, %c0_233], %807 {strides = array<i32>} : memref<2x12x128xf32, #tpu.memory_space<vmem>>, vector<2x1x128xf32>,
    return
  }
}

</mosaic_0001>

<llo_original>
// kernel: tpu_custom_call.1
$region0: #{tpu_custom_call.1}
  #allocation0 [shape = 'u32[]', space=smem, size = 0x4, offset = 0x4, fixed_abs, tag = 'smem constant byte address 0x4 - core index']
  #allocation1 [shape = 'u32[144,128]{1,0:T(1,128)}', space=vmem, size = 0x12000, scoped, tag = 'internal scratch']
  %s0 = inlined_call_operand.hbm [shape: f32[2,8,512], index: 0, kind: input, shape index: {}]
  %s1 = inlined_call_operand.hbm [shape: f32[128,512], index: 1, kind: input, shape index: {}]
  %s2 = inlined_call_operand.hbm [shape: f32[256,512], index: 2, kind: input, shape index: {}]
  %s3 = inlined_call_operand.vmem [shape: f32[1,512], index: 3, kind: input, shape index: {}]
  %s4 = inlined_call_operand.hbm [shape: f32[256,512], index: 4, kind: input, shape index: {}]
  %s5 = inlined_call_operand.vmem [shape: f32[1,512], index: 5, kind: input, shape index: {}]
  %s6 = inlined_call_operand.hbm [shape: f32[128,128], index: 6, kind: input, shape index: {}]
  %s7 = inlined_call_operand.vmem [shape: f32[1,128], index: 7, kind: input, shape index: {}]
  %s8 = inlined_call_operand.vmem [shape: f32[2,12,128], index: 8, kind: output, shape index: {}]
  %s9 = sld [smem:[#allocation0]]
  $region62: #{tpu_custom_call.1} parent=0
    _
  %s11 = ssub.s32 1, %s9
  %s12 = scalar_select 0, %s11, %s9
  $region1: #{tpu_custom_call.1} parent=0
    #allocation2 [shape = 'u8[32768]{0}', space=vmem, size = 0x8000, scoped, tag = 'input window, operand 0, single buffered']
    #allocation3 [shape = 's32[1]{0}', space=sflag, size = 0x4, scoped, tag = 'scoped memory for tpu_custom_call.1']
    #allocation4 [shape = 'u8[262144]{0}', space=vmem, size = 0x40000, scoped, tag = 'input window, operand 1, single buffered']
    #allocation5 [shape = 's32[1]{0}', space=sflag, size = 0x4, scoped, tag = 'scoped memory for tpu_custom_call.1']
    #allocation6 [shape = 'u8[524288]{0}', space=vmem, size = 0x80000, scoped, tag = 'input window, operand 2, single buffered']
    #allocation7 [shape = 'u8[524288]{0}', space=vmem, size = 0x80000, scoped, tag = 'input window, operand 4, single buffered']
    #allocation8 [shape = 's32[1]{0}', space=sflag, size = 0x4, scoped, tag = 'scoped memory for tpu_custom_call.1']
    #allocation9 [shape = 'u8[65536]{0}', space=vmem, size = 0x10000, scoped, tag = 'input window, operand 6, single buffered']
    %13 = vsyncpa [#allocation3], 0
    %14 = vsyncpa [#allocation5], 0
    %15 = vsyncpa [#allocation8], 0
    // Predicated region
    $region2: #{tpu_custom_call.1} parent=1 // pred_check
      _
    $region3: #{tpu_custom_call.1} parent=1 // pred_check_branch
      %17 = sbr.rel (0) target = $region5
    $region4: #{tpu_custom_call.1} parent=1 // pred_region
      %s19 = ssub.s32 1024, 1024
      %20 = vsyncadd [#allocation3], %s19
      %s21 = sshll.u32 [#allocation2], 4
      %s22 = int_to_ptr.vmem [resolvable:$true] %s21
      %27 = dma.hbm_to_vmem [thread:$0]  %s0, 1024, %s22, [#allocation3], 512, 512, 32
    $region5: #{tpu_custom_call.1} parent=1 // pred_fallthru
      _
    // Predicated region
    $region6: #{tpu_custom_call.1} parent=1 // pred_check
      _
    $region7: #{tpu_custom_call.1} parent=1 // pred_check_branch
      %29 = sbr.rel (0) target = $region9
    $region8: #{tpu_custom_call.1} parent=1 // pred_region
      %s31 = ssub.s32 8192, 8192
      %32 = vsyncadd [#allocation5], %s31
      %s33 = sshll.u32 [#allocation4], 4
      %s34 = int_to_ptr.vmem [resolvable:$true] %s33
      %39 = dma.hbm_to_vmem [thread:$0]  %s1, 8192, %s34, [#allocation5], 512, 512, 32
    $region9: #{tpu_custom_call.1} parent=1 // pred_fallthru
      _
    // Predicated region
    $region10: #{tpu_custom_call.1} parent=1 // pred_check
      _
    $region11: #{tpu_custom_call.1} parent=1 // pred_check_branch
      %41 = sbr.rel (0) target = $region13
    $region12: #{tpu_custom_call.1} parent=1 // pred_region
      %s43 = ssub.s32 16384, 16384
      %44 = vsyncadd [#allocation5], %s43
      %s45 = sshll.u32 [#allocation6], 4
      %s46 = int_to_ptr.vmem [resolvable:$true] %s45
      %51 = dma.hbm_to_vmem [thread:$0]  %s2, 16384, %s46, [#allocation5], 512, 512, 32
    $region13: #{tpu_custom_call.1} parent=1 // pred_fallthru
      _
    // Predicated region
    $region14: #{tpu_custom_call.1} parent=1 // pred_check
      _
    $region15: #{tpu_custom_call.1} parent=1 // pred_check_branch
      %53 = sbr.rel (0) target = $region17
    $region16: #{tpu_custom_call.1} parent=1 // pred_region
      _
    $region17: #{tpu_custom_call.1} parent=1 // pred_fallthru
      _
    // Predicated region
    $region18: #{tpu_custom_call.1} parent=1 // pred_check
      _
    $region19: #{tpu_custom_call.1} parent=1 // pred_check_branch
      %55 = sbr.rel (0) target = $region21
    $region20: #{tpu_custom_call.1} parent=1 // pred_region
      %s57 = ssub.s32 16384, 16384
      %58 = vsyncadd [#allocation8], %s57
      %s59 = sshll.u32 [#allocation7], 4
      %s60 = int_to_ptr.vmem [resolvable:$true] %s59
      %65 = dma.hbm_to_vmem [thread:$0]  %s4, 16384, %s60, [#allocation8], 512, 512, 32
    $region21: #{tpu_custom_call.1} parent=1 // pred_fallthru
      _
    // Predicated region
    $region22: #{tpu_custom_call.1} parent=1 // pred_check
      _
    $region23: #{tpu_custom_call.1} parent=1 // pred_check_branch
      %67 = sbr.rel (0) target = $region25
    $region24: #{tpu_custom_call.1} parent=1 // pred_region
      _
    $region25: #{tpu_custom_call.1} parent=1 // pred_fallthru
      _
    // Predicated region
    $region26: #{tpu_custom_call.1} parent=1 // pred_check
      _
    $region27: #{tpu_custom_call.1} parent=1 // pred_check_branch
      %69 = sbr.rel (0) target = $region29
    $region28: #{tpu_custom_call.1} parent=1 // pred_region
      %s71 = ssub.s32 2048, 2048
      %72 = vsyncadd [#allocation8], %s71
      %s73 = sshll.u32 [#allocation9], 4
      %s74 = int_to_ptr.vmem [resolvable:$true] %s73
      %79 = dma.hbm_to_vmem [thread:$0]  %s6, 2048, %s74, [#allocation8], 128, 128, 8
    $region29: #{tpu_custom_call.1} parent=1 // pred_fallthru
      _
    // Predicated region
    $region30: #{tpu_custom_call.1} parent=1 // pred_check
      _
    $region31: #{tpu_custom_call.1} parent=1 // pred_check_branch
      %81 = sbr.rel (0) target = $region33
    $region32: #{tpu_custom_call.1} parent=1 // pred_region
      _
    $region33: #{tpu_custom_call.1} parent=1 // pred_fallthru
      _
    // Predicated region
    $region34: #{tpu_custom_call.1} parent=1 // pred_check
      _
    $region35: #{tpu_custom_call.1} parent=1 // pred_check_branch
      %83 = sbr.rel (0) target = $region37
    $region36: #{tpu_custom_call.1} parent=1 // pred_region
      %84 = dma.done [#allocation3], 1024
    $region37: #{tpu_custom_call.1} parent=1 // pred_fallthru
      _
    // Predicated region
    $region38: #{tpu_custom_call.1} parent=1 // pred_check
      _
    $region39: #{tpu_custom_call.1} parent=1 // pred_check_branch
      %86 = sbr.rel (0) target = $region41
    $region40: #{tpu_custom_call.1} parent=1 // pred_region
      %87 = dma.done [#allocation5], 8192
    $region41: #{tpu_custom_call.1} parent=1 // pred_fallthru
      _
    // Predicated region
    $region42: #{tpu_custom_call.1} parent=1 // pred_check
      _
    $region43: #{tpu_custom_call.1} parent=1 // pred_check_branch
      %89 = sbr.rel (0) target = $region45
    $region44: #{tpu_custom_call.1} parent=1 // pred_region
      %90 = dma.done [#allocation5], 16384
    $region45: #{tpu_custom_call.1} parent=1 // pred_fallthru
      _
    // Predicated region
    $region46: #{tpu_custom_call.1} parent=1 // pred_check
      _
    $region47: #{tpu_custom_call.1} parent=1 // pred_check_branch
      %92 = sbr.rel (0) target = $region49
    $region48: #{tpu_custom_call.1} parent=1 // pred_region
      %93 = dma.done [#allocation8], 16384
    $region49: #{tpu_custom_call.1} parent=1 // pred_fallthru
      _
    // Predicated region
    $region50: #{tpu_custom_call.1} parent=1 // pred_check
      _
    $region51: #{tpu_custom_call.1} parent=1 // pred_check_branch
      %95 = sbr.rel (0) target = $region53
    $region52: #{tpu_custom_call.1} parent=1 // pred_region
      %96 = dma.done [#allocation8], 2048
    $region53: #{tpu_custom_call.1} parent=1 // pred_fallthru
      _
    %v97 = vld [vmem:[%s3] sm:$0xf]
    %v98 = vld [vmem:[%s5] sm:$0xf]
    %v99 = vld [vmem:[%s7] sm:$0x1]
    %v100 = vld [vmem:[#allocation2] ss:$8 sm:$0xf]
    %s101 = scalar_lea.vmem [#allocation2], 32
    %v102 = vld [vmem:[%s101] ss:$8 sm:$0xf]
    %v103 = vld [vmem:[#allocation4] sm:$0xff]
    %v104 = vld [vmem:[#allocation4 + $0x8] sm:$0xff]
    %v105 = vld [vmem:[#allocation4 + $0x10] sm:$0xff]
    %v106 = vld [vmem:[#allocation4 + $0x18] sm:$0xff]
    %v107 = vld [vmem:[#allocation4 + $0x20] sm:$0xff]
    %v108 = vld [vmem:[#allocation4 + $0x28] sm:$0xff]
    %v109 = vld [vmem:[#allocation4 + $0x30] sm:$0xff]
    %v110 = vld [vmem:[#allocation4 + $0x38] sm:$0xff]
    %v111 = vld [vmem:[#allocation4 + $0x40] sm:$0xff]
    %v112 = vld [vmem:[#allocation4 + $0x48] sm:$0xff]
    %v113 = vld [vmem:[#allocation4 + $0x50] sm:$0xff]
    %v114 = vld [vmem:[#allocation4 + $0x58] sm:$0xff]
    %v115 = vld [vmem:[#allocation4 + $0x60] sm:$0xff]
    %v116 = vld [vmem:[#allocation4 + $0x68] sm:$0xff]
    %v117 = vld [vmem:[#allocation4 + $0x70] sm:$0xff]
    %v118 = vld [vmem:[#allocation4 + $0x78] sm:$0xff]
    %v119 = vld [vmem:[#allocation4 + $0x80] sm:$0xff]
    %v120 = vld [vmem:[#allocation4 + $0x88] sm:$0xff]
    %v121 = vld [vmem:[#allocation4 + $0x90] sm:$0xff]
    %v122 = vld [vmem:[#allocation4 + $0x98] sm:$0xff]
    %v123 = vld [vmem:[#allocation4 + $0xa0] sm:$0xff]
    %v124 = vld [vmem:[#allocation4 + $0xa8] sm:$0xff]
    %v125 = vld [vmem:[#allocation4 + $0xb0] sm:$0xff]
    %v126 = vld [vmem:[#allocation4 + $0xb8] sm:$0xff]
    %v127 = vld [vmem:[#allocation4 + $0xc0] sm:$0xff]
    %v128 = vld [vmem:[#allocation4 + $0xc8] sm:$0xff]
    %v129 = vld [vmem:[#allocation4 + $0xd0] sm:$0xff]
    %v130 = vld [vmem:[#allocation4 + $0xd8] sm:$0xff]
    %v131 = vld [vmem:[#allocation4 + $0xe0] sm:$0xff]
    %v132 = vld [vmem:[#allocation4 + $0xe8] sm:$0xff]
    %v133 = vld [vmem:[#allocation4 + $0xf0] sm:$0xff]
    %v134 = vld [vmem:[#allocation4 + $0xf8] sm:$0xff]
    %v135 = vld [vmem:[#allocation4 + $0x100] sm:$0xff]
    %v136 = vld [vmem:[#allocation4 + $0x108] sm:$0xff]
    %v137 = vld [vmem:[#allocation4 + $0x110] sm:$0xff]
    %v138 = vld [vmem:[#allocation4 + $0x118] sm:$0xff]
    %v139 = vld [vmem:[#allocation4 + $0x120] sm:$0xff]
    %v140 = vld [vmem:[#allocation4 + $0x128] sm:$0xff]
    %v141 = vld [vmem:[#allocation4 + $0x130] sm:$0xff]
    %v142 = vld [vmem:[#allocation4 + $0x138] sm:$0xff]
    %v143 = vld [vmem:[#allocation4 + $0x140] sm:$0xff]
    %v144 = vld [vmem:[#allocation4 + $0x148] sm:$0xff]
    %v145 = vld [vmem:[#allocation4 + $0x150] sm:$0xff]
    %v146 = vld [vmem:[#allocation4 + $0x158] sm:$0xff]
    %v147 = vld [vmem:[#allocation4 + $0x160] sm:$0xff]
    %v148 = vld [vmem:[#allocation4 + $0x168] sm:$0xff]
    %v149 = vld [vmem:[#allocation4 + $0x170] sm:$0xff]
    %v150 = vld [vmem:[#allocation4 + $0x178] sm:$0xff]
    %v151 = vld [vmem:[#allocation4 + $0x180] sm:$0xff]
    %v152 = vld [vmem:[#allocation4 + $0x188] sm:$0xff]
    %v153 = vld [vmem:[#allocation4 + $0x190] sm:$0xff]
    %v154 = vld [vmem:[#allocation4 + $0x198] sm:$0xff]
    %v155 = vld [vmem:[#allocation4 + $0x1a0] sm:$0xff]
    %v156 = vld [vmem:[#allocation4 + $0x1a8] sm:$0xff]
    %v157 = vld [vmem:[#allocation4 + $0x1b0] sm:$0xff]
    %v158 = vld [vmem:[#allocation4 + $0x1b8] sm:$0xff]
    %v159 = vld [vmem:[#allocation4 + $0x1c0] sm:$0xff]
    %v160 = vld [vmem:[#allocation4 + $0x1c8] sm:$0xff]
    %v161 = vld [vmem:[#allocation4 + $0x1d0] sm:$0xff]
    %v162 = vld [vmem:[#allocation4 + $0x1d8] sm:$0xff]
    %v163 = vld [vmem:[#allocation4 + $0x1e0] sm:$0xff]
    %v164 = vld [vmem:[#allocation4 + $0x1e8] sm:$0xff]
    %v165 = vld [vmem:[#allocation4 + $0x1f0] sm:$0xff]
    %v166 = vld [vmem:[#allocation4 + $0x1f8] sm:$0xff]
    %167 = vmatprep.subr.mxu0 %v164
    %168 = vmatpush1.msra.mxu0 %v163
    %169 = vmatprep.subr.mxu0 %v160
    %170 = vmatpush1.msra.mxu0 %v159
    %171 = vmatprep.subr.mxu0 %v156
    %172 = vmatpush1.msra.mxu0 %v155
    %173 = vmatprep.subr.mxu0 %v152
    %174 = vmatpush1.msra.mxu0 %v151
    %175 = vmatprep.subr.mxu0 %v148
    %176 = vmatpush1.msra.mxu0 %v147
    %177 = vmatprep.subr.mxu0 %v144
    %178 = vmatpush1.msra.mxu0 %v143
    %179 = vmatprep.subr.mxu0 %v140
    %180 = vmatpush1.msra.mxu0 %v139
    %181 = vmatprep.subr.mxu0 %v136
    %182 = vmatpush1.msra.mxu0 %v135
    %183 = vmatprep.subr.mxu0 %v132
    %184 = vmatpush1.msra.mxu0 %v131
    %185 = vmatprep.subr.mxu0 %v128
    %186 = vmatpush1.msra.mxu0 %v127
    %187 = vmatprep.subr.mxu0 %v124
    %188 = vmatpush1.msra.mxu0 %v123
    %189 = vmatprep.subr.mxu0 %v120
    %190 = vmatpush1.msra.mxu0 %v119
    %191 = vmatprep.subr.mxu0 %v116
    %192 = vmatpush1.msra.mxu0 %v115
    %193 = vmatprep.subr.mxu0 %v112
    %194 = vmatpush1.msra.mxu0 %v111
    %195 = vmatprep.subr.mxu0 %v108
    %196 = vmatpush1.msra.mxu0 %v107
    %197 = vmatprep.subr.mxu0 %v104
    %198 = vmatpush1.msra.mxu0 %v103
    %199 = vmatprep.subr.mxu0 0.0
    %200 = vmatpush2.msra.mxu0 0.0
    %201 = vmatprep.subr.mxu0 0.0
    %202 = vmatpush2.msra.mxu0 0.0
    %203 = vmatprep.subr.mxu0 0.0
    %204 = vmatpush2.msra.mxu0 0.0
    %205 = vmatprep.subr.mxu0 0.0
    %206 = vmatpush2.msra.mxu0 0.0
    %207 = vmatprep.subr.mxu0 0.0
    %208 = vmatpush2.msra.mxu0 0.0
    %209 = vmatprep.subr.mxu0 0.0
    %210 = vmatpush2.msra.mxu0 0.0
    %211 = vmatprep.subr.mxu0 0.0
    %212 = vmatpush2.msra.mxu0 0.0
    %213 = vmatprep.subr.mxu0 0.0
    %214 = vmatpush2.msra.mxu0 0.0
    %215 = vmatprep.subr.mxu0 0.0
    %216 = vmatpush2.msra.mxu0 0.0
    %217 = vmatprep.subr.mxu0 0.0
    %218 = vmatpush2.msra.mxu0 0.0
    %219 = vmatprep.subr.mxu0 0.0
    %220 = vmatpush2.msra.mxu0 0.0
    %221 = vmatprep.subr.mxu0 0.0
    %222 = vmatpush2.msra.mxu0 0.0
    %223 = vmatprep.subr.mxu0 0.0
    %224 = vmatpush2.msra.mxu0 0.0
    %225 = vmatprep.subr.mxu0 0.0
    %226 = vmatpush2.msra.mxu0 0.0
    %227 = vmatprep.subr.mxu0 0.0
    %228 = vmatpush2.msra.mxu0 0.0
    %229 = vmatprep.subr.mxu0 0.0
    %230 = vmatpush2.msra.mxu0 0.0
    %231 = vmatprep.mubr.f32.mxu0 0.0
    %232 = vmatmul.mubr.f32.gmra.mxu0 0.0
    %v233 = vpop.f32.mrf.mxu0
    %v234 = vadd.f32 0.0, %v233
    %v235 = vpop.f32.mrf.mxu0
    %v236 = vadd.f32 0.0, %v235
    %237 = vdwg.mxu0
    %238 = vmatprep.subr.mxu0 %v166
    %239 = vmatpush1.msra.mxu0 %v165
    %240 = vmatprep.subr.mxu0 %v162
    %241 = vmatpush1.msra.mxu0 %v161
    %242 = vmatprep.subr.mxu0 %v158
    %243 = vmatpush1.msra.mxu0 %v157
    %244 = vmatprep.subr.mxu0 %v154
    %245 = vmatpush1.msra.mxu0 %v153
    %246 = vmatprep.subr.mxu0 %v150
    %247 = vmatpush1.msra.mxu0 %v149
    %248 = vmatprep.subr.mxu0 %v146
    %249 = vmatpush1.msra.mxu0 %v145
    %250 = vmatprep.subr.mxu0 %v142
    %251 = vmatpush1.msra.mxu0 %v141
    %252 = vmatprep.subr.mxu0 %v138
    %253 = vmatpush1.msra.mxu0 %v137
    %254 = vmatprep.subr.mxu0 %v134
    %255 = vmatpush1.msra.mxu0 %v133
    %256 = vmatprep.subr.mxu0 %v130
    %257 = vmatpush1.msra.mxu0 %v129
    %258 = vmatprep.subr.mxu0 %v126
    %259 = vmatpush1.msra.mxu0 %v125
    %260 = vmatprep.subr.mxu0 %v122
    %261 = vmatpush1.msra.mxu0 %v121
    %262 = vmatprep.subr.mxu0 %v118
    %263 = vmatpush1.msra.mxu0 %v117
    %264 = vmatprep.subr.mxu0 %v114
    %265 = vmatpush1.msra.mxu0 %v113
    %266 = vmatprep.subr.mxu0 %v110
    %267 = vmatpush1.msra.mxu0 %v109
    %268 = vmatprep.subr.mxu0 %v106
    %269 = vmatpush1.msra.mxu0 %v105
    %270 = vmatprep.subr.mxu0 0.0
    %271 = vmatpush2.msra.mxu0 0.0
    %272 = vmatprep.subr.mxu0 0.0
    %273 = vmatpush2.msra.mxu0 0.0
    %274 = vmatprep.subr.mxu0 0.0
    %275 = vmatpush2.msra.mxu0 0.0
    %276 = vmatprep.subr.mxu0 0.0
    %277 = vmatpush2.msra.mxu0 0.0
    %278 = vmatprep.subr.mxu0 0.0
    %279 = vmatpush2.msra.mxu0 0.0
    %280 = vmatprep.subr.mxu0 0.0
    %281 = vmatpush2.msra.mxu0 0.0
    %282 = vmatprep.subr.mxu0 0.0
    %283 = vmatpush2.msra.mxu0 0.0
    %284 = vmatprep.subr.mxu0 0.0
    %285 = vmatpush2.msra.mxu0 0.0
    %286 = vmatprep.subr.mxu0 0.0
    %287 = vmatpush2.msra.mxu0 0.0
    %288 = vmatprep.subr.mxu0 0.0
    %289 = vmatpush2.msra.mxu0 0.0
    %290 = vmatprep.subr.mxu0 0.0
    %291 = vmatpush2.msra.mxu0 0.0
    %292 = vmatprep.subr.mxu0 0.0
    %293 = vmatpush2.msra.mxu0 0.0
    %294 = vmatprep.subr.mxu0 0.0
    %295 = vmatpush2.msra.mxu0 0.0
    %296 = vmatprep.subr.mxu0 0.0
    %297 = vmatpush2.msra.mxu0 0.0
    %298 = vmatprep.subr.mxu0 0.0
    %299 = vmatpush2.msra.mxu0 0.0
    %300 = vmatprep.subr.mxu0 0.0
    %301 = vmatpush2.msra.mxu0 0.0
    %302 = vmatprep.mubr.f32.mxu0 0.0
    %303 = vmatmul.mubr.f32.gmra.mxu0 0.0
    %v304 = vpop.f32.mrf.mxu0
    %v305 = vadd.f32 0.0, %v304
    %v306 = vpop.f32.mrf.mxu0
    %v307 = vadd.f32 0.0, %v306
    %308 = vdwg.mxu0
    %v313 = vcombine.low %v234, %v236
    %v314 = vcombine.low %v305, %v307
    %v316 = vunpack.c.l.s4 1966171168
    %v317 = vunpack.c.0.s8 %v316
    %v318 = vlaneseq
    %v319 = vshrl.u32 %v318, 7
    %v320 = vsub.s32 %v317, %v319
    %v321 = vrot.slane %v313, %v320
    %v323 = vunpack.c.l.s4 1966171168
    %v324 = vunpack.c.0.s8 %v323
    %v325 = vlaneseq
    %v326 = vshrl.u32 %v325, 7
    %v327 = vsub.s32 %v324, %v326
    %v328 = vrot.slane %v314, %v327
    %v329 = vcombine.low %v321, %v328
    %v330 = vcombine.high %v321, %v328
    %v332 = vunpack.c.l.s4 1966171168
    %v333 = vunpack.c.0.s8 %v332
    %v334 = vlaneseq
    %v335 = vshrl.u32 %v334, 7
    %v336 = vsub.s32 %v333, %v335
    %v337 = vrot.slane %v329, %v336
    %v339 = vunpack.c.l.s4 1966171168
    %v340 = vunpack.c.0.s8 %v339
    %v341 = vlaneseq
    %v342 = vshrl.u32 %v341, 7
    %v343 = vsub.s32 %v340, %v342
    %v344 = vrot.slane %v330, %v343
    %v347 = vadd.f32 %v100, %v337
    %v348 = vadd.f32 %v102, %v344
    %v349 = vxor.u32 %v347, 2147483648
    %v350 = vxor.u32 %v348, 2147483648
    %v351 = vmul.f32 %v349, 1.442695
    %v352 = vpow.pop %v351
    %v353 = vmul.f32 %v350, 1.442695
    %v354 = vpow.pop %v353
    %v355 = vadd.f32 %v352, 1.0
    %v356 = vadd.f32 %v354, 1.0
    %v357 = vrcp.pop %v355
    %v358 = vmul.f32 1.0, %v357
    %v359 = vrcp.pop %v356
    %v360 = vmul.f32 1.0, %v359
    %v363 = vrot.slane %v347, 1
    %v364 = vrot.slane %v348, 1
    %v367 = vxor.u32 %v363, 2147483648
    %v368 = vxor.u32 %v364, 2147483648
    %v369 = vmul.f32 %v367, 1.442695
    %v370 = vpow.pop %v369
    %v371 = vmul.f32 %v368, 1.442695
    %v372 = vpow.pop %v371
    %v373 = vadd.f32 %v370, 1.0
    %v374 = vadd.f32 %v372, 1.0
    %v375 = vrcp.pop %v373
    %v376 = vmul.f32 1.0, %v375
    %v377 = vrcp.pop %v374
    %v378 = vmul.f32 1.0, %v377
    %v379 = vrot.slane %v347, 2
    %v380 = vrot.slane %v348, 2
    %v383 = vtanh.pop %v379
    %v384 = vtanh.pop %v380
    %v385 = vrot.slane %v347, 3
    %v386 = vrot.slane %v348, 3
    %v389 = vxor.u32 %v385, 2147483648
    %v390 = vxor.u32 %v386, 2147483648
    %v391 = vmul.f32 %v389, 1.442695
    %v392 = vpow.pop %v391
    %v393 = vmul.f32 %v390, 1.442695
    %v394 = vpow.pop %v393
    %v395 = vadd.f32 %v392, 1.0
    %v396 = vadd.f32 %v394, 1.0
    %v397 = vrcp.pop %v395
    %v398 = vmul.f32 1.0, %v397
    %v399 = vrcp.pop %v396
    %v400 = vmul.f32 1.0, %v399
    %v401 = vmul.f32 %v376, 0.0
    %v402 = vmul.f32 %v378, 0.0
    %v403 = vmul.f32 %v358, %v383
    %v404 = vmul.f32 %v360, %v384
    %v405 = vadd.f32 %v401, %v403
    %v406 = vadd.f32 %v402, %v404
    %v407 = vtanh.pop %v405
    %v408 = vtanh.pop %v406
    %v409 = vmul.f32 %v398, %v407
    %v410 = vmul.f32 %v400, %v408
    %v413 = vcombine.low %v409, %v410
    %v415 = vunpack.c.l.s4 1966171168
    %v416 = vunpack.c.0.s8 %v415
    %v417 = vlaneseq
    %v418 = vshrl.u32 %v417, 7
    %v419 = vsub.s32 %v416, %v418
    %v420 = vrot.slane %v413, %v419
    %v422 = vunpack.c.l.s4 1966171168
    %v423 = vunpack.c.0.s8 %v422
    %v424 = vlaneseq
    %v425 = vshrl.u32 %v424, 7
    %v426 = vsub.s32 %v423, %v425
    %v427 = vrot.slane %v420, %v426
    %v429 = vld [vmem:[#allocation7] sm:$0xff]
    %v430 = vld [vmem:[#allocation7 + $0x8] sm:$0xff]
    %v431 = vld [vmem:[#allocation7 + $0x10] sm:$0xff]
    %v432 = vld [vmem:[#allocation7 + $0x18] sm:$0xff]
    %v433 = vld [vmem:[#allocation7 + $0x20] sm:$0xff]
    %v434 = vld [vmem:[#allocation7 + $0x28] sm:$0xff]
    %v435 = vld [vmem:[#allocation7 + $0x30] sm:$0xff]
    %v436 = vld [vmem:[#allocation7 + $0x38] sm:$0xff]
    %v437 = vld [vmem:[#allocation7 + $0x40] sm:$0xff]
    %v438 = vld [vmem:[#allocation7 + $0x48] sm:$0xff]
    %v439 = vld [vmem:[#allocation7 + $0x50] sm:$0xff]
    %v440 = vld [vmem:[#allocation7 + $0x58] sm:$0xff]
    %v441 = vld [vmem:[#allocation7 + $0x60] sm:$0xff]
    %v442 = vld [vmem:[#allocation7 + $0x68] sm:$0xff]
    %v443 = vld [vmem:[#allocation7 + $0x70] sm:$0xff]
    %v444 = vld [vmem:[#allocation7 + $0x78] sm:$0xff]
    %v445 = vld [vmem:[#allocation7 + $0x80] sm:$0xff]
    %v446 = vld [vmem:[#allocation7 + $0x88] sm:$0xff]
    %v447 = vld [vmem:[#allocation7 + $0x90] sm:$0xff]
    %v448 = vld [vmem:[#allocation7 + $0x98] sm:$0xff]
    %v449 = vld [vmem:[#allocation7 + $0xa0] sm:$0xff]
    %v450 = vld [vmem:[#allocation7 + $0xa8] sm:$0xff]
    %v451 = vld [vmem:[#allocation7 + $0xb0] sm:$0xff]
    %v452 = vld [vmem:[#allocation7 + $0xb8] sm:$0xff]
    %v453 = vld [vmem:[#allocation7 + $0xc0] sm:$0xff]
    %v454 = vld [vmem:[#allocation7 + $0xc8] sm:$0xff]
    %v455 = vld [vmem:[#allocation7 + $0xd0] sm:$0xff]
    %v456 = vld [vmem:[#allocation7 + $0xd8] sm:$0xff]
    %v457 = vld [vmem:[#allocation7 + $0xe0] sm:$0xff]
    %v458 = vld [vmem:[#allocation7 + $0xe8] sm:$0xff]
    %v459 = vld [vmem:[#allocation7 + $0xf0] sm:$0xff]
    %v460 = vld [vmem:[#allocation7 + $0xf8] sm:$0xff]
    %v461 = vld [vmem:[#allocation7 + $0x100] sm:$0xff]
    %v462 = vld [vmem:[#allocation7 + $0x108] sm:$0xff]
    %v463 = vld [vmem:[#allocation7 + $0x110] sm:$0xff]
    %v464 = vld [vmem:[#allocation7 + $0x118] sm:$0xff]
    %v465 = vld [vmem:[#allocation7 + $0x120] sm:$0xff]
    %v466 = vld [vmem:[#allocation7 + $0x128] sm:$0xff]
    %v467 = vld [vmem:[#allocation7 + $0x130] sm:$0xff]
    %v468 = vld [vmem:[#allocation7 + $0x138] sm:$0xff]
    %v469 = vld [vmem:[#allocation7 + $0x140] sm:$0xff]
    %v470 = vld [vmem:[#allocation7 + $0x148] sm:$0xff]
    %v471 = vld [vmem:[#allocation7 + $0x150] sm:$0xff]
    %v472 = vld [vmem:[#allocation7 + $0x158] sm:$0xff]
    %v473 = vld [vmem:[#allocation7 + $0x160] sm:$0xff]
    %v474 = vld [vmem:[#allocation7 + $0x168] sm:$0xff]
    %v475 = vld [vmem:[#allocation7 + $0x170] sm:$0xff]
    %v476 = vld [vmem:[#allocation7 + $0x178] sm:$0xff]
    %v477 = vld [vmem:[#allocation7 + $0x180] sm:$0xff]
    %v478 = vld [vmem:[#allocation7 + $0x188] sm:$0xff]
    %v479 = vld [vmem:[#allocation7 + $0x190] sm:$0xff]
    %v480 = vld [vmem:[#allocation7 + $0x198] sm:$0xff]
    %v481 = vld [vmem:[#allocation7 + $0x1a0] sm:$0xff]
    %v482 = vld [vmem:[#allocation7 + $0x1a8] sm:$0xff]
    %v483 = vld [vmem:[#allocation7 + $0x1b0] sm:$0xff]
    %v484 = vld [vmem:[#allocation7 + $0x1b8] sm:$0xff]
    %v485 = vld [vmem:[#allocation7 + $0x1c0] sm:$0xff]
    %v486 = vld [vmem:[#allocation7 + $0x1c8] sm:$0xff]
    %v487 = vld [vmem:[#allocation7 + $0x1d0] sm:$0xff]
    %v488 = vld [vmem:[#allocation7 + $0x1d8] sm:$0xff]
    %v489 = vld [vmem:[#allocation7 + $0x1e0] sm:$0xff]
    %v490 = vld [vmem:[#allocation7 + $0x1e8] sm:$0xff]
    %v491 = vld [vmem:[#allocation7 + $0x1f0] sm:$0xff]
    %v492 = vld [vmem:[#allocation7 + $0x1f8] sm:$0xff]
    %v493 = vld [vmem:[#allocation7 + $0x200] sm:$0xff]
    %v494 = vld [vmem:[#allocation7 + $0x208] sm:$0xff]
    %v495 = vld [vmem:[#allocation7 + $0x210] sm:$0xff]
    %v496 = vld [vmem:[#allocation7 + $0x218] sm:$0xff]
    %v497 = vld [vmem:[#allocation7 + $0x220] sm:$0xff]
    %v498 = vld [vmem:[#allocation7 + $0x228] sm:$0xff]
    %v499 = vld [vmem:[#allocation7 + $0x230] sm:$0xff]
    %v500 = vld [vmem:[#allocation7 + $0x238] sm:$0xff]
    %v501 = vld [vmem:[#allocation7 + $0x240] sm:$0xff]
    %v502 = vld [vmem:[#allocation7 + $0x248] sm:$0xff]
    %v503 = vld [vmem:[#allocation7 + $0x250] sm:$0xff]
    %v504 = vld [vmem:[#allocation7 + $0x258] sm:$0xff]
    %v505 = vld [vmem:[#allocation7 + $0x260] sm:$0xff]
    %v506 = vld [vmem:[#allocation7 + $0x268] sm:$0xff]
    %v507 = vld [vmem:[#allocation7 + $0x270] sm:$0xff]
    %v508 = vld [vmem:[#allocation7 + $0x278] sm:$0xff]
    %v509 = vld [vmem:[#allocation7 + $0x280] sm:$0xff]
    %v510 = vld [vmem:[#allocation7 + $0x288] sm:$0xff]
    %v511 = vld [vmem:[#allocation7 + $0x290] sm:$0xff]
    %v512 = vld [vmem:[#allocation7 + $0x298] sm:$0xff]
    %v513 = vld [vmem:[#allocation7 + $0x2a0] sm:$0xff]
    %v514 = vld [vmem:[#allocation7 + $0x2a8] sm:$0xff]
    %v515 = vld [vmem:[#allocation7 + $0x2b0] sm:$0xff]
    %v516 = vld [vmem:[#allocation7 + $0x2b8] sm:$0xff]
    %v517 = vld [vmem:[#allocation7 + $0x2c0] sm:$0xff]
    %v518 = vld [vmem:[#allocation7 + $0x2c8] sm:$0xff]
    %v519 = vld [vmem:[#allocation7 + $0x2d0] sm:$0xff]
    %v520 = vld [vmem:[#allocation7 + $0x2d8] sm:$0xff]
    %v521 = vld [vmem:[#allocation7 + $0x2e0] sm:$0xff]
    %v522 = vld [vmem:[#allocation7 + $0x2e8] sm:$0xff]
    %v523 = vld [vmem:[#allocation7 + $0x2f0] sm:$0xff]
    %v524 = vld [vmem:[#allocation7 + $0x2f8] sm:$0xff]
    %v525 = vld [vmem:[#allocation7 + $0x300] sm:$0xff]
    %v526 = vld [vmem:[#allocation7 + $0x308] sm:$0xff]
    %v527 = vld [vmem:[#allocation7 + $0x310] sm:$0xff]
    %v528 = vld [vmem:[#allocation7 + $0x318] sm:$0xff]
    %v529 = vld [vmem:[#allocation7 + $0x320] sm:$0xff]
    %v530 = vld [vmem:[#allocation7 + $0x328] sm:$0xff]
    %v531 = vld [vmem:[#allocation7 + $0x330] sm:$0xff]
    %v532 = vld [vmem:[#allocation7 + $0x338] sm:$0xff]
    %v533 = vld [vmem:[#allocation7 + $0x340] sm:$0xff]
    %v534 = vld [vmem:[#allocation7 + $0x348] sm:$0xff]
    %v535 = vld [vmem:[#allocation7 + $0x350] sm:$0xff]
    %v536 = vld [vmem:[#allocation7 + $0x358] sm:$0xff]
    %v537 = vld [vmem:[#allocation7 + $0x360] sm:$0xff]
    %v538 = vld [vmem:[#allocation7 + $0x368] sm:$0xff]
    %v539 = vld [vmem:[#allocation7 + $0x370] sm:$0xff]
    %v540 = vld [vmem:[#allocation7 + $0x378] sm:$0xff]
    %v541 = vld [vmem:[#allocation7 + $0x380] sm:$0xff]
    %v542 = vld [vmem:[#allocation7 + $0x388] sm:$0xff]
    %v543 = vld [vmem:[#allocation7 + $0x390] sm:$0xff]
    %v544 = vld [vmem:[#allocation7 + $0x398] sm:$0xff]
    %v545 = vld [vmem:[#allocation7 + $0x3a0] sm:$0xff]
    %v546 = vld [vmem:[#allocation7 + $0x3a8] sm:$0xff]
    %v547 = vld [vmem:[#allocation7 + $0x3b0] sm:$0xff]
    %v548 = vld [vmem:[#allocation7 + $0x3b8] sm:$0xff]
    %v549 = vld [vmem:[#allocation7 + $0x3c0] sm:$0xff]
    %v550 = vld [vmem:[#allocation7 + $0x3c8] sm:$0xff]
    %v551 = vld [vmem:[#allocation7 + $0x3d0] sm:$0xff]
    %v552 = vld [vmem:[#allocation7 + $0x3d8] sm:$0xff]
    %v553 = vld [vmem:[#allocation7 + $0x3e0] sm:$0xff]
    %v554 = vld [vmem:[#allocation7 + $0x3e8] sm:$0xff]
    %v555 = vld [vmem:[#allocation7 + $0x3f0] sm:$0xff]
    %v556 = vld [vmem:[#allocation7 + $0x3f8] sm:$0xff]
    %v558 = vlaneseq
    %v559 = vshrl.u32 %v558, 7
    %v560 = vsub.s32 0, %v559
    %v561 = vrot.slane %v98, %v560
    %v562 = vlaneseq
    %v563 = vshrl.u32 %v562, 7
    %v564 = vsub.s32 1, %v563
    %v565 = vrot.slane %v98, %v564
    %v566 = vlaneseq
    %v567 = vshrl.u32 %v566, 7
    %v568 = vsub.s32 2, %v567
    %v569 = vrot.slane %v98, %v568
    %v570 = vlaneseq
    %v571 = vshrl.u32 %v570, 7
    %v572 = vsub.s32 3, %v571
    %v573 = vrot.slane %v98, %v572
    %578 = vmatprep.subr.mxu0 %v490
    %579 = vmatpush1.msra.mxu0 %v489
    %580 = vmatprep.subr.mxu0 %v486
    %581 = vmatpush1.msra.mxu0 %v485
    %582 = vmatprep.subr.mxu0 %v482
    %583 = vmatpush1.msra.mxu0 %v481
    %584 = vmatprep.subr.mxu0 %v478
    %585 = vmatpush1.msra.mxu0 %v477
    %586 = vmatprep.subr.mxu0 %v474
    %587 = vmatpush1.msra.mxu0 %v473
    %588 = vmatprep.subr.mxu0 %v470
    %589 = vmatpush1.msra.mxu0 %v469
    %590 = vmatprep.subr.mxu0 %v466
    %591 = vmatpush1.msra.mxu0 %v465
    %592 = vmatprep.subr.mxu0 %v462
    %593 = vmatpush1.msra.mxu0 %v461
    %594 = vmatprep.subr.mxu0 %v458
    %595 = vmatpush1.msra.mxu0 %v457
    %596 = vmatprep.subr.mxu0 %v454
    %597 = vmatpush1.msra.mxu0 %v453
    %598 = vmatprep.subr.mxu0 %v450
    %599 = vmatpush1.msra.mxu0 %v449
    %600 = vmatprep.subr.mxu0 %v446
    %601 = vmatpush1.msra.mxu0 %v445
    %602 = vmatprep.subr.mxu0 %v442
    %603 = vmatpush1.msra.mxu0 %v441
    %604 = vmatprep.subr.mxu0 %v438
    %605 = vmatpush1.msra.mxu0 %v437
    %606 = vmatprep.subr.mxu0 %v434
    %607 = vmatpush1.msra.mxu0 %v433
    %608 = vmatprep.subr.mxu0 %v430
    %609 = vmatpush1.msra.mxu0 %v429
    %610 = vmatprep.subr.mxu0 %v554
    %611 = vmatpush2.msra.mxu0 %v553
    %612 = vmatprep.subr.mxu0 %v550
    %613 = vmatpush2.msra.mxu0 %v549
    %614 = vmatprep.subr.mxu0 %v546
    %615 = vmatpush2.msra.mxu0 %v545
    %616 = vmatprep.subr.mxu0 %v542
    %617 = vmatpush2.msra.mxu0 %v541
    %618 = vmatprep.subr.mxu0 %v538
    %619 = vmatpush2.msra.mxu0 %v537
    %620 = vmatprep.subr.mxu0 %v534
    %621 = vmatpush2.msra.mxu0 %v533
    %622 = vmatprep.subr.mxu0 %v530
    %623 = vmatpush2.msra.mxu0 %v529
    %624 = vmatprep.subr.mxu0 %v526
    %625 = vmatpush2.msra.mxu0 %v525
    %626 = vmatprep.subr.mxu0 %v522
    %627 = vmatpush2.msra.mxu0 %v521
    %628 = vmatprep.subr.mxu0 %v518
    %629 = vmatpush2.msra.mxu0 %v517
    %630 = vmatprep.subr.mxu0 %v514
    %631 = vmatpush2.msra.mxu0 %v513
    %632 = vmatprep.subr.mxu0 %v510
    %633 = vmatpush2.msra.mxu0 %v509
    %634 = vmatprep.subr.mxu0 %v506
    %635 = vmatpush2.msra.mxu0 %v505
    %636 = vmatprep.subr.mxu0 %v502
    %637 = vmatpush2.msra.mxu0 %v501
    %638 = vmatprep.subr.mxu0 %v498
    %639 = vmatpush2.msra.mxu0 %v497
    %640 = vmatprep.subr.mxu0 %v494
    %641 = vmatpush2.msra.mxu0 %v493
    %642 = vmatprep.mubr.f32.mxu0 0.0
    %643 = vmatmul.mubr.f32.gmra.mxu0 %v427
    %v644 = vpop.f32.mrf.mxu0
    %v645 = vadd.f32 %v561, %v644
    %v646 = vpop.f32.mrf.mxu0
    %v647 = vadd.f32 %v565, %v646
    %648 = vdwg.mxu0
    %649 = vmatprep.subr.mxu0 %v492
    %650 = vmatpush1.msra.mxu0 %v491
    %651 = vmatprep.subr.mxu0 %v488
    %652 = vmatpush1.msra.mxu0 %v487
    %653 = vmatprep.subr.mxu0 %v484
    %654 = vmatpush1.msra.mxu0 %v483
    %655 = vmatprep.subr.mxu0 %v480
    %656 = vmatpush1.msra.mxu0 %v479
    %657 = vmatprep.subr.mxu0 %v476
    %658 = vmatpush1.msra.mxu0 %v475
    %659 = vmatprep.subr.mxu0 %v472
    %660 = vmatpush1.msra.mxu0 %v471
    %661 = vmatprep.subr.mxu0 %v468
    %662 = vmatpush1.msra.mxu0 %v467
    %663 = vmatprep.subr.mxu0 %v464
    %664 = vmatpush1.msra.mxu0 %v463
    %665 = vmatprep.subr.mxu0 %v460
    %666 = vmatpush1.msra.mxu0 %v459
    %667 = vmatprep.subr.mxu0 %v456
    %668 = vmatpush1.msra.mxu0 %v455
    %669 = vmatprep.subr.mxu0 %v452
    %670 = vmatpush1.msra.mxu0 %v451
    %671 = vmatprep.subr.mxu0 %v448
    %672 = vmatpush1.msra.mxu0 %v447
    %673 = vmatprep.subr.mxu0 %v444
    %674 = vmatpush1.msra.mxu0 %v443
    %675 = vmatprep.subr.mxu0 %v440
    %676 = vmatpush1.msra.mxu0 %v439
    %677 = vmatprep.subr.mxu0 %v436
    %678 = vmatpush1.msra.mxu0 %v435
    %679 = vmatprep.subr.mxu0 %v432
    %680 = vmatpush1.msra.mxu0 %v431
    %681 = vmatprep.subr.mxu0 %v556
    %682 = vmatpush2.msra.mxu0 %v555
    %683 = vmatprep.subr.mxu0 %v552
    %684 = vmatpush2.msra.mxu0 %v551
    %685 = vmatprep.subr.mxu0 %v548
    %686 = vmatpush2.msra.mxu0 %v547
    %687 = vmatprep.subr.mxu0 %v544
    %688 = vmatpush2.msra.mxu0 %v543
    %689 = vmatprep.subr.mxu0 %v540
    %690 = vmatpush2.msra.mxu0 %v539
    %691 = vmatprep.subr.mxu0 %v536
    %692 = vmatpush2.msra.mxu0 %v535
    %693 = vmatprep.subr.mxu0 %v532
    %694 = vmatpush2.msra.mxu0 %v531
    %695 = vmatprep.subr.mxu0 %v528
    %696 = vmatpush2.msra.mxu0 %v527
    %697 = vmatprep.subr.mxu0 %v524
    %698 = vmatpush2.msra.mxu0 %v523
    %699 = vmatprep.subr.mxu0 %v520
    %700 = vmatpush2.msra.mxu0 %v519
    %701 = vmatprep.subr.mxu0 %v516
    %702 = vmatpush2.msra.mxu0 %v515
    %703 = vmatprep.subr.mxu0 %v512
    %704 = vmatpush2.msra.mxu0 %v511
    %705 = vmatprep.subr.mxu0 %v508
    %706 = vmatpush2.msra.mxu0 %v507
    %707 = vmatprep.subr.mxu0 %v504
    %708 = vmatpush2.msra.mxu0 %v503
    %709 = vmatprep.subr.mxu0 %v500
    %710 = vmatpush2.msra.mxu0 %v499
    %711 = vmatprep.subr.mxu0 %v496
    %712 = vmatpush2.msra.mxu0 %v495
    %713 = vmatprep.mubr.f32.mxu0 0.0
    %714 = vmatmul.mubr.f32.gmra.mxu0 %v427
    %v715 = vpop.f32.mrf.mxu0
    %v716 = vadd.f32 %v569, %v715
    %v717 = vpop.f32.mrf.mxu0
    %v718 = vadd.f32 %v573, %v717
    %719 = vdwg.mxu0
    %v720 = vxor.u32 %v645, 2147483648
    %v721 = vmul.f32 %v720, 1.442695
    %v722 = vpow.pop %v721
    %v723 = vadd.f32 %v722, 1.0
    %v724 = vrcp.pop %v723
    %v725 = vmul.f32 1.0, %v724
    %v726 = vxor.u32 %v647, 2147483648
    %v727 = vmul.f32 %v726, 1.442695
    %v728 = vpow.pop %v727
    %v729 = vadd.f32 %v728, 1.0
    %v730 = vrcp.pop %v729
    %v731 = vmul.f32 1.0, %v730
    %v732 = vtanh.pop %v716
    %v733 = vxor.u32 %v718, 2147483648
    %v734 = vmul.f32 %v733, 1.442695
    %v735 = vpow.pop %v734
    %v736 = vadd.f32 %v735, 1.0
    %v737 = vrcp.pop %v736
    %v738 = vmul.f32 1.0, %v737
    %v739 = vmul.f32 %v731, 0.0
    %v740 = vmul.f32 %v725, %v732
    %v741 = vadd.f32 %v739, %v740
    %v742 = vtanh.pop %v741
    %v743 = vmul.f32 %v738, %v742
    %v744 = vld [vmem:[#allocation9] sm:$0xff]
    %v745 = vld [vmem:[#allocation9 + $0x8] sm:$0xff]
    %v746 = vld [vmem:[#allocation9 + $0x10] sm:$0xff]
    %v747 = vld [vmem:[#allocation9 + $0x18] sm:$0xff]
    %v748 = vld [vmem:[#allocation9 + $0x20] sm:$0xff]
    %v749 = vld [vmem:[#allocation9 + $0x28] sm:$0xff]
    %v750 = vld [vmem:[#allocation9 + $0x30] sm:$0xff]
    %v751 = vld [vmem:[#allocation9 + $0x38] sm:$0xff]
    %v752 = vld [vmem:[#allocation9 + $0x40] sm:$0xff]
    %v753 = vld [vmem:[#allocation9 + $0x48] sm:$0xff]
    %v754 = vld [vmem:[#allocation9 + $0x50] sm:$0xff]
    %v755 = vld [vmem:[#allocation9 + $0x58] sm:$0xff]
    %v756 = vld [vmem:[#allocation9 + $0x60] sm:$0xff]
    %v757 = vld [vmem:[#allocation9 + $0x68] sm:$0xff]
    %v758 = vld [vmem:[#allocation9 + $0x70] sm:$0xff]
    %v759 = vld [vmem:[#allocation9 + $0x78] sm:$0xff]
    %v761 = vlaneseq
    %v762 = vshrl.u32 %v761, 7
    %v763 = vsub.s32 0, %v762
    %v764 = vrot.slane %v99, %v763
    %766 = vmatprep.subr.mxu0 0.0
    %767 = vmatpush1.msra.mxu0 %v759
    %768 = vmatprep.subr.mxu0 0.0
    %769 = vmatpush1.msra.mxu0 %v758
    %770 = vmatprep.subr.mxu0 0.0
    %771 = vmatpush1.msra.mxu0 %v757
    %772 = vmatprep.subr.mxu0 0.0
    %773 = vmatpush1.msra.mxu0 %v756
    %774 = vmatprep.subr.mxu0 0.0
    %775 = vmatpush1.msra.mxu0 %v755
    %776 = vmatprep.subr.mxu0 0.0
    %777 = vmatpush1.msra.mxu0 %v754
    %778 = vmatprep.subr.mxu0 0.0
    %779 = vmatpush1.msra.mxu0 %v753
    %780 = vmatprep.subr.mxu0 0.0
    %781 = vmatpush1.msra.mxu0 %v752
    %782 = vmatprep.subr.mxu0 0.0
    %783 = vmatpush1.msra.mxu0 %v751
    %784 = vmatprep.subr.mxu0 0.0
    %785 = vmatpush1.msra.mxu0 %v750
    %786 = vmatprep.subr.mxu0 0.0
    %787 = vmatpush1.msra.mxu0 %v749
    %788 = vmatprep.subr.mxu0 0.0
    %789 = vmatpush1.msra.mxu0 %v748
    %790 = vmatprep.subr.mxu0 0.0
    %791 = vmatpush1.msra.mxu0 %v747
    %792 = vmatprep.subr.mxu0 0.0
    %793 = vmatpush1.msra.mxu0 %v746
    %794 = vmatprep.subr.mxu0 0.0
    %795 = vmatpush1.msra.mxu0 %v745
    %796 = vmatprep.subr.mxu0 0.0
    %797 = vmatpush1.msra.mxu0 %v744
    %798 = vmatprep.subr.mxu0 0.0
    %799 = vmatpush2.msra.mxu0 0.0
    %800 = vmatprep.subr.mxu0 0.0
    %801 = vmatpush2.msra.mxu0 0.0
    %802 = vmatprep.subr.mxu0 0.0
    %803 = vmatpush2.msra.mxu0 0.0
    %804 = vmatprep.subr.mxu0 0.0
    %805 = vmatpush2.msra.mxu0 0.0
    %806 = vmatprep.subr.mxu0 0.0
    %807 = vmatpush2.msra.mxu0 0.0
    %808 = vmatprep.subr.mxu0 0.0
    %809 = vmatpush2.msra.mxu0 0.0
    %810 = vmatprep.subr.mxu0 0.0
    %811 = vmatpush2.msra.mxu0 0.0
    %812 = vmatprep.subr.mxu0 0.0
    %813 = vmatpush2.msra.mxu0 0.0
    %814 = vmatprep.subr.mxu0 0.0
    %815 = vmatpush2.msra.mxu0 0.0
    %816 = vmatprep.subr.mxu0 0.0
    %817 = vmatpush2.msra.mxu0 0.0
    %818 = vmatprep.subr.mxu0 0.0
    %819 = vmatpush2.msra.mxu0 0.0
    %820 = vmatprep.subr.mxu0 0.0
    %821 = vmatpush2.msra.mxu0 0.0
    %822 = vmatprep.subr.mxu0 0.0
    %823 = vmatpush2.msra.mxu0 0.0
    %824 = vmatprep.subr.mxu0 0.0
    %825 = vmatpush2.msra.mxu0 0.0
    %826 = vmatprep.subr.mxu0 0.0
    %827 = vmatpush2.msra.mxu0 0.0
    %828 = vmatprep.subr.mxu0 0.0
    %829 = vmatpush2.msra.mxu0 0.0
    %830 = vmatprep.mubr.f32.mxu0 0.0
    %831 = vmatmul.mubr.f32.gmra.mxu0 %v743
    %v832 = vpop.f32.mrf.mxu0
    %v833 = vadd.f32 %v764, %v832
    %v834 = vpop.f32.mrf.mxu0
    %835 = vdwg.mxu0
    %v838 = vunpack.c.l.s4 1966171168
    %v839 = vunpack.c.0.s8 %v838
    %v840 = vlaneseq
    %v841 = vshrl.u32 %v840, 7
    %v842 = vsub.s32 %v839, %v841
    %v843 = vrot.slane %v833, %v842
    %v844 = vcombine.high %v843, %v843
    %v846 = vunpack.c.l.s4 1966171168
    %v847 = vunpack.c.0.s8 %v846
    %v848 = vlaneseq
    %v849 = vshrl.u32 %v848, 7
    %v850 = vsub.s32 %v847, %v849
    %v851 = vrot.slane %v843, %v850
    %v853 = vunpack.c.l.s4 1966171168
    %v854 = vunpack.c.0.s8 %v853
    %v855 = vlaneseq
    %v856 = vshrl.u32 %v855, 7
    %v857 = vsub.s32 %v854, %v856
    %v858 = vrot.slane %v844, %v857
    %861 = vst [vmem:[%s8] sm:$0x1] %v851
    %862 = vst [vmem:[%s8 + $0x10] sm:$0x1] %v858
    %s863 = scalar_lea.vmem [#allocation2], 1
    %v864 = vld [vmem:[%s863] ss:$8 sm:$0xf]
    %s865 = scalar_lea.vmem [#allocation2], 33
    %v866 = vld [vmem:[%s865] ss:$8 sm:$0xf]
    %v867 = vld [vmem:[#allocation4] sm:$0xff]
    %v868 = vld [vmem:[#allocation4 + $0x8] sm:$0xff]
    %v869 = vld [vmem:[#allocation4 + $0x10] sm:$0xff]
    %v870 = vld [vmem:[#allocation4 + $0x18] sm:$0xff]
    %v871 = vld [vmem:[#allocation4 + $0x20] sm:$0xff]
    %v872 = vld [vmem:[#allocation4 + $0x28] sm:$0xff]
    %v873 = vld [vmem:[#allocation4 + $0x30] sm:$0xff]
    %v874 = vld [vmem:[#allocation4 + $0x38] sm:$0xff]
    %v875 = vld [vmem:[#allocation4 + $0x40] sm:$0xff]
    %v876 = vld [vmem:[#allocation4 + $0x48] sm:$0xff]
    %v877 = vld [vmem:[#allocation4 + $0x50] sm:$0xff]
    %v878 = vld [vmem:[#allocation4 + $0x58] sm:$0xff]
    %v879 = vld [vmem:[#allocation4 + $0x60] sm:$0xff]
    %v880 = vld [vmem:[#allocation4 + $0x68] sm:$0xff]
    %v881 = vld [vmem:[#allocation4 + $0x70] sm:$0xff]
    %v882 = vld [vmem:[#allocation4 + $0x78] sm:$0xff]
    %v883 = vld [vmem:[#allocation4 + $0x80] sm:$0xff]
    %v884 = vld [vmem:[#allocation4 + $0x88] sm:$0xff]
    %v885 = vld [vmem:[#allocation4 + $0x90] sm:$0xff]
    %v886 = vld [vmem:[#allocation4 + $0x98] sm:$0xff]
    %v887 = vld [vmem:[#allocation4 + $0xa0] sm:$0xff]
    %v888 = vld [vmem:[#allocation4 + $0xa8] sm:$0xff]
    %v889 = vld [vmem:[#allocation4 + $0xb0] sm:$0xff]
    %v890 = vld [vmem:[#allocation4 + $0xb8] sm:$0xff]
    %v891 = vld [vmem:[#allocation4 + $0xc0] sm:$0xff]
    %v892 = vld [vmem:[#allocation4 + $0xc8] sm:$0xff]
    %v893 = vld [vmem:[#allocation4 + $0xd0] sm:$0xff]
    %v894 = vld [vmem:[#allocation4 + $0xd8] sm:$0xff]
    %v895 = vld [vmem:[#allocation4 + $0xe0] sm:$0xff]
    %v896 = vld [vmem:[#allocation4 + $0xe8] sm:$0xff]
    %v897 = vld [vmem:[#allocation4 + $0xf0] sm:$0xff]
    %v898 = vld [vmem:[#allocation4 + $0xf8] sm:$0xff]
    %v899 = vld [vmem:[#allocation4 + $0x100] sm:$0xff]
    %v900 = vld [vmem:[#allocation4 + $0x108] sm:$0xff]
    %v901 = vld [vmem:[#allocation4 + $0x110] sm:$0xff]
    %v902 = vld [vmem:[#allocation4 + $0x118] sm:$0xff]
    %v903 = vld [vmem:[#allocation4 + $0x120] sm:$0xff]
    %v904 = vld [vmem:[#allocation4 + $0x128] sm:$0xff]
    %v905 = vld [vmem:[#allocation4 + $0x130] sm:$0xff]
    %v906 = vld [vmem:[#allocation4 + $0x138] sm:$0xff]
    %v907 = vld [vmem:[#allocation4 + $0x140] sm:$0xff]
    %v908 = vld [vmem:[#allocation4 + $0x148] sm:$0xff]
    %v909 = vld [vmem:[#allocation4 + $0x150] sm:$0xff]
    %v910 = vld [vmem:[#allocation4 + $0x158] sm:$0xff]
    %v911 = vld [vmem:[#allocation4 + $0x160] sm:$0xff]
    %v912 = vld [vmem:[#allocation4 + $0x168] sm:$0xff]
    %v913 = vld [vmem:[#allocation4 + $0x170] sm:$0xff]
    %v914 = vld [vmem:[#allocation4 + $0x178] sm:$0xff]
    %v915 = vld [vmem:[#allocation4 + $0x180] sm:$0xff]
    %v916 = vld [vmem:[#allocation4 + $0x188] sm:$0xff]
    %v917 = vld [vmem:[#allocation4 + $0x190] sm:$0xff]
    %v918 = vld [vmem:[#allocation4 + $0x198] sm:$0xff]
    %v919 = vld [vmem:[#allocation4 + $0x1a0] sm:$0xff]
    %v920 = vld [vmem:[#allocation4 + $0x1a8] sm:$0xff]
    %v921 = vld [vmem:[#allocation4 + $0x1b0] sm:$0xff]
    %v922 = vld [vmem:[#allocation4 + $0x1b8] sm:$0xff]
    %v923 = vld [vmem:[#allocation4 + $0x1c0] sm:$0xff]
    %v924 = vld [vmem:[#allocation4 + $0x1c8] sm:$0xff]
    %v925 = vld [vmem:[#allocation4 + $0x1d0] sm:$0xff]
    %v926 = vld [vmem:[#allocation4 + $0x1d8] sm:$0xff]
    %v927 = vld [vmem:[#allocation4 + $0x1e0] sm:$0xff]
    %v928 = vld [vmem:[#allocation4 + $0x1e8] sm:$0xff]
    %v929 = vld [vmem:[#allocation4 + $0x1f0] sm:$0xff]
    %v930 = vld [vmem:[#allocation4 + $0x1f8] sm:$0xff]
    %931 = vmatprep.subr.mxu0 %v928
    %932 = vmatpush1.msra.mxu0 %v927
    %933 = vmatprep.subr.mxu0 %v924
    %934 = vmatpush1.msra.mxu0 %v923
    %935 = vmatprep.subr.mxu0 %v920
    %936 = vmatpush1.msra.mxu0 %v919
    %937 = vmatprep.subr.mxu0 %v916
    %938 = vmatpush1.msra.mxu0 %v915
    %939 = vmatprep.subr.mxu0 %v912
    %940 = vmatpush1.msra.mxu0 %v911
    %941 = vmatprep.subr.mxu0 %v908
    %942 = vmatpush1.msra.mxu0 %v907
    %943 = vmatprep.subr.mxu0 %v904
    %944 = vmatpush1.msra.mxu0 %v903
    %945 = vmatprep.subr.mxu0 %v900
    %946 = vmatpush1.msra.mxu0 %v899
    %947 = vmatprep.subr.mxu0 %v896
    %948 = vmatpush1.msra.mxu0 %v895
    %949 = vmatprep.subr.mxu0 %v892
    %950 = vmatpush1.msra.mxu0 %v891
    %951 = vmatprep.subr.mxu0 %v888
    %952 = vmatpush1.msra.mxu0 %v887
    %953 = vmatprep.subr.mxu0 %v884
    %954 = vmatpush1.msra.mxu0 %v883
    %955 = vmatprep.subr.mxu0 %v880
    %956 = vmatpush1.msra.mxu0 %v879
    %957 = vmatprep.subr.mxu0 %v876
    %958 = vmatpush1.msra.mxu0 %v875
    %959 = vmatprep.subr.mxu0 %v872
    %960 = vmatpush1.msra.mxu0 %v871
    %961 = vmatprep.subr.mxu0 %v868
    %962 = vmatpush1.msra.mxu0 %v867
    %963 = vmatprep.subr.mxu0 0.0
    %964 = vmatpush2.msra.mxu0 0.0
    %965 = vmatprep.subr.mxu0 0.0
    %966 = vmatpush2.msra.mxu0 0.0
    %967 = vmatprep.subr.mxu0 0.0
    %968 = vmatpush2.msra.mxu0 0.0
    %969 = vmatprep.subr.mxu0 0.0
    %970 = vmatpush2.msra.mxu0 0.0
    %971 = vmatprep.subr.mxu0 0.0
    %972 = vmatpush2.msra.mxu0 0.0
    %973 = vmatprep.subr.mxu0 0.0
    %974 = vmatpush2.msra.mxu0 0.0
    %975 = vmatprep.subr.mxu0 0.0
    %976 = vmatpush2.msra.mxu0 0.0
    %977 = vmatprep.subr.mxu0 0.0
    %978 = vmatpush2.msra.mxu0 0.0
    %979 = vmatprep.subr.mxu0 0.0
    %980 = vmatpush2.msra.mxu0 0.0
    %981 = vmatprep.subr.mxu0 0.0
    %982 = vmatpush2.msra.mxu0 0.0
    %983 = vmatprep.subr.mxu0 0.0
    %984 = vmatpush2.msra.mxu0 0.0
    %985 = vmatprep.subr.mxu0 0.0
    %986 = vmatpush2.msra.mxu0 0.0
    %987 = vmatprep.subr.mxu0 0.0
    %988 = vmatpush2.msra.mxu0 0.0
    %989 = vmatprep.subr.mxu0 0.0
    %990 = vmatpush2.msra.mxu0 0.0
    %991 = vmatprep.subr.mxu0 0.0
    %992 = vmatpush2.msra.mxu0 0.0
    %993 = vmatprep.subr.mxu0 0.0
    %994 = vmatpush2.msra.mxu0 0.0
    %995 = vmatprep.mubr.f32.mxu0 0.0
    %996 = vmatmul.mubr.f32.gmra.mxu0 %v427
    %v997 = vpop.f32.mrf.mxu0
    %v998 = vadd.f32 0.0, %v997
    %v999 = vpop.f32.mrf.mxu0
    %v1000 = vadd.f32 0.0, %v999
    %1001 = vdwg.mxu0
    %1002 = vmatprep.subr.mxu0 %v930
    %1003 = vmatpush1.msra.mxu0 %v929
    %1004 = vmatprep.subr.mxu0 %v926
    %1005 = vmatpush1.msra.mxu0 %v925
    %1006 = vmatprep.subr.mxu0 %v922
    %1007 = vmatpush1.msra.mxu0 %v921
    %1008 = vmatprep.subr.mxu0 %v918
    %1009 = vmatpush1.msra.mxu0 %v917
    %1010 = vmatprep.subr.mxu0 %v914
    %1011 = vmatpush1.msra.mxu0 %v913
    %1012 = vmatprep.subr.mxu0 %v910
    %1013 = vmatpush1.msra.mxu0 %v909
    %1014 = vmatprep.subr.mxu0 %v906
    %1015 = vmatpush1.msra.mxu0 %v905
    %1016 = vmatprep.subr.mxu0 %v902
    %1017 = vmatpush1.msra.mxu0 %v901
    %1018 = vmatprep.subr.mxu0 %v898
    %1019 = vmatpush1.msra.mxu0 %v897
    %1020 = vmatprep.subr.mxu0 %v894
    %1021 = vmatpush1.msra.mxu0 %v893
    %1022 = vmatprep.subr.mxu0 %v890
    %1023 = vmatpush1.msra.mxu0 %v889
    %1024 = vmatprep.subr.mxu0 %v886
    %1025 = vmatpush1.msra.mxu0 %v885
    %1026 = vmatprep.subr.mxu0 %v882
    %1027 = vmatpush1.msra.mxu0 %v881
    %1028 = vmatprep.subr.mxu0 %v878
    %1029 = vmatpush1.msra.mxu0 %v877
    %1030 = vmatprep.subr.mxu0 %v874
    %1031 = vmatpush1.msra.mxu0 %v873
    %1032 = vmatprep.subr.mxu0 %v870
    %1033 = vmatpush1.msra.mxu0 %v869
    %1034 = vmatprep.subr.mxu0 0.0
    %1035 = vmatpush2.msra.mxu0 0.0
    %1036 = vmatprep.subr.mxu0 0.0
    %1037 = vmatpush2.msra.mxu0 0.0
    %1038 = vmatprep.subr.mxu0 0.0
    %1039 = vmatpush2.msra.mxu0 0.0
    %1040 = vmatprep.subr.mxu0 0.0
    %1041 = vmatpush2.msra.mxu0 0.0
    %1042 = vmatprep.subr.mxu0 0.0
    %1043 = vmatpush2.msra.mxu0 0.0
    %1044 = vmatprep.subr.mxu0 0.0
    %1045 = vmatpush2.msra.mxu0 0.0
    %1046 = vmatprep.subr.mxu0 0.0
    %1047 = vmatpush2.msra.mxu0 0.0
    %1048 = vmatprep.subr.mxu0 0.0
    %1049 = vmatpush2.msra.mxu0 0.0
    %1050 = vmatprep.subr.mxu0 0.0
    %1051 = vmatpush2.msra.mxu0 0.0
    %1052 = vmatprep.subr.mxu0 0.0
    %1053 = vmatpush2.msra.mxu0 0.0
    %1054 = vmatprep.subr.mxu0 0.0
    %1055 = vmatpush2.msra.mxu0 0.0
    %1056 = vmatprep.subr.mxu0 0.0
    %1057 = vmatpush2.msra.mxu0 0.0
    %1058 = vmatprep.subr.mxu0 0.0
    %1059 = vmatpush2.msra.mxu0 0.0
    %1060 = vmatprep.subr.mxu0 0.0
    %1061 = vmatpush2.msra.mxu0 0.0
    %1062 = vmatprep.subr.mxu0 0.0
    %1063 = vmatpush2.msra.mxu0 0.0
    %1064 = vmatprep.subr.mxu0 0.0
    %1065 = vmatpush2.msra.mxu0 0.0
    %1066 = vmatprep.mubr.f32.mxu0 0.0
    %1067 = vmatmul.mubr.f32.gmra.mxu0 %v427
    %v1068 = vpop.f32.mrf.mxu0
    %v1069 = vadd.f32 0.0, %v1068
    %v1070 = vpop.f32.mrf.mxu0
    %v1071 = vadd.f32 0.0, %v1070
    %1072 = vdwg.mxu0
    %v1077 = vcombine.low %v998, %v1000
    %v1078 = vcombine.low %v1069, %v1071
    %v1080 = vunpack.c.l.s4 1966171168
    %v1081 = vunpack.c.0.s8 %v1080
    %v1082 = vlaneseq
    %v1083 = vshrl.u32 %v1082, 7
    %v1084 = vsub.s32 %v1081, %v1083
    %v1085 = vrot.slane %v1077, %v1084
    %v1087 = vunpack.c.l.s4 1966171168
    %v1088 = vunpack.c.0.s8 %v1087
    %v1089 = vlaneseq
    %v1090 = vshrl.u32 %v1089, 7
    %v1091 = vsub.s32 %v1088, %v1090
    %v1092 = vrot.slane %v1078, %v1091
    %v1093 = vcombine.low %v1085, %v1092
    %v1094 = vcombine.high %v1085, %v1092
    %v1096 = vunpack.c.l.s4 1966171168
    %v1097 = vunpack.c.0.s8 %v1096
    %v1098 = vlaneseq
    %v1099 = vshrl.u32 %v1098, 7
    %v1100 = vsub.s32 %v1097, %v1099
    %v1101 = vrot.slane %v1093, %v1100
    %v1103 = vunpack.c.l.s4 1966171168
    %v1104 = vunpack.c.0.s8 %v1103
    %v1105 = vlaneseq
    %v1106 = vshrl.u32 %v1105, 7
    %v1107 = vsub.s32 %v1104, %v1106
    %v1108 = vrot.slane %v1094, %v1107
    %v1111 = vadd.f32 %v864, %v1101
    %v1112 = vadd.f32 %v866, %v1108
    %v1113 = vxor.u32 %v1111, 2147483648
    %v1114 = vxor.u32 %v1112, 2147483648
    %v1115 = vmul.f32 %v1113, 1.442695
    %v1116 = vpow.pop %v1115
    %v1117 = vmul.f32 %v1114, 1.442695
    %v1118 = vpow.pop %v1117
    %v1119 = vadd.f32 %v1116, 1.0
    %v1120 = vadd.f32 %v1118, 1.0
    %v1121 = vrcp.pop %v1119
    %v1122 = vmul.f32 1.0, %v1121
    %v1123 = vrcp.pop %v1120
    %v1124 = vmul.f32 1.0, %v1123
    %v1127 = vrot.slane %v1111, 1
    %v1128 = vrot.slane %v1112, 1
    %v1131 = vxor.u32 %v1127, 2147483648
    %v1132 = vxor.u32 %v1128, 2147483648
    %v1133 = vmul.f32 %v1131, 1.442695
    %v1134 = vpow.pop %v1133
    %v1135 = vmul.f32 %v1132, 1.442695
    %v1136 = vpow.pop %v1135
    %v1137 = vadd.f32 %v1134, 1.0
    %v1138 = vadd.f32 %v1136, 1.0
    %v1139 = vrcp.pop %v1137
    %v1140 = vmul.f32 1.0, %v1139
    %v1141 = vrcp.pop %v1138
    %v1142 = vmul.f32 1.0, %v1141
    %v1143 = vrot.slane %v1111, 2
    %v1144 = vrot.slane %v1112, 2
    %v1147 = vtanh.pop %v1143
    %v1148 = vtanh.pop %v1144
    %v1149 = vrot.slane %v1111, 3
    %v1150 = vrot.slane %v1112, 3
    %v1153 = vxor.u32 %v1149, 2147483648
    %v1154 = vxor.u32 %v1150, 2147483648
    %v1155 = vmul.f32 %v1153, 1.442695
    %v1156 = vpow.pop %v1155
    %v1157 = vmul.f32 %v1154, 1.442695
    %v1158 = vpow.pop %v1157
    %v1159 = vadd.f32 %v1156, 1.0
    %v1160 = vadd.f32 %v1158, 1.0
    %v1161 = vrcp.pop %v1159
    %v1162 = vmul.f32 1.0, %v1161
    %v1163 = vrcp.pop %v1160
    %v1164 = vmul.f32 1.0, %v1163
    %v1165 = vmul.f32 %v1140, %v405
    %v1166 = vmul.f32 %v1142, %v406
    %v1167 = vmul.f32 %v1122, %v1147
    %v1168 = vmul.f32 %v1124, %v1148
    %v1169 = vadd.f32 %v1165, %v1167
    %v1170 = vadd.f32 %v1166, %v1168
    %v1171 = vtanh.pop %v1169
    %v1172 = vtanh.pop %v1170
    %v1173 = vmul.f32 %v1162, %v1171
    %v1174 = vmul.f32 %v1164, %v1172
    %v1177 = vcombine.low %v1173, %v1174
    %v1179 = vunpack.c.l.s4 1966171168
    %v1180 = vunpack.c.0.s8 %v1179
    %v1181 = vlaneseq
    %v1182 = vshrl.u32 %v1181, 7
    %v1183 = vsub.s32 %v1180, %v1182
    %v1184 = vrot.slane %v1177, %v1183
    %v1186 = vunpack.c.l.s4 1966171168
    %v1187 = vunpack.c.0.s8 %v1186
    %v1188 = vlaneseq
    %v1189 = vshrl.u32 %v1188, 7
    %v1190 = vsub.s32 %v1187, %v1189
    %v1191 = vrot.slane %v1184, %v1190
    %v1193 = vld [vmem:[#allocation7] sm:$0xff]
    %v1194 = vld [vmem:[#allocation7 + $0x8] sm:$0xff]
    %v1195 = vld [vmem:[#allocation7 + $0x10] sm:$0xff]
    %v1196 = vld [vmem:[#allocation7 + $0x18] sm:$0xff]
    %v1197 = vld [vmem:[#allocation7 + $0x20] sm:$0xff]
    %v1198 = vld [vmem:[#allocation7 + $0x28] sm:$0xff]
    %v1199 = vld [vmem:[#allocation7 + $0x30] sm:$0xff]
    %v1200 = vld [vmem:[#allocation7 + $0x38] sm:$0xff]
    %v1201 = vld [vmem:[#allocation7 + $0x40] sm:$0xff]
    %v1202 = vld [vmem:[#allocation7 + $0x48] sm:$0xff]
    %v1203 = vld [vmem:[#allocation7 + $0x50] sm:$0xff]
    %v1204 = vld [vmem:[#allocation7 + $0x58] sm:$0xff]
    %v1205 = vld [vmem:[#allocation7 + $0x60] sm:$0xff]
    %v1206 = vld [vmem:[#allocation7 + $0x68] sm:$0xff]
    %v1207 = vld [vmem:[#allocation7 + $0x70] sm:$0xff]
    %v1208 = vld [vmem:[#allocation7 + $0x78] sm:$0xff]
    %v1209 = vld [vmem:[#allocation7 + $0x80] sm:$0xff]
    %v1210 = vld [vmem:[#allocation7 + $0x88] sm:$0xff]
    %v1211 = vld [vmem:[#allocation7 + $0x90] sm:$0xff]
    %v1212 = vld [vmem:[#allocation7 + $0x98] sm:$0xff]
    %v1213 = vld [vmem:[#allocation7 + $0xa0] sm:$0xff]
    %v1214 = vld [vmem:[#allocation7 + $0xa8] sm:$0xff]
    %v1215 = vld [vmem:[#allocation7 + $0xb0] sm:$0xff]
    %v1216 = vld [vmem:[#allocation7 + $0xb8] sm:$0xff]
    %v1217 = vld [vmem:[#allocation7 + $0xc0] sm:$0xff]
    %v1218 = vld [vmem:[#allocation7 + $0xc8] sm:$0xff]
    %v1219 = vld [vmem:[#allocation7 + $0xd0] sm:$0xff]
    %v1220 = vld [vmem:[#allocation7 + $0xd8] sm:$0xff]
    %v1221 = vld [vmem:[#allocation7 + $0xe0] sm:$0xff]
    %v1222 = vld [vmem:[#allocation7 + $0xe8] sm:$0xff]
    %v1223 = vld [vmem:[#allocation7 + $0xf0] sm:$0xff]
    %v1224 = vld [vmem:[#allocation7 + $0xf8] sm:$0xff]
    %v1225 = vld [vmem:[#allocation7 + $0x100] sm:$0xff]
    %v1226 = vld [vmem:[#allocation7 + $0x108] sm:$0xff]
    %v1227 = vld [vmem:[#allocation7 + $0x110] sm:$0xff]
    %v1228 = vld [vmem:[#allocation7 + $0x118] sm:$0xff]
    %v1229 = vld [vmem:[#allocation7 + $0x120] sm:$0xff]
    %v1230 = vld [vmem:[#allocation7 + $0x128] sm:$0xff]
    %v1231 = vld [vmem:[#allocation7 + $0x130] sm:$0xff]
    %v1232 = vld [vmem:[#allocation7 + $0x138] sm:$0xff]
    %v1233 = vld [vmem:[#allocation7 + $0x140] sm:$0xff]
    %v1234 = vld [vmem:[#allocation7 + $0x148] sm:$0xff]
    %v1235 = vld [vmem:[#allocation7 + $0x150] sm:$0xff]
    %v1236 = vld [vmem:[#allocation7 + $0x158] sm:$0xff]
    %v1237 = vld [vmem:[#allocation7 + $0x160] sm:$0xff]
    %v1238 = vld [vmem:[#allocation7 + $0x168] sm:$0xff]
    %v1239 = vld [vmem:[#allocation7 + $0x170] sm:$0xff]
    %v1240 = vld [vmem:[#allocation7 + $0x178] sm:$0xff]
    %v1241 = vld [vmem:[#allocation7 + $0x180] sm:$0xff]
    %v1242 = vld [vmem:[#allocation7 + $0x188] sm:$0xff]
    %v1243 = vld [vmem:[#allocation7 + $0x190] sm:$0xff]
    %v1244 = vld [vmem:[#allocation7 + $0x198] sm:$0xff]
    %v1245 = vld [vmem:[#allocation7 + $0x1a0] sm:$0xff]
    %v1246 = vld [vmem:[#allocation7 + $0x1a8] sm:$0xff]
    %v1247 = vld [vmem:[#allocation7 + $0x1b0] sm:$0xff]
    %v1248 = vld [vmem:[#allocation7 + $0x1b8] sm:$0xff]
    %v1249 = vld [vmem:[#allocation7 + $0x1c0] sm:$0xff]
    %v1250 = vld [vmem:[#allocation7 + $0x1c8] sm:$0xff]
    %v1251 = vld [vmem:[#allocation7 + $0x1d0] sm:$0xff]
    %v1252 = vld [vmem:[#allocation7 + $0x1d8] sm:$0xff]
    %v1253 = vld [vmem:[#allocation7 + $0x1e0] sm:$0xff]
    %v1254 = vld [vmem:[#allocation7 + $0x1e8] sm:$0xff]
    %v1255 = vld [vmem:[#allocation7 + $0x1f0] sm:$0xff]
    %v1256 = vld [vmem:[#allocation7 + $0x1f8] sm:$0xff]
    %v1257 = vld [vmem:[#allocation7 + $0x200] sm:$0xff]
    %v1258 = vld [vmem:[#allocation7 + $0x208] sm:$0xff]
    %v1259 = vld [vmem:[#allocation7 + $0x210] sm:$0xff]
    %v1260 = vld [vmem:[#allocation7 + $0x218] sm:$0xff]
    %v1261 = vld [vmem:[#allocation7 + $0x220] sm:$0xff]
    %v1262 = vld [vmem:[#allocation7 + $0x228] sm:$0xff]
    %v1263 = vld [vmem:[#allocation7 + $0x230] sm:$0xff]
    %v1264 = vld [vmem:[#allocation7 + $0x238] sm:$0xff]
    %v1265 = vld [vmem:[#allocation7 + $0x240] sm:$0xff]
    %v1266 = vld [vmem:[#allocation7 + $0x248] sm:$0xff]
    %v1267 = vld [vmem:[#allocation7 + $0x250] sm:$0xff]
    %v1268 = vld [vmem:[#allocation7 + $0x258] sm:$0xff]
    %v1269 = vld [vmem:[#allocation7 + $0x260] sm:$0xff]
    %v1270 = vld [vmem:[#allocation7 + $0x268] sm:$0xff]
    %v1271 = vld [vmem:[#allocation7 + $0x270] sm:$0xff]
    %v1272 = vld [vmem:[#allocation7 + $0x278] sm:$0xff]
    %v1273 = vld [vmem:[#allocation7 + $0x280] sm:$0xff]
    %v1274 = vld [vmem:[#allocation7 + $0x288] sm:$0xff]
    %v1275 = vld [vmem:[#allocation7 + $0x290] sm:$0xff]
    %v1276 = vld [vmem:[#allocation7 + $0x298] sm:$0xff]
    %v1277 = vld [vmem:[#allocation7 + $0x2a0] sm:$0xff]
    %v1278 = vld [vmem:[#allocation7 + $0x2a8] sm:$0xff]
    %v1279 = vld [vmem:[#allocation7 + $0x2b0] sm:$0xff]
    %v1280 = vld [vmem:[#allocation7 + $0x2b8] sm:$0xff]
    %v1281 = vld [vmem:[#allocation7 + $0x2c0] sm:$0xff]
    %v1282 = vld [vmem:[#allocation7 + $0x2c8] sm:$0xff]
    %v1283 = vld [vmem:[#allocation7 + $0x2d0] sm:$0xff]
    %v1284 = vld [vmem:[#allocation7 + $0x2d8] sm:$0xff]
    %v1285 = vld [vmem:[#allocation7 + $0x2e0] sm:$0xff]
    %v1286 = vld [vmem:[#allocation7 + $0x2e8] sm:$0xff]
    %v1287 = vld [vmem:[#allocation7 + $0x2f0] sm:$0xff]
    %v1288 = vld [vmem:[#allocation7 + $0x2f8] sm:$0xff]
    %v1289 = vld [vmem:[#allocation7 + $0x300] sm:$0xff]
    %v1290 = vld [vmem:[#allocation7 + $0x308] sm:$0xff]
    %v1291 = vld [vmem:[#allocation7 + $0x310] sm:$0xff]
    %v1292 = vld [vmem:[#allocation7 + $0x318] sm:$0xff]
    %v1293 = vld [vmem:[#allocation7 + $0x320] sm:$0xff]
    %v1294 = vld [vmem:[#allocation7 + $0x328] sm:$0xff]
    %v1295 = vld [vmem:[#allocation7 + $0x330] sm:$0xff]
    %v1296 = vld [vmem:[#allocation7 + $0x338] sm:$0xff]
    %v1297 = vld [vmem:[#allocation7 + $0x340] sm:$0xff]
    %v1298 = vld [vmem:[#allocation7 + $0x348] sm:$0xff]
    %v1299 = vld [vmem:[#allocation7 + $0x350] sm:$0xff]
    %v1300 = vld [vmem:[#allocation7 + $0x358] sm:$0xff]
    %v1301 = vld [vmem:[#allocation7 + $0x360] sm:$0xff]
    %v1302 = vld [vmem:[#allocation7 + $0x368] sm:$0xff]
    %v1303 = vld [vmem:[#allocation7 + $0x370] sm:$0xff]
    %v1304 = vld [vmem:[#allocation7 + $0x378] sm:$0xff]
    %v1305 = vld [vmem:[#allocation7 + $0x380] sm:$0xff]
    %v1306 = vld [vmem:[#allocation7 + $0x388] sm:$0xff]
    %v1307 = vld [vmem:[#allocation7 + $0x390] sm:$0xff]
    %v1308 = vld [vmem:[#allocation7 + $0x398] sm:$0xff]
    %v1309 = vld [vmem:[#allocation7 + $0x3a0] sm:$0xff]
    %v1310 = vld [vmem:[#allocation7 + $0x3a8] sm:$0xff]
    %v1311 = vld [vmem:[#allocation7 + $0x3b0] sm:$0xff]
    %v1312 = vld [vmem:[#allocation7 + $0x3b8] sm:$0xff]
    %v1313 = vld [vmem:[#allocation7 + $0x3c0] sm:$0xff]
    %v1314 = vld [vmem:[#allocation7 + $0x3c8] sm:$0xff]
    %v1315 = vld [vmem:[#allocation7 + $0x3d0] sm:$0xff]
    %v1316 = vld [vmem:[#allocation7 + $0x3d8] sm:$0xff]
    %v1317 = vld [vmem:[#allocation7 + $0x3e0] sm:$0xff]
    %v1318 = vld [vmem:[#allocation7 + $0x3e8] sm:$0xff]
    %v1319 = vld [vmem:[#allocation7 + $0x3f0] sm:$0xff]
    %v1320 = vld [vmem:[#allocation7 + $0x3f8] sm:$0xff]
    %1321 = vmatprep.subr.mxu0 %v1254
    %1322 = vmatpush1.msra.mxu0 %v1253
    %1323 = vmatprep.subr.mxu0 %v1250
    %1324 = vmatpush1.msra.mxu0 %v1249
    %1325 = vmatprep.subr.mxu0 %v1246
    %1326 = vmatpush1.msra.mxu0 %v1245
    %1327 = vmatprep.subr.mxu0 %v1242
    %1328 = vmatpush1.msra.mxu0 %v1241
    %1329 = vmatprep.subr.mxu0 %v1238
    %1330 = vmatpush1.msra.mxu0 %v1237
    %1331 = vmatprep.subr.mxu0 %v1234
    %1332 = vmatpush1.msra.mxu0 %v1233
    %1333 = vmatprep.subr.mxu0 %v1230
    %1334 = vmatpush1.msra.mxu0 %v1229
    %1335 = vmatprep.subr.mxu0 %v1226
    %1336 = vmatpush1.msra.mxu0 %v1225
    %1337 = vmatprep.subr.mxu0 %v1222
    %1338 = vmatpush1.msra.mxu0 %v1221
    %1339 = vmatprep.subr.mxu0 %v1218
    %1340 = vmatpush1.msra.mxu0 %v1217
    %1341 = vmatprep.subr.mxu0 %v1214
    %1342 = vmatpush1.msra.mxu0 %v1213
    %1343 = vmatprep.subr.mxu0 %v1210
    %1344 = vmatpush1.msra.mxu0 %v1209
    %1345 = vmatprep.subr.mxu0 %v1206
    %1346 = vmatpush1.msra.mxu0 %v1205
    %1347 = vmatprep.subr.mxu0 %v1202
    %1348 = vmatpush1.msra.mxu0 %v1201
    %1349 = vmatprep.subr.mxu0 %v1198
    %1350 = vmatpush1.msra.mxu0 %v1197
    %1351 = vmatprep.subr.mxu0 %v1194
    %1352 = vmatpush1.msra.mxu0 %v1193
    %1353 = vmatprep.subr.mxu0 %v1318
    %1354 = vmatpush2.msra.mxu0 %v1317
    %1355 = vmatprep.subr.mxu0 %v1314
    %1356 = vmatpush2.msra.mxu0 %v1313
    %1357 = vmatprep.subr.mxu0 %v1310
    %1358 = vmatpush2.msra.mxu0 %v1309
    %1359 = vmatprep.subr.mxu0 %v1306
    %1360 = vmatpush2.msra.mxu0 %v1305
    %1361 = vmatprep.subr.mxu0 %v1302
    %1362 = vmatpush2.msra.mxu0 %v1301
    %1363 = vmatprep.subr.mxu0 %v1298
    %1364 = vmatpush2.msra.mxu0 %v1297
    %1365 = vmatprep.subr.mxu0 %v1294
    %1366 = vmatpush2.msra.mxu0 %v1293
    %1367 = vmatprep.subr.mxu0 %v1290
    %1368 = vmatpush2.msra.mxu0 %v1289
    %1369 = vmatprep.subr.mxu0 %v1286
    %1370 = vmatpush2.msra.mxu0 %v1285
    %1371 = vmatprep.subr.mxu0 %v1282
    %1372 = vmatpush2.msra.mxu0 %v1281
    %1373 = vmatprep.subr.mxu0 %v1278
    %1374 = vmatpush2.msra.mxu0 %v1277
    %1375 = vmatprep.subr.mxu0 %v1274
    %1376 = vmatpush2.msra.mxu0 %v1273
    %1377 = vmatprep.subr.mxu0 %v1270
    %1378 = vmatpush2.msra.mxu0 %v1269
    %1379 = vmatprep.subr.mxu0 %v1266
    %1380 = vmatpush2.msra.mxu0 %v1265
    %1381 = vmatprep.subr.mxu0 %v1262
    %1382 = vmatpush2.msra.mxu0 %v1261
    %1383 = vmatprep.subr.mxu0 %v1258
    %1384 = vmatpush2.msra.mxu0 %v1257
    %1385 = vmatprep.mubr.f32.mxu0 %v743
    %1386 = vmatmul.mubr.f32.gmra.mxu0 %v1191
    %v1387 = vpop.f32.mrf.mxu0
    %v1388 = vadd.f32 %v561, %v1387
    %v1389 = vpop.f32.mrf.mxu0
    %v1390 = vadd.f32 %v565, %v1389
    %1391 = vdwg.mxu0
    %1392 = vmatprep.subr.mxu0 %v1256
    %1393 = vmatpush1.msra.mxu0 %v1255
    %1394 = vmatprep.subr.mxu0 %v1252
    %1395 = vmatpush1.msra.mxu0 %v1251
    %1396 = vmatprep.subr.mxu0 %v1248
    %1397 = vmatpush1.msra.mxu0 %v1247
    %1398 = vmatprep.subr.mxu0 %v1244
    %1399 = vmatpush1.msra.mxu0 %v1243
    %1400 = vmatprep.subr.mxu0 %v1240
    %1401 = vmatpush1.msra.mxu0 %v1239
    %1402 = vmatprep.subr.mxu0 %v1236
    %1403 = vmatpush1.msra.mxu0 %v1235
    %1404 = vmatprep.subr.mxu0 %v1232
    %1405 = vmatpush1.msra.mxu0 %v1231
    %1406 = vmatprep.subr.mxu0 %v1228
    %1407 = vmatpush1.msra.mxu0 %v1227
    %1408 = vmatprep.subr.mxu0 %v1224
    %1409 = vmatpush1.msra.mxu0 %v1223
    %1410 = vmatprep.subr.mxu0 %v1220
    %1411 = vmatpush1.msra.mxu0 %v1219
    %1412 = vmatprep.subr.mxu0 %v1216
    %1413 = vmatpush1.msra.mxu0 %v1215
    %1414 = vmatprep.subr.mxu0 %v1212
    %1415 = vmatpush1.msra.mxu0 %v1211
    %1416 = vmatprep.subr.mxu0 %v1208
    %1417 = vmatpush1.msra.mxu0 %v1207
    %1418 = vmatprep.subr.mxu0 %v1204
    %1419 = vmatpush1.msra.mxu0 %v1203
    %1420 = vmatprep.subr.mxu0 %v1200
    %1421 = vmatpush1.msra.mxu0 %v1199
    %1422 = vmatprep.subr.mxu0 %v1196
    %1423 = vmatpush1.msra.mxu0 %v1195
    %1424 = vmatprep.subr.mxu0 %v1320
    %1425 = vmatpush2.msra.mxu0 %v1319
    %1426 = vmatprep.subr.mxu0 %v1316
    %1427 = vmatpush2.msra.mxu0 %v1315
    %1428 = vmatprep.subr.mxu0 %v1312
    %1429 = vmatpush2.msra.mxu0 %v1311
    %1430 = vmatprep.subr.mxu0 %v1308
    %1431 = vmatpush2.msra.mxu0 %v1307
    %1432 = vmatprep.subr.mxu0 %v1304
    %1433 = vmatpush2.msra.mxu0 %v1303
    %1434 = vmatprep.subr.mxu0 %v1300
    %1435 = vmatpush2.msra.mxu0 %v1299
    %1436 = vmatprep.subr.mxu0 %v1296
    %1437 = vmatpush2.msra.mxu0 %v1295
    %1438 = vmatprep.subr.mxu0 %v1292
    %1439 = vmatpush2.msra.mxu0 %v1291
    %1440 = vmatprep.subr.mxu0 %v1288
    %1441 = vmatpush2.msra.mxu0 %v1287
    %1442 = vmatprep.subr.mxu0 %v1284
    %1443 = vmatpush2.msra.mxu0 %v1283
    %1444 = vmatprep.subr.mxu0 %v1280
    %1445 = vmatpush2.msra.mxu0 %v1279
    %1446 = vmatprep.subr.mxu0 %v1276
    %1447 = vmatpush2.msra.mxu0 %v1275
    %1448 = vmatprep.subr.mxu0 %v1272
    %1449 = vmatpush2.msra.mxu0 %v1271
    %1450 = vmatprep.subr.mxu0 %v1268
    %1451 = vmatpush2.msra.mxu0 %v1267
    %1452 = vmatprep.subr.mxu0 %v1264
    %1453 = vmatpush2.msra.mxu0 %v1263
    %1454 = vmatprep.subr.mxu0 %v1260
    %1455 = vmatpush2.msra.mxu0 %v1259
    %1456 = vmatprep.mubr.f32.mxu0 %v743
    %1457 = vmatmul.mubr.f32.gmra.mxu0 %v1191
    %v1458 = vpop.f32.mrf.mxu0
    %v1459 = vadd.f32 %v569, %v1458
    %v1460 = vpop.f32.mrf.mxu0
    %v1461 = vadd.f32 %v573, %v1460
    %1462 = vdwg.mxu0
    %v1463 = vxor.u32 %v1388, 2147483648
    %v1464 = vmul.f32 %v1463, 1.442695
    %v1465 = vpow.pop %v1464
    %v1466 = vadd.f32 %v1465, 1.0
    %v1467 = vrcp.pop %v1466
    %v1468 = vmul.f32 1.0, %v1467
    %v1469 = vxor.u32 %v1390, 2147483648
    %v1470 = vmul.f32 %v1469, 1.442695
    %v1471 = vpow.pop %v1470
    %v1472 = vadd.f32 %v1471, 1.0
    %v1473 = vrcp.pop %v1472
    %v1474 = vmul.f32 1.0, %v1473
    %v1475 = vtanh.pop %v1459
    %v1476 = vxor.u32 %v1461, 2147483648
    %v1477 = vmul.f32 %v1476, 1.442695
    %v1478 = vpow.pop %v1477
    %v1479 = vadd.f32 %v1478, 1.0
    %v1480 = vrcp.pop %v1479
    %v1481 = vmul.f32 1.0, %v1480
    %v1482 = vmul.f32 %v1474, %v741
    %v1483 = vmul.f32 %v1468, %v1475
    %v1484 = vadd.f32 %v1482, %v1483
    %v1485 = vtanh.pop %v1484
    %v1486 = vmul.f32 %v1481, %v1485
    %v1487 = vld [vmem:[#allocation9] sm:$0xff]
    %v1488 = vld [vmem:[#allocation9 + $0x8] sm:$0xff]
    %v1489 = vld [vmem:[#allocation9 + $0x10] sm:$0xff]
    %v1490 = vld [vmem:[#allocation9 + $0x18] sm:$0xff]
    %v1491 = vld [vmem:[#allocation9 + $0x20] sm:$0xff]
    %v1492 = vld [vmem:[#allocation9 + $0x28] sm:$0xff]
    %v1493 = vld [vmem:[#allocation9 + $0x30] sm:$0xff]
    %v1494 = vld [vmem:[#allocation9 + $0x38] sm:$0xff]
    %v1495 = vld [vmem:[#allocation9 + $0x40] sm:$0xff]
    %v1496 = vld [vmem:[#allocation9 + $0x48] sm:$0xff]
    %v1497 = vld [vmem:[#allocation9 + $0x50] sm:$0xff]
    %v1498 = vld [vmem:[#allocation9 + $0x58] sm:$0xff]
    %v1499 = vld [vmem:[#allocation9 + $0x60] sm:$0xff]
    %v1500 = vld [vmem:[#allocation9 + $0x68] sm:$0xff]
    %v1501 = vld [vmem:[#allocation9 + $0x70] sm:$0xff]
    %v1502 = vld [vmem:[#allocation9 + $0x78] sm:$0xff]
    %1503 = vmatprep.subr.mxu0 0.0
    %1504 = vmatpush1.msra.mxu0 %v1502
    %1505 = vmatprep.subr.mxu0 0.0
    %1506 = vmatpush1.msra.mxu0 %v1501
    %1507 = vmatprep.subr.mxu0 0.0
    %1508 = vmatpush1.msra.mxu0 %v1500
    %1509 = vmatprep.subr.mxu0 0.0
    %1510 = vmatpush1.msra.mxu0 %v1499
    %1511 = vmatprep.subr.mxu0 0.0
    %1512 = vmatpush1.msra.mxu0 %v1498
    %1513 = vmatprep.subr.mxu0 0.0
    %1514 = vmatpush1.msra.mxu0 %v1497
    %1515 = vmatprep.subr.mxu0 0.0
    %1516 = vmatpush1.msra.mxu0 %v1496
    %1517 = vmatprep.subr.mxu0 0.0
    %1518 = vmatpush1.msra.mxu0 %v1495
    %1519 = vmatprep.subr.mxu0 0.0
    %1520 = vmatpush1.msra.mxu0 %v1494
    %1521 = vmatprep.subr.mxu0 0.0
    %1522 = vmatpush1.msra.mxu0 %v1493
    %1523 = vmatprep.subr.mxu0 0.0
    %1524 = vmatpush1.msra.mxu0 %v1492
    %1525 = vmatprep.subr.mxu0 0.0
    %1526 = vmatpush1.msra.mxu0 %v1491
    %1527 = vmatprep.subr.mxu0 0.0
    %1528 = vmatpush1.msra.mxu0 %v1490
    %1529 = vmatprep.subr.mxu0 0.0
    %1530 = vmatpush1.msra.mxu0 %v1489
    %1531 = vmatprep.subr.mxu0 0.0
    %1532 = vmatpush1.msra.mxu0 %v1488
    %1533 = vmatprep.subr.mxu0 0.0
    %1534 = vmatpush1.msra.mxu0 %v1487
    %1535 = vmatprep.subr.mxu0 0.0
    %1536 = vmatpush2.msra.mxu0 0.0
    %1537 = vmatprep.subr.mxu0 0.0
    %1538 = vmatpush2.msra.mxu0 0.0
    %1539 = vmatprep.subr.mxu0 0.0
    %1540 = vmatpush2.msra.mxu0 0.0
    %1541 = vmatprep.subr.mxu0 0.0
    %1542 = vmatpush2.msra.mxu0 0.0
    %1543 = vmatprep.subr.mxu0 0.0
    %1544 = vmatpush2.msra.mxu0 0.0
    %1545 = vmatprep.subr.mxu0 0.0
    %1546 = vmatpush2.msra.mxu0 0.0
    %1547 = vmatprep.subr.mxu0 0.0
    %1548 = vmatpush2.msra.mxu0 0.0
    %1549 = vmatprep.subr.mxu0 0.0
    %1550 = vmatpush2.msra.mxu0 0.0
    %1551 = vmatprep.subr.mxu0 0.0
    %1552 = vmatpush2.msra.mxu0 0.0
    %1553 = vmatprep.subr.mxu0 0.0
    %1554 = vmatpush2.msra.mxu0 0.0
    %1555 = vmatprep.subr.mxu0 0.0
    %1556 = vmatpush2.msra.mxu0 0.0
    %1557 = vmatprep.subr.mxu0 0.0
    %1558 = vmatpush2.msra.mxu0 0.0
    %1559 = vmatprep.subr.mxu0 0.0
    %1560 = vmatpush2.msra.mxu0 0.0
    %1561 = vmatprep.subr.mxu0 0.0
    %1562 = vmatpush2.msra.mxu0 0.0
    %1563 = vmatprep.subr.mxu0 0.0
    %1564 = vmatpush2.msra.mxu0 0.0
    %1565 = vmatprep.subr.mxu0 0.0
    %1566 = vmatpush2.msra.mxu0 0.0
    %1567 = vmatprep.mubr.f32.mxu0 0.0
    %1568 = vmatmul.mubr.f32.gmra.mxu0 %v1486
    %v1569 = vpop.f32.mrf.mxu0
    %v1570 = vadd.f32 %v764, %v1569
    %v1571 = vpop.f32.mrf.mxu0
    %1572 = vdwg.mxu0
    %v1575 = vunpack.c.l.s4 1966171168
    %v1576 = vunpack.c.0.s8 %v1575
    %v1577 = vlaneseq
    %v1578 = vshrl.u32 %v1577, 7
    %v1579 = vsub.s32 %v1576, %v1578
    %v1580 = vrot.slane %v1570, %v1579
    %v1581 = vcombine.high %v1580, %v1580
    %v1583 = vunpack.c.l.s4 1966171168
    %v1584 = vunpack.c.0.s8 %v1583
    %v1585 = vlaneseq
    %v1586 = vshrl.u32 %v1585, 7
    %v1587 = vsub.s32 %v1584, %v1586
    %v1588 = vrot.slane %v1580, %v1587
    %v1590 = vunpack.c.l.s4 1966171168
    %v1591 = vunpack.c.0.s8 %v1590
    %v1592 = vlaneseq
    %v1593 = vshrl.u32 %v1592, 7
    %v1594 = vsub.s32 %v1591, %v1593
    %v1595 = vrot.slane %v1581, %v1594
    %1598 = vst [vmem:[%s8 + $0x1] sm:$0x1] %v1588
    %1599 = vst [vmem:[%s8 + $0x11] sm:$0x1] %v1595
    %s1600 = scalar_lea.vmem [#allocation2], 2
    %v1601 = vld [vmem:[%s1600] ss:$8 sm:$0xf]
    %s1602 = scalar_lea.vmem [#allocation2], 34
    %v1603 = vld [vmem:[%s1602] ss:$8 sm:$0xf]
    %v1604 = vld [vmem:[#allocation4] sm:$0xff]
    %v1605 = vld [vmem:[#allocation4 + $0x8] sm:$0xff]
    %v1606 = vld [vmem:[#allocation4 + $0x10] sm:$0xff]
    %v1607 = vld [vmem:[#allocation4 + $0x18] sm:$0xff]
    %v1608 = vld [vmem:[#allocation4 + $0x20] sm:$0xff]
    %v1609 = vld [vmem:[#allocation4 + $0x28] sm:$0xff]
    %v1610 = vld [vmem:[#allocation4 + $0x30] sm:$0xff]
    %v1611 = vld [vmem:[#allocation4 + $0x38] sm:$0xff]
    %v1612 = vld [vmem:[#allocation4 + $0x40] sm:$0xff]
    %v1613 = vld [vmem:[#allocation4 + $0x48] sm:$0xff]
    %v1614 = vld [vmem:[#allocation4 + $0x50] sm:$0xff]
    %v1615 = vld [vmem:[#allocation4 + $0x58] sm:$0xff]
    %v1616 = vld [vmem:[#allocation4 + $0x60] sm:$0xff]
    %v1617 = vld [vmem:[#allocation4 + $0x68] sm:$0xff]
    %v1618 = vld [vmem:[#allocation4 + $0x70] sm:$0xff]
    %v1619 = vld [vmem:[#allocation4 + $0x78] sm:$0xff]
    %v1620 = vld [vmem:[#allocation4 + $0x80] sm:$0xff]
    %v1621 = vld [vmem:[#allocation4 + $0x88] sm:$0xff]
    %v1622 = vld [vmem:[#allocation4 + $0x90] sm:$0xff]
    %v1623 = vld [vmem:[#allocation4 + $0x98] sm:$0xff]
    %v1624 = vld [vmem:[#allocation4 + $0xa0] sm:$0xff]
    %v1625 = vld [vmem:[#allocation4 + $0xa8] sm:$0xff]
    %v1626 = vld [vmem:[#allocation4 + $0xb0] sm:$0xff]
    %v1627 = vld [vmem:[#allocation4 + $0xb8] sm:$0xff]
    %v1628 = vld [vmem:[#allocation4 + $0xc0] sm:$0xff]
    %v1629 = vld [vmem:[#allocation4 + $0xc8] sm:$0xff]
    %v1630 = vld [vmem:[#allocation4 + $0xd0] sm:$0xff]
    %v1631 = vld [vmem:[#allocation4 + $0xd8] sm:$0xff]
    %v1632 = vld [vmem:[#allocation4 + $0xe0] sm:$0xff]
    %v1633 = vld [vmem:[#allocation4 + $0xe8] sm:$0xff]
    %v1634 = vld [vmem:[#allocation4 + $0xf0] sm:$0xff]
    %v1635 = vld [vmem:[#allocation4 + $0xf8] sm:$0xff]
    %v1636 = vld [vmem:[#allocation4 + $0x100] sm:$0xff]
    %v1637 = vld [vmem:[#allocation4 + $0x108] sm:$0xff]
    %v1638 = vld [vmem:[#allocation4 + $0x110] sm:$0xff]
    %v1639 = vld [vmem:[#allocation4 + $0x118] sm:$0xff]
    %v1640 = vld [vmem:[#allocation4 + $0x120] sm:$0xff]
    %v1641 = vld [vmem:[#allocation4 + $0x128] sm:$0xff]
    %v1642 = vld [vmem:[#allocation4 + $0x130] sm:$0xff]
    %v1643 = vld [vmem:[#allocation4 + $0x138] sm:$0xff]
    %v1644 = vld [vmem:[#allocation4 + $0x140] sm:$0xff]
    %v1645 = vld [vmem:[#allocation4 + $0x148] sm:$0xff]
    %v1646 = vld [vmem:[#allocation4 + $0x150] sm:$0xff]
    %v1647 = vld [vmem:[#allocation4 + $0x158] sm:$0xff]
    %v1648 = vld [vmem:[#allocation4 + $0x160] sm:$0xff]
    %v1649 = vld [vmem:[#allocation4 + $0x168] sm:$0xff]
    %v1650 = vld [vmem:[#allocation4 + $0x170] sm:$0xff]
    %v1651 = vld [vmem:[#allocation4 + $0x178] sm:$0xff]
    %v1652 = vld [vmem:[#allocation4 + $0x180] sm:$0xff]
    %v1653 = vld [vmem:[#allocation4 + $0x188] sm:$0xff]
    %v1654 = vld [vmem:[#allocation4 + $0x190] sm:$0xff]
    %v1655 = vld [vmem:[#allocation4 + $0x198] sm:$0xff]
    %v1656 = vld [vmem:[#allocation4 + $0x1a0] sm:$0xff]
    %v1657 = vld [vmem:[#allocation4 + $0x1a8] sm:$0xff]
    %v1658 = vld [vmem:[#allocation4 + $0x1b0] sm:$0xff]
    %v1659 = vld [vmem:[#allocation4 + $0x1b8] sm:$0xff]
    %v1660 = vld [vmem:[#allocation4 + $0x1c0] sm:$0xff]
    %v1661 = vld [vmem:[#allocation4 + $0x1c8] sm:$0xff]
    %v1662 = vld [vmem:[#allocation4 + $0x1d0] sm:$0xff]
    %v1663 = vld [vmem:[#allocation4 + $0x1d8] sm:$0xff]
    %v1664 = vld [vmem:[#allocation4 + $0x1e0] sm:$0xff]
    %v1665 = vld [vmem:[#allocation4 + $0x1e8] sm:$0xff]
    %v1666 = vld [vmem:[#allocation4 + $0x1f0] sm:$0xff]
    %v1667 = vld [vmem:[#allocation4 + $0x1f8] sm:$0xff]
    %1668 = vmatprep.subr.mxu0 %v1665
    %1669 = vmatpush1.msra.mxu0 %v1664
    %1670 = vmatprep.subr.mxu0 %v1661
    %1671 = vmatpush1.msra.mxu0 %v1660
    %1672 = vmatprep.subr.mxu0 %v1657
    %1673 = vmatpush1.msra.mxu0 %v1656
    %1674 = vmatprep.subr.mxu0 %v1653
    %1675 = vmatpush1.msra.mxu0 %v1652
    %1676 = vmatprep.subr.mxu0 %v1649
    %1677 = vmatpush1.msra.mxu0 %v1648
    %1678 = vmatprep.subr.mxu0 %v1645
    %1679 = vmatpush1.msra.mxu0 %v1644
    %1680 = vmatprep.subr.mxu0 %v1641
    %1681 = vmatpush1.msra.mxu0 %v1640
    %1682 = vmatprep.subr.mxu0 %v1637
    %1683 = vmatpush1.msra.mxu0 %v1636
    %1684 = vmatprep.subr.mxu0 %v1633
    %1685 = vmatpush1.msra.mxu0 %v1632
    %1686 = vmatprep.subr.mxu0 %v1629
    %1687 = vmatpush1.msra.mxu0 %v1628
    %1688 = vmatprep.subr.mxu0 %v1625
    %1689 = vmatpush1.msra.mxu0 %v1624
    %1690 = vmatprep.subr.mxu0 %v1621
    %1691 = vmatpush1.msra.mxu0 %v1620
    %1692 = vmatprep.subr.mxu0 %v1617
    %1693 = vmatpush1.msra.mxu0 %v1616
    %1694 = vmatprep.subr.mxu0 %v1613
    %1695 = vmatpush1.msra.mxu0 %v1612
    %1696 = vmatprep.subr.mxu0 %v1609
    %1697 = vmatpush1.msra.mxu0 %v1608
    %1698 = vmatprep.subr.mxu0 %v1605
    %1699 = vmatpush1.msra.mxu0 %v1604
    %1700 = vmatprep.subr.mxu0 0.0
    %1701 = vmatpush2.msra.mxu0 0.0
    %1702 = vmatprep.subr.mxu0 0.0
    %1703 = vmatpush2.msra.mxu0 0.0
    %1704 = vmatprep.subr.mxu0 0.0
    %1705 = vmatpush2.msra.mxu0 0.0
    %1706 = vmatprep.subr.mxu0 0.0
    %1707 = vmatpush2.msra.mxu0 0.0
    %1708 = vmatprep.subr.mxu0 0.0
    %1709 = vmatpush2.msra.mxu0 0.0
    %1710 = vmatprep.subr.mxu0 0.0
    %1711 = vmatpush2.msra.mxu0 0.0
    %1712 = vmatprep.subr.mxu0 0.0
    %1713 = vmatpush2.msra.mxu0 0.0
    %1714 = vmatprep.subr.mxu0 0.0
    %1715 = vmatpush2.msra.mxu0 0.0
    %1716 = vmatprep.subr.mxu0 0.0
    %1717 = vmatpush2.msra.mxu0 0.0
    %1718 = vmatprep.subr.mxu0 0.0
    %1719 = vmatpush2.msra.mxu0 0.0
    %1720 = vmatprep.subr.mxu0 0.0
    %1721 = vmatpush2.msra.mxu0 0.0
    %1722 = vmatprep.subr.mxu0 0.0
    %1723 = vmatpush2.msra.mxu0 0.0
    %1724 = vmatprep.subr.mxu0 0.0
    %1725 = vmatpush2.msra.mxu0 0.0
    %1726 = vmatprep.subr.mxu0 0.0
    %1727 = vmatpush2.msra.mxu0 0.0
    %1728 = vmatprep.subr.mxu0 0.0
    %1729 = vmatpush2.msra.mxu0 0.0
    %1730 = vmatprep.subr.mxu0 0.0
    %1731 = vmatpush2.msra.mxu0 0.0
    %1732 = vmatprep.mubr.f32.mxu0 0.0
    %1733 = vmatmul.mubr.f32.gmra.mxu0 %v1191
    %v1734 = vpop.f32.mrf.mxu0
    %v1735 = vadd.f32 0.0, %v1734
    %v1736 = vpop.f32.mrf.mxu0
    %v1737 = vadd.f32 0.0, %v1736
    %1738 = vdwg.mxu0
    %1739 = vmatprep.subr.mxu0 %v1667
    %1740 = vmatpush1.msra.mxu0 %v1666
    %1741 = vmatprep.subr.mxu0 %v1663
    %1742 = vmatpush1.msra.mxu0 %v1662
    %1743 = vmatprep.subr.mxu0 %v1659
    %1744 = vmatpush1.msra.mxu0 %v1658
    %1745 = vmatprep.subr.mxu0 %v1655
    %1746 = vmatpush1.msra.mxu0 %v1654
    %1747 = vmatprep.subr.mxu0 %v1651
    %1748 = vmatpush1.msra.mxu0 %v1650
    %1749 = vmatprep.subr.mxu0 %v1647
    %1750 = vmatpush1.msra.mxu0 %v1646
    %1751 = vmatprep.subr.mxu0 %v1643
    %1752 = vmatpush1.msra.mxu0 %v1642
    %1753 = vmatprep.subr.mxu0 %v1639
    %1754 = vmatpush1.msra.mxu0 %v1638
    %1755 = vmatprep.subr.mxu0 %v1635
    %1756 = vmatpush1.msra.mxu0 %v1634
    %1757 = vmatprep.subr.mxu0 %v1631
    %1758 = vmatpush1.msra.mxu0 %v1630
    %1759 = vmatprep.subr.mxu0 %v1627
    %1760 = vmatpush1.msra.mxu0 %v1626
    %1761 = vmatprep.subr.mxu0 %v1623
    %1762 = vmatpush1.msra.mxu0 %v1622
    %1763 = vmatprep.subr.mxu0 %v1619
    %1764 = vmatpush1.msra.mxu0 %v1618
    %1765 = vmatprep.subr.mxu0 %v1615
    %1766 = vmatpush1.msra.mxu0 %v1614
    %1767 = vmatprep.subr.mxu0 %v1611
    %1768 = vmatpush1.msra.mxu0 %v1610
    %1769 = vmatprep.subr.mxu0 %v1607
    %1770 = vmatpush1.msra.mxu0 %v1606
    %1771 = vmatprep.subr.mxu0 0.0
    %1772 = vmatpush2.msra.mxu0 0.0
    %1773 = vmatprep.subr.mxu0 0.0
    %1774 = vmatpush2.msra.mxu0 0.0
    %1775 = vmatprep.subr.mxu0 0.0
    %1776 = vmatpush2.msra.mxu0 0.0
    %1777 = vmatprep.subr.mxu0 0.0
    %1778 = vmatpush2.msra.mxu0 0.0
    %1779 = vmatprep.subr.mxu0 0.0
    %1780 = vmatpush2.msra.mxu0 0.0
    %1781 = vmatprep.subr.mxu0 0.0
    %1782 = vmatpush2.msra.mxu0 0.0
    %1783 = vmatprep.subr.mxu0 0.0
    %1784 = vmatpush2.msra.mxu0 0.0
    %1785 = vmatprep.subr.mxu0 0.0
    %1786 = vmatpush2.msra.mxu0 0.0
    %1787 = vmatprep.subr.mxu0 0.0
    %1788 = vmatpush2.msra.mxu0 0.0
    %1789 = vmatprep.subr.mxu0 0.0
    %1790 = vmatpush2.msra.mxu0 0.0
    %1791 = vmatprep.subr.mxu0 0.0
    %1792 = vmatpush2.msra.mxu0 0.0
    %1793 = vmatprep.subr.mxu0 0.0
    %1794 = vmatpush2.msra.mxu0 0.0
    %1795 = vmatprep.subr.mxu0 0.0
    %1796 = vmatpush2.msra.mxu0 0.0
    %1797 = vmatprep.subr.mxu0 0.0
    %1798 = vmatpush2.msra.mxu0 0.0
    %1799 = vmatprep.subr.mxu0 0.0
    %1800 = vmatpush2.msra.mxu0 0.0
    %1801 = vmatprep.subr.mxu0 0.0
    %1802 = vmatpush2.msra.mxu0 0.0
    %1803 = vmatprep.mubr.f32.mxu0 0.0
    %1804 = vmatmul.mubr.f32.gmra.mxu0 %v1191
    %v1805 = vpop.f32.mrf.mxu0
    %v1806 = vadd.f32 0.0, %v1805
    %v1807 = vpop.f32.mrf.mxu0
    %v1808 = vadd.f32 0.0, %v1807
    %1809 = vdwg.mxu0
    %v1814 = vcombine.low %v1735, %v1737
    %v1815 = vcombine.low %v1806, %v1808
    %v1817 = vunpack.c.l.s4 1966171168
    %v1818 = vunpack.c.0.s8 %v1817
    %v1819 = vlaneseq
    %v1820 = vshrl.u32 %v1819, 7
    %v1821 = vsub.s32 %v1818, %v1820
    %v1822 = vrot.slane %v1814, %v1821
    %v1824 = vunpack.c.l.s4 1966171168
    %v1825 = vunpack.c.0.s8 %v1824
    %v1826 = vlaneseq
    %v1827 = vshrl.u32 %v1826, 7
    %v1828 = vsub.s32 %v1825, %v1827
    %v1829 = vrot.slane %v1815, %v1828
    %v1830 = vcombine.low %v1822, %v1829
    %v1831 = vcombine.high %v1822, %v1829
    %v1833 = vunpack.c.l.s4 1966171168
    %v1834 = vunpack.c.0.s8 %v1833
    %v1835 = vlaneseq
    %v1836 = vshrl.u32 %v1835, 7
    %v1837 = vsub.s32 %v1834, %v1836
    %v1838 = vrot.slane %v1830, %v1837
    %v1840 = vunpack.c.l.s4 1966171168
    %v1841 = vunpack.c.0.s8 %v1840
    %v1842 = vlaneseq
    %v1843 = vshrl.u32 %v1842, 7
    %v1844 = vsub.s32 %v1841, %v1843
    %v1845 = vrot.slane %v1831, %v1844
    %v1848 = vadd.f32 %v1601, %v1838
    %v1849 = vadd.f32 %v1603, %v1845
    %v1850 = vxor.u32 %v1848, 2147483648
    %v1851 = vxor.u32 %v1849, 2147483648
    %v1852 = vmul.f32 %v1850, 1.442695
    %v1853 = vpow.pop %v1852
    %v1854 = vmul.f32 %v1851, 1.442695
    %v1855 = vpow.pop %v1854
    %v1856 = vadd.f32 %v1853, 1.0
    %v1857 = vadd.f32 %v1855, 1.0
    %v1858 = vrcp.pop %v1856
    %v1859 = vmul.f32 1.0, %v1858
    %v1860 = vrcp.pop %v1857
    %v1861 = vmul.f32 1.0, %v1860
    %v1864 = vrot.slane %v1848, 1
    %v1865 = vrot.slane %v1849, 1
    %v1868 = vxor.u32 %v1864, 2147483648
    %v1869 = vxor.u32 %v1865, 2147483648
    %v1870 = vmul.f32 %v1868, 1.442695
    %v1871 = vpow.pop %v1870
    %v1872 = vmul.f32 %v1869, 1.442695
    %v1873 = vpow.pop %v1872
    %v1874 = vadd.f32 %v1871, 1.0
    %v1875 = vadd.f32 %v1873, 1.0
    %v1876 = vrcp.pop %v1874
    %v1877 = vmul.f32 1.0, %v1876
    %v1878 = vrcp.pop %v1875
    %v1879 = vmul.f32 1.0, %v1878
    %v1880 = vrot.slane %v1848, 2
    %v1881 = vrot.slane %v1849, 2
    %v1884 = vtanh.pop %v1880
    %v1885 = vtanh.pop %v1881
    %v1886 = vrot.slane %v1848, 3
    %v1887 = vrot.slane %v1849, 3
    %v1890 = vxor.u32 %v1886, 2147483648
    %v1891 = vxor.u32 %v1887, 2147483648
    %v1892 = vmul.f32 %v1890, 1.442695
    %v1893 = vpow.pop %v1892
    %v1894 = vmul.f32 %v1891, 1.442695
    %v1895 = vpow.pop %v1894
    %v1896 = vadd.f32 %v1893, 1.0
    %v1897 = vadd.f32 %v1895, 1.0
    %v1898 = vrcp.pop %v1896
    %v1899 = vmul.f32 1.0, %v1898
    %v1900 = vrcp.pop %v1897
    %v1901 = vmul.f32 1.0, %v1900
    %v1902 = vmul.f32 %v1877, %v1169
    %v1903 = vmul.f32 %v1879, %v1170
    %v1904 = vmul.f32 %v1859, %v1884
    %v1905 = vmul.f32 %v1861, %v1885
    %v1906 = vadd.f32 %v1902, %v1904
    %v1907 = vadd.f32 %v1903, %v1905
    %v1908 = vtanh.pop %v1906
    %v1909 = vtanh.pop %v1907
    %v1910 = vmul.f32 %v1899, %v1908
    %v1911 = vmul.f32 %v1901, %v1909
    %v1914 = vcombine.low %v1910, %v1911
    %v1916 = vunpack.c.l.s4 1966171168
    %v1917 = vunpack.c.0.s8 %v1916
    %v1918 = vlaneseq
    %v1919 = vshrl.u32 %v1918, 7
    %v1920 = vsub.s32 %v1917, %v1919
    %v1921 = vrot.slane %v1914, %v1920
    %v1923 = vunpack.c.l.s4 1966171168
    %v1924 = vunpack.c.0.s8 %v1923
    %v1925 = vlaneseq
    %v1926 = vshrl.u32 %v1925, 7
    %v1927 = vsub.s32 %v1924, %v1926
    %v1928 = vrot.slane %v1921, %v1927
    %v1930 = vld [vmem:[#allocation7] sm:$0xff]
    %v1931 = vld [vmem:[#allocation7 + $0x8] sm:$0xff]
    %v1932 = vld [vmem:[#allocation7 + $0x10] sm:$0xff]
    %v1933 = vld [vmem:[#allocation7 + $0x18] sm:$0xff]
    %v1934 = vld [vmem:[#allocation7 + $0x20] sm:$0xff]
    %v1935 = vld [vmem:[#allocation7 + $0x28] sm:$0xff]
    %v1936 = vld [vmem:[#allocation7 + $0x30] sm:$0xff]
    %v1937 = vld [vmem:[#allocation7 + $0x38] sm:$0xff]
    %v1938 = vld [vmem:[#allocation7 + $0x40] sm:$0xff]
    %v1939 = vld [vmem:[#allocation7 + $0x48] sm:$0xff]
    %v1940 = vld [vmem:[#allocation7 + $0x50] sm:$0xff]
    %v1941 = vld [vmem:[#allocation7 + $0x58] sm:$0xff]
    %v1942 = vld [vmem:[#allocation7 + $0x60] sm:$0xff]
    %v1943 = vld [vmem:[#allocation7 + $0x68] sm:$0xff]
    %v1944 = vld [vmem:[#allocation7 + $0x70] sm:$0xff]
    %v1945 = vld [vmem:[#allocation7 + $0x78] sm:$0xff]
    %v1946 = vld [vmem:[#allocation7 + $0x80] sm:$0xff]
    %v1947 = vld [vmem:[#allocation7 + $0x88] sm:$0xff]
    %v1948 = vld [vmem:[#allocation7 + $0x90] sm:$0xff]
    %v1949 = vld [vmem:[#allocation7 + $0x98] sm:$0xff]
    %v1950 = vld [vmem:[#allocation7 + $0xa0] sm:$0xff]
    %v1951 = vld [vmem:[#allocation7 + $0xa8] sm:$0xff]
    %v1952 = vld [vmem:[#allocation7 + $0xb0] sm:$0xff]
    %v1953 = vld [vmem:[#allocation7 + $0xb8] sm:$0xff]
    %v1954 = vld [vmem:[#allocation7 + $0xc0] sm:$0xff]
    %v1955 = vld [vmem:[#allocation7 + $0xc8] sm:$0xff]
    %v1956 = vld [vmem:[#allocation7 + $0xd0] sm:$0xff]
    %v1957 = vld [vmem:[#allocation7 + $0xd8] sm:$0xff]
    %v1958 = vld [vmem:[#allocation7 + $0xe0] sm:$0xff]
    %v1959 = vld [vmem:[#allocation7 + $0xe8] sm:$0xff]
    %v1960 = vld [vmem:[#allocation7 + $0xf0] sm:$0xff]
    %v1961 = vld [vmem:[#allocation7 + $0xf8] sm:$0xff]
    %v1962 = vld [vmem:[#allocation7 + $0x100] sm:$0xff]
    %v1963 = vld [vmem:[#allocation7 + $0x108] sm:$0xff]
    %v1964 = vld [vmem:[#allocation7 + $0x110] sm:$0xff]
    %v1965 = vld [vmem:[#allocation7 + $0x118] sm:$0xff]
    %v1966 = vld [vmem:[#allocation7 + $0x120] sm:$0xff]
    %v1967 = vld [vmem:[#allocation7 + $0x128] sm:$0xff]
    %v1968 = vld [vmem:[#allocation7 + $0x130] sm:$0xff]
    %v1969 = vld [vmem:[#allocation7 + $0x138] sm:$0xff]
    %v1970 = vld [vmem:[#allocation7 + $0x140] sm:$0xff]
    %v1971 = vld [vmem:[#allocation7 + $0x148] sm:$0xff]
    %v1972 = vld [vmem:[#allocation7 + $0x150] sm:$0xff]
    %v1973 = vld [vmem:[#allocation7 + $0x158] sm:$0xff]
    %v1974 = vld [vmem:[#allocation7 + $0x160] sm:$0xff]
    %v1975 = vld [vmem:[#allocation7 + $0x168] sm:$0xff]
    %v1976 = vld [vmem:[#allocation7 + $0x170] sm:$0xff]
    %v1977 = vld [vmem:[#allocation7 + $0x178] sm:$0xff]
    %v1978 = vld [vmem:[#allocation7 + $0x180] sm:$0xff]
    %v1979 = vld [vmem:[#allocation7 + $0x188] sm:$0xff]
    %v1980 = vld [vmem:[#allocation7 + $0x190] sm:$0xff]
    %v1981 = vld [vmem:[#allocation7 + $0x198] sm:$0xff]
    %v1982 = vld [vmem:[#allocation7 + $0x1a0] sm:$0xff]
    %v1983 = vld [vmem:[#allocation7 + $0x1a8] sm:$0xff]
    %v1984 = vld [vmem:[#allocation7 + $0x1b0] sm:$0xff]
    %v1985 = vld [vmem:[#allocation7 + $0x1b8] sm:$0xff]
    %v1986 = vld [vmem:[#allocation7 + $0x1c0] sm:$0xff]
    %v1987 = vld [vmem:[#allocation7 + $0x1c8] sm:$0xff]
    %v1988 = vld [vmem:[#allocation7 + $0x1d0] sm:$0xff]
    %v1989 = vld [vmem:[#allocation7 + $0x1d8] sm:$0xff]
    %v1990 = vld [vmem:[#allocation7 + $0x1e0] sm:$0xff]
    %v1991 = vld [vmem:[#allocation7 + $0x1e8] sm:$0xff]
    %v1992 = vld [vmem:[#allocation7 + $0x1f0] sm:$0xff]
    %v1993 = vld [vmem:[#allocation7 + $0x1f8] sm:$0xff]
    %v1994 = vld [vmem:[#allocation7 + $0x200] sm:$0xff]
    %v1995 = vld [vmem:[#allocation7 + $0x208] sm:$0xff]
    %v1996 = vld [vmem:[#allocation7 + $0x210] sm:$0xff]
    %v1997 = vld [vmem:[#allocation7 + $0x218] sm:$0xff]
    %v1998 = vld [vmem:[#allocation7 + $0x220] sm:$0xff]
    %v1999 = vld [vmem:[#allocation7 + $0x228] sm:$0xff]
    %v2000 = vld [vmem:[#allocation7 + $0x230] sm:$0xff]
    %v2001 = vld [vmem:[#allocation7 + $0x238] sm:$0xff]
    %v2002 = vld [vmem:[#allocation7 + $0x240] sm:$0xff]
    %v2003 = vld [vmem:[#allocation7 + $0x248] sm:$0xff]
    %v2004 = vld [vmem:[#allocation7 + $0x250] sm:$0xff]
    %v2005 = vld [vmem:[#allocation7 + $0x258] sm:$0xff]
    %v2006 = vld [vmem:[#allocation7 + $0x260] sm:$0xff]
    %v2007 = vld [vmem:[#allocation7 + $0x268] sm:$0xff]
    %v2008 = vld [vmem:[#allocation7 + $0x270] sm:$0xff]
    %v2009 = vld [vmem:[#allocation7 + $0x278] sm:$0xff]
    %v2010 = vld [vmem:[#allocation7 + $0x280] sm:$0xff]
    %v2011 = vld [vmem:[#allocation7 + $0x288] sm:$0xff]
    %v2012 = vld [vmem:[#allocation7 + $0x290] sm:$0xff]
    %v2013 = vld [vmem:[#allocation7 + $0x298] sm:$0xff]
    %v2014 = vld [vmem:[#allocation7 + $0x2a0] sm:$0xff]
    %v2015 = vld [vmem:[#allocation7 + $0x2a8] sm:$0xff]
    %v2016 = vld [vmem:[#allocation7 + $0x2b0] sm:$0xff]
    %v2017 = vld [vmem:[#allocation7 + $0x2b8] sm:$0xff]
    %v2018 = vld [vmem:[#allocation7 + $0x2c0] sm:$0xff]
    %v2019 = vld [vmem:[#allocation7 + $0x2c8] sm:$0xff]
    %v2020 = vld [vmem:[#allocation7 + $0x2d0] sm:$0xff]
    %v2021 = vld [vmem:[#allocation7 + $0x2d8] sm:$0xff]
    %v2022 = vld [vmem:[#allocation7 + $0x2e0] sm:$0xff]
    %v2023 = vld [vmem:[#allocation7 + $0x2e8] sm:$0xff]
    %v2024 = vld [vmem:[#allocation7 + $0x2f0] sm:$0xff]
    %v2025 = vld [vmem:[#allocation7 + $0x2f8] sm:$0xff]
    %v2026 = vld [vmem:[#allocation7 + $0x300] sm:$0xff]
    %v2027 = vld [vmem:[#allocation7 + $0x308] sm:$0xff]
    %v2028 = vld [vmem:[#allocation7 + $0x310] sm:$0xff]
    %v2029 = vld [vmem:[#allocation7 + $0x318] sm:$0xff]
    %v2030 = vld [vmem:[#allocation7 + $0x320] sm:$0xff]
    %v2031 = vld [vmem:[#allocation7 + $0x328] sm:$0xff]
    %v2032 = vld [vmem:[#allocation7 + $0x330] sm:$0xff]
    %v2033 = vld [vmem:[#allocation7 + $0x338] sm:$0xff]
    %v2034 = vld [vmem:[#allocation7 + $0x340] sm:$0xff]
    %v2035 = vld [vmem:[#allocation7 + $0x348] sm:$0xff]
    %v2036 = vld [vmem:[#allocation7 + $0x350] sm:$0xff]
    %v2037 = vld [vmem:[#allocation7 + $0x358] sm:$0xff]
    %v2038 = vld [vmem:[#allocation7 + $0x360] sm:$0xff]
    %v2039 = vld [vmem:[#allocation7 + $0x368] sm:$0xff]
    %v2040 = vld [vmem:[#allocation7 + $0x370] sm:$0xff]
    %v2041 = vld [vmem:[#allocation7 + $0x378] sm:$0xff]
    %v2042 = vld [vmem:[#allocation7 + $0x380] sm:$0xff]
    %v2043 = vld [vmem:[#allocation7 + $0x388] sm:$0xff]
    %v2044 = vld [vmem:[#allocation7 + $0x390] sm:$0xff]
    %v2045 = vld [vmem:[#allocation7 + $0x398] sm:$0xff]
    %v2046 = vld [vmem:[#allocation7 + $0x3a0] sm:$0xff]
    %v2047 = vld [vmem:[#allocation7 + $0x3a8] sm:$0xff]
    %v2048 = vld [vmem:[#allocation7 + $0x3b0] sm:$0xff]
    %v2049 = vld [vmem:[#allocation7 + $0x3b8] sm:$0xff]
    %v2050 = vld [vmem:[#allocation7 + $0x3c0] sm:$0xff]
    %v2051 = vld [vmem:[#allocation7 + $0x3c8] sm:$0xff]
    %v2052 = vld [vmem:[#allocation7 + $0x3d0] sm:$0xff]
    %v2053 = vld [vmem:[#allocation7 + $0x3d8] sm:$0xff]
    %v2054 = vld [vmem:[#allocation7 + $0x3e0] sm:$0xff]
    %v2055 = vld [vmem:[#allocation7 + $0x3e8] sm:$0xff]
    %v2056 = vld [vmem:[#allocation7 + $0x3f0] sm:$0xff]
    %v2057 = vld [vmem:[#allocation7 + $0x3f8] sm:$0xff]
    %2058 = vmatprep.subr.mxu0 %v1991
    %2059 = vmatpush1.msra.mxu0 %v1990
    %2060 = vmatprep.subr.mxu0 %v1987
    %2061 = vmatpush1.msra.mxu0 %v1986
    %2062 = vmatprep.subr.mxu0 %v1983
    %2063 = vmatpush1.msra.mxu0 %v1982
    %2064 = vmatprep.subr.mxu0 %v1979
    %2065 = vmatpush1.msra.mxu0 %v1978
    %2066 = vmatprep.subr.mxu0 %v1975
    %2067 = vmatpush1.msra.mxu0 %v1974
    %2068 = vmatprep.subr.mxu0 %v1971
    %2069 = vmatpush1.msra.mxu0 %v1970
    %2070 = vmatprep.subr.mxu0 %v1967
    %2071 = vmatpush1.msra.mxu0 %v1966
    %2072 = vmatprep.subr.mxu0 %v1963
    %2073 = vmatpush1.msra.mxu0 %v1962
    %2074 = vmatprep.subr.mxu0 %v1959
    %2075 = vmatpush1.msra.mxu0 %v1958
    %2076 = vmatprep.subr.mxu0 %v1955
    %2077 = vmatpush1.msra.mxu0 %v1954
    %2078 = vmatprep.subr.mxu0 %v1951
    %2079 = vmatpush1.msra.mxu0 %v1950
    %2080 = vmatprep.subr.mxu0 %v1947
    %2081 = vmatpush1.msra.mxu0 %v1946
    %2082 = vmatprep.subr.mxu0 %v1943
    %2083 = vmatpush1.msra.mxu0 %v1942
    %2084 = vmatprep.subr.mxu0 %v1939
    %2085 = vmatpush1.msra.mxu0 %v1938
    %2086 = vmatprep.subr.mxu0 %v1935
    %2087 = vmatpush1.msra.mxu0 %v1934
    %2088 = vmatprep.subr.mxu0 %v1931
    %2089 = vmatpush1.msra.mxu0 %v1930
    %2090 = vmatprep.subr.mxu0 %v2055
    %2091 = vmatpush2.msra.mxu0 %v2054
    %2092 = vmatprep.subr.mxu0 %v2051
    %2093 = vmatpush2.msra.mxu0 %v2050
    %2094 = vmatprep.subr.mxu0 %v2047
    %2095 = vmatpush2.msra.mxu0 %v2046
    %2096 = vmatprep.subr.mxu0 %v2043
    %2097 = vmatpush2.msra.mxu0 %v2042
    %2098 = vmatprep.subr.mxu0 %v2039
    %2099 = vmatpush2.msra.mxu0 %v2038
    %2100 = vmatprep.subr.mxu0 %v2035
    %2101 = vmatpush2.msra.mxu0 %v2034
    %2102 = vmatprep.subr.mxu0 %v2031
    %2103 = vmatpush2.msra.mxu0 %v2030
    %2104 = vmatprep.subr.mxu0 %v2027
    %2105 = vmatpush2.msra.mxu0 %v2026
    %2106 = vmatprep.subr.mxu0 %v2023
    %2107 = vmatpush2.msra.mxu0 %v2022
    %2108 = vmatprep.subr.mxu0 %v2019
    %2109 = vmatpush2.msra.mxu0 %v2018
    %2110 = vmatprep.subr.mxu0 %v2015
    %2111 = vmatpush2.msra.mxu0 %v2014
    %2112 = vmatprep.subr.mxu0 %v2011
    %2113 = vmatpush2.msra.mxu0 %v2010
    %2114 = vmatprep.subr.mxu0 %v2007
    %2115 = vmatpush2.msra.mxu0 %v2006
    %2116 = vmatprep.subr.mxu0 %v2003
    %2117 = vmatpush2.msra.mxu0 %v2002
    %2118 = vmatprep.subr.mxu0 %v1999
    %2119 = vmatpush2.msra.mxu0 %v1998
    %2120 = vmatprep.subr.mxu0 %v1995
    %2121 = vmatpush2.msra.mxu0 %v1994
    %2122 = vmatprep.mubr.f32.mxu0 %v1486
    %2123 = vmatmul.mubr.f32.gmra.mxu0 %v1928
    %v2124 = vpop.f32.mrf.mxu0
    %v2125 = vadd.f32 %v561, %v2124
    %v2126 = vpop.f32.mrf.mxu0
    %v2127 = vadd.f32 %v565, %v2126
    %2128 = vdwg.mxu0
    %2129 = vmatprep.subr.mxu0 %v1993
    %2130 = vmatpush1.msra.mxu0 %v1992
    %2131 = vmatprep.subr.mxu0 %v1989
    %2132 = vmatpush1.msra.mxu0 %v1988
    %2133 = vmatprep.subr.mxu0 %v1985
    %2134 = vmatpush1.msra.mxu0 %v1984
    %2135 = vmatprep.subr.mxu0 %v1981
    %2136 = vmatpush1.msra.mxu0 %v1980
    %2137 = vmatprep.subr.mxu0 %v1977
    %2138 = vmatpush1.msra.mxu0 %v1976
    %2139 = vmatprep.subr.mxu0 %v1973
    %2140 = vmatpush1.msra.mxu0 %v1972
    %2141 = vmatprep.subr.mxu0 %v1969
    %2142 = vmatpush1.msra.mxu0 %v1968
    %2143 = vmatprep.subr.mxu0 %v1965
    %2144 = vmatpush1.msra.mxu0 %v1964
    %2145 = vmatprep.subr.mxu0 %v1961
    %2146 = vmatpush1.msra.mxu0 %v1960
    %2147 = vmatprep.subr.mxu0 %v1957
    %2148 = vmatpush1.msra.mxu0 %v1956
    %2149 = vmatprep.subr.mxu0 %v1953
    %2150 = vmatpush1.msra.mxu0 %v1952
    %2151 = vmatprep.subr.mxu0 %v1949
    %2152 = vmatpush1.msra.mxu0 %v1948
    %2153 = vmatprep.subr.mxu0 %v1945
    %2154 = vmatpush1.msra.mxu0 %v1944
    %2155 = vmatprep.subr.mxu0 %v1941
    %2156 = vmatpush1.msra.mxu0 %v1940
    %2157 = vmatprep.subr.mxu0 %v1937
    %2158 = vmatpush1.msra.mxu0 %v1936
    %2159 = vmatprep.subr.mxu0 %v1933
    %2160 = vmatpush1.msra.mxu0 %v1932
    %2161 = vmatprep.subr.mxu0 %v2057
    %2162 = vmatpush2.msra.mxu0 %v2056
    %2163 = vmatprep.subr.mxu0 %v2053
    %2164 = vmatpush2.msra.mxu0 %v2052
    %2165 = vmatprep.subr.mxu0 %v2049
    %2166 = vmatpush2.msra.mxu0 %v2048
    %2167 = vmatprep.subr.mxu0 %v2045
    %2168 = vmatpush2.msra.mxu0 %v2044
    %2169 = vmatprep.subr.mxu0 %v2041
    %2170 = vmatpush2.msra.mxu0 %v2040
    %2171 = vmatprep.subr.mxu0 %v2037
    %2172 = vmatpush2.msra.mxu0 %v2036
    %2173 = vmatprep.subr.mxu0 %v2033
    %2174 = vmatpush2.msra.mxu0 %v2032
    %2175 = vmatprep.subr.mxu0 %v2029
    %2176 = vmatpush2.msra.mxu0 %v2028
    %2177 = vmatprep.subr.mxu0 %v2025
    %2178 = vmatpush2.msra.mxu0 %v2024
    %2179 = vmatprep.subr.mxu0 %v2021
    %2180 = vmatpush2.msra.mxu0 %v2020
    %2181 = vmatprep.subr.mxu0 %v2017
    %2182 = vmatpush2.msra.mxu0 %v2016
    %2183 = vmatprep.subr.mxu0 %v2013
    %2184 = vmatpush2.msra.mxu0 %v2012
    %2185 = vmatprep.subr.mxu0 %v2009
    %2186 = vmatpush2.msra.mxu0 %v2008
    %2187 = vmatprep.subr.mxu0 %v2005
    %2188 = vmatpush2.msra.mxu0 %v2004
    %2189 = vmatprep.subr.mxu0 %v2001
    %2190 = vmatpush2.msra.mxu0 %v2000
    %2191 = vmatprep.subr.mxu0 %v1997
    %2192 = vmatpush2.msra.mxu0 %v1996
    %2193 = vmatprep.mubr.f32.mxu0 %v1486
    %2194 = vmatmul.mubr.f32.gmra.mxu0 %v1928
    %v2195 = vpop.f32.mrf.mxu0
    %v2196 = vadd.f32 %v569, %v2195
    %v2197 = vpop.f32.mrf.mxu0
    %v2198 = vadd.f32 %v573, %v2197
    %2199 = vdwg.mxu0
    %v2200 = vxor.u32 %v2125, 2147483648
    %v2201 = vmul.f32 %v2200, 1.442695
    %v2202 = vpow.pop %v2201
    %v2203 = vadd.f32 %v2202, 1.0
    %v2204 = vrcp.pop %v2203
    %v2205 = vmul.f32 1.0, %v2204
    %v2206 = vxor.u32 %v2127, 2147483648
    %v2207 = vmul.f32 %v2206, 1.442695
    %v2208 = vpow.pop %v2207
    %v2209 = vadd.f32 %v2208, 1.0
    %v2210 = vrcp.pop %v2209
    %v2211 = vmul.f32 1.0, %v2210
    %v2212 = vtanh.pop %v2196
    %v2213 = vxor.u32 %v2198, 2147483648
    %v2214 = vmul.f32 %v2213, 1.442695
    %v2215 = vpow.pop %v2214
    %v2216 = vadd.f32 %v2215, 1.0
    %v2217 = vrcp.pop %v2216
    %v2218 = vmul.f32 1.0, %v2217
    %v2219 = vmul.f32 %v2211, %v1484
    %v2220 = vmul.f32 %v2205, %v2212
    %v2221 = vadd.f32 %v2219, %v2220
    %v2222 = vtanh.pop %v2221
    %v2223 = vmul.f32 %v2218, %v2222
    %v2224 = vld [vmem:[#allocation9] sm:$0xff]
    %v2225 = vld [vmem:[#allocation9 + $0x8] sm:$0xff]
    %v2226 = vld [vmem:[#allocation9 + $0x10] sm:$0xff]
    %v2227 = vld [vmem:[#allocation9 + $0x18] sm:$0xff]
    %v2228 = vld [vmem:[#allocation9 + $0x20] sm:$0xff]
    %v2229 = vld [vmem:[#allocation9 + $0x28] sm:$0xff]
    %v2230 = vld [vmem:[#allocation9 + $0x30] sm:$0xff]
    %v2231 = vld [vmem:[#allocation9 + $0x38] sm:$0xff]
    %v2232 = vld [vmem:[#allocation9 + $0x40] sm:$0xff]
    %v2233 = vld [vmem:[#allocation9 + $0x48] sm:$0xff]
    %v2234 = vld [vmem:[#allocation9 + $0x50] sm:$0xff]
    %v2235 = vld [vmem:[#allocation9 + $0x58] sm:$0xff]
    %v2236 = vld [vmem:[#allocation9 + $0x60] sm:$0xff]
    %v2237 = vld [vmem:[#allocation9 + $0x68] sm:$0xff]
    %v2238 = vld [vmem:[#allocation9 + $0x70] sm:$0xff]
    %v2239 = vld [vmem:[#allocation9 + $0x78] sm:$0xff]
    %2240 = vmatprep.subr.mxu0 0.0
    %2241 = vmatpush1.msra.mxu0 %v2239
    %2242 = vmatprep.subr.mxu0 0.0
    %2243 = vmatpush1.msra.mxu0 %v2238
    %2244 = vmatprep.subr.mxu0 0.0
    %2245 = vmatpush1.msra.mxu0 %v2237
    %2246 = vmatprep.subr.mxu0 0.0
    %2247 = vmatpush1.msra.mxu0 %v2236
    %2248 = vmatprep.subr.mxu0 0.0
    %2249 = vmatpush1.msra.mxu0 %v2235
    %2250 = vmatprep.subr.mxu0 0.0
    %2251 = vmatpush1.msra.mxu0 %v2234
    %2252 = vmatprep.subr.mxu0 0.0
    %2253 = vmatpush1.msra.mxu0 %v2233
    %2254 = vmatprep.subr.mxu0 0.0
    %2255 = vmatpush1.msra.mxu0 %v2232
    %2256 = vmatprep.subr.mxu0 0.0
    %2257 = vmatpush1.msra.mxu0 %v2231
    %2258 = vmatprep.subr.mxu0 0.0
    %2259 = vmatpush1.msra.mxu0 %v2230
    %2260 = vmatprep.subr.mxu0 0.0
    %2261 = vmatpush1.msra.mxu0 %v2229
    %2262 = vmatprep.subr.mxu0 0.0
    %2263 = vmatpush1.msra.mxu0 %v2228
    %2264 = vmatprep.subr.mxu0 0.0
    %2265 = vmatpush1.msra.mxu0 %v2227
    %2266 = vmatprep.subr.mxu0 0.0
    %2267 = vmatpush1.msra.mxu0 %v2226
    %2268 = vmatprep.subr.mxu0 0.0
    %2269 = vmatpush1.msra.mxu0 %v2225
    %2270 = vmatprep.subr.mxu0 0.0
    %2271 = vmatpush1.msra.mxu0 %v2224
    %2272 = vmatprep.subr.mxu0 0.0
    %2273 = vmatpush2.msra.mxu0 0.0
    %2274 = vmatprep.subr.mxu0 0.0
    %2275 = vmatpush2.msra.mxu0 0.0
    %2276 = vmatprep.subr.mxu0 0.0
    %2277 = vmatpush2.msra.mxu0 0.0
    %2278 = vmatprep.subr.mxu0 0.0
    %2279 = vmatpush2.msra.mxu0 0.0
    %2280 = vmatprep.subr.mxu0 0.0
    %2281 = vmatpush2.msra.mxu0 0.0
    %2282 = vmatprep.subr.mxu0 0.0
    %2283 = vmatpush2.msra.mxu0 0.0
    %2284 = vmatprep.subr.mxu0 0.0
    %2285 = vmatpush2.msra.mxu0 0.0
    %2286 = vmatprep.subr.mxu0 0.0
    %2287 = vmatpush2.msra.mxu0 0.0
    %2288 = vmatprep.subr.mxu0 0.0
    %2289 = vmatpush2.msra.mxu0 0.0
    %2290 = vmatprep.subr.mxu0 0.0
    %2291 = vmatpush2.msra.mxu0 0.0
    %2292 = vmatprep.subr.mxu0 0.0
    %2293 = vmatpush2.msra.mxu0 0.0
    %2294 = vmatprep.subr.mxu0 0.0
    %2295 = vmatpush2.msra.mxu0 0.0
    %2296 = vmatprep.subr.mxu0 0.0
    %2297 = vmatpush2.msra.mxu0 0.0
    %2298 = vmatprep.subr.mxu0 0.0
    %2299 = vmatpush2.msra.mxu0 0.0
    %2300 = vmatprep.subr.mxu0 0.0
    %2301 = vmatpush2.msra.mxu0 0.0
    %2302 = vmatprep.subr.mxu0 0.0
    %2303 = vmatpush2.msra.mxu0 0.0
    %2304 = vmatprep.mubr.f32.mxu0 0.0
    %2305 = vmatmul.mubr.f32.gmra.mxu0 %v2223
    %v2306 = vpop.f32.mrf.mxu0
    %v2307 = vadd.f32 %v764, %v2306
    %v2308 = vpop.f32.mrf.mxu0
    %2309 = vdwg.mxu0
    %v2312 = vunpack.c.l.s4 1966171168
    %v2313 = vunpack.c.0.s8 %v2312
    %v2314 = vlaneseq
    %v2315 = vshrl.u32 %v2314, 7
    %v2316 = vsub.s32 %v2313, %v2315
    %v2317 = vrot.slane %v2307, %v2316
    %v2318 = vcombine.high %v2317, %v2317
    %v2320 = vunpack.c.l.s4 1966171168
    %v2321 = vunpack.c.0.s8 %v2320
    %v2322 = vlaneseq
    %v2323 = vshrl.u32 %v2322, 7
    %v2324 = vsub.s32 %v2321, %v2323
    %v2325 = vrot.slane %v2317, %v2324
    %v2327 = vunpack.c.l.s4 1966171168
    %v2328 = vunpack.c.0.s8 %v2327
    %v2329 = vlaneseq
    %v2330 = vshrl.u32 %v2329, 7
    %v2331 = vsub.s32 %v2328, %v2330
    %v2332 = vrot.slane %v2318, %v2331
    %2335 = vst [vmem:[%s8 + $0x2] sm:$0x1] %v2325
    %2336 = vst [vmem:[%s8 + $0x12] sm:$0x1] %v2332
    %s2337 = scalar_lea.vmem [#allocation2], 3
    %v2338 = vld [vmem:[%s2337] ss:$8 sm:$0xf]
    %s2339 = scalar_lea.vmem [#allocation2], 35
    %v2340 = vld [vmem:[%s2339] ss:$8 sm:$0xf]
    %v2341 = vld [vmem:[#allocation4] sm:$0xff]
    %v2342 = vld [vmem:[#allocation4 + $0x8] sm:$0xff]
    %v2343 = vld [vmem:[#allocation4 + $0x10] sm:$0xff]
    %v2344 = vld [vmem:[#allocation4 + $0x18] sm:$0xff]
    %v2345 = vld [vmem:[#allocation4 + $0x20] sm:$0xff]
    %v2346 = vld [vmem:[#allocation4 + $0x28] sm:$0xff]
    %v2347 = vld [vmem:[#allocation4 + $0x30] sm:$0xff]
    %v2348 = vld [vmem:[#allocation4 + $0x38] sm:$0xff]
    %v2349 = vld [vmem:[#allocation4 + $0x40] sm:$0xff]
    %v2350 = vld [vmem:[#allocation4 + $0x48] sm:$0xff]
    %v2351 = vld [vmem:[#allocation4 + $0x50] sm:$0xff]
    %v2352 = vld [vmem:[#allocation4 + $0x58] sm:$0xff]
    %v2353 = vld [vmem:[#allocation4 + $0x60] sm:$0xff]
    %v2354 = vld [vmem:[#allocation4 + $0x68] sm:$0xff]
    %v2355 = vld [vmem:[#allocation4 + $0x70] sm:$0xff]
    %v2356 = vld [vmem:[#allocation4 + $0x78] sm:$0xff]
    %v2357 = vld [vmem:[#allocation4 + $0x80] sm:$0xff]
    %v2358 = vld [vmem:[#allocation4 + $0x88] sm:$0xff]
    %v2359 = vld [vmem:[#allocation4 + $0x90] sm:$0xff]
    %v2360 = vld [vmem:[#allocation4 + $0x98] sm:$0xff]
    %v2361 = vld [vmem:[#allocation4 + $0xa0] sm:$0xff]
    %v2362 = vld [vmem:[#allocation4 + $0xa8] sm:$0xff]
    %v2363 = vld [vmem:[#allocation4 + $0xb0] sm:$0xff]
    %v2364 = vld [vmem:[#allocation4 + $0xb8] sm:$0xff]
    %v2365 = vld [vmem:[#allocation4 + $0xc0] sm:$0xff]
    %v2366 = vld [vmem:[#allocation4 + $0xc8] sm:$0xff]
    %v2367 = vld [vmem:[#allocation4 + $0xd0] sm:$0xff]
    %v2368 = vld [vmem:[#allocation4 + $0xd8] sm:$0xff]
    %v2369 = vld [vmem:[#allocation4 + $0xe0] sm:$0xff]
    %v2370 = vld [vmem:[#allocation4 + $0xe8] sm:$0xff]
    %v2371 = vld [vmem:[#allocation4 + $0xf0] sm:$0xff]
    %v2372 = vld [vmem:[#allocation4 + $0xf8] sm:$0xff]
    %v2373 = vld [vmem:[#allocation4 + $0x100] sm:$0xff]
    %v2374 = vld [vmem:[#allocation4 + $0x108] sm:$0xff]
    %v2375 = vld [vmem:[#allocation4 + $0x110] sm:$0xff]
    %v2376 = vld [vmem:[#allocation4 + $0x118] sm:$0xff]
    %v2377 = vld [vmem:[#allocation4 + $0x120] sm:$0xff]
    %v2378 = vld [vmem:[#allocation4 + $0x128] sm:$0xff]
    %v2379 = vld [vmem:[#allocation4 + $0x130] sm:$0xff]
    %v2380 = vld [vmem:[#allocation4 + $0x138] sm:$0xff]
    %v2381 = vld [vmem:[#allocation4 + $0x140] sm:$0xff]
    %v2382 = vld [vmem:[#allocation4 + $0x148] sm:$0xff]
    %v2383 = vld [vmem:[#allocation4 + $0x150] sm:$0xff]
    %v2384 = vld [vmem:[#allocation4 + $0x158] sm:$0xff]
    %v2385 = vld [vmem:[#allocation4 + $0x160] sm:$0xff]
    %v2386 = vld [vmem:[#allocation4 + $0x168] sm:$0xff]
    %v2387 = vld [vmem:[#allocation4 + $0x170] sm:$0xff]
    %v2388 = vld [vmem:[#allocation4 + $0x178] sm:$0xff]
    %v2389 = vld [vmem:[#allocation4 + $0x180] sm:$0xff]
    %v2390 = vld [vmem:[#allocation4 + $0x188] sm:$0xff]
    %v2391 = vld [vmem:[#allocation4 + $0x190] sm:$0xff]
    %v2392 = vld [vmem:[#allocation4 + $0x198] sm:$0xff]
    %v2393 = vld [vmem:[#allocation4 + $0x1a0] sm:$0xff]
    %v2394 = vld [vmem:[#allocation4 + $0x1a8] sm:$0xff]
    %v2395 = vld [vmem:[#allocation4 + $0x1b0] sm:$0xff]
    %v2396 = vld [vmem:[#allocation4 + $0x1b8] sm:$0xff]
    %v2397 = vld [vmem:[#allocation4 + $0x1c0] sm:$0xff]
    %v2398 = vld [vmem:[#allocation4 + $0x1c8] sm:$0xff]
    %v2399 = vld [vmem:[#allocation4 + $0x1d0] sm:$0xff]
    %v2400 = vld [vmem:[#allocation4 + $0x1d8] sm:$0xff]
    %v2401 = vld [vmem:[#allocation4 + $0x1e0] sm:$0xff]
    %v2402 = vld [vmem:[#allocation4 + $0x1e8] sm:$0xff]
    %v2403 = vld [vmem:[#allocation4 + $0x1f0] sm:$0xff]
    %v2404 = vld [vmem:[#allocation4 + $0x1f8] sm:$0xff]
    %2405 = vmatprep.subr.mxu0 %v2402
    %2406 = vmatpush1.msra.mxu0 %v2401
    %2407 = vmatprep.subr.mxu0 %v2398
    %2408 = vmatpush1.msra.mxu0 %v2397
    %2409 = vmatprep.subr.mxu0 %v2394
    %2410 = vmatpush1.msra.mxu0 %v2393
    %2411 = vmatprep.subr.mxu0 %v2390
    %2412 = vmatpush1.msra.mxu0 %v2389
    %2413 = vmatprep.subr.mxu0 %v2386
    %2414 = vmatpush1.msra.mxu0 %v2385
    %2415 = vmatprep.subr.mxu0 %v2382
    %2416 = vmatpush1.msra.mxu0 %v2381
    %2417 = vmatprep.subr.mxu0 %v2378
    %2418 = vmatpush1.msra.mxu0 %v2377
    %2419 = vmatprep.subr.mxu0 %v2374
    %2420 = vmatpush1.msra.mxu0 %v2373
    %2421 = vmatprep.subr.mxu0 %v2370
    %2422 = vmatpush1.msra.mxu0 %v2369
    %2423 = vmatprep.subr.mxu0 %v2366
    %2424 = vmatpush1.msra.mxu0 %v2365
    %2425 = vmatprep.subr.mxu0 %v2362
    %2426 = vmatpush1.msra.mxu0 %v2361
    %2427 = vmatprep.subr.mxu0 %v2358
    %2428 = vmatpush1.msra.mxu0 %v2357
    %2429 = vmatprep.subr.mxu0 %v2354
    %2430 = vmatpush1.msra.mxu0 %v2353
    %2431 = vmatprep.subr.mxu0 %v2350
    %2432 = vmatpush1.msra.mxu0 %v2349
    %2433 = vmatprep.subr.mxu0 %v2346
    %2434 = vmatpush1.msra.mxu0 %v2345
    %2435 = vmatprep.subr.mxu0 %v2342
    %2436 = vmatpush1.msra.mxu0 %v2341
    %2437 = vmatprep.subr.mxu0 0.0
    %2438 = vmatpush2.msra.mxu0 0.0
    %2439 = vmatprep.subr.mxu0 0.0
    %2440 = vmatpush2.msra.mxu0 0.0
    %2441 = vmatprep.subr.mxu0 0.0
    %2442 = vmatpush2.msra.mxu0 0.0
    %2443 = vmatprep.subr.mxu0 0.0
    %2444 = vmatpush2.msra.mxu0 0.0
    %2445 = vmatprep.subr.mxu0 0.0
    %2446 = vmatpush2.msra.mxu0 0.0
    %2447 = vmatprep.subr.mxu0 0.0
    %2448 = vmatpush2.msra.mxu0 0.0
    %2449 = vmatprep.subr.mxu0 0.0
    %2450 = vmatpush2.msra.mxu0 0.0
    %2451 = vmatprep.subr.mxu0 0.0
    %2452 = vmatpush2.msra.mxu0 0.0
    %2453 = vmatprep.subr.mxu0 0.0
    %2454 = vmatpush2.msra.mxu0 0.0
    %2455 = vmatprep.subr.mxu0 0.0
    %2456 = vmatpush2.msra.mxu0 0.0
    %2457 = vmatprep.subr.mxu0 0.0
    %2458 = vmatpush2.msra.mxu0 0.0
    %2459 = vmatprep.subr.mxu0 0.0
    %2460 = vmatpush2.msra.mxu0 0.0
    %2461 = vmatprep.subr.mxu0 0.0
    %2462 = vmatpush2.msra.mxu0 0.0
    %2463 = vmatprep.subr.mxu0 0.0
    %2464 = vmatpush2.msra.mxu0 0.0
    %2465 = vmatprep.subr.mxu0 0.0
    %2466 = vmatpush2.msra.mxu0 0.0
    %2467 = vmatprep.subr.mxu0 0.0
    %2468 = vmatpush2.msra.mxu0 0.0
    %2469 = vmatprep.mubr.f32.mxu0 0.0
    %2470 = vmatmul.mubr.f32.gmra.mxu0 %v1928
    %v2471 = vpop.f32.mrf.mxu0
    %v2472 = vadd.f32 0.0, %v2471
    %v2473 = vpop.f32.mrf.mxu0
    %v2474 = vadd.f32 0.0, %v2473
    %2475 = vdwg.mxu0
    %2476 = vmatprep.subr.mxu0 %v2404
    %2477 = vmatpush1.msra.mxu0 %v2403
    %2478 = vmatprep.subr.mxu0 %v2400
    %2479 = vmatpush1.msra.mxu0 %v2399
    %2480 = vmatprep.subr.mxu0 %v2396
    %2481 = vmatpush1.msra.mxu0 %v2395
    %2482 = vmatprep.subr.mxu0 %v2392
    %2483 = vmatpush1.msra.mxu0 %v2391
    %2484 = vmatprep.subr.mxu0 %v2388
    %2485 = vmatpush1.msra.mxu0 %v2387
    %2486 = vmatprep.subr.mxu0 %v2384
    %2487 = vmatpush1.msra.mxu0 %v2383
    %2488 = vmatprep.subr.mxu0 %v2380
    %2489 = vmatpush1.msra.mxu0 %v2379
    %2490 = vmatprep.subr.mxu0 %v2376
    %2491 = vmatpush1.msra.mxu0 %v2375
    %2492 = vmatprep.subr.mxu0 %v2372
    %2493 = vmatpush1.msra.mxu0 %v2371
    %2494 = vmatprep.subr.mxu0 %v2368
    %2495 = vmatpush1.msra.mxu0 %v2367
    %2496 = vmatprep.subr.mxu0 %v2364
    %2497 = vmatpush1.msra.mxu0 %v2363
    %2498 = vmatprep.subr.mxu0 %v2360
    %2499 = vmatpush1.msra.mxu0 %v2359
    %2500 = vmatprep.subr.mxu0 %v2356
    %2501 = vmatpush1.msra.mxu0 %v2355
    %2502 = vmatprep.subr.mxu0 %v2352
    %2503 = vmatpush1.msra.mxu0 %v2351
    %2504 = vmatprep.subr.mxu0 %v2348
    %2505 = vmatpush1.msra.mxu0 %v2347
    %2506 = vmatprep.subr.mxu0 %v2344
    %2507 = vmatpush1.msra.mxu0 %v2343
    %2508 = vmatprep.subr.mxu0 0.0
    %2509 = vmatpush2.msra.mxu0 0.0
    %2510 = vmatprep.subr.mxu0 0.0
    %2511 = vmatpush2.msra.mxu0 0.0
    %2512 = vmatprep.subr.mxu0 0.0
    %2513 = vmatpush2.msra.mxu0 0.0
    %2514 = vmatprep.subr.mxu0 0.0
    %2515 = vmatpush2.msra.mxu0 0.0
    %2516 = vmatprep.subr.mxu0 0.0
    %2517 = vmatpush2.msra.mxu0 0.0
    %2518 = vmatprep.subr.mxu0 0.0
    %2519 = vmatpush2.msra.mxu0 0.0
    %2520 = vmatprep.subr.mxu0 0.0
    %2521 = vmatpush2.msra.mxu0 0.0
    %2522 = vmatprep.subr.mxu0 0.0
    %2523 = vmatpush2.msra.mxu0 0.0
    %2524 = vmatprep.subr.mxu0 0.0
    %2525 = vmatpush2.msra.mxu0 0.0
    %2526 = vmatprep.subr.mxu0 0.0
    %2527 = vmatpush2.msra.mxu0 0.0
    %2528 = vmatprep.subr.mxu0 0.0
    %2529 = vmatpush2.msra.mxu0 0.0
    %2530 = vmatprep.subr.mxu0 0.0
    %2531 = vmatpush2.msra.mxu0 0.0
    %2532 = vmatprep.subr.mxu0 0.0
    %2533 = vmatpush2.msra.mxu0 0.0
    %2534 = vmatprep.subr.mxu0 0.0
    %2535 = vmatpush2.msra.mxu0 0.0
    %2536 = vmatprep.subr.mxu0 0.0
    %2537 = vmatpush2.msra.mxu0 0.0
    %2538 = vmatprep.subr.mxu0 0.0
    %2539 = vmatpush2.msra.mxu0 0.0
    %2540 = vmatprep.mubr.f32.mxu0 0.0
    %2541 = vmatmul.mubr.f32.gmra.mxu0 %v1928
    %v2542 = vpop.f32.mrf.mxu0
    %v2543 = vadd.f32 0.0, %v2542
    %v2544 = vpop.f32.mrf.mxu0
    %v2545 = vadd.f32 0.0, %v2544
    %2546 = vdwg.mxu0
    %v2551 = vcombine.low %v2472, %v2474
    %v2552 = vcombine.low %v2543, %v2545
    %v2554 = vunpack.c.l.s4 1966171168
    %v2555 = vunpack.c.0.s8 %v2554
    %v2556 = vlaneseq
    %v2557 = vshrl.u32 %v2556, 7
    %v2558 = vsub.s32 %v2555, %v2557
    %v2559 = vrot.slane %v2551, %v2558
    %v2561 = vunpack.c.l.s4 1966171168
    %v2562 = vunpack.c.0.s8 %v2561
    %v2563 = vlaneseq
    %v2564 = vshrl.u32 %v2563, 7
    %v2565 = vsub.s32 %v2562, %v2564
    %v2566 = vrot.slane %v2552, %v2565
    %v2567 = vcombine.low %v2559, %v2566
    %v2568 = vcombine.high %v2559, %v2566
    %v2570 = vunpack.c.l.s4 1966171168
    %v2571 = vunpack.c.0.s8 %v2570
    %v2572 = vlaneseq
    %v2573 = vshrl.u32 %v2572, 7
    %v2574 = vsub.s32 %v2571, %v2573
    %v2575 = vrot.slane %v2567, %v2574
    %v2577 = vunpack.c.l.s4 1966171168
    %v2578 = vunpack.c.0.s8 %v2577
    %v2579 = vlaneseq
    %v2580 = vshrl.u32 %v2579, 7
    %v2581 = vsub.s32 %v2578, %v2580
    %v2582 = vrot.slane %v2568, %v2581
    %v2585 = vadd.f32 %v2338, %v2575
    %v2586 = vadd.f32 %v2340, %v2582
    %v2587 = vxor.u32 %v2585, 2147483648
    %v2588 = vxor.u32 %v2586, 2147483648
    %v2589 = vmul.f32 %v2587, 1.442695
    %v2590 = vpow.pop %v2589
    %v2591 = vmul.f32 %v2588, 1.442695
    %v2592 = vpow.pop %v2591
    %v2593 = vadd.f32 %v2590, 1.0
    %v2594 = vadd.f32 %v2592, 1.0
    %v2595 = vrcp.pop %v2593
    %v2596 = vmul.f32 1.0, %v2595
    %v2597 = vrcp.pop %v2594
    %v2598 = vmul.f32 1.0, %v2597
    %v2601 = vrot.slane %v2585, 1
    %v2602 = vrot.slane %v2586, 1
    %v2605 = vxor.u32 %v2601, 2147483648
    %v2606 = vxor.u32 %v2602, 2147483648
    %v2607 = vmul.f32 %v2605, 1.442695
    %v2608 = vpow.pop %v2607
    %v2609 = vmul.f32 %v2606, 1.442695
    %v2610 = vpow.pop %v2609
    %v2611 = vadd.f32 %v2608, 1.0
    %v2612 = vadd.f32 %v2610, 1.0
    %v2613 = vrcp.pop %v2611
    %v2614 = vmul.f32 1.0, %v2613
    %v2615 = vrcp.pop %v2612
    %v2616 = vmul.f32 1.0, %v2615
    %v2617 = vrot.slane %v2585, 2
    %v2618 = vrot.slane %v2586, 2
    %v2621 = vtanh.pop %v2617
    %v2622 = vtanh.pop %v2618
    %v2623 = vrot.slane %v2585, 3
    %v2624 = vrot.slane %v2586, 3
    %v2627 = vxor.u32 %v2623, 2147483648
    %v2628 = vxor.u32 %v2624, 2147483648
    %v2629 = vmul.f32 %v2627, 1.442695
    %v2630 = vpow.pop %v2629
    %v2631 = vmul.f32 %v2628, 1.442695
    %v2632 = vpow.pop %v2631
    %v2633 = vadd.f32 %v2630, 1.0
    %v2634 = vadd.f32 %v2632, 1.0
    %v2635 = vrcp.pop %v2633
    %v2636 = vmul.f32 1.0, %v2635
    %v2637 = vrcp.pop %v2634
    %v2638 = vmul.f32 1.0, %v2637
    %v2639 = vmul.f32 %v2614, %v1906
    %v2640 = vmul.f32 %v2616, %v1907
    %v2641 = vmul.f32 %v2596, %v2621
    %v2642 = vmul.f32 %v2598, %v2622
    %v2643 = vadd.f32 %v2639, %v2641
    %v2644 = vadd.f32 %v2640, %v2642
    %v2645 = vtanh.pop %v2643
    %v2646 = vtanh.pop %v2644
    %v2647 = vmul.f32 %v2636, %v2645
    %v2648 = vmul.f32 %v2638, %v2646
    %v2651 = vcombine.low %v2647, %v2648
    %v2653 = vunpack.c.l.s4 1966171168
    %v2654 = vunpack.c.0.s8 %v2653
    %v2655 = vlaneseq
    %v2656 = vshrl.u32 %v2655, 7
    %v2657 = vsub.s32 %v2654, %v2656
    %v2658 = vrot.slane %v2651, %v2657
    %v2660 = vunpack.c.l.s4 1966171168
    %v2661 = vunpack.c.0.s8 %v2660
    %v2662 = vlaneseq
    %v2663 = vshrl.u32 %v2662, 7
    %v2664 = vsub.s32 %v2661, %v2663
    %v2665 = vrot.slane %v2658, %v2664
    %v2667 = vld [vmem:[#allocation7] sm:$0xff]
    %v2668 = vld [vmem:[#allocation7 + $0x8] sm:$0xff]
    %v2669 = vld [vmem:[#allocation7 + $0x10] sm:$0xff]
    %v2670 = vld [vmem:[#allocation7 + $0x18] sm:$0xff]
    %v2671 = vld [vmem:[#allocation7 + $0x20] sm:$0xff]
    %v2672 = vld [vmem:[#allocation7 + $0x28] sm:$0xff]
    %v2673 = vld [vmem:[#allocation7 + $0x30] sm:$0xff]
    %v2674 = vld [vmem:[#allocation7 + $0x38] sm:$0xff]
    %v2675 = vld [vmem:[#allocation7 + $0x40] sm:$0xff]
    %v2676 = vld [vmem:[#allocation7 + $0x48] sm:$0xff]
    %v2677 = vld [vmem:[#allocation7 + $0x50] sm:$0xff]
    %v2678 = vld [vmem:[#allocation7 + $0x58] sm:$0xff]
    %v2679 = vld [vmem:[#allocation7 + $0x60] sm:$0xff]
    %v2680 = vld [vmem:[#allocation7 + $0x68] sm:$0xff]
    %v2681 = vld [vmem:[#allocation7 + $0x70] sm:$0xff]
    %v2682 = vld [vmem:[#allocation7 + $0x78] sm:$0xff]
    %v2683 = vld [vmem:[#allocation7 + $0x80] sm:$0xff]
    %v2684 = vld [vmem:[#allocation7 + $0x88] sm:$0xff]
    %v2685 = vld [vmem:[#allocation7 + $0x90] sm:$0xff]
    %v2686 = vld [vmem:[#allocation7 + $0x98] sm:$0xff]
    %v2687 = vld [vmem:[#allocation7 + $0xa0] sm:$0xff]
    %v2688 = vld [vmem:[#allocation7 + $0xa8] sm:$0xff]
    %v2689 = vld [vmem:[#allocation7 + $0xb0] sm:$0xff]
    %v2690 = vld [vmem:[#allocation7 + $0xb8] sm:$0xff]
    %v2691 = vld [vmem:[#allocation7 + $0xc0] sm:$0xff]
    %v2692 = vld [vmem:[#allocation7 + $0xc8] sm:$0xff]
    %v2693 = vld [vmem:[#allocation7 + $0xd0] sm:$0xff]
    %v2694 = vld [vmem:[#allocation7 + $0xd8] sm:$0xff]
    %v2695 = vld [vmem:[#allocation7 + $0xe0] sm:$0xff]
    %v2696 = vld [vmem:[#allocation7 + $0xe8] sm:$0xff]
    %v2697 = vld [vmem:[#allocation7 + $0xf0] sm:$0xff]
    %v2698 = vld [vmem:[#allocation7 + $0xf8] sm:$0xff]
    %v2699 = vld [vmem:[#allocation7 + $0x100] sm:$0xff]
    %v2700 = vld [vmem:[#allocation7 + $0x108] sm:$0xff]
    %v2701 = vld [vmem:[#allocation7 + $0x110] sm:$0xff]
    %v2702 = vld [vmem:[#allocation7 + $0x118] sm:$0xff]
    %v2703 = vld [vmem:[#allocation7 + $0x120] sm:$0xff]
    %v2704 = vld [vmem:[#allocation7 + $0x128] sm:$0xff]
    %v2705 = vld [vmem:[#allocation7 + $0x130] sm:$0xff]
    %v2706 = vld [vmem:[#allocation7 + $0x138] sm:$0xff]
    %v2707 = vld [vmem:[#allocation7 + $0x140] sm:$0xff]
    %v2708 = vld [vmem:[#allocation7 + $0x148] sm:$0xff]
    %v2709 = vld [vmem:[#allocation7 + $0x150] sm:$0xff]
    %v2710 = vld [vmem:[#allocation7 + $0x158] sm:$0xff]
    %v2711 = vld [vmem:[#allocation7 + $0x160] sm:$0xff]
    %v2712 = vld [vmem:[#allocation7 + $0x168] sm:$0xff]
    %v2713 = vld [vmem:[#allocation7 + $0x170] sm:$0xff]
    %v2714 = vld [vmem:[#allocation7 + $0x178] sm:$0xff]
    %v2715 = vld [vmem:[#allocation7 + $0x180] sm:$0xff]
    %v2716 = vld [vmem:[#allocation7 + $0x188] sm:$0xff]
    %v2717 = vld [vmem:[#allocation7 + $0x190] sm:$0xff]
    %v2718 = vld [vmem:[#allocation7 + $0x198] sm:$0xff]
    %v2719 = vld [vmem:[#allocation7 + $0x1a0] sm:$0xff]
    %v2720 = vld [vmem:[#allocation7 + $0x1a8] sm:$0xff]
    %v2721 = vld [vmem:[#allocation7 + $0x1b0] sm:$0xff]
    %v2722 = vld [vmem:[#allocation7 + $0x1b8] sm:$0xff]
    %v2723 = vld [vmem:[#allocation7 + $0x1c0] sm:$0xff]
    %v2724 = vld [vmem:[#allocation7 + $0x1c8] sm:$0xff]
    %v2725 = vld [vmem:[#allocation7 + $0x1d0] sm:$0xff]
    %v2726 = vld [vmem:[#allocation7 + $0x1d8] sm:$0xff]
    %v2727 = vld [vmem:[#allocation7 + $0x1e0] sm:$0xff]
    %v2728 = vld [vmem:[#allocation7 + $0x1e8] sm:$0xff]
    %v2729 = vld [vmem:[#allocation7 + $0x1f0] sm:$0xff]
    %v2730 = vld [vmem:[#allocation7 + $0x1f8] sm:$0xff]
    %v2731 = vld [vmem:[#allocation7 + $0x200] sm:$0xff]
    %v2732 = vld [vmem:[#allocation7 + $0x208] sm:$0xff]
    %v2733 = vld [vmem:[#allocation7 + $0x210] sm:$0xff]
    %v2734 = vld [vmem:[#allocation7 + $0x218] sm:$0xff]
    %v2735 = vld [vmem:[#allocation7 + $0x220] sm:$0xff]
    %v2736 = vld [vmem:[#allocation7 + $0x228] sm:$0xff]
    %v2737 = vld [vmem:[#allocation7 + $0x230] sm:$0xff]
    %v2738 = vld [vmem:[#allocation7 + $0x238] sm:$0xff]
    %v2739 = vld [vmem:[#allocation7 + $0x240] sm:$0xff]
    %v2740 = vld [vmem:[#allocation7 + $0x248] sm:$0xff]
    %v2741 = vld [vmem:[#allocation7 + $0x250] sm:$0xff]
    %v2742 = vld [vmem:[#allocation7 + $0x258] sm:$0xff]
    %v2743 = vld [vmem:[#allocation7 + $0x260] sm:$0xff]
    %v2744 = vld [vmem:[#allocation7 + $0x268] sm:$0xff]
    %v2745 = vld [vmem:[#allocation7 + $0x270] sm:$0xff]
    %v2746 = vld [vmem:[#allocation7 + $0x278] sm:$0xff]
    %v2747 = vld [vmem:[#allocation7 + $0x280] sm:$0xff]
    %v2748 = vld [vmem:[#allocation7 + $0x288] sm:$0xff]
    %v2749 = vld [vmem:[#allocation7 + $0x290] sm:$0xff]
    %v2750 = vld [vmem:[#allocation7 + $0x298] sm:$0xff]
    %v2751 = vld [vmem:[#allocation7 + $0x2a0] sm:$0xff]
    %v2752 = vld [vmem:[#allocation7 + $0x2a8] sm:$0xff]
    %v2753 = vld [vmem:[#allocation7 + $0x2b0] sm:$0xff]
    %v2754 = vld [vmem:[#allocation7 + $0x2b8] sm:$0xff]
    %v2755 = vld [vmem:[#allocation7 + $0x2c0] sm:$0xff]
    %v2756 = vld [vmem:[#allocation7 + $0x2c8] sm:$0xff]
    %v2757 = vld [vmem:[#allocation7 + $0x2d0] sm:$0xff]
    %v2758 = vld [vmem:[#allocation7 + $0x2d8] sm:$0xff]
    %v2759 = vld [vmem:[#allocation7 + $0x2e0] sm:$0xff]
    %v2760 = vld [vmem:[#allocation7 + $0x2e8] sm:$0xff]
    %v2761 = vld [vmem:[#allocation7 + $0x2f0] sm:$0xff]
    %v2762 = vld [vmem:[#allocation7 + $0x2f8] sm:$0xff]
    %v2763 = vld [vmem:[#allocation7 + $0x300] sm:$0xff]
    %v2764 = vld [vmem:[#allocation7 + $0x308] sm:$0xff]
    %v2765 = vld [vmem:[#allocation7 + $0x310] sm:$0xff]
    %v2766 = vld [vmem:[#allocation7 + $0x318] sm:$0xff]
    %v2767 = vld [vmem:[#allocation7 + $0x320] sm:$0xff]
    %v2768 = vld [vmem:[#allocation7 + $0x328] sm:$0xff]
    %v2769 = vld [vmem:[#allocation7 + $0x330] sm:$0xff]
    %v2770 = vld [vmem:[#allocation7 + $0x338] sm:$0xff]
    %v2771 = vld [vmem:[#allocation7 + $0x340] sm:$0xff]
    %v2772 = vld [vmem:[#allocation7 + $0x348] sm:$0xff]
    %v2773 = vld [vmem:[#allocation7 + $0x350] sm:$0xff]
    %v2774 = vld [vmem:[#allocation7 + $0x358] sm:$0xff]
    %v2775 = vld [vmem:[#allocation7 + $0x360] sm:$0xff]
    %v2776 = vld [vmem:[#allocation7 + $0x368] sm:$0xff]
    %v2777 = vld [vmem:[#allocation7 + $0x370] sm:$0xff]
    %v2778 = vld [vmem:[#allocation7 + $0x378] sm:$0xff]
    %v2779 = vld [vmem:[#allocation7 + $0x380] sm:$0xff]
    %v2780 = vld [vmem:[#allocation7 + $0x388] sm:$0xff]
    %v2781 = vld [vmem:[#allocation7 + $0x390] sm:$0xff]
    %v2782 = vld [vmem:[#allocation7 + $0x398] sm:$0xff]
    %v2783 = vld [vmem:[#allocation7 + $0x3a0] sm:$0xff]
    %v2784 = vld [vmem:[#allocation7 + $0x3a8] sm:$0xff]
    %v2785 = vld [vmem:[#allocation7 + $0x3b0] sm:$0xff]
    %v2786 = vld [vmem:[#allocation7 + $0x3b8] sm:$0xff]
    %v2787 = vld [vmem:[#allocation7 + $0x3c0] sm:$0xff]
    %v2788 = vld [vmem:[#allocation7 + $0x3c8] sm:$0xff]
    %v2789 = vld [vmem:[#allocation7 + $0x3d0] sm:$0xff]
    %v2790 = vld [vmem:[#allocation7 + $0x3d8] sm:$0xff]
    %v2791 = vld [vmem:[#allocation7 + $0x3e0] sm:$0xff]
    %v2792 = vld [vmem:[#allocation7 + $0x3e8] sm:$0xff]
    %v2793 = vld [vmem:[#allocation7 + $0x3f0] sm:$0xff]
    %v2794 = vld [vmem:[#allocation7 + $0x3f8] sm:$0xff]
    %2795 = vmatprep.subr.mxu0 %v2728
    %2796 = vmatpush1.msra.mxu0 %v2727
    %2797 = vmatprep.subr.mxu0 %v2724
    %2798 = vmatpush1.msra.mxu0 %v2723
    %2799 = vmatprep.subr.mxu0 %v2720
    %2800 = vmatpush1.msra.mxu0 %v2719
    %2801 = vmatprep.subr.mxu0 %v2716
    %2802 = vmatpush1.msra.mxu0 %v2715
    %2803 = vmatprep.subr.mxu0 %v2712
    %2804 = vmatpush1.msra.mxu0 %v2711
    %2805 = vmatprep.subr.mxu0 %v2708
    %2806 = vmatpush1.msra.mxu0 %v2707
    %2807 = vmatprep.subr.mxu0 %v2704
    %2808 = vmatpush1.msra.mxu0 %v2703
    %2809 = vmatprep.subr.mxu0 %v2700
    %2810 = vmatpush1.msra.mxu0 %v2699
    %2811 = vmatprep.subr.mxu0 %v2696
    %2812 = vmatpush1.msra.mxu0 %v2695
    %2813 = vmatprep.subr.mxu0 %v2692
    %2814 = vmatpush1.msra.mxu0 %v2691
    %2815 = vmatprep.subr.mxu0 %v2688
    %2816 = vmatpush1.msra.mxu0 %v2687
    %2817 = vmatprep.subr.mxu0 %v2684
    %2818 = vmatpush1.msra.mxu0 %v2683
    %2819 = vmatprep.subr.mxu0 %v2680
    %2820 = vmatpush1.msra.mxu0 %v2679
    %2821 = vmatprep.subr.mxu0 %v2676
    %2822 = vmatpush1.msra.mxu0 %v2675
    %2823 = vmatprep.subr.mxu0 %v2672
    %2824 = vmatpush1.msra.mxu0 %v2671
    %2825 = vmatprep.subr.mxu0 %v2668
    %2826 = vmatpush1.msra.mxu0 %v2667
    %2827 = vmatprep.subr.mxu0 %v2792
    %2828 = vmatpush2.msra.mxu0 %v2791
    %2829 = vmatprep.subr.mxu0 %v2788
    %2830 = vmatpush2.msra.mxu0 %v2787
    %2831 = vmatprep.subr.mxu0 %v2784
    %2832 = vmatpush2.msra.mxu0 %v2783
    %2833 = vmatprep.subr.mxu0 %v2780
    %2834 = vmatpush2.msra.mxu0 %v2779
    %2835 = vmatprep.subr.mxu0 %v2776
    %2836 = vmatpush2.msra.mxu0 %v2775
    %2837 = vmatprep.subr.mxu0 %v2772
    %2838 = vmatpush2.msra.mxu0 %v2771
    %2839 = vmatprep.subr.mxu0 %v2768
    %2840 = vmatpush2.msra.mxu0 %v2767
    %2841 = vmatprep.subr.mxu0 %v2764
    %2842 = vmatpush2.msra.mxu0 %v2763
    %2843 = vmatprep.subr.mxu0 %v2760
    %2844 = vmatpush2.msra.mxu0 %v2759
    %2845 = vmatprep.subr.mxu0 %v2756
    %2846 = vmatpush2.msra.mxu0 %v2755
    %2847 = vmatprep.subr.mxu0 %v2752
    %2848 = vmatpush2.msra.mxu0 %v2751
    %2849 = vmatprep.subr.mxu0 %v2748
    %2850 = vmatpush2.msra.mxu0 %v2747
    %2851 = vmatprep.subr.mxu0 %v2744
    %2852 = vmatpush2.msra.mxu0 %v2743
    %2853 = vmatprep.subr.mxu0 %v2740
    %2854 = vmatpush2.msra.mxu0 %v2739
    %2855 = vmatprep.subr.mxu0 %v2736
    %2856 = vmatpush2.msra.mxu0 %v2735
    %2857 = vmatprep.subr.mxu0 %v2732
    %2858 = vmatpush2.msra.mxu0 %v2731
    %2859 = vmatprep.mubr.f32.mxu0 %v2223
    %2860 = vmatmul.mubr.f32.gmra.mxu0 %v2665
    %v2861 = vpop.f32.mrf.mxu0
    %v2862 = vadd.f32 %v561, %v2861
    %v2863 = vpop.f32.mrf.mxu0
    %v2864 = vadd.f32 %v565, %v2863
    %2865 = vdwg.mxu0
    %2866 = vmatprep.subr.mxu0 %v2730
    %2867 = vmatpush1.msra.mxu0 %v2729
    %2868 = vmatprep.subr.mxu0 %v2726
    %2869 = vmatpush1.msra.mxu0 %v2725
    %2870 = vmatprep.subr.mxu0 %v2722
    %2871 = vmatpush1.msra.mxu0 %v2721
    %2872 = vmatprep.subr.mxu0 %v2718
    %2873 = vmatpush1.msra.mxu0 %v2717
    %2874 = vmatprep.subr.mxu0 %v2714
    %2875 = vmatpush1.msra.mxu0 %v2713
    %2876 = vmatprep.subr.mxu0 %v2710
    %2877 = vmatpush1.msra.mxu0 %v2709
    %2878 = vmatprep.subr.mxu0 %v2706
    %2879 = vmatpush1.msra.mxu0 %v2705
    %2880 = vmatprep.subr.mxu0 %v2702
    %2881 = vmatpush1.msra.mxu0 %v2701
    %2882 = vmatprep.subr.mxu0 %v2698
    %2883 = vmatpush1.msra.mxu0 %v2697
    %2884 = vmatprep.subr.mxu0 %v2694
    %2885 = vmatpush1.msra.mxu0 %v2693
    %2886 = vmatprep.subr.mxu0 %v2690
    %2887 = vmatpush1.msra.mxu0 %v2689
    %2888 = vmatprep.subr.mxu0 %v2686
    %2889 = vmatpush1.msra.mxu0 %v2685
    %2890 = vmatprep.subr.mxu0 %v2682
    %2891 = vmatpush1.msra.mxu0 %v2681
    %2892 = vmatprep.subr.mxu0 %v2678
    %2893 = vmatpush1.msra.mxu0 %v2677
    %2894 = vmatprep.subr.mxu0 %v2674
    %2895 = vmatpush1.msra.mxu0 %v2673
    %2896 = vmatprep.subr.mxu0 %v2670
    %2897 = vmatpush1.msra.mxu0 %v2669
    %2898 = vmatprep.subr.mxu0 %v2794
    %2899 = vmatpush2.msra.mxu0 %v2793
    %2900 = vmatprep.subr.mxu0 %v2790
    %2901 = vmatpush2.msra.mxu0 %v2789
    %2902 = vmatprep.subr.mxu0 %v2786
    %2903 = vmatpush2.msra.mxu0 %v2785
    %2904 = vmatprep.subr.mxu0 %v2782
    %2905 = vmatpush2.msra.mxu0 %v2781
    %2906 = vmatprep.subr.mxu0 %v2778
    %2907 = vmatpush2.msra.mxu0 %v2777
    %2908 = vmatprep.subr.mxu0 %v2774
    %2909 = vmatpush2.msra.mxu0 %v2773
    %2910 = vmatprep.subr.mxu0 %v2770
    %2911 = vmatpush2.msra.mxu0 %v2769
    %2912 = vmatprep.subr.mxu0 %v2766
    %2913 = vmatpush2.msra.mxu0 %v2765
    %2914 = vmatprep.subr.mxu0 %v2762
    %2915 = vmatpush2.msra.mxu0 %v2761
    %2916 = vmatprep.subr.mxu0 %v2758
    %2917 = vmatpush2.msra.mxu0 %v2757
    %2918 = vmatprep.subr.mxu0 %v2754
    %2919 = vmatpush2.msra.mxu0 %v2753
    %2920 = vmatprep.subr.mxu0 %v2750
    %2921 = vmatpush2.msra.mxu0 %v2749
    %2922 = vmatprep.subr.mxu0 %v2746
    %2923 = vmatpush2.msra.mxu0 %v2745
    %2924 = vmatprep.subr.mxu0 %v2742
    %2925 = vmatpush2.msra.mxu0 %v2741
    %2926 = vmatprep.subr.mxu0 %v2738
    %2927 = vmatpush2.msra.mxu0 %v2737
    %2928 = vmatprep.subr.mxu0 %v2734
    %2929 = vmatpush2.msra.mxu0 %v2733
    %2930 = vmatprep.mubr.f32.mxu0 %v2223
    %2931 = vmatmul.mubr.f32.gmra.mxu0 %v2665
    %v2932 = vpop.f32.mrf.mxu0
    %v2933 = vadd.f32 %v569, %v2932
    %v2934 = vpop.f32.mrf.mxu0
    %v2935 = vadd.f32 %v573, %v2934
    %2936 = vdwg.mxu0
    %v2937 = vxor.u32 %v2862, 2147483648
    %v2938 = vmul.f32 %v2937, 1.442695
    %v2939 = vpow.pop %v2938
    %v2940 = vadd.f32 %v2939, 1.0
    %v2941 = vrcp.pop %v2940
    %v2942 = vmul.f32 1.0, %v2941
    %v2943 = vxor.u32 %v2864, 2147483648
    %v2944 = vmul.f32 %v2943, 1.442695
    %v2945 = vpow.pop %v2944
    %v2946 = vadd.f32 %v2945, 1.0
    %v2947 = vrcp.pop %v2946
    %v2948 = vmul.f32 1.0, %v2947
    %v2949 = vtanh.pop %v2933
    %v2950 = vxor.u32 %v2935, 2147483648
    %v2951 = vmul.f32 %v2950, 1.442695
    %v2952 = vpow.pop %v2951
    %v2953 = vadd.f32 %v2952, 1.0
    %v2954 = vrcp.pop %v2953
    %v2955 = vmul.f32 1.0, %v2954
    %v2956 = vmul.f32 %v2948, %v2221
    %v2957 = vmul.f32 %v2942, %v2949
    %v2958 = vadd.f32 %v2956, %v2957
    %v2959 = vtanh.pop %v2958
    %v2960 = vmul.f32 %v2955, %v2959
    %v2961 = vld [vmem:[#allocation9] sm:$0xff]
    %v2962 = vld [vmem:[#allocation9 + $0x8] sm:$0xff]
    %v2963 = vld [vmem:[#allocation9 + $0x10] sm:$0xff]
    %v2964 = vld [vmem:[#allocation9 + $0x18] sm:$0xff]
    %v2965 = vld [vmem:[#allocation9 + $0x20] sm:$0xff]
    %v2966 = vld [vmem:[#allocation9 + $0x28] sm:$0xff]
    %v2967 = vld [vmem:[#allocation9 + $0x30] sm:$0xff]
    %v2968 = vld [vmem:[#allocation9 + $0x38] sm:$0xff]
    %v2969 = vld [vmem:[#allocation9 + $0x40] sm:$0xff]
    %v2970 = vld [vmem:[#allocation9 + $0x48] sm:$0xff]
    %v2971 = vld [vmem:[#allocation9 + $0x50] sm:$0xff]
    %v2972 = vld [vmem:[#allocation9 + $0x58] sm:$0xff]
    %v2973 = vld [vmem:[#allocation9 + $0x60] sm:$0xff]
    %v2974 = vld [vmem:[#allocation9 + $0x68] sm:$0xff]
    %v2975 = vld [vmem:[#allocation9 + $0x70] sm:$0xff]
    %v2976 = vld [vmem:[#allocation9 + $0x78] sm:$0xff]
    %2977 = vmatprep.subr.mxu0 0.0
    %2978 = vmatpush1.msra.mxu0 %v2976
    %2979 = vmatprep.subr.mxu0 0.0
    %2980 = vmatpush1.msra.mxu0 %v2975
    %2981 = vmatprep.subr.mxu0 0.0
    %2982 = vmatpush1.msra.mxu0 %v2974
    %2983 = vmatprep.subr.mxu0 0.0
    %2984 = vmatpush1.msra.mxu0 %v2973
    %2985 = vmatprep.subr.mxu0 0.0
    %2986 = vmatpush1.msra.mxu0 %v2972
    %2987 = vmatprep.subr.mxu0 0.0
    %2988 = vmatpush1.msra.mxu0 %v2971
    %2989 = vmatprep.subr.mxu0 0.0
    %2990 = vmatpush1.msra.mxu0 %v2970
    %2991 = vmatprep.subr.mxu0 0.0
    %2992 = vmatpush1.msra.mxu0 %v2969
    %2993 = vmatprep.subr.mxu0 0.0
    %2994 = vmatpush1.msra.mxu0 %v2968
    %2995 = vmatprep.subr.mxu0 0.0
    %2996 = vmatpush1.msra.mxu0 %v2967
    %2997 = vmatprep.subr.mxu0 0.0
    %2998 = vmatpush1.msra.mxu0 %v2966
    %2999 = vmatprep.subr.mxu0 0.0
    %3000 = vmatpush1.msra.mxu0 %v2965
    %3001 = vmatprep.subr.mxu0 0.0
    %3002 = vmatpush1.msra.mxu0 %v2964
    %3003 = vmatprep.subr.mxu0 0.0
    %3004 = vmatpush1.msra.mxu0 %v2963
    %3005 = vmatprep.subr.mxu0 0.0
    %3006 = vmatpush1.msra.mxu0 %v2962
    %3007 = vmatprep.subr.mxu0 0.0
    %3008 = vmatpush1.msra.mxu0 %v2961
    %3009 = vmatprep.subr.mxu0 0.0
    %3010 = vmatpush2.msra.mxu0 0.0
    %3011 = vmatprep.subr.mxu0 0.0
    %3012 = vmatpush2.msra.mxu0 0.0
    %3013 = vmatprep.subr.mxu0 0.0
    %3014 = vmatpush2.msra.mxu0 0.0
    %3015 = vmatprep.subr.mxu0 0.0
    %3016 = vmatpush2.msra.mxu0 0.0
    %3017 = vmatprep.subr.mxu0 0.0
    %3018 = vmatpush2.msra.mxu0 0.0
    %3019 = vmatprep.subr.mxu0 0.0
    %3020 = vmatpush2.msra.mxu0 0.0
    %3021 = vmatprep.subr.mxu0 0.0
    %3022 = vmatpush2.msra.mxu0 0.0
    %3023 = vmatprep.subr.mxu0 0.0
    %3024 = vmatpush2.msra.mxu0 0.0
    %3025 = vmatprep.subr.mxu0 0.0
    %3026 = vmatpush2.msra.mxu0 0.0
    %3027 = vmatprep.subr.mxu0 0.0
    %3028 = vmatpush2.msra.mxu0 0.0
    %3029 = vmatprep.subr.mxu0 0.0
    %3030 = vmatpush2.msra.mxu0 0.0
    %3031 = vmatprep.subr.mxu0 0.0
    %3032 = vmatpush2.msra.mxu0 0.0
    %3033 = vmatprep.subr.mxu0 0.0
    %3034 = vmatpush2.msra.mxu0 0.0
    %3035 = vmatprep.subr.mxu0 0.0
    %3036 = vmatpush2.msra.mxu0 0.0
    %3037 = vmatprep.subr.mxu0 0.0
    %3038 = vmatpush2.msra.mxu0 0.0
    %3039 = vmatprep.subr.mxu0 0.0
    %3040 = vmatpush2.msra.mxu0 0.0
    %3041 = vmatprep.mubr.f32.mxu0 0.0
    %3042 = vmatmul.mubr.f32.gmra.mxu0 %v2960
    %v3043 = vpop.f32.mrf.mxu0
    %v3044 = vadd.f32 %v764, %v3043
    %v3045 = vpop.f32.mrf.mxu0
    %3046 = vdwg.mxu0
    %v3049 = vunpack.c.l.s4 1966171168
    %v3050 = vunpack.c.0.s8 %v3049
    %v3051 = vlaneseq
    %v3052 = vshrl.u32 %v3051, 7
    %v3053 = vsub.s32 %v3050, %v3052
    %v3054 = vrot.slane %v3044, %v3053
    %v3055 = vcombine.high %v3054, %v3054
    %v3057 = vunpack.c.l.s4 1966171168
    %v3058 = vunpack.c.0.s8 %v3057
    %v3059 = vlaneseq
    %v3060 = vshrl.u32 %v3059, 7
    %v3061 = vsub.s32 %v3058, %v3060
    %v3062 = vrot.slane %v3054, %v3061
    %v3064 = vunpack.c.l.s4 1966171168
    %v3065 = vunpack.c.0.s8 %v3064
    %v3066 = vlaneseq
    %v3067 = vshrl.u32 %v3066, 7
    %v3068 = vsub.s32 %v3065, %v3067
    %v3069 = vrot.slane %v3055, %v3068
    %3072 = vst [vmem:[%s8 + $0x3] sm:$0x1] %v3062
    %3073 = vst [vmem:[%s8 + $0x13] sm:$0x1] %v3069
    %s3074 = scalar_lea.vmem [#allocation2], 4
    %v3075 = vld [vmem:[%s3074] ss:$8 sm:$0xf]
    %s3076 = scalar_lea.vmem [#allocation2], 36
    %v3077 = vld [vmem:[%s3076] ss:$8 sm:$0xf]
    %v3078 = vld [vmem:[#allocation4] sm:$0xff]
    %v3079 = vld [vmem:[#allocation4 + $0x8] sm:$0xff]
    %v3080 = vld [vmem:[#allocation4 + $0x10] sm:$0xff]
    %v3081 = vld [vmem:[#allocation4 + $0x18] sm:$0xff]
    %v3082 = vld [vmem:[#allocation4 + $0x20] sm:$0xff]
    %v3083 = vld [vmem:[#allocation4 + $0x28] sm:$0xff]
    %v3084 = vld [vmem:[#allocation4 + $0x30] sm:$0xff]
    %v3085 = vld [vmem:[#allocation4 + $0x38] sm:$0xff]
    %v3086 = vld [vmem:[#allocation4 + $0x40] sm:$0xff]
    %v3087 = vld [vmem:[#allocation4 + $0x48] sm:$0xff]
    %v3088 = vld [vmem:[#allocation4 + $0x50] sm:$0xff]
    %v3089 = vld [vmem:[#allocation4 + $0x58] sm:$0xff]
    %v3090 = vld [vmem:[#allocation4 + $0x60] sm:$0xff]
    %v3091 = vld [vmem:[#allocation4 + $0x68] sm:$0xff]
    %v3092 = vld [vmem:[#allocation4 + $0x70] sm:$0xff]
    %v3093 = vld [vmem:[#allocation4 + $0x78] sm:$0xff]
    %v3094 = vld [vmem:[#allocation4 + $0x80] sm:$0xff]
    %v3095 = vld [vmem:[#allocation4 + $0x88] sm:$0xff]
    %v3096 = vld [vmem:[#allocation4 + $0x90] sm:$0xff]
    %v3097 = vld [vmem:[#allocation4 + $0x98] sm:$0xff]
    %v3098 = vld [vmem:[#allocation4 + $0xa0] sm:$0xff]
    %v3099 = vld [vmem:[#allocation4 + $0xa8] sm:$0xff]
    %v3100 = vld [vmem:[#allocation4 + $0xb0] sm:$0xff]
    %v3101 = vld [vmem:[#allocation4 + $0xb8] sm:$0xff]
    %v3102 = vld [vmem:[#allocation4 + $0xc0] sm:$0xff]
    %v3103 = vld [vmem:[#allocation4 + $0xc8] sm:$0xff]
    %v3104 = vld [vmem:[#allocation4 + $0xd0] sm:$0xff]
    %v3105 = vld [vmem:[#allocation4 + $0xd8] sm:$0xff]
    %v3106 = vld [vmem:[#allocation4 + $0xe0] sm:$0xff]
    %v3107 = vld [vmem:[#allocation4 + $0xe8] sm:$0xff]
    %v3108 = vld [vmem:[#allocation4 + $0xf0] sm:$0xff]
    %v3109 = vld [vmem:[#allocation4 + $0xf8] sm:$0xff]
    %v3110 = vld [vmem:[#allocation4 + $0x100] sm:$0xff]
    %v3111 = vld [vmem:[#allocation4 + $0x108] sm:$0xff]
    %v3112 = vld [vmem:[#allocation4 + $0x110] sm:$0xff]
    %v3113 = vld [vmem:[#allocation4 + $0x118] sm:$0xff]
    %v3114 = vld [vmem:[#allocation4 + $0x120] sm:$0xff]
    %v3115 = vld [vmem:[#allocation4 + $0x128] sm:$0xff]
    %v3116 = vld [vmem:[#allocation4 + $0x130] sm:$0xff]
    %v3117 = vld [vmem:[#allocation4 + $0x138] sm:$0xff]
    %v3118 = vld [vmem:[#allocation4 + $0x140] sm:$0xff]
    %v3119 = vld [vmem:[#allocation4 + $0x148] sm:$0xff]
    %v3120 = vld [vmem:[#allocation4 + $0x150] sm:$0xff]
    %v3121 = vld [vmem:[#allocation4 + $0x158] sm:$0xff]
    %v3122 = vld [vmem:[#allocation4 + $0x160] sm:$0xff]
    %v3123 = vld [vmem:[#allocation4 + $0x168] sm:$0xff]
    %v3124 = vld [vmem:[#allocation4 + $0x170] sm:$0xff]
    %v3125 = vld [vmem:[#allocation4 + $0x178] sm:$0xff]
    %v3126 = vld [vmem:[#allocation4 + $0x180] sm:$0xff]
    %v3127 = vld [vmem:[#allocation4 + $0x188] sm:$0xff]
    %v3128 = vld [vmem:[#allocation4 + $0x190] sm:$0xff]
    %v3129 = vld [vmem:[#allocation4 + $0x198] sm:$0xff]
    %v3130 = vld [vmem:[#allocation4 + $0x1a0] sm:$0xff]
    %v3131 = vld [vmem:[#allocation4 + $0x1a8] sm:$0xff]
    %v3132 = vld [vmem:[#allocation4 + $0x1b0] sm:$0xff]
    %v3133 = vld [vmem:[#allocation4 + $0x1b8] sm:$0xff]
    %v3134 = vld [vmem:[#allocation4 + $0x1c0] sm:$0xff]
    %v3135 = vld [vmem:[#allocation4 + $0x1c8] sm:$0xff]
    %v3136 = vld [vmem:[#allocation4 + $0x1d0] sm:$0xff]
    %v3137 = vld [vmem:[#allocation4 + $0x1d8] sm:$0xff]
    %v3138 = vld [vmem:[#allocation4 + $0x1e0] sm:$0xff]
    %v3139 = vld [vmem:[#allocation4 + $0x1e8] sm:$0xff]
    %v3140 = vld [vmem:[#allocation4 + $0x1f0] sm:$0xff]
    %v3141 = vld [vmem:[#allocation4 + $0x1f8] sm:$0xff]
    %3142 = vmatprep.subr.mxu0 %v3139
    %3143 = vmatpush1.msra.mxu0 %v3138
    %3144 = vmatprep.subr.mxu0 %v3135
    %3145 = vmatpush1.msra.mxu0 %v3134
    %3146 = vmatprep.subr.mxu0 %v3131
    %3147 = vmatpush1.msra.mxu0 %v3130
    %3148 = vmatprep.subr.mxu0 %v3127
    %3149 = vmatpush1.msra.mxu0 %v3126
    %3150 = vmatprep.subr.mxu0 %v3123
    %3151 = vmatpush1.msra.mxu0 %v3122
    %3152 = vmatprep.subr.mxu0 %v3119
    %3153 = vmatpush1.msra.mxu0 %v3118
    %3154 = vmatprep.subr.mxu0 %v3115
    %3155 = vmatpush1.msra.mxu0 %v3114
    %3156 = vmatprep.subr.mxu0 %v3111
    %3157 = vmatpush1.msra.mxu0 %v3110
    %3158 = vmatprep.subr.mxu0 %v3107
    %3159 = vmatpush1.msra.mxu0 %v3106
    %3160 = vmatprep.subr.mxu0 %v3103
    %3161 = vmatpush1.msra.mxu0 %v3102
    %3162 = vmatprep.subr.mxu0 %v3099
    %3163 = vmatpush1.msra.mxu0 %v3098
    %3164 = vmatprep.subr.mxu0 %v3095
    %3165 = vmatpush1.msra.mxu0 %v3094
    %3166 = vmatprep.subr.mxu0 %v3091
    %3167 = vmatpush1.msra.mxu0 %v3090
    %3168 = vmatprep.subr.mxu0 %v3087
    %3169 = vmatpush1.msra.mxu0 %v3086
    %3170 = vmatprep.subr.mxu0 %v3083
    %3171 = vmatpush1.msra.mxu0 %v3082
    %3172 = vmatprep.subr.mxu0 %v3079
    %3173 = vmatpush1.msra.mxu0 %v3078
    %3174 = vmatprep.subr.mxu0 0.0
    %3175 = vmatpush2.msra.mxu0 0.0
    %3176 = vmatprep.subr.mxu0 0.0
    %3177 = vmatpush2.msra.mxu0 0.0
    %3178 = vmatprep.subr.mxu0 0.0
    %3179 = vmatpush2.msra.mxu0 0.0
    %3180 = vmatprep.subr.mxu0 0.0
    %3181 = vmatpush2.msra.mxu0 0.0
    %3182 = vmatprep.subr.mxu0 0.0
    %3183 = vmatpush2.msra.mxu0 0.0
    %3184 = vmatprep.subr.mxu0 0.0
    %3185 = vmatpush2.msra.mxu0 0.0
    %3186 = vmatprep.subr.mxu0 0.0
    %3187 = vmatpush2.msra.mxu0 0.0
    %3188 = vmatprep.subr.mxu0 0.0
    %3189 = vmatpush2.msra.mxu0 0.0
    %3190 = vmatprep.subr.mxu0 0.0
    %3191 = vmatpush2.msra.mxu0 0.0
    %3192 = vmatprep.subr.mxu0 0.0
    %3193 = vmatpush2.msra.mxu0 0.0
    %3194 = vmatprep.subr.mxu0 0.0
    %3195 = vmatpush2.msra.mxu0 0.0
    %3196 = vmatprep.subr.mxu0 0.0
    %3197 = vmatpush2.msra.mxu0 0.0
    %3198 = vmatprep.subr.mxu0 0.0
    %3199 = vmatpush2.msra.mxu0 0.0
    %3200 = vmatprep.subr.mxu0 0.0
    %3201 = vmatpush2.msra.mxu0 0.0
    %3202 = vmatprep.subr.mxu0 0.0
    %3203 = vmatpush2.msra.mxu0 0.0
    %3204 = vmatprep.subr.mxu0 0.0
    %3205 = vmatpush2.msra.mxu0 0.0
    %3206 = vmatprep.mubr.f32.mxu0 0.0
    %3207 = vmatmul.mubr.f32.gmra.mxu0 %v2665
    %v3208 = vpop.f32.mrf.mxu0
    %v3209 = vadd.f32 0.0, %v3208
    %v3210 = vpop.f32.mrf.mxu0
    %v3211 = vadd.f32 0.0, %v3210
    %3212 = vdwg.mxu0
    %3213 = vmatprep.subr.mxu0 %v3141
    %3214 = vmatpush1.msra.mxu0 %v3140
    %3215 = vmatprep.subr.mxu0 %v3137
    %3216 = vmatpush1.msra.mxu0 %v3136
    %3217 = vmatprep.subr.mxu0 %v3133
    %3218 = vmatpush1.msra.mxu0 %v3132
    %3219 = vmatprep.subr.mxu0 %v3129
    %3220 = vmatpush1.msra.mxu0 %v3128
    %3221 = vmatprep.subr.mxu0 %v3125
    %3222 = vmatpush1.msra.mxu0 %v3124
    %3223 = vmatprep.subr.mxu0 %v3121
    %3224 = vmatpush1.msra.mxu0 %v3120
    %3225 = vmatprep.subr.mxu0 %v3117
    %3226 = vmatpush1.msra.mxu0 %v3116
    %3227 = vmatprep.subr.mxu0 %v3113
    %3228 = vmatpush1.msra.mxu0 %v3112
    %3229 = vmatprep.subr.mxu0 %v3109
    %3230 = vmatpush1.msra.mxu0 %v3108
    %3231 = vmatprep.subr.mxu0 %v3105
    %3232 = vmatpush1.msra.mxu0 %v3104
    %3233 = vmatprep.subr.mxu0 %v3101
    %3234 = vmatpush1.msra.mxu0 %v3100
    %3235 = vmatprep.subr.mxu0 %v3097
    %3236 = vmatpush1.msra.mxu0 %v3096
    %3237 = vmatprep.subr.mxu0 %v3093
    %3238 = vmatpush1.msra.mxu0 %v3092
    %3239 = vmatprep.subr.mxu0 %v3089
    %3240 = vmatpush1.msra.mxu0 %v3088
    %3241 = vmatprep.subr.mxu0 %v3085
    %3242 = vmatpush1.msra.mxu0 %v3084
    %3243 = vmatprep.subr.mxu0 %v3081
    %3244 = vmatpush1.msra.mxu0 %v3080
    %3245 = vmatprep.subr.mxu0 0.0
    %3246 = vmatpush2.msra.mxu0 0.0
    %3247 = vmatprep.subr.mxu0 0.0
    %3248 = vmatpush2.msra.mxu0 0.0
    %3249 = vmatprep.subr.mxu0 0.0
    %3250 = vmatpush2.msra.mxu0 0.0
    %3251 = vmatprep.subr.mxu0 0.0
    %3252 = vmatpush2.msra.mxu0 0.0
    %3253 = vmatprep.subr.mxu0 0.0
    %3254 = vmatpush2.msra.mxu0 0.0
    %3255 = vmatprep.subr.mxu0 0.0
    %3256 = vmatpush2.msra.mxu0 0.0
    %3257 = vmatprep.subr.mxu0 0.0
    %3258 = vmatpush2.msra.mxu0 0.0
    %3259 = vmatprep.subr.mxu0 0.0
    %3260 = vmatpush2.msra.mxu0 0.0
    %3261 = vmatprep.subr.mxu0 0.0
    %3262 = vmatpush2.msra.mxu0 0.0
    %3263 = vmatprep.subr.mxu0 0.0
    %3264 = vmatpush2.msra.mxu0 0.0
    %3265 = vmatprep.subr.mxu0 0.0
    %3266 = vmatpush2.msra.mxu0 0.0
    %3267 = vmatprep.subr.mxu0 0.0
    %3268 = vmatpush2.msra.mxu0 0.0
    %3269 = vmatprep.subr.mxu0 0.0
    %3270 = vmatpush2.msra.mxu0 0.0
    %3271 = vmatprep.subr.mxu0 0.0
    %3272 = vmatpush2.msra.mxu0 0.0
    %3273 = vmatprep.subr.mxu0 0.0
    %3274 = vmatpush2.msra.mxu0 0.0
    %3275 = vmatprep.subr.mxu0 0.0
    %3276 = vmatpush2.msra.mxu0 0.0
    %3277 = vmatprep.mubr.f32.mxu0 0.0
    %3278 = vmatmul.mubr.f32.gmra.mxu0 %v2665
    %v3279 = vpop.f32.mrf.mxu0
    %v3280 = vadd.f32 0.0, %v3279
    %v3281 = vpop.f32.mrf.mxu0
    %v3282 = vadd.f32 0.0, %v3281
    %3283 = vdwg.mxu0
    %v3288 = vcombine.low %v3209, %v3211
    %v3289 = vcombine.low %v3280, %v3282
    %v3291 = vunpack.c.l.s4 1966171168
    %v3292 = vunpack.c.0.s8 %v3291
    %v3293 = vlaneseq
    %v3294 = vshrl.u32 %v3293, 7
    %v3295 = vsub.s32 %v3292, %v3294
    %v3296 = vrot.slane %v3288, %v3295
    %v3298 = vunpack.c.l.s4 1966171168
    %v3299 = vunpack.c.0.s8 %v3298
    %v3300 = vlaneseq
    %v3301 = vshrl.u32 %v3300, 7
    %v3302 = vsub.s32 %v3299, %v3301
    %v3303 = vrot.slane %v3289, %v3302
    %v3304 = vcombine.low %v3296, %v3303
    %v3305 = vcombine.high %v3296, %v3303
    %v3307 = vunpack.c.l.s4 1966171168
    %v3308 = vunpack.c.0.s8 %v3307
    %v3309 = vlaneseq
    %v3310 = vshrl.u32 %v3309, 7
    %v3311 = vsub.s32 %v3308, %v3310
    %v3312 = vrot.slane %v3304, %v3311
    %v3314 = vunpack.c.l.s4 1966171168
    %v3315 = vunpack.c.0.s8 %v3314
    %v3316 = vlaneseq
    %v3317 = vshrl.u32 %v3316, 7
    %v3318 = vsub.s32 %v3315, %v3317
    %v3319 = vrot.slane %v3305, %v3318
    %v3322 = vadd.f32 %v3075, %v3312
    %v3323 = vadd.f32 %v3077, %v3319
    %v3324 = vxor.u32 %v3322, 2147483648
    %v3325 = vxor.u32 %v3323, 2147483648
    %v3326 = vmul.f32 %v3324, 1.442695
    %v3327 = vpow.pop %v3326
    %v3328 = vmul.f32 %v3325, 1.442695
    %v3329 = vpow.pop %v3328
    %v3330 = vadd.f32 %v3327, 1.0
    %v3331 = vadd.f32 %v3329, 1.0
    %v3332 = vrcp.pop %v3330
    %v3333 = vmul.f32 1.0, %v3332
    %v3334 = vrcp.pop %v3331
    %v3335 = vmul.f32 1.0, %v3334
    %v3338 = vrot.slane %v3322, 1
    %v3339 = vrot.slane %v3323, 1
    %v3342 = vxor.u32 %v3338, 2147483648
    %v3343 = vxor.u32 %v3339, 2147483648
    %v3344 = vmul.f32 %v3342, 1.442695
    %v3345 = vpow.pop %v3344
    %v3346 = vmul.f32 %v3343, 1.442695
    %v3347 = vpow.pop %v3346
    %v3348 = vadd.f32 %v3345, 1.0
    %v3349 = vadd.f32 %v3347, 1.0
    %v3350 = vrcp.pop %v3348
    %v3351 = vmul.f32 1.0, %v3350
    %v3352 = vrcp.pop %v3349
    %v3353 = vmul.f32 1.0, %v3352
    %v3354 = vrot.slane %v3322, 2
    %v3355 = vrot.slane %v3323, 2
    %v3358 = vtanh.pop %v3354
    %v3359 = vtanh.pop %v3355
    %v3360 = vrot.slane %v3322, 3
    %v3361 = vrot.slane %v3323, 3
    %v3364 = vxor.u32 %v3360, 2147483648
    %v3365 = vxor.u32 %v3361, 2147483648
    %v3366 = vmul.f32 %v3364, 1.442695
    %v3367 = vpow.pop %v3366
    %v3368 = vmul.f32 %v3365, 1.442695
    %v3369 = vpow.pop %v3368
    %v3370 = vadd.f32 %v3367, 1.0
    %v3371 = vadd.f32 %v3369, 1.0
    %v3372 = vrcp.pop %v3370
    %v3373 = vmul.f32 1.0, %v3372
    %v3374 = vrcp.pop %v3371
    %v3375 = vmul.f32 1.0, %v3374
    %v3376 = vmul.f32 %v3351, %v2643
    %v3377 = vmul.f32 %v3353, %v2644
    %v3378 = vmul.f32 %v3333, %v3358
    %v3379 = vmul.f32 %v3335, %v3359
    %v3380 = vadd.f32 %v3376, %v3378
    %v3381 = vadd.f32 %v3377, %v3379
    %v3382 = vtanh.pop %v3380
    %v3383 = vtanh.pop %v3381
    %v3384 = vmul.f32 %v3373, %v3382
    %v3385 = vmul.f32 %v3375, %v3383
    %v3388 = vcombine.low %v3384, %v3385
    %v3390 = vunpack.c.l.s4 1966171168
    %v3391 = vunpack.c.0.s8 %v3390
    %v3392 = vlaneseq
    %v3393 = vshrl.u32 %v3392, 7
    %v3394 = vsub.s32 %v3391, %v3393
    %v3395 = vrot.slane %v3388, %v3394
    %v3397 = vunpack.c.l.s4 1966171168
    %v3398 = vunpack.c.0.s8 %v3397
    %v3399 = vlaneseq
    %v3400 = vshrl.u32 %v3399, 7
    %v3401 = vsub.s32 %v3398, %v3400
    %v3402 = vrot.slane %v3395, %v3401
    %v3404 = vld [vmem:[#allocation7] sm:$0xff]
    %v3405 = vld [vmem:[#allocation7 + $0x8] sm:$0xff]
    %v3406 = vld [vmem:[#allocation7 + $0x10] sm:$0xff]
    %v3407 = vld [vmem:[#allocation7 + $0x18] sm:$0xff]
    %v3408 = vld [vmem:[#allocation7 + $0x20] sm:$0xff]
    %v3409 = vld [vmem:[#allocation7 + $0x28] sm:$0xff]
    %v3410 = vld [vmem:[#allocation7 + $0x30] sm:$0xff]
    %v3411 = vld [vmem:[#allocation7 + $0x38] sm:$0xff]
    %v3412 = vld [vmem:[#allocation7 + $0x40] sm:$0xff]
    %v3413 = vld [vmem:[#allocation7 + $0x48] sm:$0xff]
    %v3414 = vld [vmem:[#allocation7 + $0x50] sm:$0xff]
    %v3415 = vld [vmem:[#allocation7 + $0x58] sm:$0xff]
    %v3416 = vld [vmem:[#allocation7 + $0x60] sm:$0xff]
    %v3417 = vld [vmem:[#allocation7 + $0x68] sm:$0xff]
    %v3418 = vld [vmem:[#allocation7 + $0x70] sm:$0xff]
    %v3419 = vld [vmem:[#allocation7 + $0x78] sm:$0xff]
    %v3420 = vld [vmem:[#allocation7 + $0x80] sm:$0xff]
    %v3421 = vld [vmem:[#allocation7 + $0x88] sm:$0xff]
    %v3422 = vld [vmem:[#allocation7 + $0x90] sm:$0xff]
    %v3423 = vld [vmem:[#allocation7 + $0x98] sm:$0xff]
    %v3424 = vld [vmem:[#allocation7 + $0xa0] sm:$0xff]
    %v3425 = vld [vmem:[#allocation7 + $0xa8] sm:$0xff]
    %v3426 = vld [vmem:[#allocation7 + $0xb0] sm:$0xff]
    %v3427 = vld [vmem:[#allocation7 + $0xb8] sm:$0xff]
    %v3428 = vld [vmem:[#allocation7 + $0xc0] sm:$0xff]
    %v3429 = vld [vmem:[#allocation7 + $0xc8] sm:$0xff]
    %v3430 = vld [vmem:[#allocation7 + $0xd0] sm:$0xff]
    %v3431 = vld [vmem:[#allocation7 + $0xd8] sm:$0xff]
    %v3432 = vld [vmem:[#allocation7 + $0xe0] sm:$0xff]
    %v3433 = vld [vmem:[#allocation7 + $0xe8] sm:$0xff]
    %v3434 = vld [vmem:[#allocation7 + $0xf0] sm:$0xff]
    %v3435 = vld [vmem:[#allocation7 + $0xf8] sm:$0xff]
    %v3436 = vld [vmem:[#allocation7 + $0x100] sm:$0xff]
    %v3437 = vld [vmem:[#allocation7 + $0x108] sm:$0xff]
    %v3438 = vld [vmem:[#allocation7 + $0x110] sm:$0xff]
    %v3439 = vld [vmem:[#allocation7 + $0x118] sm:$0xff]
    %v3440 = vld [vmem:[#allocation7 + $0x120] sm:$0xff]
    %v3441 = vld [vmem:[#allocation7 + $0x128] sm:$0xff]
    %v3442 = vld [vmem:[#allocation7 + $0x130] sm:$0xff]
    %v3443 = vld [vmem:[#allocation7 + $0x138] sm:$0xff]
    %v3444 = vld [vmem:[#allocation7 + $0x140] sm:$0xff]
    %v3445 = vld [vmem:[#allocation7 + $0x148] sm:$0xff]
    %v3446 = vld [vmem:[#allocation7 + $0x150] sm:$0xff]
    %v3447 = vld [vmem:[#allocation7 + $0x158] sm:$0xff]
    %v3448 = vld [vmem:[#allocation7 + $0x160] sm:$0xff]
    %v3449 = vld [vmem:[#allocation7 + $0x168] sm:$0xff]
    %v3450 = vld [vmem:[#allocation7 + $0x170] sm:$0xff]
    %v3451 = vld [vmem:[#allocation7 + $0x178] sm:$0xff]
    %v3452 = vld [vmem:[#allocation7 + $0x180] sm:$0xff]
    %v3453 = vld [vmem:[#allocation7 + $0x188] sm:$0xff]
    %v3454 = vld [vmem:[#allocation7 + $0x190] sm:$0xff]
    %v3455 = vld [vmem:[#allocation7 + $0x198] sm:$0xff]
    %v3456 = vld [vmem:[#allocation7 + $0x1a0] sm:$0xff]
    %v3457 = vld [vmem:[#allocation7 + $0x1a8] sm:$0xff]
    %v3458 = vld [vmem:[#allocation7 + $0x1b0] sm:$0xff]
    %v3459 = vld [vmem:[#allocation7 + $0x1b8] sm:$0xff]
    %v3460 = vld [vmem:[#allocation7 + $0x1c0] sm:$0xff]
    %v3461 = vld [vmem:[#allocation7 + $0x1c8] sm:$0xff]
    %v3462 = vld [vmem:[#allocation7 + $0x1d0] sm:$0xff]
    %v3463 = vld [vmem:[#allocation7 + $0x1d8] sm:$0xff]
    %v3464 = vld [vmem:[#allocation7 + $0x1e0] sm:$0xff]
    %v3465 = vld [vmem:[#allocation7 + $0x1e8] sm:$0xff]
    %v3466 = vld [vmem:[#allocation7 + $0x1f0] sm:$0xff]
    %v3467 = vld [vmem:[#allocation7 + $0x1f8] sm:$0xff]
    %v3468 = vld [vmem:[#allocation7 + $0x200] sm:$0xff]
    %v3469 = vld [vmem:[#allocation7 + $0x208] sm:$0xff]
    %v3470 = vld [vmem:[#allocation7 + $0x210] sm:$0xff]
    %v3471 = vld [vmem:[#allocation7 + $0x218] sm:$0xff]
    %v3472 = vld [vmem:[#allocation7 + $0x220] sm:$0xff]
    %v3473 = vld [vmem:[#allocation7 + $0x228] sm:$0xff]
    %v3474 = vld [vmem:[#allocation7 + $0x230] sm:$0xff]
    %v3475 = vld [vmem:[#allocation7 + $0x238] sm:$0xff]
    %v3476 = vld [vmem:[#allocation7 + $0x240] sm:$0xff]
    %v3477 = vld [vmem:[#allocation7 + $0x248] sm:$0xff]
    %v3478 = vld [vmem:[#allocation7 + $0x250] sm:$0xff]
    %v3479 = vld [vmem:[#allocation7 + $0x258] sm:$0xff]
    %v3480 = vld [vmem:[#allocation7 + $0x260] sm:$0xff]
    %v3481 = vld [vmem:[#allocation7 + $0x268] sm:$0xff]
    %v3482 = vld [vmem:[#allocation7 + $0x270] sm:$0xff]
    %v3483 = vld [vmem:[#allocation7 + $0x278] sm:$0xff]
    %v3484 = vld [vmem:[#allocation7 + $0x280] sm:$0xff]
    %v3485 = vld [vmem:[#allocation7 + $0x288] sm:$0xff]
    %v3486 = vld [vmem:[#allocation7 + $0x290] sm:$0xff]
    %v3487 = vld [vmem:[#allocation7 + $0x298] sm:$0xff]
    %v3488 = vld [vmem:[#allocation7 + $0x2a0] sm:$0xff]
    %v3489 = vld [vmem:[#allocation7 + $0x2a8] sm:$0xff]
    %v3490 = vld [vmem:[#allocation7 + $0x2b0] sm:$0xff]
    %v3491 = vld [vmem:[#allocation7 + $0x2b8] sm:$0xff]
    %v3492 = vld [vmem:[#allocation7 + $0x2c0] sm:$0xff]
    %v3493 = vld [vmem:[#allocation7 + $0x2c8] sm:$0xff]
    %v3494 = vld [vmem:[#allocation7 + $0x2d0] sm:$0xff]
    %v3495 = vld [vmem:[#allocation7 + $0x2d8] sm:$0xff]
    %v3496 = vld [vmem:[#allocation7 + $0x2e0] sm:$0xff]
    %v3497 = vld [vmem:[#allocation7 + $0x2e8] sm:$0xff]
    %v3498 = vld [vmem:[#allocation7 + $0x2f0] sm:$0xff]
    %v3499 = vld [vmem:[#allocation7 + $0x2f8] sm:$0xff]
    %v3500 = vld [vmem:[#allocation7 + $0x300] sm:$0xff]
    %v3501 = vld [vmem:[#allocation7 + $0x308] sm:$0xff]
    %v3502 = vld [vmem:[#allocation7 + $0x310] sm:$0xff]
    %v3503 = vld [vmem:[#allocation7 + $0x318] sm:$0xff]
    %v3504 = vld [vmem:[#allocation7 + $0x320] sm:$0xff]
    %v3505 = vld [vmem:[#allocation7 + $0x328] sm:$0xff]
    %v3506 = vld [vmem:[#allocation7 + $0x330] sm:$0xff]
    %v3507 = vld [vmem:[#allocation7 + $0x338] sm:$0xff]
    %v3508 = vld [vmem:[#allocation7 + $0x340] sm:$0xff]
    %v3509 = vld [vmem:[#allocation7 + $0x348] sm:$0xff]
    %v3510 = vld [vmem:[#allocation7 + $0x350] sm:$0xff]
    %v3511 = vld [vmem:[#allocation7 + $0x358] sm:$0xff]
    %v3512 = vld [vmem:[#allocation7 + $0x360] sm:$0xff]
    %v3513 = vld [vmem:[#allocation7 + $0x368] sm:$0xff]
    %v3514 = vld [vmem:[#allocation7 + $0x370] sm:$0xff]
    %v3515 = vld [vmem:[#allocation7 + $0x378] sm:$0xff]
    %v3516 = vld [vmem:[#allocation7 + $0x380] sm:$0xff]
    %v3517 = vld [vmem:[#allocation7 + $0x388] sm:$0xff]
    %v3518 = vld [vmem:[#allocation7 + $0x390] sm:$0xff]
    %v3519 = vld [vmem:[#allocation7 + $0x398] sm:$0xff]
    %v3520 = vld [vmem:[#allocation7 + $0x3a0] sm:$0xff]
    %v3521 = vld [vmem:[#allocation7 + $0x3a8] sm:$0xff]
    %v3522 = vld [vmem:[#allocation7 + $0x3b0] sm:$0xff]
    %v3523 = vld [vmem:[#allocation7 + $0x3b8] sm:$0xff]
    %v3524 = vld [vmem:[#allocation7 + $0x3c0] sm:$0xff]
    %v3525 = vld [vmem:[#allocation7 + $0x3c8] sm:$0xff]
    %v3526 = vld [vmem:[#allocation7 + $0x3d0] sm:$0xff]
    %v3527 = vld [vmem:[#allocation7 + $0x3d8] sm:$0xff]
    %v3528 = vld [vmem:[#allocation7 + $0x3e0] sm:$0xff]
    %v3529 = vld [vmem:[#allocation7 + $0x3e8] sm:$0xff]
    %v3530 = vld [vmem:[#allocation7 + $0x3f0] sm:$0xff]
    %v3531 = vld [vmem:[#allocation7 + $0x3f8] sm:$0xff]
    %3532 = vmatprep.subr.mxu0 %v3465
    %3533 = vmatpush1.msra.mxu0 %v3464
    %3534 = vmatprep.subr.mxu0 %v3461
    %3535 = vmatpush1.msra.mxu0 %v3460
    %3536 = vmatprep.subr.mxu0 %v3457
    %3537 = vmatpush1.msra.mxu0 %v3456
    %3538 = vmatprep.subr.mxu0 %v3453
    %3539 = vmatpush1.msra.mxu0 %v3452
    %3540 = vmatprep.subr.mxu0 %v3449
    %3541 = vmatpush1.msra.mxu0 %v3448
    %3542 = vmatprep.subr.mxu0 %v3445
    %3543 = vmatpush1.msra.mxu0 %v3444
    %3544 = vmatprep.subr.mxu0 %v3441
    %3545 = vmatpush1.msra.mxu0 %v3440
    %3546 = vmatprep.subr.mxu0 %v3437
    %3547 = vmatpush1.msra.mxu0 %v3436
    %3548 = vmatprep.subr.mxu0 %v3433
    %3549 = vmatpush1.msra.mxu0 %v3432
    %3550 = vmatprep.subr.mxu0 %v3429
    %3551 = vmatpush1.msra.mxu0 %v3428
    %3552 = vmatprep.subr.mxu0 %v3425
    %3553 = vmatpush1.msra.mxu0 %v3424
    %3554 = vmatprep.subr.mxu0 %v3421
    %3555 = vmatpush1.msra.mxu0 %v3420
    %3556 = vmatprep.subr.mxu0 %v3417
    %3557 = vmatpush1.msra.mxu0 %v3416
    %3558 = vmatprep.subr.mxu0 %v3413
    %3559 = vmatpush1.msra.mxu0 %v3412
    %3560 = vmatprep.subr.mxu0 %v3409
    %3561 = vmatpush1.msra.mxu0 %v3408
    %3562 = vmatprep.subr.mxu0 %v3405
    %3563 = vmatpush1.msra.mxu0 %v3404
    %3564 = vmatprep.subr.mxu0 %v3529
    %3565 = vmatpush2.msra.mxu0 %v3528
    %3566 = vmatprep.subr.mxu0 %v3525
    %3567 = vmatpush2.msra.mxu0 %v3524
    %3568 = vmatprep.subr.mxu0 %v3521
    %3569 = vmatpush2.msra.mxu0 %v3520
    %3570 = vmatprep.subr.mxu0 %v3517
    %3571 = vmatpush2.msra.mxu0 %v3516
    %3572 = vmatprep.subr.mxu0 %v3513
    %3573 = vmatpush2.msra.mxu0 %v3512
    %3574 = vmatprep.subr.mxu0 %v3509
    %3575 = vmatpush2.msra.mxu0 %v3508
    %3576 = vmatprep.subr.mxu0 %v3505
    %3577 = vmatpush2.msra.mxu0 %v3504
    %3578 = vmatprep.subr.mxu0 %v3501
    %3579 = vmatpush2.msra.mxu0 %v3500
    %3580 = vmatprep.subr.mxu0 %v3497
    %3581 = vmatpush2.msra.mxu0 %v3496
    %3582 = vmatprep.subr.mxu0 %v3493
    %3583 = vmatpush2.msra.mxu0 %v3492
    %3584 = vmatprep.subr.mxu0 %v3489
    %3585 = vmatpush2.msra.mxu0 %v3488
    %3586 = vmatprep.subr.mxu0 %v3485
    %3587 = vmatpush2.msra.mxu0 %v3484
    %3588 = vmatprep.subr.mxu0 %v3481
    %3589 = vmatpush2.msra.mxu0 %v3480
    %3590 = vmatprep.subr.mxu0 %v3477
    %3591 = vmatpush2.msra.mxu0 %v3476
    %3592 = vmatprep.subr.mxu0 %v3473
    %3593 = vmatpush2.msra.mxu0 %v3472
    %3594 = vmatprep.subr.mxu0 %v3469
    %3595 = vmatpush2.msra.mxu0 %v3468
    %3596 = vmatprep.mubr.f32.mxu0 %v2960
    %3597 = vmatmul.mubr.f32.gmra.mxu0 %v3402
    %v3598 = vpop.f32.mrf.mxu0
    %v3599 = vadd.f32 %v561, %v3598
    %v3600 = vpop.f32.mrf.mxu0
    %v3601 = vadd.f32 %v565, %v3600
    %3602 = vdwg.mxu0
    %3603 = vmatprep.subr.mxu0 %v3467
    %3604 = vmatpush1.msra.mxu0 %v3466
    %3605 = vmatprep.subr.mxu0 %v3463
    %3606 = vmatpush1.msra.mxu0 %v3462
    %3607 = vmatprep.subr.mxu0 %v3459
    %3608 = vmatpush1.msra.mxu0 %v3458
    %3609 = vmatprep.subr.mxu0 %v3455
    %3610 = vmatpush1.msra.mxu0 %v3454
    %3611 = vmatprep.subr.mxu0 %v3451
    %3612 = vmatpush1.msra.mxu0 %v3450
    %3613 = vmatprep.subr.mxu0 %v3447
    %3614 = vmatpush1.msra.mxu0 %v3446
    %3615 = vmatprep.subr.mxu0 %v3443
    %3616 = vmatpush1.msra.mxu0 %v3442
    %3617 = vmatprep.subr.mxu0 %v3439
    %3618 = vmatpush1.msra.mxu0 %v3438
    %3619 = vmatprep.subr.mxu0 %v3435
    %3620 = vmatpush1.msra.mxu0 %v3434
    %3621 = vmatprep.subr.mxu0 %v3431
    %3622 = vmatpush1.msra.mxu0 %v3430
    %3623 = vmatprep.subr.mxu0 %v3427
    %3624 = vmatpush1.msra.mxu0 %v3426
    %3625 = vmatprep.subr.mxu0 %v3423
    %3626 = vmatpush1.msra.mxu0 %v3422
    %3627 = vmatprep.subr.mxu0 %v3419
    %3628 = vmatpush1.msra.mxu0 %v3418
    %3629 = vmatprep.subr.mxu0 %v3415
    %3630 = vmatpush1.msra.mxu0 %v3414
    %3631 = vmatprep.subr.mxu0 %v3411
    %3632 = vmatpush1.msra.mxu0 %v3410
    %3633 = vmatprep.subr.mxu0 %v3407
    %3634 = vmatpush1.msra.mxu0 %v3406
    %3635 = vmatprep.subr.mxu0 %v3531
    %3636 = vmatpush2.msra.mxu0 %v3530
    %3637 = vmatprep.subr.mxu0 %v3527
    %3638 = vmatpush2.msra.mxu0 %v3526
    %3639 = vmatprep.subr.mxu0 %v3523
    %3640 = vmatpush2.msra.mxu0 %v3522
    %3641 = vmatprep.subr.mxu0 %v3519
    %3642 = vmatpush2.msra.mxu0 %v3518
    %3643 = vmatprep.subr.mxu0 %v3515
    %3644 = vmatpush2.msra.mxu0 %v3514
    %3645 = vmatprep.subr.mxu0 %v3511
    %3646 = vmatpush2.msra.mxu0 %v3510
    %3647 = vmatprep.subr.mxu0 %v3507
    %3648 = vmatpush2.msra.mxu0 %v3506
    %3649 = vmatprep.subr.mxu0 %v3503
    %3650 = vmatpush2.msra.mxu0 %v3502
    %3651 = vmatprep.subr.mxu0 %v3499
    %3652 = vmatpush2.msra.mxu0 %v3498
    %3653 = vmatprep.subr.mxu0 %v3495
    %3654 = vmatpush2.msra.mxu0 %v3494
    %3655 = vmatprep.subr.mxu0 %v3491
    %3656 = vmatpush2.msra.mxu0 %v3490
    %3657 = vmatprep.subr.mxu0 %v3487
    %3658 = vmatpush2.msra.mxu0 %v3486
    %3659 = vmatprep.subr.mxu0 %v3483
    %3660 = vmatpush2.msra.mxu0 %v3482
    %3661 = vmatprep.subr.mxu0 %v3479
    %3662 = vmatpush2.msra.mxu0 %v3478
    %3663 = vmatprep.subr.mxu0 %v3475
    %3664 = vmatpush2.msra.mxu0 %v3474
    %3665 = vmatprep.subr.mxu0 %v3471
    %3666 = vmatpush2.msra.mxu0 %v3470
    %3667 = vmatprep.mubr.f32.mxu0 %v2960
    %3668 = vmatmul.mubr.f32.gmra.mxu0 %v3402
    %v3669 = vpop.f32.mrf.mxu0
    %v3670 = vadd.f32 %v569, %v3669
    %v3671 = vpop.f32.mrf.mxu0
    %v3672 = vadd.f32 %v573, %v3671
    %3673 = vdwg.mxu0
    %v3674 = vxor.u32 %v3599, 2147483648
    %v3675 = vmul.f32 %v3674, 1.442695
    %v3676 = vpow.pop %v3675
    %v3677 = vadd.f32 %v3676, 1.0
    %v3678 = vrcp.pop %v3677
    %v3679 = vmul.f32 1.0, %v3678
    %v3680 = vxor.u32 %v3601, 2147483648
    %v3681 = vmul.f32 %v3680, 1.442695
    %v3682 = vpow.pop %v3681
    %v3683 = vadd.f32 %v3682, 1.0
    %v3684 = vrcp.pop %v3683
    %v3685 = vmul.f32 1.0, %v3684
    %v3686 = vtanh.pop %v3670
    %v3687 = vxor.u32 %v3672, 2147483648
    %v3688 = vmul.f32 %v3687, 1.442695
    %v3689 = vpow.pop %v3688
    %v3690 = vadd.f32 %v3689, 1.0
    %v3691 = vrcp.pop %v3690
    %v3692 = vmul.f32 1.0, %v3691
    %v3693 = vmul.f32 %v3685, %v2958
    %v3694 = vmul.f32 %v3679, %v3686
    %v3695 = vadd.f32 %v3693, %v3694
    %v3696 = vtanh.pop %v3695
    %v3697 = vmul.f32 %v3692, %v3696
    %v3698 = vld [vmem:[#allocation9] sm:$0xff]
    %v3699 = vld [vmem:[#allocation9 + $0x8] sm:$0xff]
    %v3700 = vld [vmem:[#allocation9 + $0x10] sm:$0xff]
    %v3701 = vld [vmem:[#allocation9 + $0x18] sm:$0xff]
    %v3702 = vld [vmem:[#allocation9 + $0x20] sm:$0xff]
    %v3703 = vld [vmem:[#allocation9 + $0x28] sm:$0xff]
    %v3704 = vld [vmem:[#allocation9 + $0x30] sm:$0xff]
    %v3705 = vld [vmem:[#allocation9 + $0x38] sm:$0xff]
    %v3706 = vld [vmem:[#allocation9 + $0x40] sm:$0xff]
    %v3707 = vld [vmem:[#allocation9 + $0x48] sm:$0xff]
    %v3708 = vld [vmem:[#allocation9 + $0x50] sm:$0xff]
    %v3709 = vld [vmem:[#allocation9 + $0x58] sm:$0xff]
    %v3710 = vld [vmem:[#allocation9 + $0x60] sm:$0xff]
    %v3711 = vld [vmem:[#allocation9 + $0x68] sm:$0xff]
    %v3712 = vld [vmem:[#allocation9 + $0x70] sm:$0xff]
    %v3713 = vld [vmem:[#allocation9 + $0x78] sm:$0xff]
    %3714 = vmatprep.subr.mxu0 0.0
    %3715 = vmatpush1.msra.mxu0 %v3713
    %3716 = vmatprep.subr.mxu0 0.0
    %3717 = vmatpush1.msra.mxu0 %v3712
    %3718 = vmatprep.subr.mxu0 0.0
    %3719 = vmatpush1.msra.mxu0 %v3711
    %3720 = vmatprep.subr.mxu0 0.0
    %3721 = vmatpush1.msra.mxu0 %v3710
    %3722 = vmatprep.subr.mxu0 0.0
    %3723 = vmatpush1.msra.mxu0 %v3709
    %3724 = vmatprep.subr.mxu0 0.0
    %3725 = vmatpush1.msra.mxu0 %v3708
    %3726 = vmatprep.subr.mxu0 0.0
    %3727 = vmatpush1.msra.mxu0 %v3707
    %3728 = vmatprep.subr.mxu0 0.0
    %3729 = vmatpush1.msra.mxu0 %v3706
    %3730 = vmatprep.subr.mxu0 0.0
    %3731 = vmatpush1.msra.mxu0 %v3705
    %3732 = vmatprep.subr.mxu0 0.0
    %3733 = vmatpush1.msra.mxu0 %v3704
    %3734 = vmatprep.subr.mxu0 0.0
    %3735 = vmatpush1.msra.mxu0 %v3703
    %3736 = vmatprep.subr.mxu0 0.0
    %3737 = vmatpush1.msra.mxu0 %v3702
    %3738 = vmatprep.subr.mxu0 0.0
    %3739 = vmatpush1.msra.mxu0 %v3701
    %3740 = vmatprep.subr.mxu0 0.0
    %3741 = vmatpush1.msra.mxu0 %v3700
    %3742 = vmatprep.subr.mxu0 0.0
    %3743 = vmatpush1.msra.mxu0 %v3699
    %3744 = vmatprep.subr.mxu0 0.0
    %3745 = vmatpush1.msra.mxu0 %v3698
    %3746 = vmatprep.subr.mxu0 0.0
    %3747 = vmatpush2.msra.mxu0 0.0
    %3748 = vmatprep.subr.mxu0 0.0
    %3749 = vmatpush2.msra.mxu0 0.0
    %3750 = vmatprep.subr.mxu0 0.0
    %3751 = vmatpush2.msra.mxu0 0.0
    %3752 = vmatprep.subr.mxu0 0.0
    %3753 = vmatpush2.msra.mxu0 0.0
    %3754 = vmatprep.subr.mxu0 0.0
    %3755 = vmatpush2.msra.mxu0 0.0
    %3756 = vmatprep.subr.mxu0 0.0
    %3757 = vmatpush2.msra.mxu0 0.0
    %3758 = vmatprep.subr.mxu0 0.0
    %3759 = vmatpush2.msra.mxu0 0.0
    %3760 = vmatprep.subr.mxu0 0.0
    %3761 = vmatpush2.msra.mxu0 0.0
    %3762 = vmatprep.subr.mxu0 0.0
    %3763 = vmatpush2.msra.mxu0 0.0
    %3764 = vmatprep.subr.mxu0 0.0
    %3765 = vmatpush2.msra.mxu0 0.0
    %3766 = vmatprep.subr.mxu0 0.0
    %3767 = vmatpush2.msra.mxu0 0.0
    %3768 = vmatprep.subr.mxu0 0.0
    %3769 = vmatpush2.msra.mxu0 0.0
    %3770 = vmatprep.subr.mxu0 0.0
    %3771 = vmatpush2.msra.mxu0 0.0
    %3772 = vmatprep.subr.mxu0 0.0
    %3773 = vmatpush2.msra.mxu0 0.0
    %3774 = vmatprep.subr.mxu0 0.0
    %3775 = vmatpush2.msra.mxu0 0.0
    %3776 = vmatprep.subr.mxu0 0.0
    %3777 = vmatpush2.msra.mxu0 0.0
    %3778 = vmatprep.mubr.f32.mxu0 0.0
    %3779 = vmatmul.mubr.f32.gmra.mxu0 %v3697
    %v3780 = vpop.f32.mrf.mxu0
    %v3781 = vadd.f32 %v764, %v3780
    %v3782 = vpop.f32.mrf.mxu0
    %3783 = vdwg.mxu0
    %v3786 = vunpack.c.l.s4 1966171168
    %v3787 = vunpack.c.0.s8 %v3786
    %v3788 = vlaneseq
    %v3789 = vshrl.u32 %v3788, 7
    %v3790 = vsub.s32 %v3787, %v3789
    %v3791 = vrot.slane %v3781, %v3790
    %v3792 = vcombine.high %v3791, %v3791
    %v3794 = vunpack.c.l.s4 1966171168
    %v3795 = vunpack.c.0.s8 %v3794
    %v3796 = vlaneseq
    %v3797 = vshrl.u32 %v3796, 7
    %v3798 = vsub.s32 %v3795, %v3797
    %v3799 = vrot.slane %v3791, %v3798
    %v3801 = vunpack.c.l.s4 1966171168
    %v3802 = vunpack.c.0.s8 %v3801
    %v3803 = vlaneseq
    %v3804 = vshrl.u32 %v3803, 7
    %v3805 = vsub.s32 %v3802, %v3804
    %v3806 = vrot.slane %v3792, %v3805
    %3809 = vst [vmem:[%s8 + $0x4] sm:$0x1] %v3799
    %3810 = vst [vmem:[%s8 + $0x14] sm:$0x1] %v3806
    %s3811 = scalar_lea.vmem [#allocation2], 5
    %v3812 = vld [vmem:[%s3811] ss:$8 sm:$0xf]
    %s3813 = scalar_lea.vmem [#allocation2], 37
    %v3814 = vld [vmem:[%s3813] ss:$8 sm:$0xf]
    %v3815 = vld [vmem:[#allocation4] sm:$0xff]
    %v3816 = vld [vmem:[#allocation4 + $0x8] sm:$0xff]
    %v3817 = vld [vmem:[#allocation4 + $0x10] sm:$0xff]
    %v3818 = vld [vmem:[#allocation4 + $0x18] sm:$0xff]
    %v3819 = vld [vmem:[#allocation4 + $0x20] sm:$0xff]
    %v3820 = vld [vmem:[#allocation4 + $0x28] sm:$0xff]
    %v3821 = vld [vmem:[#allocation4 + $0x30] sm:$0xff]
    %v3822 = vld [vmem:[#allocation4 + $0x38] sm:$0xff]
    %v3823 = vld [vmem:[#allocation4 + $0x40] sm:$0xff]
    %v3824 = vld [vmem:[#allocation4 + $0x48] sm:$0xff]
    %v3825 = vld [vmem:[#allocation4 + $0x50] sm:$0xff]
    %v3826 = vld [vmem:[#allocation4 + $0x58] sm:$0xff]
    %v3827 = vld [vmem:[#allocation4 + $0x60] sm:$0xff]
    %v3828 = vld [vmem:[#allocation4 + $0x68] sm:$0xff]
    %v3829 = vld [vmem:[#allocation4 + $0x70] sm:$0xff]
    %v3830 = vld [vmem:[#allocation4 + $0x78] sm:$0xff]
    %v3831 = vld [vmem:[#allocation4 + $0x80] sm:$0xff]
    %v3832 = vld [vmem:[#allocation4 + $0x88] sm:$0xff]
    %v3833 = vld [vmem:[#allocation4 + $0x90] sm:$0xff]
    %v3834 = vld [vmem:[#allocation4 + $0x98] sm:$0xff]
    %v3835 = vld [vmem:[#allocation4 + $0xa0] sm:$0xff]
    %v3836 = vld [vmem:[#allocation4 + $0xa8] sm:$0xff]
    %v3837 = vld [vmem:[#allocation4 + $0xb0] sm:$0xff]
    %v3838 = vld [vmem:[#allocation4 + $0xb8] sm:$0xff]
    %v3839 = vld [vmem:[#allocation4 + $0xc0] sm:$0xff]
    %v3840 = vld [vmem:[#allocation4 + $0xc8] sm:$0xff]
    %v3841 = vld [vmem:[#allocation4 + $0xd0] sm:$0xff]
    %v3842 = vld [vmem:[#allocation4 + $0xd8] sm:$0xff]
    %v3843 = vld [vmem:[#allocation4 + $0xe0] sm:$0xff]
    %v3844 = vld [vmem:[#allocation4 + $0xe8] sm:$0xff]
    %v3845 = vld [vmem:[#allocation4 + $0xf0] sm:$0xff]
    %v3846 = vld [vmem:[#allocation4 + $0xf8] sm:$0xff]
    %v3847 = vld [vmem:[#allocation4 + $0x100] sm:$0xff]
    %v3848 = vld [vmem:[#allocation4 + $0x108] sm:$0xff]
    %v3849 = vld [vmem:[#allocation4 + $0x110] sm:$0xff]
    %v3850 = vld [vmem:[#allocation4 + $0x118] sm:$0xff]
    %v3851 = vld [vmem:[#allocation4 + $0x120] sm:$0xff]
    %v3852 = vld [vmem:[#allocation4 + $0x128] sm:$0xff]
    %v3853 = vld [vmem:[#allocation4 + $0x130] sm:$0xff]
    %v3854 = vld [vmem:[#allocation4 + $0x138] sm:$0xff]
    %v3855 = vld [vmem:[#allocation4 + $0x140] sm:$0xff]
    %v3856 = vld [vmem:[#allocation4 + $0x148] sm:$0xff]
    %v3857 = vld [vmem:[#allocation4 + $0x150] sm:$0xff]
    %v3858 = vld [vmem:[#allocation4 + $0x158] sm:$0xff]
    %v3859 = vld [vmem:[#allocation4 + $0x160] sm:$0xff]
    %v3860 = vld [vmem:[#allocation4 + $0x168] sm:$0xff]
    %v3861 = vld [vmem:[#allocation4 + $0x170] sm:$0xff]
    %v3862 = vld [vmem:[#allocation4 + $0x178] sm:$0xff]
    %v3863 = vld [vmem:[#allocation4 + $0x180] sm:$0xff]
    %v3864 = vld [vmem:[#allocation4 + $0x188] sm:$0xff]
    %v3865 = vld [vmem:[#allocation4 + $0x190] sm:$0xff]
    %v3866 = vld [vmem:[#allocation4 + $0x198] sm:$0xff]
    %v3867 = vld [vmem:[#allocation4 + $0x1a0] sm:$0xff]
    %v3868 = vld [vmem:[#allocation4 + $0x1a8] sm:$0xff]
    %v3869 = vld [vmem:[#allocation4 + $0x1b0] sm:$0xff]
    %v3870 = vld [vmem:[#allocation4 + $0x1b8] sm:$0xff]
    %v3871 = vld [vmem:[#allocation4 + $0x1c0] sm:$0xff]
    %v3872 = vld [vmem:[#allocation4 + $0x1c8] sm:$0xff]
    %v3873 = vld [vmem:[#allocation4 + $0x1d0] sm:$0xff]
    %v3874 = vld [vmem:[#allocation4 + $0x1d8] sm:$0xff]
    %v3875 = vld [vmem:[#allocation4 + $0x1e0] sm:$0xff]
    %v3876 = vld [vmem:[#allocation4 + $0x1e8] sm:$0xff]
    %v3877 = vld [vmem:[#allocation4 + $0x1f0] sm:$0xff]
    %v3878 = vld [vmem:[#allocation4 + $0x1f8] sm:$0xff]
    %3879 = vmatprep.subr.mxu0 %v3876
    %3880 = vmatpush1.msra.mxu0 %v3875
    %3881 = vmatprep.subr.mxu0 %v3872
    %3882 = vmatpush1.msra.mxu0 %v3871
    %3883 = vmatprep.subr.mxu0 %v3868
    %3884 = vmatpush1.msra.mxu0 %v3867
    %3885 = vmatprep.subr.mxu0 %v3864
    %3886 = vmatpush1.msra.mxu0 %v3863
    %3887 = vmatprep.subr.mxu0 %v3860
    %3888 = vmatpush1.msra.mxu0 %v3859
    %3889 = vmatprep.subr.mxu0 %v3856
    %3890 = vmatpush1.msra.mxu0 %v3855
    %3891 = vmatprep.subr.mxu0 %v3852
    %3892 = vmatpush1.msra.mxu0 %v3851
    %3893 = vmatprep.subr.mxu0 %v3848
    %3894 = vmatpush1.msra.mxu0 %v3847
    %3895 = vmatprep.subr.mxu0 %v3844
    %3896 = vmatpush1.msra.mxu0 %v3843
    %3897 = vmatprep.subr.mxu0 %v3840
    %3898 = vmatpush1.msra.mxu0 %v3839
    %3899 = vmatprep.subr.mxu0 %v3836
    %3900 = vmatpush1.msra.mxu0 %v3835
    %3901 = vmatprep.subr.mxu0 %v3832
    %3902 = vmatpush1.msra.mxu0 %v3831
    %3903 = vmatprep.subr.mxu0 %v3828
    %3904 = vmatpush1.msra.mxu0 %v3827
    %3905 = vmatprep.subr.mxu0 %v3824
    %3906 = vmatpush1.msra.mxu0 %v3823
    %3907 = vmatprep.subr.mxu0 %v3820
    %3908 = vmatpush1.msra.mxu0 %v3819
    %3909 = vmatprep.subr.mxu0 %v3816
    %3910 = vmatpush1.msra.mxu0 %v3815
    %3911 = vmatprep.subr.mxu0 0.0
    %3912 = vmatpush2.msra.mxu0 0.0
    %3913 = vmatprep.subr.mxu0 0.0
    %3914 = vmatpush2.msra.mxu0 0.0
    %3915 = vmatprep.subr.mxu0 0.0
    %3916 = vmatpush2.msra.mxu0 0.0
    %3917 = vmatprep.subr.mxu0 0.0
    %3918 = vmatpush2.msra.mxu0 0.0
    %3919 = vmatprep.subr.mxu0 0.0
    %3920 = vmatpush2.msra.mxu0 0.0
    %3921 = vmatprep.subr.mxu0 0.0
    %3922 = vmatpush2.msra.mxu0 0.0
    %3923 = vmatprep.subr.mxu0 0.0
    %3924 = vmatpush2.msra.mxu0 0.0
    %3925 = vmatprep.subr.mxu0 0.0
    %3926 = vmatpush2.msra.mxu0 0.0
    %3927 = vmatprep.subr.mxu0 0.0
    %3928 = vmatpush2.msra.mxu0 0.0
    %3929 = vmatprep.subr.mxu0 0.0
    %3930 = vmatpush2.msra.mxu0 0.0
    %3931 = vmatprep.subr.mxu0 0.0
    %3932 = vmatpush2.msra.mxu0 0.0
    %3933 = vmatprep.subr.mxu0 0.0
    %3934 = vmatpush2.msra.mxu0 0.0
    %3935 = vmatprep.subr.mxu0 0.0
    %3936 = vmatpush2.msra.mxu0 0.0
    %3937 = vmatprep.subr.mxu0 0.0
    %3938 = vmatpush2.msra.mxu0 0.0
    %3939 = vmatprep.subr.mxu0 0.0
    %3940 = vmatpush2.msra.mxu0 0.0
    %3941 = vmatprep.subr.mxu0 0.0
    %3942 = vmatpush2.msra.mxu0 0.0
    %3943 = vmatprep.mubr.f32.mxu0 0.0
    %3944 = vmatmul.mubr.f32.gmra.mxu0 %v3402
    %v3945 = vpop.f32.mrf.mxu0
    %v3946 = vadd.f32 0.0, %v3945
    %v3947 = vpop.f32.mrf.mxu0
    %v3948 = vadd.f32 0.0, %v3947
    %3949 = vdwg.mxu0
    %3950 = vmatprep.subr.mxu0 %v3878
    %3951 = vmatpush1.msra.mxu0 %v3877
    %3952 = vmatprep.subr.mxu0 %v3874
    %3953 = vmatpush1.msra.mxu0 %v3873
    %3954 = vmatprep.subr.mxu0 %v3870
    %3955 = vmatpush1.msra.mxu0 %v3869
    %3956 = vmatprep.subr.mxu0 %v3866
    %3957 = vmatpush1.msra.mxu0 %v3865
    %3958 = vmatprep.subr.mxu0 %v3862
    %3959 = vmatpush1.msra.mxu0 %v3861
    %3960 = vmatprep.subr.mxu0 %v3858
    %3961 = vmatpush1.msra.mxu0 %v3857
    %3962 = vmatprep.subr.mxu0 %v3854
    %3963 = vmatpush1.msra.mxu0 %v3853
    %3964 = vmatprep.subr.mxu0 %v3850
    %3965 = vmatpush1.msra.mxu0 %v3849
    %3966 = vmatprep.subr.mxu0 %v3846
    %3967 = vmatpush1.msra.mxu0 %v3845
    %3968 = vmatprep.subr.mxu0 %v3842
    %3969 = vmatpush1.msra.mxu0 %v3841
    %3970 = vmatprep.subr.mxu0 %v3838
    %3971 = vmatpush1.msra.mxu0 %v3837
    %3972 = vmatprep.subr.mxu0 %v3834
    %3973 = vmatpush1.msra.mxu0 %v3833
    %3974 = vmatprep.subr.mxu0 %v3830
    %3975 = vmatpush1.msra.mxu0 %v3829
    %3976 = vmatprep.subr.mxu0 %v3826
    %3977 = vmatpush1.msra.mxu0 %v3825
    %3978 = vmatprep.subr.mxu0 %v3822
    %3979 = vmatpush1.msra.mxu0 %v3821
    %3980 = vmatprep.subr.mxu0 %v3818
    %3981 = vmatpush1.msra.mxu0 %v3817
    %3982 = vmatprep.subr.mxu0 0.0
    %3983 = vmatpush2.msra.mxu0 0.0
    %3984 = vmatprep.subr.mxu0 0.0
    %3985 = vmatpush2.msra.mxu0 0.0
    %3986 = vmatprep.subr.mxu0 0.0
    %3987 = vmatpush2.msra.mxu0 0.0
    %3988 = vmatprep.subr.mxu0 0.0
    %3989 = vmatpush2.msra.mxu0 0.0
    %3990 = vmatprep.subr.mxu0 0.0
    %3991 = vmatpush2.msra.mxu0 0.0
    %3992 = vmatprep.subr.mxu0 0.0
    %3993 = vmatpush2.msra.mxu0 0.0
    %3994 = vmatprep.subr.mxu0 0.0
    %3995 = vmatpush2.msra.mxu0 0.0
    %3996 = vmatprep.subr.mxu0 0.0
    %3997 = vmatpush2.msra.mxu0 0.0
    %3998 = vmatprep.subr.mxu0 0.0
    %3999 = vmatpush2.msra.mxu0 0.0
    %4000 = vmatprep.subr.mxu0 0.0
    %4001 = vmatpush2.msra.mxu0 0.0
    %4002 = vmatprep.subr.mxu0 0.0
    %4003 = vmatpush2.msra.mxu0 0.0
    %4004 = vmatprep.subr.mxu0 0.0
    %4005 = vmatpush2.msra.mxu0 0.0
    %4006 = vmatprep.subr.mxu0 0.0
    %4007 = vmatpush2.msra.mxu0 0.0
    %4008 = vmatprep.subr.mxu0 0.0
    %4009 = vmatpush2.msra.mxu0 0.0
    %4010 = vmatprep.subr.mxu0 0.0
    %4011 = vmatpush2.msra.mxu0 0.0
    %4012 = vmatprep.subr.mxu0 0.0
    %4013 = vmatpush2.msra.mxu0 0.0
    %4014 = vmatprep.mubr.f32.mxu0 0.0
    %4015 = vmatmul.mubr.f32.gmra.mxu0 %v3402
    %v4016 = vpop.f32.mrf.mxu0
    %v4017 = vadd.f32 0.0, %v4016
    %v4018 = vpop.f32.mrf.mxu0
    %v4019 = vadd.f32 0.0, %v4018
    %4020 = vdwg.mxu0
    %v4025 = vcombine.low %v3946, %v3948
    %v4026 = vcombine.low %v4017, %v4019
    %v4028 = vunpack.c.l.s4 1966171168
    %v4029 = vunpack.c.0.s8 %v4028
    %v4030 = vlaneseq
    %v4031 = vshrl.u32 %v4030, 7
    %v4032 = vsub.s32 %v4029, %v4031
    %v4033 = vrot.slane %v4025, %v4032
    %v4035 = vunpack.c.l.s4 1966171168
    %v4036 = vunpack.c.0.s8 %v4035
    %v4037 = vlaneseq
    %v4038 = vshrl.u32 %v4037, 7
    %v4039 = vsub.s32 %v4036, %v4038
    %v4040 = vrot.slane %v4026, %v4039
    %v4041 = vcombine.low %v4033, %v4040
    %v4042 = vcombine.high %v4033, %v4040
    %v4044 = vunpack.c.l.s4 1966171168
    %v4045 = vunpack.c.0.s8 %v4044
    %v4046 = vlaneseq
    %v4047 = vshrl.u32 %v4046, 7
    %v4048 = vsub.s32 %v4045, %v4047
    %v4049 = vrot.slane %v4041, %v4048
    %v4051 = vunpack.c.l.s4 1966171168
    %v4052 = vunpack.c.0.s8 %v4051
    %v4053 = vlaneseq
    %v4054 = vshrl.u32 %v4053, 7
    %v4055 = vsub.s32 %v4052, %v4054
    %v4056 = vrot.slane %v4042, %v4055
    %v4059 = vadd.f32 %v3812, %v4049
    %v4060 = vadd.f32 %v3814, %v4056
    %v4061 = vxor.u32 %v4059, 2147483648
    %v4062 = vxor.u32 %v4060, 2147483648
    %v4063 = vmul.f32 %v4061, 1.442695
    %v4064 = vpow.pop %v4063
    %v4065 = vmul.f32 %v4062, 1.442695
    %v4066 = vpow.pop %v4065
    %v4067 = vadd.f32 %v4064, 1.0
    %v4068 = vadd.f32 %v4066, 1.0
    %v4069 = vrcp.pop %v4067
    %v4070 = vmul.f32 1.0, %v4069
    %v4071 = vrcp.pop %v4068
    %v4072 = vmul.f32 1.0, %v4071
    %v4075 = vrot.slane %v4059, 1
    %v4076 = vrot.slane %v4060, 1
    %v4079 = vxor.u32 %v4075, 2147483648
    %v4080 = vxor.u32 %v4076, 2147483648
    %v4081 = vmul.f32 %v4079, 1.442695
    %v4082 = vpow.pop %v4081
    %v4083 = vmul.f32 %v4080, 1.442695
    %v4084 = vpow.pop %v4083
    %v4085 = vadd.f32 %v4082, 1.0
    %v4086 = vadd.f32 %v4084, 1.0
    %v4087 = vrcp.pop %v4085
    %v4088 = vmul.f32 1.0, %v4087
    %v4089 = vrcp.pop %v4086
    %v4090 = vmul.f32 1.0, %v4089
    %v4091 = vrot.slane %v4059, 2
    %v4092 = vrot.slane %v4060, 2
    %v4095 = vtanh.pop %v4091
    %v4096 = vtanh.pop %v4092
    %v4097 = vrot.slane %v4059, 3
    %v4098 = vrot.slane %v4060, 3
    %v4101 = vxor.u32 %v4097, 2147483648
    %v4102 = vxor.u32 %v4098, 2147483648
    %v4103 = vmul.f32 %v4101, 1.442695
    %v4104 = vpow.pop %v4103
    %v4105 = vmul.f32 %v4102, 1.442695
    %v4106 = vpow.pop %v4105
    %v4107 = vadd.f32 %v4104, 1.0
    %v4108 = vadd.f32 %v4106, 1.0
    %v4109 = vrcp.pop %v4107
    %v4110 = vmul.f32 1.0, %v4109
    %v4111 = vrcp.pop %v4108
    %v4112 = vmul.f32 1.0, %v4111
    %v4113 = vmul.f32 %v4088, %v3380
    %v4114 = vmul.f32 %v4090, %v3381
    %v4115 = vmul.f32 %v4070, %v4095
    %v4116 = vmul.f32 %v4072, %v4096
    %v4117 = vadd.f32 %v4113, %v4115
    %v4118 = vadd.f32 %v4114, %v4116
    %v4119 = vtanh.pop %v4117
    %v4120 = vtanh.pop %v4118
    %v4121 = vmul.f32 %v4110, %v4119
    %v4122 = vmul.f32 %v4112, %v4120
    %v4125 = vcombine.low %v4121, %v4122
    %v4127 = vunpack.c.l.s4 1966171168
    %v4128 = vunpack.c.0.s8 %v4127
    %v4129 = vlaneseq
    %v4130 = vshrl.u32 %v4129, 7
    %v4131 = vsub.s32 %v4128, %v4130
    %v4132 = vrot.slane %v4125, %v4131
    %v4134 = vunpack.c.l.s4 1966171168
    %v4135 = vunpack.c.0.s8 %v4134
    %v4136 = vlaneseq
    %v4137 = vshrl.u32 %v4136, 7
    %v4138 = vsub.s32 %v4135, %v4137
    %v4139 = vrot.slane %v4132, %v4138
    %v4141 = vld [vmem:[#allocation7] sm:$0xff]
    %v4142 = vld [vmem:[#allocation7 + $0x8] sm:$0xff]
    %v4143 = vld [vmem:[#allocation7 + $0x10] sm:$0xff]
    %v4144 = vld [vmem:[#allocation7 + $0x18] sm:$0xff]
    %v4145 = vld [vmem:[#allocation7 + $0x20] sm:$0xff]
    %v4146 = vld [vmem:[#allocation7 + $0x28] sm:$0xff]
    %v4147 = vld [vmem:[#allocation7 + $0x30] sm:$0xff]
    %v4148 = vld [vmem:[#allocation7 + $0x38] sm:$0xff]
    %v4149 = vld [vmem:[#allocation7 + $0x40] sm:$0xff]
    %v4150 = vld [vmem:[#allocation7 + $0x48] sm:$0xff]
    %v4151 = vld [vmem:[#allocation7 + $0x50] sm:$0xff]
    %v4152 = vld [vmem:[#allocation7 + $0x58] sm:$0xff]
    %v4153 = vld [vmem:[#allocation7 + $0x60] sm:$0xff]
    %v4154 = vld [vmem:[#allocation7 + $0x68] sm:$0xff]
    %v4155 = vld [vmem:[#allocation7 + $0x70] sm:$0xff]
    %v4156 = vld [vmem:[#allocation7 + $0x78] sm:$0xff]
    %v4157 = vld [vmem:[#allocation7 + $0x80] sm:$0xff]
    %v4158 = vld [vmem:[#allocation7 + $0x88] sm:$0xff]
    %v4159 = vld [vmem:[#allocation7 + $0x90] sm:$0xff]
    %v4160 = vld [vmem:[#allocation7 + $0x98] sm:$0xff]
    %v4161 = vld [vmem:[#allocation7 + $0xa0] sm:$0xff]
    %v4162 = vld [vmem:[#allocation7 + $0xa8] sm:$0xff]
    %v4163 = vld [vmem:[#allocation7 + $0xb0] sm:$0xff]
    %v4164 = vld [vmem:[#allocation7 + $0xb8] sm:$0xff]
    %v4165 = vld [vmem:[#allocation7 + $0xc0] sm:$0xff]
    %v4166 = vld [vmem:[#allocation7 + $0xc8] sm:$0xff]
    %v4167 = vld [vmem:[#allocation7 + $0xd0] sm:$0xff]
    %v4168 = vld [vmem:[#allocation7 + $0xd8] sm:$0xff]
    %v4169 = vld [vmem:[#allocation7 + $0xe0] sm:$0xff]
    %v4170 = vld [vmem:[#allocation7 + $0xe8] sm:$0xff]
    %v4171 = vld [vmem:[#allocation7 + $0xf0] sm:$0xff]
    %v4172 = vld [vmem:[#allocation7 + $0xf8] sm:$0xff]
    %v4173 = vld [vmem:[#allocation7 + $0x100] sm:$0xff]
    %v4174 = vld [vmem:[#allocation7 + $0x108] sm:$0xff]
    %v4175 = vld [vmem:[#allocation7 + $0x110] sm:$0xff]
    %v4176 = vld [vmem:[#allocation7 + $0x118] sm:$0xff]
    %v4177 = vld [vmem:[#allocation7 + $0x120] sm:$0xff]
    %v4178 = vld [vmem:[#allocation7 + $0x128] sm:$0xff]
    %v4179 = vld [vmem:[#allocation7 + $0x130] sm:$0xff]
    %v4180 = vld [vmem:[#allocation7 + $0x138] sm:$0xff]
    %v4181 = vld [vmem:[#allocation7 + $0x140] sm:$0xff]
    %v4182 = vld [vmem:[#allocation7 + $0x148] sm:$0xff]
    %v4183 = vld [vmem:[#allocation7 + $0x150] sm:$0xff]
    %v4184 = vld [vmem:[#allocation7 + $0x158] sm:$0xff]
    %v4185 = vld [vmem:[#allocation7 + $0x160] sm:$0xff]
    %v4186 = vld [vmem:[#allocation7 + $0x168] sm:$0xff]
    %v4187 = vld [vmem:[#allocation7 + $0x170] sm:$0xff]
    %v4188 = vld [vmem:[#allocation7 + $0x178] sm:$0xff]
    %v4189 = vld [vmem:[#allocation7 + $0x180] sm:$0xff]
    %v4190 = vld [vmem:[#allocation7 + $0x188] sm:$0xff]
    %v4191 = vld [vmem:[#allocation7 + $0x190] sm:$0xff]
    %v4192 = vld [vmem:[#allocation7 + $0x198] sm:$0xff]
    %v4193 = vld [vmem:[#allocation7 + $0x1a0] sm:$0xff]
    %v4194 = vld [vmem:[#allocation7 + $0x1a8] sm:$0xff]
    %v4195 = vld [vmem:[#allocation7 + $0x1b0] sm:$0xff]
    %v4196 = vld [vmem:[#allocation7 + $0x1b8] sm:$0xff]
    %v4197 = vld [vmem:[#allocation7 + $0x1c0] sm:$0xff]
    %v4198 = vld [vmem:[#allocation7 + $0x1c8] sm:$0xff]
    %v4199 = vld [vmem:[#allocation7 + $0x1d0] sm:$0xff]
    %v4200 = vld [vmem:[#allocation7 + $0x1d8] sm:$0xff]
    %v4201 = vld [vmem:[#allocation7 + $0x1e0] sm:$0xff]
    %v4202 = vld [vmem:[#allocation7 + $0x1e8] sm:$0xff]
    %v4203 = vld [vmem:[#allocation7 + $0x1f0] sm:$0xff]
    %v4204 = vld [vmem:[#allocation7 + $0x1f8] sm:$0xff]
    %v4205 = vld [vmem:[#allocation7 + $0x200] sm:$0xff]
    %v4206 = vld [vmem:[#allocation7 + $0x208] sm:$0xff]
    %v4207 = vld [vmem:[#allocation7 + $0x210] sm:$0xff]
    %v4208 = vld [vmem:[#allocation7 + $0x218] sm:$0xff]
    %v4209 = vld [vmem:[#allocation7 + $0x220] sm:$0xff]
    %v4210 = vld [vmem:[#allocation7 + $0x228] sm:$0xff]
    %v4211 = vld [vmem:[#allocation7 + $0x230] sm:$0xff]
    %v4212 = vld [vmem:[#allocation7 + $0x238] sm:$0xff]
    %v4213 = vld [vmem:[#allocation7 + $0x240] sm:$0xff]
    %v4214 = vld [vmem:[#allocation7 + $0x248] sm:$0xff]
    %v4215 = vld [vmem:[#allocation7 + $0x250] sm:$0xff]
    %v4216 = vld [vmem:[#allocation7 + $0x258] sm:$0xff]
    %v4217 = vld [vmem:[#allocation7 + $0x260] sm:$0xff]
    %v4218 = vld [vmem:[#allocation7 + $0x268] sm:$0xff]
    %v4219 = vld [vmem:[#allocation7 + $0x270] sm:$0xff]
    %v4220 = vld [vmem:[#allocation7 + $0x278] sm:$0xff]
    %v4221 = vld [vmem:[#allocation7 + $0x280] sm:$0xff]
    %v4222 = vld [vmem:[#allocation7 + $0x288] sm:$0xff]
    %v4223 = vld [vmem:[#allocation7 + $0x290] sm:$0xff]
    %v4224 = vld [vmem:[#allocation7 + $0x298] sm:$0xff]
    %v4225 = vld [vmem:[#allocation7 + $0x2a0] sm:$0xff]
    %v4226 = vld [vmem:[#allocation7 + $0x2a8] sm:$0xff]
    %v4227 = vld [vmem:[#allocation7 + $0x2b0] sm:$0xff]
    %v4228 = vld [vmem:[#allocation7 + $0x2b8] sm:$0xff]
    %v4229 = vld [vmem:[#allocation7 + $0x2c0] sm:$0xff]
    %v4230 = vld [vmem:[#allocation7 + $0x2c8] sm:$0xff]
    %v4231 = vld [vmem:[#allocation7 + $0x2d0] sm:$0xff]
    %v4232 = vld [vmem:[#allocation7 + $0x2d8] sm:$0xff]
    %v4233 = vld [vmem:[#allocation7 + $0x2e0] sm:$0xff]
    %v4234 = vld [vmem:[#allocation7 + $0x2e8] sm:$0xff]
    %v4235 = vld [vmem:[#allocation7 + $0x2f0] sm:$0xff]
    %v4236 = vld [vmem:[#allocation7 + $0x2f8] sm:$0xff]
    %v4237 = vld [vmem:[#allocation7 + $0x300] sm:$0xff]
    %v4238 = vld [vmem:[#allocation7 + $0x308] sm:$0xff]
    %v4239 = vld [vmem:[#allocation7 + $0x310] sm:$0xff]
    %v4240 = vld [vmem:[#allocation7 + $0x318] sm:$0xff]
    %v4241 = vld [vmem:[#allocation7 + $0x320] sm:$0xff]
    %v4242 = vld [vmem:[#allocation7 + $0x328] sm:$0xff]
    %v4243 = vld [vmem:[#allocation7 + $0x330] sm:$0xff]
    %v4244 = vld [vmem:[#allocation7 + $0x338] sm:$0xff]
    %v4245 = vld [vmem:[#allocation7 + $0x340] sm:$0xff]
    %v4246 = vld [vmem:[#allocation7 + $0x348] sm:$0xff]
    %v4247 = vld [vmem:[#allocation7 + $0x350] sm:$0xff]
    %v4248 = vld [vmem:[#allocation7 + $0x358] sm:$0xff]
    %v4249 = vld [vmem:[#allocation7 + $0x360] sm:$0xff]
    %v4250 = vld [vmem:[#allocation7 + $0x368] sm:$0xff]
    %v4251 = vld [vmem:[#allocation7 + $0x370] sm:$0xff]
    %v4252 = vld [vmem:[#allocation7 + $0x378] sm:$0xff]
    %v4253 = vld [vmem:[#allocation7 + $0x380] sm:$0xff]
    %v4254 = vld [vmem:[#allocation7 + $0x388] sm:$0xff]
    %v4255 = vld [vmem:[#allocation7 + $0x390] sm:$0xff]
    %v4256 = vld [vmem:[#allocation7 + $0x398] sm:$0xff]
    %v4257 = vld [vmem:[#allocation7 + $0x3a0] sm:$0xff]
    %v4258 = vld [vmem:[#allocation7 + $0x3a8] sm:$0xff]
    %v4259 = vld [vmem:[#allocation7 + $0x3b0] sm:$0xff]
    %v4260 = vld [vmem:[#allocation7 + $0x3b8] sm:$0xff]
    %v4261 = vld [vmem:[#allocation7 + $0x3c0] sm:$0xff]
    %v4262 = vld [vmem:[#allocation7 + $0x3c8] sm:$0xff]
    %v4263 = vld [vmem:[#allocation7 + $0x3d0] sm:$0xff]
    %v4264 = vld [vmem:[#allocation7 + $0x3d8] sm:$0xff]
    %v4265 = vld [vmem:[#allocation7 + $0x3e0] sm:$0xff]
    %v4266 = vld [vmem:[#allocation7 + $0x3e8] sm:$0xff]
    %v4267 = vld [vmem:[#allocation7 + $0x3f0] sm:$0xff]
    %v4268 = vld [vmem:[#allocation7 + $0x3f8] sm:$0xff]
    %4269 = vmatprep.subr.mxu0 %v4202
    %4270 = vmatpush1.msra.mxu0 %v4201
    %4271 = vmatprep.subr.mxu0 %v4198
    %4272 = vmatpush1.msra.mxu0 %v4197
    %4273 = vmatprep.subr.mxu0 %v4194
    %4274 = vmatpush1.msra.mxu0 %v4193
    %4275 = vmatprep.subr.mxu0 %v4190
    %4276 = vmatpush1.msra.mxu0 %v4189
    %4277 = vmatprep.subr.mxu0 %v4186
    %4278 = vmatpush1.msra.mxu0 %v4185
    %4279 = vmatprep.subr.mxu0 %v4182
    %4280 = vmatpush1.msra.mxu0 %v4181
    %4281 = vmatprep.subr.mxu0 %v4178
    %4282 = vmatpush1.msra.mxu0 %v4177
    %4283 = vmatprep.subr.mxu0 %v4174
    %4284 = vmatpush1.msra.mxu0 %v4173
    %4285 = vmatprep.subr.mxu0 %v4170
    %4286 = vmatpush1.msra.mxu0 %v4169
    %4287 = vmatprep.subr.mxu0 %v4166
    %4288 = vmatpush1.msra.mxu0 %v4165
    %4289 = vmatprep.subr.mxu0 %v4162
    %4290 = vmatpush1.msra.mxu0 %v4161
    %4291 = vmatprep.subr.mxu0 %v4158
    %4292 = vmatpush1.msra.mxu0 %v4157
    %4293 = vmatprep.subr.mxu0 %v4154
    %4294 = vmatpush1.msra.mxu0 %v4153
    %4295 = vmatprep.subr.mxu0 %v4150
    %4296 = vmatpush1.msra.mxu0 %v4149
    %4297 = vmatprep.subr.mxu0 %v4146
    %4298 = vmatpush1.msra.mxu0 %v4145
    %4299 = vmatprep.subr.mxu0 %v4142
    %4300 = vmatpush1.msra.mxu0 %v4141
    %4301 = vmatprep.subr.mxu0 %v4266
    %4302 = vmatpush2.msra.mxu0 %v4265
    %4303 = vmatprep.subr.mxu0 %v4262
    %4304 = vmatpush2.msra.mxu0 %v4261
    %4305 = vmatprep.subr.mxu0 %v4258
    %4306 = vmatpush2.msra.mxu0 %v4257
    %4307 = vmatprep.subr.mxu0 %v4254
    %4308 = vmatpush2.msra.mxu0 %v4253
    %4309 = vmatprep.subr.mxu0 %v4250
    %4310 = vmatpush2.msra.mxu0 %v4249
    %4311 = vmatprep.subr.mxu0 %v4246
    %4312 = vmatpush2.msra.mxu0 %v4245
    %4313 = vmatprep.subr.mxu0 %v4242
    %4314 = vmatpush2.msra.mxu0 %v4241
    %4315 = vmatprep.subr.mxu0 %v4238
    %4316 = vmatpush2.msra.mxu0 %v4237
    %4317 = vmatprep.subr.mxu0 %v4234
    %4318 = vmatpush2.msra.mxu0 %v4233
    %4319 = vmatprep.subr.mxu0 %v4230
    %4320 = vmatpush2.msra.mxu0 %v4229
    %4321 = vmatprep.subr.mxu0 %v4226
    %4322 = vmatpush2.msra.mxu0 %v4225
    %4323 = vmatprep.subr.mxu0 %v4222
    %4324 = vmatpush2.msra.mxu0 %v4221
    %4325 = vmatprep.subr.mxu0 %v4218
    %4326 = vmatpush2.msra.mxu0 %v4217
    %4327 = vmatprep.subr.mxu0 %v4214
    %4328 = vmatpush2.msra.mxu0 %v4213
    %4329 = vmatprep.subr.mxu0 %v4210
    %4330 = vmatpush2.msra.mxu0 %v4209
    %4331 = vmatprep.subr.mxu0 %v4206
    %4332 = vmatpush2.msra.mxu0 %v4205
    %4333 = vmatprep.mubr.f32.mxu0 %v3697
    %4334 = vmatmul.mubr.f32.gmra.mxu0 %v4139
    %v4335 = vpop.f32.mrf.mxu0
    %v4336 = vadd.f32 %v561, %v4335
    %v4337 = vpop.f32.mrf.mxu0
    %v4338 = vadd.f32 %v565, %v4337
    %4339 = vdwg.mxu0
    %4340 = vmatprep.subr.mxu0 %v4204
    %4341 = vmatpush1.msra.mxu0 %v4203
    %4342 = vmatprep.subr.mxu0 %v4200
    %4343 = vmatpush1.msra.mxu0 %v4199
    %4344 = vmatprep.subr.mxu0 %v4196
    %4345 = vmatpush1.msra.mxu0 %v4195
    %4346 = vmatprep.subr.mxu0 %v4192
    %4347 = vmatpush1.msra.mxu0 %v4191
    %4348 = vmatprep.subr.mxu0 %v4188
    %4349 = vmatpush1.msra.mxu0 %v4187
    %4350 = vmatprep.subr.mxu0 %v4184
    %4351 = vmatpush1.msra.mxu0 %v4183
    %4352 = vmatprep.subr.mxu0 %v4180
    %4353 = vmatpush1.msra.mxu0 %v4179
    %4354 = vmatprep.subr.mxu0 %v4176
    %4355 = vmatpush1.msra.mxu0 %v4175
    %4356 = vmatprep.subr.mxu0 %v4172
    %4357 = vmatpush1.msra.mxu0 %v4171
    %4358 = vmatprep.subr.mxu0 %v4168
    %4359 = vmatpush1.msra.mxu0 %v4167
    %4360 = vmatprep.subr.mxu0 %v4164
    %4361 = vmatpush1.msra.mxu0 %v4163
    %4362 = vmatprep.subr.mxu0 %v4160
    %4363 = vmatpush1.msra.mxu0 %v4159
    %4364 = vmatprep.subr.mxu0 %v4156
    %4365 = vmatpush1.msra.mxu0 %v4155
    %4366 = vmatprep.subr.mxu0 %v4152
    %4367 = vmatpush1.msra.mxu0 %v4151
    %4368 = vmatprep.subr.mxu0 %v4148
    %4369 = vmatpush1.msra.mxu0 %v4147
    %4370 = vmatprep.subr.mxu0 %v4144
    %4371 = vmatpush1.msra.mxu0 %v4143
    %4372 = vmatprep.subr.mxu0 %v4268
    %4373 = vmatpush2.msra.mxu0 %v4267
    %4374 = vmatprep.subr.mxu0 %v4264
    %4375 = vmatpush2.msra.mxu0 %v4263
    %4376 = vmatprep.subr.mxu0 %v4260
    %4377 = vmatpush2.msra.mxu0 %v4259
    %4378 = vmatprep.subr.mxu0 %v4256
    %4379 = vmatpush2.msra.mxu0 %v4255
    %4380 = vmatprep.subr.mxu0 %v4252
    %4381 = vmatpush2.msra.mxu0 %v4251
    %4382 = vmatprep.subr.mxu0 %v4248
    %4383 = vmatpush2.msra.mxu0 %v4247
    %4384 = vmatprep.subr.mxu0 %v4244
    %4385 = vmatpush2.msra.mxu0 %v4243
    %4386 = vmatprep.subr.mxu0 %v4240
    %4387 = vmatpush2.msra.mxu0 %v4239
    %4388 = vmatprep.subr.mxu0 %v4236
    %4389 = vmatpush2.msra.mxu0 %v4235
    %4390 = vmatprep.subr.mxu0 %v4232
    %4391 = vmatpush2.msra.mxu0 %v4231
    %4392 = vmatprep.subr.mxu0 %v4228
    %4393 = vmatpush2.msra.mxu0 %v4227
    %4394 = vmatprep.subr.mxu0 %v4224
    %4395 = vmatpush2.msra.mxu0 %v4223
    %4396 = vmatprep.subr.mxu0 %v4220
    %4397 = vmatpush2.msra.mxu0 %v4219
    %4398 = vmatprep.subr.mxu0 %v4216
    %4399 = vmatpush2.msra.mxu0 %v4215
    %4400 = vmatprep.subr.mxu0 %v4212
    %4401 = vmatpush2.msra.mxu0 %v4211
    %4402 = vmatprep.subr.mxu0 %v4208
    %4403 = vmatpush2.msra.mxu0 %v4207
    %4404 = vmatprep.mubr.f32.mxu0 %v3697
    %4405 = vmatmul.mubr.f32.gmra.mxu0 %v4139
    %v4406 = vpop.f32.mrf.mxu0
    %v4407 = vadd.f32 %v569, %v4406
    %v4408 = vpop.f32.mrf.mxu0
    %v4409 = vadd.f32 %v573, %v4408
    %4410 = vdwg.mxu0
    %v4411 = vxor.u32 %v4336, 2147483648
    %v4412 = vmul.f32 %v4411, 1.442695
    %v4413 = vpow.pop %v4412
    %v4414 = vadd.f32 %v4413, 1.0
    %v4415 = vrcp.pop %v4414
    %v4416 = vmul.f32 1.0, %v4415
    %v4417 = vxor.u32 %v4338, 2147483648
    %v4418 = vmul.f32 %v4417, 1.442695
    %v4419 = vpow.pop %v4418
    %v4420 = vadd.f32 %v4419, 1.0
    %v4421 = vrcp.pop %v4420
    %v4422 = vmul.f32 1.0, %v4421
    %v4423 = vtanh.pop %v4407
    %v4424 = vxor.u32 %v4409, 2147483648
    %v4425 = vmul.f32 %v4424, 1.442695
    %v4426 = vpow.pop %v4425
    %v4427 = vadd.f32 %v4426, 1.0
    %v4428 = vrcp.pop %v4427
    %v4429 = vmul.f32 1.0, %v4428
    %v4430 = vmul.f32 %v4422, %v3695
    %v4431 = vmul.f32 %v4416, %v4423
    %v4432 = vadd.f32 %v4430, %v4431
    %v4433 = vtanh.pop %v4432
    %v4434 = vmul.f32 %v4429, %v4433
    %v4435 = vld [vmem:[#allocation9] sm:$0xff]
    %v4436 = vld [vmem:[#allocation9 + $0x8] sm:$0xff]
    %v4437 = vld [vmem:[#allocation9 + $0x10] sm:$0xff]
    %v4438 = vld [vmem:[#allocation9 + $0x18] sm:$0xff]
    %v4439 = vld [vmem:[#allocation9 + $0x20] sm:$0xff]
    %v4440 = vld [vmem:[#allocation9 + $0x28] sm:$0xff]
    %v4441 = vld [vmem:[#allocation9 + $0x30] sm:$0xff]
    %v4442 = vld [vmem:[#allocation9 + $0x38] sm:$0xff]
    %v4443 = vld [vmem:[#allocation9 + $0x40] sm:$0xff]
    %v4444 = vld [vmem:[#allocation9 + $0x48] sm:$0xff]
    %v4445 = vld [vmem:[#allocation9 + $0x50] sm:$0xff]
    %v4446 = vld [vmem:[#allocation9 + $0x58] sm:$0xff]
    %v4447 = vld [vmem:[#allocation9 + $0x60] sm:$0xff]
    %v4448 = vld [vmem:[#allocation9 + $0x68] sm:$0xff]
    %v4449 = vld [vmem:[#allocation9 + $0x70] sm:$0xff]
    %v4450 = vld [vmem:[#allocation9 + $0x78] sm:$0xff]
    %4451 = vmatprep.subr.mxu0 0.0
    %4452 = vmatpush1.msra.mxu0 %v4450
    %4453 = vmatprep.subr.mxu0 0.0
    %4454 = vmatpush1.msra.mxu0 %v4449
    %4455 = vmatprep.subr.mxu0 0.0
    %4456 = vmatpush1.msra.mxu0 %v4448
    %4457 = vmatprep.subr.mxu0 0.0
    %4458 = vmatpush1.msra.mxu0 %v4447
    %4459 = vmatprep.subr.mxu0 0.0
    %4460 = vmatpush1.msra.mxu0 %v4446
    %4461 = vmatprep.subr.mxu0 0.0
    %4462 = vmatpush1.msra.mxu0 %v4445
    %4463 = vmatprep.subr.mxu0 0.0
    %4464 = vmatpush1.msra.mxu0 %v4444
    %4465 = vmatprep.subr.mxu0 0.0
    %4466 = vmatpush1.msra.mxu0 %v4443
    %4467 = vmatprep.subr.mxu0 0.0
    %4468 = vmatpush1.msra.mxu0 %v4442
    %4469 = vmatprep.subr.mxu0 0.0
    %4470 = vmatpush1.msra.mxu0 %v4441
    %4471 = vmatprep.subr.mxu0 0.0
    %4472 = vmatpush1.msra.mxu0 %v4440
    %4473 = vmatprep.subr.mxu0 0.0
    %4474 = vmatpush1.msra.mxu0 %v4439
    %4475 = vmatprep.subr.mxu0 0.0
    %4476 = vmatpush1.msra.mxu0 %v4438
    %4477 = vmatprep.subr.mxu0 0.0
    %4478 = vmatpush1.msra.mxu0 %v4437
    %4479 = vmatprep.subr.mxu0 0.0
    %4480 = vmatpush1.msra.mxu0 %v4436
    %4481 = vmatprep.subr.mxu0 0.0
    %4482 = vmatpush1.msra.mxu0 %v4435
    %4483 = vmatprep.subr.mxu0 0.0
    %4484 = vmatpush2.msra.mxu0 0.0
    %4485 = vmatprep.subr.mxu0 0.0
    %4486 = vmatpush2.msra.mxu0 0.0
    %4487 = vmatprep.subr.mxu0 0.0
    %4488 = vmatpush2.msra.mxu0 0.0
    %4489 = vmatprep.subr.mxu0 0.0
    %4490 = vmatpush2.msra.mxu0 0.0
    %4491 = vmatprep.subr.mxu0 0.0
    %4492 = vmatpush2.msra.mxu0 0.0
    %4493 = vmatprep.subr.mxu0 0.0
    %4494 = vmatpush2.msra.mxu0 0.0
    %4495 = vmatprep.subr.mxu0 0.0
    %4496 = vmatpush2.msra.mxu0 0.0
    %4497 = vmatprep.subr.mxu0 0.0
    %4498 = vmatpush2.msra.mxu0 0.0
    %4499 = vmatprep.subr.mxu0 0.0
    %4500 = vmatpush2.msra.mxu0 0.0
    %4501 = vmatprep.subr.mxu0 0.0
    %4502 = vmatpush2.msra.mxu0 0.0
    %4503 = vmatprep.subr.mxu0 0.0
    %4504 = vmatpush2.msra.mxu0 0.0
    %4505 = vmatprep.subr.mxu0 0.0
    %4506 = vmatpush2.msra.mxu0 0.0
    %4507 = vmatprep.subr.mxu0 0.0
    %4508 = vmatpush2.msra.mxu0 0.0
    %4509 = vmatprep.subr.mxu0 0.0
    %4510 = vmatpush2.msra.mxu0 0.0
    %4511 = vmatprep.subr.mxu0 0.0
    %4512 = vmatpush2.msra.mxu0 0.0
    %4513 = vmatprep.subr.mxu0 0.0
    %4514 = vmatpush2.msra.mxu0 0.0
    %4515 = vmatprep.mubr.f32.mxu0 0.0
    %4516 = vmatmul.mubr.f32.gmra.mxu0 %v4434
    %v4517 = vpop.f32.mrf.mxu0
    %v4518 = vadd.f32 %v764, %v4517
    %v4519 = vpop.f32.mrf.mxu0
    %4520 = vdwg.mxu0
    %v4523 = vunpack.c.l.s4 1966171168
    %v4524 = vunpack.c.0.s8 %v4523
    %v4525 = vlaneseq
    %v4526 = vshrl.u32 %v4525, 7
    %v4527 = vsub.s32 %v4524, %v4526
    %v4528 = vrot.slane %v4518, %v4527
    %v4529 = vcombine.high %v4528, %v4528
    %v4531 = vunpack.c.l.s4 1966171168
    %v4532 = vunpack.c.0.s8 %v4531
    %v4533 = vlaneseq
    %v4534 = vshrl.u32 %v4533, 7
    %v4535 = vsub.s32 %v4532, %v4534
    %v4536 = vrot.slane %v4528, %v4535
    %v4538 = vunpack.c.l.s4 1966171168
    %v4539 = vunpack.c.0.s8 %v4538
    %v4540 = vlaneseq
    %v4541 = vshrl.u32 %v4540, 7
    %v4542 = vsub.s32 %v4539, %v4541
    %v4543 = vrot.slane %v4529, %v4542
    %4546 = vst [vmem:[%s8 + $0x5] sm:$0x1] %v4536
    %4547 = vst [vmem:[%s8 + $0x15] sm:$0x1] %v4543
    %s4548 = scalar_lea.vmem [#allocation2], 6
    %v4549 = vld [vmem:[%s4548] ss:$8 sm:$0xf]
    %s4550 = scalar_lea.vmem [#allocation2], 38
    %v4551 = vld [vmem:[%s4550] ss:$8 sm:$0xf]
    %v4552 = vld [vmem:[#allocation4] sm:$0xff]
    %v4553 = vld [vmem:[#allocation4 + $0x8] sm:$0xff]
    %v4554 = vld [vmem:[#allocation4 + $0x10] sm:$0xff]
    %v4555 = vld [vmem:[#allocation4 + $0x18] sm:$0xff]
    %v4556 = vld [vmem:[#allocation4 + $0x20] sm:$0xff]
    %v4557 = vld [vmem:[#allocation4 + $0x28] sm:$0xff]
    %v4558 = vld [vmem:[#allocation4 + $0x30] sm:$0xff]
    %v4559 = vld [vmem:[#allocation4 + $0x38] sm:$0xff]
    %v4560 = vld [vmem:[#allocation4 + $0x40] sm:$0xff]
    %v4561 = vld [vmem:[#allocation4 + $0x48] sm:$0xff]
    %v4562 = vld [vmem:[#allocation4 + $0x50] sm:$0xff]
    %v4563 = vld [vmem:[#allocation4 + $0x58] sm:$0xff]
    %v4564 = vld [vmem:[#allocation4 + $0x60] sm:$0xff]
    %v4565 = vld [vmem:[#allocation4 + $0x68] sm:$0xff]
    %v4566 = vld [vmem:[#allocation4 + $0x70] sm:$0xff]
    %v4567 = vld [vmem:[#allocation4 + $0x78] sm:$0xff]
    %v4568 = vld [vmem:[#allocation4 + $0x80] sm:$0xff]
    %v4569 = vld [vmem:[#allocation4 + $0x88] sm:$0xff]
    %v4570 = vld [vmem:[#allocation4 + $0x90] sm:$0xff]
    %v4571 = vld [vmem:[#allocation4 + $0x98] sm:$0xff]
    %v4572 = vld [vmem:[#allocation4 + $0xa0] sm:$0xff]
    %v4573 = vld [vmem:[#allocation4 + $0xa8] sm:$0xff]
    %v4574 = vld [vmem:[#allocation4 + $0xb0] sm:$0xff]
    %v4575 = vld [vmem:[#allocation4 + $0xb8] sm:$0xff]
    %v4576 = vld [vmem:[#allocation4 + $0xc0] sm:$0xff]
    %v4577 = vld [vmem:[#allocation4 + $0xc8] sm:$0xff]
    %v4578 = vld [vmem:[#allocation4 + $0xd0] sm:$0xff]
    %v4579 = vld [vmem:[#allocation4 + $0xd8] sm:$0xff]
    %v4580 = vld [vmem:[#allocation4 + $0xe0] sm:$0xff]
    %v4581 = vld [vmem:[#allocation4 + $0xe8] sm:$0xff]
    %v4582 = vld [vmem:[#allocation4 + $0xf0] sm:$0xff]
    %v4583 = vld [vmem:[#allocation4 + $0xf8] sm:$0xff]
    %v4584 = vld [vmem:[#allocation4 + $0x100] sm:$0xff]
    %v4585 = vld [vmem:[#allocation4 + $0x108] sm:$0xff]
    %v4586 = vld [vmem:[#allocation4 + $0x110] sm:$0xff]
    %v4587 = vld [vmem:[#allocation4 + $0x118] sm:$0xff]
    %v4588 = vld [vmem:[#allocation4 + $0x120] sm:$0xff]
    %v4589 = vld [vmem:[#allocation4 + $0x128] sm:$0xff]
    %v4590 = vld [vmem:[#allocation4 + $0x130] sm:$0xff]
    %v4591 = vld [vmem:[#allocation4 + $0x138] sm:$0xff]
    %v4592 = vld [vmem:[#allocation4 + $0x140] sm:$0xff]
    %v4593 = vld [vmem:[#allocation4 + $0x148] sm:$0xff]
    %v4594 = vld [vmem:[#allocation4 + $0x150] sm:$0xff]
    %v4595 = vld [vmem:[#allocation4 + $0x158] sm:$0xff]
    %v4596 = vld [vmem:[#allocation4 + $0x160] sm:$0xff]
    %v4597 = vld [vmem:[#allocation4 + $0x168] sm:$0xff]
    %v4598 = vld [vmem:[#allocation4 + $0x170] sm:$0xff]
    %v4599 = vld [vmem:[#allocation4 + $0x178] sm:$0xff]
    %v4600 = vld [vmem:[#allocation4 + $0x180] sm:$0xff]
    %v4601 = vld [vmem:[#allocation4 + $0x188] sm:$0xff]
    %v4602 = vld [vmem:[#allocation4 + $0x190] sm:$0xff]
    %v4603 = vld [vmem:[#allocation4 + $0x198] sm:$0xff]
    %v4604 = vld [vmem:[#allocation4 + $0x1a0] sm:$0xff]
    %v4605 = vld [vmem:[#allocation4 + $0x1a8] sm:$0xff]
    %v4606 = vld [vmem:[#allocation4 + $0x1b0] sm:$0xff]
    %v4607 = vld [vmem:[#allocation4 + $0x1b8] sm:$0xff]
    %v4608 = vld [vmem:[#allocation4 + $0x1c0] sm:$0xff]
    %v4609 = vld [vmem:[#allocation4 + $0x1c8] sm:$0xff]
    %v4610 = vld [vmem:[#allocation4 + $0x1d0] sm:$0xff]
    %v4611 = vld [vmem:[#allocation4 + $0x1d8] sm:$0xff]
    %v4612 = vld [vmem:[#allocation4 + $0x1e0] sm:$0xff]
    %v4613 = vld [vmem:[#allocation4 + $0x1e8] sm:$0xff]
    %v4614 = vld [vmem:[#allocation4 + $0x1f0] sm:$0xff]
    %v4615 = vld [vmem:[#allocation4 + $0x1f8] sm:$0xff]
    %4616 = vmatprep.subr.mxu0 %v4613
    %4617 = vmatpush1.msra.mxu0 %v4612
    %4618 = vmatprep.subr.mxu0 %v4609
    %4619 = vmatpush1.msra.mxu0 %v4608
    %4620 = vmatprep.subr.mxu0 %v4605
    %4621 = vmatpush1.msra.mxu0 %v4604
    %4622 = vmatprep.subr.mxu0 %v4601
    %4623 = vmatpush1.msra.mxu0 %v4600
    %4624 = vmatprep.subr.mxu0 %v4597
    %4625 = vmatpush1.msra.mxu0 %v4596
    %4626 = vmatprep.subr.mxu0 %v4593
    %4627 = vmatpush1.msra.mxu0 %v4592
    %4628 = vmatprep.subr.mxu0 %v4589
    %4629 = vmatpush1.msra.mxu0 %v4588
    %4630 = vmatprep.subr.mxu0 %v4585
    %4631 = vmatpush1.msra.mxu0 %v4584
    %4632 = vmatprep.subr.mxu0 %v4581
    %4633 = vmatpush1.msra.mxu0 %v4580
    %4634 = vmatprep.subr.mxu0 %v4577
    %4635 = vmatpush1.msra.mxu0 %v4576
    %4636 = vmatprep.subr.mxu0 %v4573
    %4637 = vmatpush1.msra.mxu0 %v4572
    %4638 = vmatprep.subr.mxu0 %v4569
    %4639 = vmatpush1.msra.mxu0 %v4568
    %4640 = vmatprep.subr.mxu0 %v4565
    %4641 = vmatpush1.msra.mxu0 %v4564
    %4642 = vmatprep.subr.mxu0 %v4561
    %4643 = vmatpush1.msra.mxu0 %v4560
    %4644 = vmatprep.subr.mxu0 %v4557
    %4645 = vmatpush1.msra.mxu0 %v4556
    %4646 = vmatprep.subr.mxu0 %v4553
    %4647 = vmatpush1.msra.mxu0 %v4552
    %4648 = vmatprep.subr.mxu0 0.0
    %4649 = vmatpush2.msra.mxu0 0.0
    %4650 = vmatprep.subr.mxu0 0.0
    %4651 = vmatpush2.msra.mxu0 0.0
    %4652 = vmatprep.subr.mxu0 0.0
    %4653 = vmatpush2.msra.mxu0 0.0
    %4654 = vmatprep.subr.mxu0 0.0
    %4655 = vmatpush2.msra.mxu0 0.0
    %4656 = vmatprep.subr.mxu0 0.0
    %4657 = vmatpush2.msra.mxu0 0.0
    %4658 = vmatprep.subr.mxu0 0.0
    %4659 = vmatpush2.msra.mxu0 0.0
    %4660 = vmatprep.subr.mxu0 0.0
    %4661 = vmatpush2.msra.mxu0 0.0
    %4662 = vmatprep.subr.mxu0 0.0
    %4663 = vmatpush2.msra.mxu0 0.0
    %4664 = vmatprep.subr.mxu0 0.0
    %4665 = vmatpush2.msra.mxu0 0.0
    %4666 = vmatprep.subr.mxu0 0.0
    %4667 = vmatpush2.msra.mxu0 0.0
    %4668 = vmatprep.subr.mxu0 0.0
    %4669 = vmatpush2.msra.mxu0 0.0
    %4670 = vmatprep.subr.mxu0 0.0
    %4671 = vmatpush2.msra.mxu0 0.0
    %4672 = vmatprep.subr.mxu0 0.0
    %4673 = vmatpush2.msra.mxu0 0.0
    %4674 = vmatprep.subr.mxu0 0.0
    %4675 = vmatpush2.msra.mxu0 0.0
    %4676 = vmatprep.subr.mxu0 0.0
    %4677 = vmatpush2.msra.mxu0 0.0
    %4678 = vmatprep.subr.mxu0 0.0
    %4679 = vmatpush2.msra.mxu0 0.0
    %4680 = vmatprep.mubr.f32.mxu0 0.0
    %4681 = vmatmul.mubr.f32.gmra.mxu0 %v4139
    %v4682 = vpop.f32.mrf.mxu0
    %v4683 = vadd.f32 0.0, %v4682
    %v4684 = vpop.f32.mrf.mxu0
    %v4685 = vadd.f32 0.0, %v4684
    %4686 = vdwg.mxu0
    %4687 = vmatprep.subr.mxu0 %v4615
    %4688 = vmatpush1.msra.mxu0 %v4614
    %4689 = vmatprep.subr.mxu0 %v4611
    %4690 = vmatpush1.msra.mxu0 %v4610
    %4691 = vmatprep.subr.mxu0 %v4607
    %4692 = vmatpush1.msra.mxu0 %v4606
    %4693 = vmatprep.subr.mxu0 %v4603
    %4694 = vmatpush1.msra.mxu0 %v4602
    %4695 = vmatprep.subr.mxu0 %v4599
    %4696 = vmatpush1.msra.mxu0 %v4598
    %4697 = vmatprep.subr.mxu0 %v4595
    %4698 = vmatpush1.msra.mxu0 %v4594
    %4699 = vmatprep.subr.mxu0 %v4591
    %4700 = vmatpush1.msra.mxu0 %v4590
    %4701 = vmatprep.subr.mxu0 %v4587
    %4702 = vmatpush1.msra.mxu0 %v4586
    %4703 = vmatprep.subr.mxu0 %v4583
    %4704 = vmatpush1.msra.mxu0 %v4582
    %4705 = vmatprep.subr.mxu0 %v4579
    %4706 = vmatpush1.msra.mxu0 %v4578
    %4707 = vmatprep.subr.mxu0 %v4575
    %4708 = vmatpush1.msra.mxu0 %v4574
    %4709 = vmatprep.subr.mxu0 %v4571
    %4710 = vmatpush1.msra.mxu0 %v4570
    %4711 = vmatprep.subr.mxu0 %v4567
    %4712 = vmatpush1.msra.mxu0 %v4566
    %4713 = vmatprep.subr.mxu0 %v4563
    %4714 = vmatpush1.msra.mxu0 %v4562
    %4715 = vmatprep.subr.mxu0 %v4559
    %4716 = vmatpush1.msra.mxu0 %v4558
    %4717 = vmatprep.subr.mxu0 %v4555
    %4718 = vmatpush1.msra.mxu0 %v4554
    %4719 = vmatprep.subr.mxu0 0.0
    %4720 = vmatpush2.msra.mxu0 0.0
    %4721 = vmatprep.subr.mxu0 0.0
    %4722 = vmatpush2.msra.mxu0 0.0
    %4723 = vmatprep.subr.mxu0 0.0
    %4724 = vmatpush2.msra.mxu0 0.0
    %4725 = vmatprep.subr.mxu0 0.0
    %4726 = vmatpush2.msra.mxu0 0.0
    %4727 = vmatprep.subr.mxu0 0.0
    %4728 = vmatpush2.msra.mxu0 0.0
    %4729 = vmatprep.subr.mxu0 0.0
    %4730 = vmatpush2.msra.mxu0 0.0
    %4731 = vmatprep.subr.mxu0 0.0
    %4732 = vmatpush2.msra.mxu0 0.0
    %4733 = vmatprep.subr.mxu0 0.0
    %4734 = vmatpush2.msra.mxu0 0.0
    %4735 = vmatprep.subr.mxu0 0.0
    %4736 = vmatpush2.msra.mxu0 0.0
    %4737 = vmatprep.subr.mxu0 0.0
    %4738 = vmatpush2.msra.mxu0 0.0
    %4739 = vmatprep.subr.mxu0 0.0
    %4740 = vmatpush2.msra.mxu0 0.0
    %4741 = vmatprep.subr.mxu0 0.0
    %4742 = vmatpush2.msra.mxu0 0.0
    %4743 = vmatprep.subr.mxu0 0.0
    %4744 = vmatpush2.msra.mxu0 0.0
    %4745 = vmatprep.subr.mxu0 0.0
    %4746 = vmatpush2.msra.mxu0 0.0
    %4747 = vmatprep.subr.mxu0 0.0
    %4748 = vmatpush2.msra.mxu0 0.0
    %4749 = vmatprep.subr.mxu0 0.0
    %4750 = vmatpush2.msra.mxu0 0.0
    %4751 = vmatprep.mubr.f32.mxu0 0.0
    %4752 = vmatmul.mubr.f32.gmra.mxu0 %v4139
    %v4753 = vpop.f32.mrf.mxu0
    %v4754 = vadd.f32 0.0, %v4753
    %v4755 = vpop.f32.mrf.mxu0
    %v4756 = vadd.f32 0.0, %v4755
    %4757 = vdwg.mxu0
    %v4762 = vcombine.low %v4683, %v4685
    %v4763 = vcombine.low %v4754, %v4756
    %v4765 = vunpack.c.l.s4 1966171168
    %v4766 = vunpack.c.0.s8 %v4765
    %v4767 = vlaneseq
    %v4768 = vshrl.u32 %v4767, 7
    %v4769 = vsub.s32 %v4766, %v4768
    %v4770 = vrot.slane %v4762, %v4769
    %v4772 = vunpack.c.l.s4 1966171168
    %v4773 = vunpack.c.0.s8 %v4772
    %v4774 = vlaneseq
    %v4775 = vshrl.u32 %v4774, 7
    %v4776 = vsub.s32 %v4773, %v4775
    %v4777 = vrot.slane %v4763, %v4776
    %v4778 = vcombine.low %v4770, %v4777
    %v4779 = vcombine.high %v4770, %v4777
    %v4781 = vunpack.c.l.s4 1966171168
    %v4782 = vunpack.c.0.s8 %v4781
    %v4783 = vlaneseq
    %v4784 = vshrl.u32 %v4783, 7
    %v4785 = vsub.s32 %v4782, %v4784
    %v4786 = vrot.slane %v4778, %v4785
    %v4788 = vunpack.c.l.s4 1966171168
    %v4789 = vunpack.c.0.s8 %v4788
    %v4790 = vlaneseq
    %v4791 = vshrl.u32 %v4790, 7
    %v4792 = vsub.s32 %v4789, %v4791
    %v4793 = vrot.slane %v4779, %v4792
    %v4796 = vadd.f32 %v4549, %v4786
    %v4797 = vadd.f32 %v4551, %v4793
    %v4798 = vxor.u32 %v4796, 2147483648
    %v4799 = vxor.u32 %v4797, 2147483648
    %v4800 = vmul.f32 %v4798, 1.442695
    %v4801 = vpow.pop %v4800
    %v4802 = vmul.f32 %v4799, 1.442695
    %v4803 = vpow.pop %v4802
    %v4804 = vadd.f32 %v4801, 1.0
    %v4805 = vadd.f32 %v4803, 1.0
    %v4806 = vrcp.pop %v4804
    %v4807 = vmul.f32 1.0, %v4806
    %v4808 = vrcp.pop %v4805
    %v4809 = vmul.f32 1.0, %v4808
    %v4812 = vrot.slane %v4796, 1
    %v4813 = vrot.slane %v4797, 1
    %v4816 = vxor.u32 %v4812, 2147483648
    %v4817 = vxor.u32 %v4813, 2147483648
    %v4818 = vmul.f32 %v4816, 1.442695
    %v4819 = vpow.pop %v4818
    %v4820 = vmul.f32 %v4817, 1.442695
    %v4821 = vpow.pop %v4820
    %v4822 = vadd.f32 %v4819, 1.0
    %v4823 = vadd.f32 %v4821, 1.0
    %v4824 = vrcp.pop %v4822
    %v4825 = vmul.f32 1.0, %v4824
    %v4826 = vrcp.pop %v4823
    %v4827 = vmul.f32 1.0, %v4826
    %v4828 = vrot.slane %v4796, 2
    %v4829 = vrot.slane %v4797, 2
    %v4832 = vtanh.pop %v4828
    %v4833 = vtanh.pop %v4829
    %v4834 = vrot.slane %v4796, 3
    %v4835 = vrot.slane %v4797, 3
    %v4838 = vxor.u32 %v4834, 2147483648
    %v4839 = vxor.u32 %v4835, 2147483648
    %v4840 = vmul.f32 %v4838, 1.442695
    %v4841 = vpow.pop %v4840
    %v4842 = vmul.f32 %v4839, 1.442695
    %v4843 = vpow.pop %v4842
    %v4844 = vadd.f32 %v4841, 1.0
    %v4845 = vadd.f32 %v4843, 1.0
    %v4846 = vrcp.pop %v4844
    %v4847 = vmul.f32 1.0, %v4846
    %v4848 = vrcp.pop %v4845
    %v4849 = vmul.f32 1.0, %v4848
    %v4850 = vmul.f32 %v4825, %v4117
    %v4851 = vmul.f32 %v4827, %v4118
    %v4852 = vmul.f32 %v4807, %v4832
    %v4853 = vmul.f32 %v4809, %v4833
    %v4854 = vadd.f32 %v4850, %v4852
    %v4855 = vadd.f32 %v4851, %v4853
    %v4856 = vtanh.pop %v4854
    %v4857 = vtanh.pop %v4855
    %v4858 = vmul.f32 %v4847, %v4856
    %v4859 = vmul.f32 %v4849, %v4857
    %v4862 = vcombine.low %v4858, %v4859
    %v4864 = vunpack.c.l.s4 1966171168
    %v4865 = vunpack.c.0.s8 %v4864
    %v4866 = vlaneseq
    %v4867 = vshrl.u32 %v4866, 7
    %v4868 = vsub.s32 %v4865, %v4867
    %v4869 = vrot.slane %v4862, %v4868
    %v4871 = vunpack.c.l.s4 1966171168
    %v4872 = vunpack.c.0.s8 %v4871
    %v4873 = vlaneseq
    %v4874 = vshrl.u32 %v4873, 7
    %v4875 = vsub.s32 %v4872, %v4874
    %v4876 = vrot.slane %v4869, %v4875
    %v4878 = vld [vmem:[#allocation7] sm:$0xff]
    %v4879 = vld [vmem:[#allocation7 + $0x8] sm:$0xff]
    %v4880 = vld [vmem:[#allocation7 + $0x10] sm:$0xff]
    %v4881 = vld [vmem:[#allocation7 + $0x18] sm:$0xff]
    %v4882 = vld [vmem:[#allocation7 + $0x20] sm:$0xff]
    %v4883 = vld [vmem:[#allocation7 + $0x28] sm:$0xff]
    %v4884 = vld [vmem:[#allocation7 + $0x30] sm:$0xff]
    %v4885 = vld [vmem:[#allocation7 + $0x38] sm:$0xff]
    %v4886 = vld [vmem:[#allocation7 + $0x40] sm:$0xff]
    %v4887 = vld [vmem:[#allocation7 + $0x48] sm:$0xff]
    %v4888 = vld [vmem:[#allocation7 + $0x50] sm:$0xff]
    %v4889 = vld [vmem:[#allocation7 + $0x58] sm:$0xff]
    %v4890 = vld [vmem:[#allocation7 + $0x60] sm:$0xff]
    %v4891 = vld [vmem:[#allocation7 + $0x68] sm:$0xff]
    %v4892 = vld [vmem:[#allocation7 + $0x70] sm:$0xff]
    %v4893 = vld [vmem:[#allocation7 + $0x78] sm:$0xff]
    %v4894 = vld [vmem:[#allocation7 + $0x80] sm:$0xff]
    %v4895 = vld [vmem:[#allocation7 + $0x88] sm:$0xff]
    %v4896 = vld [vmem:[#allocation7 + $0x90] sm:$0xff]
    %v4897 = vld [vmem:[#allocation7 + $0x98] sm:$0xff]
    %v4898 = vld [vmem:[#allocation7 + $0xa0] sm:$0xff]
    %v4899 = vld [vmem:[#allocation7 + $0xa8] sm:$0xff]
    %v4900 = vld [vmem:[#allocation7 + $0xb0] sm:$0xff]
    %v4901 = vld [vmem:[#allocation7 + $0xb8] sm:$0xff]
    %v4902 = vld [vmem:[#allocation7 + $0xc0] sm:$0xff]
    %v4903 = vld [vmem:[#allocation7 + $0xc8] sm:$0xff]
    %v4904 = vld [vmem:[#allocation7 + $0xd0] sm:$0xff]
    %v4905 = vld [vmem:[#allocation7 + $0xd8] sm:$0xff]
    %v4906 = vld [vmem:[#allocation7 + $0xe0] sm:$0xff]
    %v4907 = vld [vmem:[#allocation7 + $0xe8] sm:$0xff]
    %v4908 = vld [vmem:[#allocation7 + $0xf0] sm:$0xff]
    %v4909 = vld [vmem:[#allocation7 + $0xf8] sm:$0xff]
    %v4910 = vld [vmem:[#allocation7 + $0x100] sm:$0xff]
    %v4911 = vld [vmem:[#allocation7 + $0x108] sm:$0xff]
    %v4912 = vld [vmem:[#allocation7 + $0x110] sm:$0xff]
    %v4913 = vld [vmem:[#allocation7 + $0x118] sm:$0xff]
    %v4914 = vld [vmem:[#allocation7 + $0x120] sm:$0xff]
    %v4915 = vld [vmem:[#allocation7 + $0x128] sm:$0xff]
    %v4916 = vld [vmem:[#allocation7 + $0x130] sm:$0xff]
    %v4917 = vld [vmem:[#allocation7 + $0x138] sm:$0xff]
    %v4918 = vld [vmem:[#allocation7 + $0x140] sm:$0xff]
    %v4919 = vld [vmem:[#allocation7 + $0x148] sm:$0xff]
    %v4920 = vld [vmem:[#allocation7 + $0x150] sm:$0xff]
    %v4921 = vld [vmem:[#allocation7 + $0x158] sm:$0xff]
    %v4922 = vld [vmem:[#allocation7 + $0x160] sm:$0xff]
    %v4923 = vld [vmem:[#allocation7 + $0x168] sm:$0xff]
    %v4924 = vld [vmem:[#allocation7 + $0x170] sm:$0xff]
    %v4925 = vld [vmem:[#allocation7 + $0x178] sm:$0xff]
    %v4926 = vld [vmem:[#allocation7 + $0x180] sm:$0xff]
    %v4927 = vld [vmem:[#allocation7 + $0x188] sm:$0xff]
    %v4928 = vld [vmem:[#allocation7 + $0x190] sm:$0xff]
    %v4929 = vld [vmem:[#allocation7 + $0x198] sm:$0xff]
    %v4930 = vld [vmem:[#allocation7 + $0x1a0] sm:$0xff]
    %v4931 = vld [vmem:[#allocation7 + $0x1a8] sm:$0xff]
    %v4932 = vld [vmem:[#allocation7 + $0x1b0] sm:$0xff]
    %v4933 = vld [vmem:[#allocation7 + $0x1b8] sm:$0xff]
    %v4934 = vld [vmem:[#allocation7 + $0x1c0] sm:$0xff]
    %v4935 = vld [vmem:[#allocation7 + $0x1c8] sm:$0xff]
    %v4936 = vld [vmem:[#allocation7 + $0x1d0] sm:$0xff]
    %v4937 = vld [vmem:[#allocation7 + $0x1d8] sm:$0xff]
    %v4938 = vld [vmem:[#allocation7 + $0x1e0] sm:$0xff]
    %v4939 = vld [vmem:[#allocation7 + $0x1e8] sm:$0xff]
    %v4940 = vld [vmem:[#allocation7 + $0x1f0] sm:$0xff]
    %v4941 = vld [vmem:[#allocation7 + $0x1f8] sm:$0xff]
    %v4942 = vld [vmem:[#allocation7 + $0x200] sm:$0xff]
    %v4943 = vld [vmem:[#allocation7 + $0x208] sm:$0xff]
    %v4944 = vld [vmem:[#allocation7 + $0x210] sm:$0xff]
    %v4945 = vld [vmem:[#allocation7 + $0x218] sm:$0xff]
    %v4946 = vld [vmem:[#allocation7 + $0x220] sm:$0xff]
    %v4947 = vld [vmem:[#allocation7 + $0x228] sm:$0xff]
    %v4948 = vld [vmem:[#allocation7 + $0x230] sm:$0xff]
    %v4949 = vld [vmem:[#allocation7 + $0x238] sm:$0xff]
    %v4950 = vld [vmem:[#allocation7 + $0x240] sm:$0xff]
    %v4951 = vld [vmem:[#allocation7 + $0x248] sm:$0xff]
    %v4952 = vld [vmem:[#allocation7 + $0x250] sm:$0xff]
    %v4953 = vld [vmem:[#allocation7 + $0x258] sm:$0xff]
    %v4954 = vld [vmem:[#allocation7 + $0x260] sm:$0xff]
    %v4955 = vld [vmem:[#allocation7 + $0x268] sm:$0xff]
    %v4956 = vld [vmem:[#allocation7 + $0x270] sm:$0xff]
    %v4957 = vld [vmem:[#allocation7 + $0x278] sm:$0xff]
    %v4958 = vld [vmem:[#allocation7 + $0x280] sm:$0xff]
    %v4959 = vld [vmem:[#allocation7 + $0x288] sm:$0xff]
    %v4960 = vld [vmem:[#allocation7 + $0x290] sm:$0xff]
    %v4961 = vld [vmem:[#allocation7 + $0x298] sm:$0xff]
    %v4962 = vld [vmem:[#allocation7 + $0x2a0] sm:$0xff]
    %v4963 = vld [vmem:[#allocation7 + $0x2a8] sm:$0xff]
    %v4964 = vld [vmem:[#allocation7 + $0x2b0] sm:$0xff]
    %v4965 = vld [vmem:[#allocation7 + $0x2b8] sm:$0xff]
    %v4966 = vld [vmem:[#allocation7 + $0x2c0] sm:$0xff]
    %v4967 = vld [vmem:[#allocation7 + $0x2c8] sm:$0xff]
    %v4968 = vld [vmem:[#allocation7 + $0x2d0] sm:$0xff]
    %v4969 = vld [vmem:[#allocation7 + $0x2d8] sm:$0xff]
    %v4970 = vld [vmem:[#allocation7 + $0x2e0] sm:$0xff]
    %v4971 = vld [vmem:[#allocation7 + $0x2e8] sm:$0xff]
    %v4972 = vld [vmem:[#allocation7 + $0x2f0] sm:$0xff]
    %v4973 = vld [vmem:[#allocation7 + $0x2f8] sm:$0xff]
    %v4974 = vld [vmem:[#allocation7 + $0x300] sm:$0xff]
    %v4975 = vld [vmem:[#allocation7 + $0x308] sm:$0xff]
    %v4976 = vld [vmem:[#allocation7 + $0x310] sm:$0xff]
    %v4977 = vld [vmem:[#allocation7 + $0x318] sm:$0xff]
    %v4978 = vld [vmem:[#allocation7 + $0x320] sm:$0xff]
    %v4979 = vld [vmem:[#allocation7 + $0x328] sm:$0xff]
    %v4980 = vld [vmem:[#allocation7 + $0x330] sm:$0xff]
    %v4981 = vld [vmem:[#allocation7 + $0x338] sm:$0xff]
    %v4982 = vld [vmem:[#allocation7 + $0x340] sm:$0xff]
    %v4983 = vld [vmem:[#allocation7 + $0x348] sm:$0xff]
    %v4984 = vld [vmem:[#allocation7 + $0x350] sm:$0xff]
    %v4985 = vld [vmem:[#allocation7 + $0x358] sm:$0xff]
    %v4986 = vld [vmem:[#allocation7 + $0x360] sm:$0xff]
    %v4987 = vld [vmem:[#allocation7 + $0x368] sm:$0xff]
    %v4988 = vld [vmem:[#allocation7 + $0x370] sm:$0xff]
    %v4989 = vld [vmem:[#allocation7 + $0x378] sm:$0xff]
    %v4990 = vld [vmem:[#allocation7 + $0x380] sm:$0xff]
    %v4991 = vld [vmem:[#allocation7 + $0x388] sm:$0xff]
    %v4992 = vld [vmem:[#allocation7 + $0x390] sm:$0xff]
    %v4993 = vld [vmem:[#allocation7 + $0x398] sm:$0xff]
    %v4994 = vld [vmem:[#allocation7 + $0x3a0] sm:$0xff]
    %v4995 = vld [vmem:[#allocation7 + $0x3a8] sm:$0xff]
    %v4996 = vld [vmem:[#allocation7 + $0x3b0] sm:$0xff]
    %v4997 = vld [vmem:[#allocation7 + $0x3b8] sm:$0xff]
    %v4998 = vld [vmem:[#allocation7 + $0x3c0] sm:$0xff]
    %v4999 = vld [vmem:[#allocation7 + $0x3c8] sm:$0xff]
    %v5000 = vld [vmem:[#allocation7 + $0x3d0] sm:$0xff]
    %v5001 = vld [vmem:[#allocation7 + $0x3d8] sm:$0xff]
    %v5002 = vld [vmem:[#allocation7 + $0x3e0] sm:$0xff]
    %v5003 = vld [vmem:[#allocation7 + $0x3e8] sm:$0xff]
    %v5004 = vld [vmem:[#allocation7 + $0x3f0] sm:$0xff]
    %v5005 = vld [vmem:[#allocation7 + $0x3f8] sm:$0xff]
    %5006 = vmatprep.subr.mxu0 %v4939
    %5007 = vmatpush1.msra.mxu0 %v4938
    %5008 = vmatprep.subr.mxu0 %v4935
    %5009 = vmatpush1.msra.mxu0 %v4934
    %5010 = vmatprep.subr.mxu0 %v4931
    %5011 = vmatpush1.msra.mxu0 %v4930
    %5012 = vmatprep.subr.mxu0 %v4927
    %5013 = vmatpush1.msra.mxu0 %v4926
    %5014 = vmatprep.subr.mxu0 %v4923
    %5015 = vmatpush1.msra.mxu0 %v4922
    %5016 = vmatprep.subr.mxu0 %v4919
    %5017 = vmatpush1.msra.mxu0 %v4918
    %5018 = vmatprep.subr.mxu0 %v4915
    %5019 = vmatpush1.msra.mxu0 %v4914
    %5020 = vmatprep.subr.mxu0 %v4911
    %5021 = vmatpush1.msra.mxu0 %v4910
    %5022 = vmatprep.subr.mxu0 %v4907
    %5023 = vmatpush1.msra.mxu0 %v4906
    %5024 = vmatprep.subr.mxu0 %v4903
    %5025 = vmatpush1.msra.mxu0 %v4902
    %5026 = vmatprep.subr.mxu0 %v4899
    %5027 = vmatpush1.msra.mxu0 %v4898
    %5028 = vmatprep.subr.mxu0 %v4895
    %5029 = vmatpush1.msra.mxu0 %v4894
    %5030 = vmatprep.subr.mxu0 %v4891
    %5031 = vmatpush1.msra.mxu0 %v4890
    %5032 = vmatprep.subr.mxu0 %v4887
    %5033 = vmatpush1.msra.mxu0 %v4886
    %5034 = vmatprep.subr.mxu0 %v4883
    %5035 = vmatpush1.msra.mxu0 %v4882
    %5036 = vmatprep.subr.mxu0 %v4879
    %5037 = vmatpush1.msra.mxu0 %v4878
    %5038 = vmatprep.subr.mxu0 %v5003
    %5039 = vmatpush2.msra.mxu0 %v5002
    %5040 = vmatprep.subr.mxu0 %v4999
    %5041 = vmatpush2.msra.mxu0 %v4998
    %5042 = vmatprep.subr.mxu0 %v4995
    %5043 = vmatpush2.msra.mxu0 %v4994
    %5044 = vmatprep.subr.mxu0 %v4991
    %5045 = vmatpush2.msra.mxu0 %v4990
    %5046 = vmatprep.subr.mxu0 %v4987
    %5047 = vmatpush2.msra.mxu0 %v4986
    %5048 = vmatprep.subr.mxu0 %v4983
    %5049 = vmatpush2.msra.mxu0 %v4982
    %5050 = vmatprep.subr.mxu0 %v4979
    %5051 = vmatpush2.msra.mxu0 %v4978
    %5052 = vmatprep.subr.mxu0 %v4975
    %5053 = vmatpush2.msra.mxu0 %v4974
    %5054 = vmatprep.subr.mxu0 %v4971
    %5055 = vmatpush2.msra.mxu0 %v4970
    %5056 = vmatprep.subr.mxu0 %v4967
    %5057 = vmatpush2.msra.mxu0 %v4966
    %5058 = vmatprep.subr.mxu0 %v4963
    %5059 = vmatpush2.msra.mxu0 %v4962
    %5060 = vmatprep.subr.mxu0 %v4959
    %5061 = vmatpush2.msra.mxu0 %v4958
    %5062 = vmatprep.subr.mxu0 %v4955
    %5063 = vmatpush2.msra.mxu0 %v4954
    %5064 = vmatprep.subr.mxu0 %v4951
    %5065 = vmatpush2.msra.mxu0 %v4950
    %5066 = vmatprep.subr.mxu0 %v4947
    %5067 = vmatpush2.msra.mxu0 %v4946
    %5068 = vmatprep.subr.mxu0 %v4943
    %5069 = vmatpush2.msra.mxu0 %v4942
    %5070 = vmatprep.mubr.f32.mxu0 %v4434
    %5071 = vmatmul.mubr.f32.gmra.mxu0 %v4876
    %v5072 = vpop.f32.mrf.mxu0
    %v5073 = vadd.f32 %v561, %v5072
    %v5074 = vpop.f32.mrf.mxu0
    %v5075 = vadd.f32 %v565, %v5074
    %5076 = vdwg.mxu0
    %5077 = vmatprep.subr.mxu0 %v4941
    %5078 = vmatpush1.msra.mxu0 %v4940
    %5079 = vmatprep.subr.mxu0 %v4937
    %5080 = vmatpush1.msra.mxu0 %v4936
    %5081 = vmatprep.subr.mxu0 %v4933
    %5082 = vmatpush1.msra.mxu0 %v4932
    %5083 = vmatprep.subr.mxu0 %v4929
    %5084 = vmatpush1.msra.mxu0 %v4928
    %5085 = vmatprep.subr.mxu0 %v4925
    %5086 = vmatpush1.msra.mxu0 %v4924
    %5087 = vmatprep.subr.mxu0 %v4921
    %5088 = vmatpush1.msra.mxu0 %v4920
    %5089 = vmatprep.subr.mxu0 %v4917
    %5090 = vmatpush1.msra.mxu0 %v4916
    %5091 = vmatprep.subr.mxu0 %v4913
    %5092 = vmatpush1.msra.mxu0 %v4912
    %5093 = vmatprep.subr.mxu0 %v4909
    %5094 = vmatpush1.msra.mxu0 %v4908
    %5095 = vmatprep.subr.mxu0 %v4905
    %5096 = vmatpush1.msra.mxu0 %v4904
    %5097 = vmatprep.subr.mxu0 %v4901
    %5098 = vmatpush1.msra.mxu0 %v4900
    %5099 = vmatprep.subr.mxu0 %v4897
    %5100 = vmatpush1.msra.mxu0 %v4896
    %5101 = vmatprep.subr.mxu0 %v4893
    %5102 = vmatpush1.msra.mxu0 %v4892
    %5103 = vmatprep.subr.mxu0 %v4889
    %5104 = vmatpush1.msra.mxu0 %v4888
    %5105 = vmatprep.subr.mxu0 %v4885
    %5106 = vmatpush1.msra.mxu0 %v4884
    %5107 = vmatprep.subr.mxu0 %v4881
    %5108 = vmatpush1.msra.mxu0 %v4880
    %5109 = vmatprep.subr.mxu0 %v5005
    %5110 = vmatpush2.msra.mxu0 %v5004
    %5111 = vmatprep.subr.mxu0 %v5001
    %5112 = vmatpush2.msra.mxu0 %v5000
    %5113 = vmatprep.subr.mxu0 %v4997
    %5114 = vmatpush2.msra.mxu0 %v4996
    %5115 = vmatprep.subr.mxu0 %v4993
    %5116 = vmatpush2.msra.mxu0 %v4992
    %5117 = vmatprep.subr.mxu0 %v4989
    %5118 = vmatpush2.msra.mxu0 %v4988
    %5119 = vmatprep.subr.mxu0 %v4985
    %5120 = vmatpush2.msra.mxu0 %v4984
    %5121 = vmatprep.subr.mxu0 %v4981
    %5122 = vmatpush2.msra.mxu0 %v4980
    %5123 = vmatprep.subr.mxu0 %v4977
    %5124 = vmatpush2.msra.mxu0 %v4976
    %5125 = vmatprep.subr.mxu0 %v4973
    %5126 = vmatpush2.msra.mxu0 %v4972
    %5127 = vmatprep.subr.mxu0 %v4969
    %5128 = vmatpush2.msra.mxu0 %v4968
    %5129 = vmatprep.subr.mxu0 %v4965
    %5130 = vmatpush2.msra.mxu0 %v4964
    %5131 = vmatprep.subr.mxu0 %v4961
    %5132 = vmatpush2.msra.mxu0 %v4960
    %5133 = vmatprep.subr.mxu0 %v4957
    %5134 = vmatpush2.msra.mxu0 %v4956
    %5135 = vmatprep.subr.mxu0 %v4953
    %5136 = vmatpush2.msra.mxu0 %v4952
    %5137 = vmatprep.subr.mxu0 %v4949
    %5138 = vmatpush2.msra.mxu0 %v4948
    %5139 = vmatprep.subr.mxu0 %v4945
    %5140 = vmatpush2.msra.mxu0 %v4944
    %5141 = vmatprep.mubr.f32.mxu0 %v4434
    %5142 = vmatmul.mubr.f32.gmra.mxu0 %v4876
    %v5143 = vpop.f32.mrf.mxu0
    %v5144 = vadd.f32 %v569, %v5143
    %v5145 = vpop.f32.mrf.mxu0
    %v5146 = vadd.f32 %v573, %v5145
    %5147 = vdwg.mxu0
    %v5148 = vxor.u32 %v5073, 2147483648
    %v5149 = vmul.f32 %v5148, 1.442695
    %v5150 = vpow.pop %v5149
    %v5151 = vadd.f32 %v5150, 1.0
    %v5152 = vrcp.pop %v5151
    %v5153 = vmul.f32 1.0, %v5152
    %v5154 = vxor.u32 %v5075, 2147483648
    %v5155 = vmul.f32 %v5154, 1.442695
    %v5156 = vpow.pop %v5155
    %v5157 = vadd.f32 %v5156, 1.0
    %v5158 = vrcp.pop %v5157
    %v5159 = vmul.f32 1.0, %v5158
    %v5160 = vtanh.pop %v5144
    %v5161 = vxor.u32 %v5146, 2147483648
    %v5162 = vmul.f32 %v5161, 1.442695
    %v5163 = vpow.pop %v5162
    %v5164 = vadd.f32 %v5163, 1.0
    %v5165 = vrcp.pop %v5164
    %v5166 = vmul.f32 1.0, %v5165
    %v5167 = vmul.f32 %v5159, %v4432
    %v5168 = vmul.f32 %v5153, %v5160
    %v5169 = vadd.f32 %v5167, %v5168
    %v5170 = vtanh.pop %v5169
    %v5171 = vmul.f32 %v5166, %v5170
    %v5172 = vld [vmem:[#allocation9] sm:$0xff]
    %v5173 = vld [vmem:[#allocation9 + $0x8] sm:$0xff]
    %v5174 = vld [vmem:[#allocation9 + $0x10] sm:$0xff]
    %v5175 = vld [vmem:[#allocation9 + $0x18] sm:$0xff]
    %v5176 = vld [vmem:[#allocation9 + $0x20] sm:$0xff]
    %v5177 = vld [vmem:[#allocation9 + $0x28] sm:$0xff]
    %v5178 = vld [vmem:[#allocation9 + $0x30] sm:$0xff]
    %v5179 = vld [vmem:[#allocation9 + $0x38] sm:$0xff]
    %v5180 = vld [vmem:[#allocation9 + $0x40] sm:$0xff]
    %v5181 = vld [vmem:[#allocation9 + $0x48] sm:$0xff]
    %v5182 = vld [vmem:[#allocation9 + $0x50] sm:$0xff]
    %v5183 = vld [vmem:[#allocation9 + $0x58] sm:$0xff]
    %v5184 = vld [vmem:[#allocation9 + $0x60] sm:$0xff]
    %v5185 = vld [vmem:[#allocation9 + $0x68] sm:$0xff]
    %v5186 = vld [vmem:[#allocation9 + $0x70] sm:$0xff]
    %v5187 = vld [vmem:[#allocation9 + $0x78] sm:$0xff]
    %5188 = vmatprep.subr.mxu0 0.0
    %5189 = vmatpush1.msra.mxu0 %v5187
    %5190 = vmatprep.subr.mxu0 0.0
    %5191 = vmatpush1.msra.mxu0 %v5186
    %5192 = vmatprep.subr.mxu0 0.0
    %5193 = vmatpush1.msra.mxu0 %v5185
    %5194 = vmatprep.subr.mxu0 0.0
    %5195 = vmatpush1.msra.mxu0 %v5184
    %5196 = vmatprep.subr.mxu0 0.0
    %5197 = vmatpush1.msra.mxu0 %v5183
    %5198 = vmatprep.subr.mxu0 0.0
    %5199 = vmatpush1.msra.mxu0 %v5182
    %5200 = vmatprep.subr.mxu0 0.0
    %5201 = vmatpush1.msra.mxu0 %v5181
    %5202 = vmatprep.subr.mxu0 0.0
    %5203 = vmatpush1.msra.mxu0 %v5180
    %5204 = vmatprep.subr.mxu0 0.0
    %5205 = vmatpush1.msra.mxu0 %v5179
    %5206 = vmatprep.subr.mxu0 0.0
    %5207 = vmatpush1.msra.mxu0 %v5178
    %5208 = vmatprep.subr.mxu0 0.0
    %5209 = vmatpush1.msra.mxu0 %v5177
    %5210 = vmatprep.subr.mxu0 0.0
    %5211 = vmatpush1.msra.mxu0 %v5176
    %5212 = vmatprep.subr.mxu0 0.0
    %5213 = vmatpush1.msra.mxu0 %v5175
    %5214 = vmatprep.subr.mxu0 0.0
    %5215 = vmatpush1.msra.mxu0 %v5174
    %5216 = vmatprep.subr.mxu0 0.0
    %5217 = vmatpush1.msra.mxu0 %v5173
    %5218 = vmatprep.subr.mxu0 0.0
    %5219 = vmatpush1.msra.mxu0 %v5172
    %5220 = vmatprep.subr.mxu0 0.0
    %5221 = vmatpush2.msra.mxu0 0.0
    %5222 = vmatprep.subr.mxu0 0.0
    %5223 = vmatpush2.msra.mxu0 0.0
    %5224 = vmatprep.subr.mxu0 0.0
    %5225 = vmatpush2.msra.mxu0 0.0
    %5226 = vmatprep.subr.mxu0 0.0
    %5227 = vmatpush2.msra.mxu0 0.0
    %5228 = vmatprep.subr.mxu0 0.0
    %5229 = vmatpush2.msra.mxu0 0.0
    %5230 = vmatprep.subr.mxu0 0.0
    %5231 = vmatpush2.msra.mxu0 0.0
    %5232 = vmatprep.subr.mxu0 0.0
    %5233 = vmatpush2.msra.mxu0 0.0
    %5234 = vmatprep.subr.mxu0 0.0
    %5235 = vmatpush2.msra.mxu0 0.0
    %5236 = vmatprep.subr.mxu0 0.0
    %5237 = vmatpush2.msra.mxu0 0.0
    %5238 = vmatprep.subr.mxu0 0.0
    %5239 = vmatpush2.msra.mxu0 0.0
    %5240 = vmatprep.subr.mxu0 0.0
    %5241 = vmatpush2.msra.mxu0 0.0
    %5242 = vmatprep.subr.mxu0 0.0
    %5243 = vmatpush2.msra.mxu0 0.0
    %5244 = vmatprep.subr.mxu0 0.0
    %5245 = vmatpush2.msra.mxu0 0.0
    %5246 = vmatprep.subr.mxu0 0.0
    %5247 = vmatpush2.msra.mxu0 0.0
    %5248 = vmatprep.subr.mxu0 0.0
    %5249 = vmatpush2.msra.mxu0 0.0
    %5250 = vmatprep.subr.mxu0 0.0
    %5251 = vmatpush2.msra.mxu0 0.0
    %5252 = vmatprep.mubr.f32.mxu0 0.0
    %5253 = vmatmul.mubr.f32.gmra.mxu0 %v5171
    %v5254 = vpop.f32.mrf.mxu0
    %v5255 = vadd.f32 %v764, %v5254
    %v5256 = vpop.f32.mrf.mxu0
    %5257 = vdwg.mxu0
    %v5260 = vunpack.c.l.s4 1966171168
    %v5261 = vunpack.c.0.s8 %v5260
    %v5262 = vlaneseq
    %v5263 = vshrl.u32 %v5262, 7
    %v5264 = vsub.s32 %v5261, %v5263
    %v5265 = vrot.slane %v5255, %v5264
    %v5266 = vcombine.high %v5265, %v5265
    %v5268 = vunpack.c.l.s4 1966171168
    %v5269 = vunpack.c.0.s8 %v5268
    %v5270 = vlaneseq
    %v5271 = vshrl.u32 %v5270, 7
    %v5272 = vsub.s32 %v5269, %v5271
    %v5273 = vrot.slane %v5265, %v5272
    %v5275 = vunpack.c.l.s4 1966171168
    %v5276 = vunpack.c.0.s8 %v5275
    %v5277 = vlaneseq
    %v5278 = vshrl.u32 %v5277, 7
    %v5279 = vsub.s32 %v5276, %v5278
    %v5280 = vrot.slane %v5266, %v5279
    %5283 = vst [vmem:[%s8 + $0x6] sm:$0x1] %v5273
    %5284 = vst [vmem:[%s8 + $0x16] sm:$0x1] %v5280
    %s5285 = scalar_lea.vmem [#allocation2], 7
    %v5286 = vld [vmem:[%s5285] ss:$8 sm:$0xf]
    %s5287 = scalar_lea.vmem [#allocation2], 39
    %v5288 = vld [vmem:[%s5287] ss:$8 sm:$0xf]
    %v5289 = vld [vmem:[#allocation4] sm:$0xff]
    %v5290 = vld [vmem:[#allocation4 + $0x8] sm:$0xff]
    %v5291 = vld [vmem:[#allocation4 + $0x10] sm:$0xff]
    %v5292 = vld [vmem:[#allocation4 + $0x18] sm:$0xff]
    %v5293 = vld [vmem:[#allocation4 + $0x20] sm:$0xff]
    %v5294 = vld [vmem:[#allocation4 + $0x28] sm:$0xff]
    %v5295 = vld [vmem:[#allocation4 + $0x30] sm:$0xff]
    %v5296 = vld [vmem:[#allocation4 + $0x38] sm:$0xff]
    %v5297 = vld [vmem:[#allocation4 + $0x40] sm:$0xff]
    %v5298 = vld [vmem:[#allocation4 + $0x48] sm:$0xff]
    %v5299 = vld [vmem:[#allocation4 + $0x50] sm:$0xff]
    %v5300 = vld [vmem:[#allocation4 + $0x58] sm:$0xff]
    %v5301 = vld [vmem:[#allocation4 + $0x60] sm:$0xff]
    %v5302 = vld [vmem:[#allocation4 + $0x68] sm:$0xff]
    %v5303 = vld [vmem:[#allocation4 + $0x70] sm:$0xff]
    %v5304 = vld [vmem:[#allocation4 + $0x78] sm:$0xff]
    %v5305 = vld [vmem:[#allocation4 + $0x80] sm:$0xff]
    %v5306 = vld [vmem:[#allocation4 + $0x88] sm:$0xff]
    %v5307 = vld [vmem:[#allocation4 + $0x90] sm:$0xff]
    %v5308 = vld [vmem:[#allocation4 + $0x98] sm:$0xff]
    %v5309 = vld [vmem:[#allocation4 + $0xa0] sm:$0xff]
    %v5310 = vld [vmem:[#allocation4 + $0xa8] sm:$0xff]
    %v5311 = vld [vmem:[#allocation4 + $0xb0] sm:$0xff]
    %v5312 = vld [vmem:[#allocation4 + $0xb8] sm:$0xff]
    %v5313 = vld [vmem:[#allocation4 + $0xc0] sm:$0xff]
    %v5314 = vld [vmem:[#allocation4 + $0xc8] sm:$0xff]
    %v5315 = vld [vmem:[#allocation4 + $0xd0] sm:$0xff]
    %v5316 = vld [vmem:[#allocation4 + $0xd8] sm:$0xff]
    %v5317 = vld [vmem:[#allocation4 + $0xe0] sm:$0xff]
    %v5318 = vld [vmem:[#allocation4 + $0xe8] sm:$0xff]
    %v5319 = vld [vmem:[#allocation4 + $0xf0] sm:$0xff]
    %v5320 = vld [vmem:[#allocation4 + $0xf8] sm:$0xff]
    %v5321 = vld [vmem:[#allocation4 + $0x100] sm:$0xff]
    %v5322 = vld [vmem:[#allocation4 + $0x108] sm:$0xff]
    %v5323 = vld [vmem:[#allocation4 + $0x110] sm:$0xff]
    %v5324 = vld [vmem:[#allocation4 + $0x118] sm:$0xff]
    %v5325 = vld [vmem:[#allocation4 + $0x120] sm:$0xff]
    %v5326 = vld [vmem:[#allocation4 + $0x128] sm:$0xff]
    %v5327 = vld [vmem:[#allocation4 + $0x130] sm:$0xff]
    %v5328 = vld [vmem:[#allocation4 + $0x138] sm:$0xff]
    %v5329 = vld [vmem:[#allocation4 + $0x140] sm:$0xff]
    %v5330 = vld [vmem:[#allocation4 + $0x148] sm:$0xff]
    %v5331 = vld [vmem:[#allocation4 + $0x150] sm:$0xff]
    %v5332 = vld [vmem:[#allocation4 + $0x158] sm:$0xff]
    %v5333 = vld [vmem:[#allocation4 + $0x160] sm:$0xff]
    %v5334 = vld [vmem:[#allocation4 + $0x168] sm:$0xff]
    %v5335 = vld [vmem:[#allocation4 + $0x170] sm:$0xff]
    %v5336 = vld [vmem:[#allocation4 + $0x178] sm:$0xff]
    %v5337 = vld [vmem:[#allocation4 + $0x180] sm:$0xff]
    %v5338 = vld [vmem:[#allocation4 + $0x188] sm:$0xff]
    %v5339 = vld [vmem:[#allocation4 + $0x190] sm:$0xff]
    %v5340 = vld [vmem:[#allocation4 + $0x198] sm:$0xff]
    %v5341 = vld [vmem:[#allocation4 + $0x1a0] sm:$0xff]
    %v5342 = vld [vmem:[#allocation4 + $0x1a8] sm:$0xff]
    %v5343 = vld [vmem:[#allocation4 + $0x1b0] sm:$0xff]
    %v5344 = vld [vmem:[#allocation4 + $0x1b8] sm:$0xff]
    %v5345 = vld [vmem:[#allocation4 + $0x1c0] sm:$0xff]
    %v5346 = vld [vmem:[#allocation4 + $0x1c8] sm:$0xff]
    %v5347 = vld [vmem:[#allocation4 + $0x1d0] sm:$0xff]
    %v5348 = vld [vmem:[#allocation4 + $0x1d8] sm:$0xff]
    %v5349 = vld [vmem:[#allocation4 + $0x1e0] sm:$0xff]
    %v5350 = vld [vmem:[#allocation4 + $0x1e8] sm:$0xff]
    %v5351 = vld [vmem:[#allocation4 + $0x1f0] sm:$0xff]
    %v5352 = vld [vmem:[#allocation4 + $0x1f8] sm:$0xff]
    %5353 = vmatprep.subr.mxu0 %v5350
    %5354 = vmatpush1.msra.mxu0 %v5349
    %5355 = vmatprep.subr.mxu0 %v5346
    %5356 = vmatpush1.msra.mxu0 %v5345
    %5357 = vmatprep.subr.mxu0 %v5342
    %5358 = vmatpush1.msra.mxu0 %v5341
    %5359 = vmatprep.subr.mxu0 %v5338
    %5360 = vmatpush1.msra.mxu0 %v5337
    %5361 = vmatprep.subr.mxu0 %v5334
    %5362 = vmatpush1.msra.mxu0 %v5333
    %5363 = vmatprep.subr.mxu0 %v5330
    %5364 = vmatpush1.msra.mxu0 %v5329
    %5365 = vmatprep.subr.mxu0 %v5326
    %5366 = vmatpush1.msra.mxu0 %v5325
    %5367 = vmatprep.subr.mxu0 %v5322
    %5368 = vmatpush1.msra.mxu0 %v5321
    %5369 = vmatprep.subr.mxu0 %v5318
    %5370 = vmatpush1.msra.mxu0 %v5317
    %5371 = vmatprep.subr.mxu0 %v5314
    %5372 = vmatpush1.msra.mxu0 %v5313
    %5373 = vmatprep.subr.mxu0 %v5310
    %5374 = vmatpush1.msra.mxu0 %v5309
    %5375 = vmatprep.subr.mxu0 %v5306
    %5376 = vmatpush1.msra.mxu0 %v5305
    %5377 = vmatprep.subr.mxu0 %v5302
    %5378 = vmatpush1.msra.mxu0 %v5301
    %5379 = vmatprep.subr.mxu0 %v5298
    %5380 = vmatpush1.msra.mxu0 %v5297
    %5381 = vmatprep.subr.mxu0 %v5294
    %5382 = vmatpush1.msra.mxu0 %v5293
    %5383 = vmatprep.subr.mxu0 %v5290
    %5384 = vmatpush1.msra.mxu0 %v5289
    %5385 = vmatprep.subr.mxu0 0.0
    %5386 = vmatpush2.msra.mxu0 0.0
    %5387 = vmatprep.subr.mxu0 0.0
    %5388 = vmatpush2.msra.mxu0 0.0
    %5389 = vmatprep.subr.mxu0 0.0
    %5390 = vmatpush2.msra.mxu0 0.0
    %5391 = vmatprep.subr.mxu0 0.0
    %5392 = vmatpush2.msra.mxu0 0.0
    %5393 = vmatprep.subr.mxu0 0.0
    %5394 = vmatpush2.msra.mxu0 0.0
    %5395 = vmatprep.subr.mxu0 0.0
    %5396 = vmatpush2.msra.mxu0 0.0
    %5397 = vmatprep.subr.mxu0 0.0
    %5398 = vmatpush2.msra.mxu0 0.0
    %5399 = vmatprep.subr.mxu0 0.0
    %5400 = vmatpush2.msra.mxu0 0.0
    %5401 = vmatprep.subr.mxu0 0.0
    %5402 = vmatpush2.msra.mxu0 0.0
    %5403 = vmatprep.subr.mxu0 0.0
    %5404 = vmatpush2.msra.mxu0 0.0
    %5405 = vmatprep.subr.mxu0 0.0
    %5406 = vmatpush2.msra.mxu0 0.0
    %5407 = vmatprep.subr.mxu0 0.0
    %5408 = vmatpush2.msra.mxu0 0.0
    %5409 = vmatprep.subr.mxu0 0.0
    %5410 = vmatpush2.msra.mxu0 0.0
    %5411 = vmatprep.subr.mxu0 0.0
    %5412 = vmatpush2.msra.mxu0 0.0
    %5413 = vmatprep.subr.mxu0 0.0
    %5414 = vmatpush2.msra.mxu0 0.0
    %5415 = vmatprep.subr.mxu0 0.0
    %5416 = vmatpush2.msra.mxu0 0.0
    %5417 = vmatprep.mubr.f32.mxu0 0.0
    %5418 = vmatmul.mubr.f32.gmra.mxu0 %v4876
    %v5419 = vpop.f32.mrf.mxu0
    %v5420 = vadd.f32 0.0, %v5419
    %v5421 = vpop.f32.mrf.mxu0
    %v5422 = vadd.f32 0.0, %v5421
    %5423 = vdwg.mxu0
    %5424 = vmatprep.subr.mxu0 %v5352
    %5425 = vmatpush1.msra.mxu0 %v5351
    %5426 = vmatprep.subr.mxu0 %v5348
    %5427 = vmatpush1.msra.mxu0 %v5347
    %5428 = vmatprep.subr.mxu0 %v5344
    %5429 = vmatpush1.msra.mxu0 %v5343
    %5430 = vmatprep.subr.mxu0 %v5340
    %5431 = vmatpush1.msra.mxu0 %v5339
    %5432 = vmatprep.subr.mxu0 %v5336
    %5433 = vmatpush1.msra.mxu0 %v5335
    %5434 = vmatprep.subr.mxu0 %v5332
    %5435 = vmatpush1.msra.mxu0 %v5331
    %5436 = vmatprep.subr.mxu0 %v5328
    %5437 = vmatpush1.msra.mxu0 %v5327
    %5438 = vmatprep.subr.mxu0 %v5324
    %5439 = vmatpush1.msra.mxu0 %v5323
    %5440 = vmatprep.subr.mxu0 %v5320
    %5441 = vmatpush1.msra.mxu0 %v5319
    %5442 = vmatprep.subr.mxu0 %v5316
    %5443 = vmatpush1.msra.mxu0 %v5315
    %5444 = vmatprep.subr.mxu0 %v5312
    %5445 = vmatpush1.msra.mxu0 %v5311
    %5446 = vmatprep.subr.mxu0 %v5308
    %5447 = vmatpush1.msra.mxu0 %v5307
    %5448 = vmatprep.subr.mxu0 %v5304
    %5449 = vmatpush1.msra.mxu0 %v5303
    %5450 = vmatprep.subr.mxu0 %v5300
    %5451 = vmatpush1.msra.mxu0 %v5299
    %5452 = vmatprep.subr.mxu0 %v5296
    %5453 = vmatpush1.msra.mxu0 %v5295
    %5454 = vmatprep.subr.mxu0 %v5292
    %5455 = vmatpush1.msra.mxu0 %v5291
    %5456 = vmatprep.subr.mxu0 0.0
    %5457 = vmatpush2.msra.mxu0 0.0
    %5458 = vmatprep.subr.mxu0 0.0
    %5459 = vmatpush2.msra.mxu0 0.0
    %5460 = vmatprep.subr.mxu0 0.0
    %5461 = vmatpush2.msra.mxu0 0.0
    %5462 = vmatprep.subr.mxu0 0.0
    %5463 = vmatpush2.msra.mxu0 0.0
    %5464 = vmatprep.subr.mxu0 0.0
    %5465 = vmatpush2.msra.mxu0 0.0
    %5466 = vmatprep.subr.mxu0 0.0
    %5467 = vmatpush2.msra.mxu0 0.0
    %5468 = vmatprep.subr.mxu0 0.0
    %5469 = vmatpush2.msra.mxu0 0.0
    %5470 = vmatprep.subr.mxu0 0.0
    %5471 = vmatpush2.msra.mxu0 0.0
    %5472 = vmatprep.subr.mxu0 0.0
    %5473 = vmatpush2.msra.mxu0 0.0
    %5474 = vmatprep.subr.mxu0 0.0
    %5475 = vmatpush2.msra.mxu0 0.0
    %5476 = vmatprep.subr.mxu0 0.0
    %5477 = vmatpush2.msra.mxu0 0.0
    %5478 = vmatprep.subr.mxu0 0.0
    %5479 = vmatpush2.msra.mxu0 0.0
    %5480 = vmatprep.subr.mxu0 0.0
    %5481 = vmatpush2.msra.mxu0 0.0
    %5482 = vmatprep.subr.mxu0 0.0
    %5483 = vmatpush2.msra.mxu0 0.0
    %5484 = vmatprep.subr.mxu0 0.0
    %5485 = vmatpush2.msra.mxu0 0.0
    %5486 = vmatprep.subr.mxu0 0.0
    %5487 = vmatpush2.msra.mxu0 0.0
    %5488 = vmatprep.mubr.f32.mxu0 0.0
    %5489 = vmatmul.mubr.f32.gmra.mxu0 %v4876
    %v5490 = vpop.f32.mrf.mxu0
    %v5491 = vadd.f32 0.0, %v5490
    %v5492 = vpop.f32.mrf.mxu0
    %v5493 = vadd.f32 0.0, %v5492
    %5494 = vdwg.mxu0
    %v5499 = vcombine.low %v5420, %v5422
    %v5500 = vcombine.low %v5491, %v5493
    %v5502 = vunpack.c.l.s4 1966171168
    %v5503 = vunpack.c.0.s8 %v5502
    %v5504 = vlaneseq
    %v5505 = vshrl.u32 %v5504, 7
    %v5506 = vsub.s32 %v5503, %v5505
    %v5507 = vrot.slane %v5499, %v5506
    %v5509 = vunpack.c.l.s4 1966171168
    %v5510 = vunpack.c.0.s8 %v5509
    %v5511 = vlaneseq
    %v5512 = vshrl.u32 %v5511, 7
    %v5513 = vsub.s32 %v5510, %v5512
    %v5514 = vrot.slane %v5500, %v5513
    %v5515 = vcombine.low %v5507, %v5514
    %v5516 = vcombine.high %v5507, %v5514
    %v5518 = vunpack.c.l.s4 1966171168
    %v5519 = vunpack.c.0.s8 %v5518
    %v5520 = vlaneseq
    %v5521 = vshrl.u32 %v5520, 7
    %v5522 = vsub.s32 %v5519, %v5521
    %v5523 = vrot.slane %v5515, %v5522
    %v5525 = vunpack.c.l.s4 1966171168
    %v5526 = vunpack.c.0.s8 %v5525
    %v5527 = vlaneseq
    %v5528 = vshrl.u32 %v5527, 7
    %v5529 = vsub.s32 %v5526, %v5528
    %v5530 = vrot.slane %v5516, %v5529
    %v5533 = vadd.f32 %v5286, %v5523
    %v5534 = vadd.f32 %v5288, %v5530
    %v5535 = vxor.u32 %v5533, 2147483648
    %v5536 = vxor.u32 %v5534, 2147483648
    %v5537 = vmul.f32 %v5535, 1.442695
    %v5538 = vpow.pop %v5537
    %v5539 = vmul.f32 %v5536, 1.442695
    %v5540 = vpow.pop %v5539
    %v5541 = vadd.f32 %v5538, 1.0
    %v5542 = vadd.f32 %v5540, 1.0
    %v5543 = vrcp.pop %v5541
    %v5544 = vmul.f32 1.0, %v5543
    %v5545 = vrcp.pop %v5542
    %v5546 = vmul.f32 1.0, %v5545
    %v5549 = vrot.slane %v5533, 1
    %v5550 = vrot.slane %v5534, 1
    %v5553 = vxor.u32 %v5549, 2147483648
    %v5554 = vxor.u32 %v5550, 2147483648
    %v5555 = vmul.f32 %v5553, 1.442695
    %v5556 = vpow.pop %v5555
    %v5557 = vmul.f32 %v5554, 1.442695
    %v5558 = vpow.pop %v5557
    %v5559 = vadd.f32 %v5556, 1.0
    %v5560 = vadd.f32 %v5558, 1.0
    %v5561 = vrcp.pop %v5559
    %v5562 = vmul.f32 1.0, %v5561
    %v5563 = vrcp.pop %v5560
    %v5564 = vmul.f32 1.0, %v5563
    %v5565 = vrot.slane %v5533, 2
    %v5566 = vrot.slane %v5534, 2
    %v5569 = vtanh.pop %v5565
    %v5570 = vtanh.pop %v5566
    %v5571 = vrot.slane %v5533, 3
    %v5572 = vrot.slane %v5534, 3
    %v5575 = vxor.u32 %v5571, 2147483648
    %v5576 = vxor.u32 %v5572, 2147483648
    %v5577 = vmul.f32 %v5575, 1.442695
    %v5578 = vpow.pop %v5577
    %v5579 = vmul.f32 %v5576, 1.442695
    %v5580 = vpow.pop %v5579
    %v5581 = vadd.f32 %v5578, 1.0
    %v5582 = vadd.f32 %v5580, 1.0
    %v5583 = vrcp.pop %v5581
    %v5584 = vmul.f32 1.0, %v5583
    %v5585 = vrcp.pop %v5582
    %v5586 = vmul.f32 1.0, %v5585
    %v5587 = vmul.f32 %v5562, %v4854
    %v5588 = vmul.f32 %v5564, %v4855
    %v5589 = vmul.f32 %v5544, %v5569
    %v5590 = vmul.f32 %v5546, %v5570
    %v5591 = vadd.f32 %v5587, %v5589
    %v5592 = vadd.f32 %v5588, %v5590
    %v5593 = vtanh.pop %v5591
    %v5594 = vtanh.pop %v5592
    %v5595 = vmul.f32 %v5584, %v5593
    %v5596 = vmul.f32 %v5586, %v5594
    %v5599 = vcombine.low %v5595, %v5596
    %v5601 = vunpack.c.l.s4 1966171168
    %v5602 = vunpack.c.0.s8 %v5601
    %v5603 = vlaneseq
    %v5604 = vshrl.u32 %v5603, 7
    %v5605 = vsub.s32 %v5602, %v5604
    %v5606 = vrot.slane %v5599, %v5605
    %v5608 = vunpack.c.l.s4 1966171168
    %v5609 = vunpack.c.0.s8 %v5608
    %v5610 = vlaneseq
    %v5611 = vshrl.u32 %v5610, 7
    %v5612 = vsub.s32 %v5609, %v5611
    %v5613 = vrot.slane %v5606, %v5612
    %v5615 = vld [vmem:[#allocation7] sm:$0xff]
    %v5616 = vld [vmem:[#allocation7 + $0x8] sm:$0xff]
    %v5617 = vld [vmem:[#allocation7 + $0x10] sm:$0xff]
    %v5618 = vld [vmem:[#allocation7 + $0x18] sm:$0xff]
    %v5619 = vld [vmem:[#allocation7 + $0x20] sm:$0xff]
    %v5620 = vld [vmem:[#allocation7 + $0x28] sm:$0xff]
    %v5621 = vld [vmem:[#allocation7 + $0x30] sm:$0xff]
    %v5622 = vld [vmem:[#allocation7 + $0x38] sm:$0xff]
    %v5623 = vld [vmem:[#allocation7 + $0x40] sm:$0xff]
    %v5624 = vld [vmem:[#allocation7 + $0x48] sm:$0xff]
    %v5625 = vld [vmem:[#allocation7 + $0x50] sm:$0xff]
    %v5626 = vld [vmem:[#allocation7 + $0x58] sm:$0xff]
    %v5627 = vld [vmem:[#allocation7 + $0x60] sm:$0xff]
    %v5628 = vld [vmem:[#allocation7 + $0x68] sm:$0xff]
    %v5629 = vld [vmem:[#allocation7 + $0x70] sm:$0xff]
    %v5630 = vld [vmem:[#allocation7 + $0x78] sm:$0xff]
    %v5631 = vld [vmem:[#allocation7 + $0x80] sm:$0xff]
    %v5632 = vld [vmem:[#allocation7 + $0x88] sm:$0xff]
    %v5633 = vld [vmem:[#allocation7 + $0x90] sm:$0xff]
    %v5634 = vld [vmem:[#allocation7 + $0x98] sm:$0xff]
    %v5635 = vld [vmem:[#allocation7 + $0xa0] sm:$0xff]
    %v5636 = vld [vmem:[#allocation7 + $0xa8] sm:$0xff]
    %v5637 = vld [vmem:[#allocation7 + $0xb0] sm:$0xff]
    %v5638 = vld [vmem:[#allocation7 + $0xb8] sm:$0xff]
    %v5639 = vld [vmem:[#allocation7 + $0xc0] sm:$0xff]
    %v5640 = vld [vmem:[#allocation7 + $0xc8] sm:$0xff]
    %v5641 = vld [vmem:[#allocation7 + $0xd0] sm:$0xff]
    %v5642 = vld [vmem:[#allocation7 + $0xd8] sm:$0xff]
    %v5643 = vld [vmem:[#allocation7 + $0xe0] sm:$0xff]
    %v5644 = vld [vmem:[#allocation7 + $0xe8] sm:$0xff]
    %v5645 = vld [vmem:[#allocation7 + $0xf0] sm:$0xff]
    %v5646 = vld [vmem:[#allocation7 + $0xf8] sm:$0xff]
    %v5647 = vld [vmem:[#allocation7 + $0x100] sm:$0xff]
    %v5648 = vld [vmem:[#allocation7 + $0x108] sm:$0xff]
    %v5649 = vld [vmem:[#allocation7 + $0x110] sm:$0xff]
    %v5650 = vld [vmem:[#allocation7 + $0x118] sm:$0xff]
    %v5651 = vld [vmem:[#allocation7 + $0x120] sm:$0xff]
    %v5652 = vld [vmem:[#allocation7 + $0x128] sm:$0xff]
    %v5653 = vld [vmem:[#allocation7 + $0x130] sm:$0xff]
    %v5654 = vld [vmem:[#allocation7 + $0x138] sm:$0xff]
    %v5655 = vld [vmem:[#allocation7 + $0x140] sm:$0xff]
    %v5656 = vld [vmem:[#allocation7 + $0x148] sm:$0xff]
    %v5657 = vld [vmem:[#allocation7 + $0x150] sm:$0xff]
    %v5658 = vld [vmem:[#allocation7 + $0x158] sm:$0xff]
    %v5659 = vld [vmem:[#allocation7 + $0x160] sm:$0xff]
    %v5660 = vld [vmem:[#allocation7 + $0x168] sm:$0xff]
    %v5661 = vld [vmem:[#allocation7 + $0x170] sm:$0xff]
    %v5662 = vld [vmem:[#allocation7 + $0x178] sm:$0xff]
    %v5663 = vld [vmem:[#allocation7 + $0x180] sm:$0xff]
    %v5664 = vld [vmem:[#allocation7 + $0x188] sm:$0xff]
    %v5665 = vld [vmem:[#allocation7 + $0x190] sm:$0xff]
    %v5666 = vld [vmem:[#allocation7 + $0x198] sm:$0xff]
    %v5667 = vld [vmem:[#allocation7 + $0x1a0] sm:$0xff]
    %v5668 = vld [vmem:[#allocation7 + $0x1a8] sm:$0xff]
    %v5669 = vld [vmem:[#allocation7 + $0x1b0] sm:$0xff]
    %v5670 = vld [vmem:[#allocation7 + $0x1b8] sm:$0xff]
    %v5671 = vld [vmem:[#allocation7 + $0x1c0] sm:$0xff]
    %v5672 = vld [vmem:[#allocation7 + $0x1c8] sm:$0xff]
    %v5673 = vld [vmem:[#allocation7 + $0x1d0] sm:$0xff]
    %v5674 = vld [vmem:[#allocation7 + $0x1d8] sm:$0xff]
    %v5675 = vld [vmem:[#allocation7 + $0x1e0] sm:$0xff]
    %v5676 = vld [vmem:[#allocation7 + $0x1e8] sm:$0xff]
    %v5677 = vld [vmem:[#allocation7 + $0x1f0] sm:$0xff]
    %v5678 = vld [vmem:[#allocation7 + $0x1f8] sm:$0xff]
    %v5679 = vld [vmem:[#allocation7 + $0x200] sm:$0xff]
    %v5680 = vld [vmem:[#allocation7 + $0x208] sm:$0xff]
    %v5681 = vld [vmem:[#allocation7 + $0x210] sm:$0xff]
    %v5682 = vld [vmem:[#allocation7 + $0x218] sm:$0xff]
    %v5683 = vld [vmem:[#allocation7 + $0x220] sm:$0xff]
    %v5684 = vld [vmem:[#allocation7 + $0x228] sm:$0xff]
    %v5685 = vld [vmem:[#allocation7 + $0x230] sm:$0xff]
    %v5686 = vld [vmem:[#allocation7 + $0x238] sm:$0xff]
    %v5687 = vld [vmem:[#allocation7 + $0x240] sm:$0xff]
    %v5688 = vld [vmem:[#allocation7 + $0x248] sm:$0xff]
    %v5689 = vld [vmem:[#allocation7 + $0x250] sm:$0xff]
    %v5690 = vld [vmem:[#allocation7 + $0x258] sm:$0xff]
    %v5691 = vld [vmem:[#allocation7 + $0x260] sm:$0xff]
    %v5692 = vld [vmem:[#allocation7 + $0x268] sm:$0xff]
    %v5693 = vld [vmem:[#allocation7 + $0x270] sm:$0xff]
    %v5694 = vld [vmem:[#allocation7 + $0x278] sm:$0xff]
    %v5695 = vld [vmem:[#allocation7 + $0x280] sm:$0xff]
    %v5696 = vld [vmem:[#allocation7 + $0x288] sm:$0xff]
    %v5697 = vld [vmem:[#allocation7 + $0x290] sm:$0xff]
    %v5698 = vld [vmem:[#allocation7 + $0x298] sm:$0xff]
    %v5699 = vld [vmem:[#allocation7 + $0x2a0] sm:$0xff]
    %v5700 = vld [vmem:[#allocation7 + $0x2a8] sm:$0xff]
    %v5701 = vld [vmem:[#allocation7 + $0x2b0] sm:$0xff]
    %v5702 = vld [vmem:[#allocation7 + $0x2b8] sm:$0xff]
    %v5703 = vld [vmem:[#allocation7 + $0x2c0] sm:$0xff]
    %v5704 = vld [vmem:[#allocation7 + $0x2c8] sm:$0xff]
    %v5705 = vld [vmem:[#allocation7 + $0x2d0] sm:$0xff]
    %v5706 = vld [vmem:[#allocation7 + $0x2d8] sm:$0xff]
    %v5707 = vld [vmem:[#allocation7 + $0x2e0] sm:$0xff]
    %v5708 = vld [vmem:[#allocation7 + $0x2e8] sm:$0xff]
    %v5709 = vld [vmem:[#allocation7 + $0x2f0] sm:$0xff]
    %v5710 = vld [vmem:[#allocation7 + $0x2f8] sm:$0xff]
    %v5711 = vld [vmem:[#allocation7 + $0x300] sm:$0xff]
    %v5712 = vld [vmem:[#allocation7 + $0x308] sm:$0xff]
    %v5713 = vld [vmem:[#allocation7 + $0x310] sm:$0xff]
    %v5714 = vld [vmem:[#allocation7 + $0x318] sm:$0xff]
    %v5715 = vld [vmem:[#allocation7 + $0x320] sm:$0xff]
    %v5716 = vld [vmem:[#allocation7 + $0x328] sm:$0xff]
    %v5717 = vld [vmem:[#allocation7 + $0x330] sm:$0xff]
    %v5718 = vld [vmem:[#allocation7 + $0x338] sm:$0xff]
    %v5719 = vld [vmem:[#allocation7 + $0x340] sm:$0xff]
    %v5720 = vld [vmem:[#allocation7 + $0x348] sm:$0xff]
    %v5721 = vld [vmem:[#allocation7 + $0x350] sm:$0xff]
    %v5722 = vld [vmem:[#allocation7 + $0x358] sm:$0xff]
    %v5723 = vld [vmem:[#allocation7 + $0x360] sm:$0xff]
    %v5724 = vld [vmem:[#allocation7 + $0x368] sm:$0xff]
    %v5725 = vld [vmem:[#allocation7 + $0x370] sm:$0xff]
    %v5726 = vld [vmem:[#allocation7 + $0x378] sm:$0xff]
    %v5727 = vld [vmem:[#allocation7 + $0x380] sm:$0xff]
    %v5728 = vld [vmem:[#allocation7 + $0x388] sm:$0xff]
    %v5729 = vld [vmem:[#allocation7 + $0x390] sm:$0xff]
    %v5730 = vld [vmem:[#allocation7 + $0x398] sm:$0xff]
    %v5731 = vld [vmem:[#allocation7 + $0x3a0] sm:$0xff]
    %v5732 = vld [vmem:[#allocation7 + $0x3a8] sm:$0xff]
    %v5733 = vld [vmem:[#allocation7 + $0x3b0] sm:$0xff]
    %v5734 = vld [vmem:[#allocation7 + $0x3b8] sm:$0xff]
    %v5735 = vld [vmem:[#allocation7 + $0x3c0] sm:$0xff]
    %v5736 = vld [vmem:[#allocation7 + $0x3c8] sm:$0xff]
    %v5737 = vld [vmem:[#allocation7 + $0x3d0] sm:$0xff]
    %v5738 = vld [vmem:[#allocation7 + $0x3d8] sm:$0xff]
    %v5739 = vld [vmem:[#allocation7 + $0x3e0] sm:$0xff]
    %v5740 = vld [vmem:[#allocation7 + $0x3e8] sm:$0xff]
    %v5741 = vld [vmem:[#allocation7 + $0x3f0] sm:$0xff]
    %v5742 = vld [vmem:[#allocation7 + $0x3f8] sm:$0xff]
    %5743 = vmatprep.subr.mxu0 %v5676
    %5744 = vmatpush1.msra.mxu0 %v5675
    %5745 = vmatprep.subr.mxu0 %v5672
    %5746 = vmatpush1.msra.mxu0 %v5671
    %5747 = vmatprep.subr.mxu0 %v5668
    %5748 = vmatpush1.msra.mxu0 %v5667
    %5749 = vmatprep.subr.mxu0 %v5664
    %5750 = vmatpush1.msra.mxu0 %v5663
    %5751 = vmatprep.subr.mxu0 %v5660
    %5752 = vmatpush1.msra.mxu0 %v5659
    %5753 = vmatprep.subr.mxu0 %v5656
    %5754 = vmatpush1.msra.mxu0 %v5655
    %5755 = vmatprep.subr.mxu0 %v5652
    %5756 = vmatpush1.msra.mxu0 %v5651
    %5757 = vmatprep.subr.mxu0 %v5648
    %5758 = vmatpush1.msra.mxu0 %v5647
    %5759 = vmatprep.subr.mxu0 %v5644
    %5760 = vmatpush1.msra.mxu0 %v5643
    %5761 = vmatprep.subr.mxu0 %v5640
    %5762 = vmatpush1.msra.mxu0 %v5639
    %5763 = vmatprep.subr.mxu0 %v5636
    %5764 = vmatpush1.msra.mxu0 %v5635
    %5765 = vmatprep.subr.mxu0 %v5632
    %5766 = vmatpush1.msra.mxu0 %v5631
    %5767 = vmatprep.subr.mxu0 %v5628
    %5768 = vmatpush1.msra.mxu0 %v5627
    %5769 = vmatprep.subr.mxu0 %v5624
    %5770 = vmatpush1.msra.mxu0 %v5623
    %5771 = vmatprep.subr.mxu0 %v5620
    %5772 = vmatpush1.msra.mxu0 %v5619
    %5773 = vmatprep.subr.mxu0 %v5616
    %5774 = vmatpush1.msra.mxu0 %v5615
    %5775 = vmatprep.subr.mxu0 %v5740
    %5776 = vmatpush2.msra.mxu0 %v5739
    %5777 = vmatprep.subr.mxu0 %v5736
    %5778 = vmatpush2.msra.mxu0 %v5735
    %5779 = vmatprep.subr.mxu0 %v5732
    %5780 = vmatpush2.msra.mxu0 %v5731
    %5781 = vmatprep.subr.mxu0 %v5728
    %5782 = vmatpush2.msra.mxu0 %v5727
    %5783 = vmatprep.subr.mxu0 %v5724
    %5784 = vmatpush2.msra.mxu0 %v5723
    %5785 = vmatprep.subr.mxu0 %v5720
    %5786 = vmatpush2.msra.mxu0 %v5719
    %5787 = vmatprep.subr.mxu0 %v5716
    %5788 = vmatpush2.msra.mxu0 %v5715
    %5789 = vmatprep.subr.mxu0 %v5712
    %5790 = vmatpush2.msra.mxu0 %v5711
    %5791 = vmatprep.subr.mxu0 %v5708
    %5792 = vmatpush2.msra.mxu0 %v5707
    %5793 = vmatprep.subr.mxu0 %v5704
    %5794 = vmatpush2.msra.mxu0 %v5703
    %5795 = vmatprep.subr.mxu0 %v5700
    %5796 = vmatpush2.msra.mxu0 %v5699
    %5797 = vmatprep.subr.mxu0 %v5696
    %5798 = vmatpush2.msra.mxu0 %v5695
    %5799 = vmatprep.subr.mxu0 %v5692
    %5800 = vmatpush2.msra.mxu0 %v5691
    %5801 = vmatprep.subr.mxu0 %v5688
    %5802 = vmatpush2.msra.mxu0 %v5687
    %5803 = vmatprep.subr.mxu0 %v5684
    %5804 = vmatpush2.msra.mxu0 %v5683
    %5805 = vmatprep.subr.mxu0 %v5680
    %5806 = vmatpush2.msra.mxu0 %v5679
    %5807 = vmatprep.mubr.f32.mxu0 %v5171
    %5808 = vmatmul.mubr.f32.gmra.mxu0 %v5613
    %v5809 = vpop.f32.mrf.mxu0
    %v5810 = vadd.f32 %v561, %v5809
    %v5811 = vpop.f32.mrf.mxu0
    %v5812 = vadd.f32 %v565, %v5811
    %5813 = vdwg.mxu0
    %5814 = vmatprep.subr.mxu0 %v5678
    %5815 = vmatpush1.msra.mxu0 %v5677
    %5816 = vmatprep.subr.mxu0 %v5674
    %5817 = vmatpush1.msra.mxu0 %v5673
    %5818 = vmatprep.subr.mxu0 %v5670
    %5819 = vmatpush1.msra.mxu0 %v5669
    %5820 = vmatprep.subr.mxu0 %v5666
    %5821 = vmatpush1.msra.mxu0 %v5665
    %5822 = vmatprep.subr.mxu0 %v5662
    %5823 = vmatpush1.msra.mxu0 %v5661
    %5824 = vmatprep.subr.mxu0 %v5658
    %5825 = vmatpush1.msra.mxu0 %v5657
    %5826 = vmatprep.subr.mxu0 %v5654
    %5827 = vmatpush1.msra.mxu0 %v5653
    %5828 = vmatprep.subr.mxu0 %v5650
    %5829 = vmatpush1.msra.mxu0 %v5649
    %5830 = vmatprep.subr.mxu0 %v5646
    %5831 = vmatpush1.msra.mxu0 %v5645
    %5832 = vmatprep.subr.mxu0 %v5642
    %5833 = vmatpush1.msra.mxu0 %v5641
    %5834 = vmatprep.subr.mxu0 %v5638
    %5835 = vmatpush1.msra.mxu0 %v5637
    %5836 = vmatprep.subr.mxu0 %v5634
    %5837 = vmatpush1.msra.mxu0 %v5633
    %5838 = vmatprep.subr.mxu0 %v5630
    %5839 = vmatpush1.msra.mxu0 %v5629
    %5840 = vmatprep.subr.mxu0 %v5626
    %5841 = vmatpush1.msra.mxu0 %v5625
    %5842 = vmatprep.subr.mxu0 %v5622
    %5843 = vmatpush1.msra.mxu0 %v5621
    %5844 = vmatprep.subr.mxu0 %v5618
    %5845 = vmatpush1.msra.mxu0 %v5617
    %5846 = vmatprep.subr.mxu0 %v5742
    %5847 = vmatpush2.msra.mxu0 %v5741
    %5848 = vmatprep.subr.mxu0 %v5738
    %5849 = vmatpush2.msra.mxu0 %v5737
    %5850 = vmatprep.subr.mxu0 %v5734
    %5851 = vmatpush2.msra.mxu0 %v5733
    %5852 = vmatprep.subr.mxu0 %v5730
    %5853 = vmatpush2.msra.mxu0 %v5729
    %5854 = vmatprep.subr.mxu0 %v5726
    %5855 = vmatpush2.msra.mxu0 %v5725
    %5856 = vmatprep.subr.mxu0 %v5722
    %5857 = vmatpush2.msra.mxu0 %v5721
    %5858 = vmatprep.subr.mxu0 %v5718
    %5859 = vmatpush2.msra.mxu0 %v5717
    %5860 = vmatprep.subr.mxu0 %v5714
    %5861 = vmatpush2.msra.mxu0 %v5713
    %5862 = vmatprep.subr.mxu0 %v5710
    %5863 = vmatpush2.msra.mxu0 %v5709
    %5864 = vmatprep.subr.mxu0 %v5706
    %5865 = vmatpush2.msra.mxu0 %v5705
    %5866 = vmatprep.subr.mxu0 %v5702
    %5867 = vmatpush2.msra.mxu0 %v5701
    %5868 = vmatprep.subr.mxu0 %v5698
    %5869 = vmatpush2.msra.mxu0 %v5697
    %5870 = vmatprep.subr.mxu0 %v5694
    %5871 = vmatpush2.msra.mxu0 %v5693
    %5872 = vmatprep.subr.mxu0 %v5690
    %5873 = vmatpush2.msra.mxu0 %v5689
    %5874 = vmatprep.subr.mxu0 %v5686
    %5875 = vmatpush2.msra.mxu0 %v5685
    %5876 = vmatprep.subr.mxu0 %v5682
    %5877 = vmatpush2.msra.mxu0 %v5681
    %5878 = vmatprep.mubr.f32.mxu0 %v5171
    %5879 = vmatmul.mubr.f32.gmra.mxu0 %v5613
    %v5880 = vpop.f32.mrf.mxu0
    %v5881 = vadd.f32 %v569, %v5880
    %v5882 = vpop.f32.mrf.mxu0
    %v5883 = vadd.f32 %v573, %v5882
    %5884 = vdwg.mxu0
    %v5885 = vxor.u32 %v5810, 2147483648
    %v5886 = vmul.f32 %v5885, 1.442695
    %v5887 = vpow.pop %v5886
    %v5888 = vadd.f32 %v5887, 1.0
    %v5889 = vrcp.pop %v5888
    %v5890 = vmul.f32 1.0, %v5889
    %v5891 = vxor.u32 %v5812, 2147483648
    %v5892 = vmul.f32 %v5891, 1.442695
    %v5893 = vpow.pop %v5892
    %v5894 = vadd.f32 %v5893, 1.0
    %v5895 = vrcp.pop %v5894
    %v5896 = vmul.f32 1.0, %v5895
    %v5897 = vtanh.pop %v5881
    %v5898 = vxor.u32 %v5883, 2147483648
    %v5899 = vmul.f32 %v5898, 1.442695
    %v5900 = vpow.pop %v5899
    %v5901 = vadd.f32 %v5900, 1.0
    %v5902 = vrcp.pop %v5901
    %v5903 = vmul.f32 1.0, %v5902
    %v5904 = vmul.f32 %v5896, %v5169
    %v5905 = vmul.f32 %v5890, %v5897
    %v5906 = vadd.f32 %v5904, %v5905
    %v5907 = vtanh.pop %v5906
    %v5908 = vmul.f32 %v5903, %v5907
    %v5909 = vld [vmem:[#allocation9] sm:$0xff]
    %v5910 = vld [vmem:[#allocation9 + $0x8] sm:$0xff]
    %v5911 = vld [vmem:[#allocation9 + $0x10] sm:$0xff]
    %v5912 = vld [vmem:[#allocation9 + $0x18] sm:$0xff]
    %v5913 = vld [vmem:[#allocation9 + $0x20] sm:$0xff]
    %v5914 = vld [vmem:[#allocation9 + $0x28] sm:$0xff]
    %v5915 = vld [vmem:[#allocation9 + $0x30] sm:$0xff]
    %v5916 = vld [vmem:[#allocation9 + $0x38] sm:$0xff]
    %v5917 = vld [vmem:[#allocation9 + $0x40] sm:$0xff]
    %v5918 = vld [vmem:[#allocation9 + $0x48] sm:$0xff]
    %v5919 = vld [vmem:[#allocation9 + $0x50] sm:$0xff]
    %v5920 = vld [vmem:[#allocation9 + $0x58] sm:$0xff]
    %v5921 = vld [vmem:[#allocation9 + $0x60] sm:$0xff]
    %v5922 = vld [vmem:[#allocation9 + $0x68] sm:$0xff]
    %v5923 = vld [vmem:[#allocation9 + $0x70] sm:$0xff]
    %v5924 = vld [vmem:[#allocation9 + $0x78] sm:$0xff]
    %5925 = vmatprep.subr.mxu0 0.0
    %5926 = vmatpush1.msra.mxu0 %v5924
    %5927 = vmatprep.subr.mxu0 0.0
    %5928 = vmatpush1.msra.mxu0 %v5923
    %5929 = vmatprep.subr.mxu0 0.0
    %5930 = vmatpush1.msra.mxu0 %v5922
    %5931 = vmatprep.subr.mxu0 0.0
    %5932 = vmatpush1.msra.mxu0 %v5921
    %5933 = vmatprep.subr.mxu0 0.0
    %5934 = vmatpush1.msra.mxu0 %v5920
    %5935 = vmatprep.subr.mxu0 0.0
    %5936 = vmatpush1.msra.mxu0 %v5919
    %5937 = vmatprep.subr.mxu0 0.0
    %5938 = vmatpush1.msra.mxu0 %v5918
    %5939 = vmatprep.subr.mxu0 0.0
    %5940 = vmatpush1.msra.mxu0 %v5917
    %5941 = vmatprep.subr.mxu0 0.0
    %5942 = vmatpush1.msra.mxu0 %v5916
    %5943 = vmatprep.subr.mxu0 0.0
    %5944 = vmatpush1.msra.mxu0 %v5915
    %5945 = vmatprep.subr.mxu0 0.0
    %5946 = vmatpush1.msra.mxu0 %v5914
    %5947 = vmatprep.subr.mxu0 0.0
    %5948 = vmatpush1.msra.mxu0 %v5913
    %5949 = vmatprep.subr.mxu0 0.0
    %5950 = vmatpush1.msra.mxu0 %v5912
    %5951 = vmatprep.subr.mxu0 0.0
    %5952 = vmatpush1.msra.mxu0 %v5911
    %5953 = vmatprep.subr.mxu0 0.0
    %5954 = vmatpush1.msra.mxu0 %v5910
    %5955 = vmatprep.subr.mxu0 0.0
    %5956 = vmatpush1.msra.mxu0 %v5909
    %5957 = vmatprep.subr.mxu0 0.0
    %5958 = vmatpush2.msra.mxu0 0.0
    %5959 = vmatprep.subr.mxu0 0.0
    %5960 = vmatpush2.msra.mxu0 0.0
    %5961 = vmatprep.subr.mxu0 0.0
    %5962 = vmatpush2.msra.mxu0 0.0
    %5963 = vmatprep.subr.mxu0 0.0
    %5964 = vmatpush2.msra.mxu0 0.0
    %5965 = vmatprep.subr.mxu0 0.0
    %5966 = vmatpush2.msra.mxu0 0.0
    %5967 = vmatprep.subr.mxu0 0.0
    %5968 = vmatpush2.msra.mxu0 0.0
    %5969 = vmatprep.subr.mxu0 0.0
    %5970 = vmatpush2.msra.mxu0 0.0
    %5971 = vmatprep.subr.mxu0 0.0
    %5972 = vmatpush2.msra.mxu0 0.0
    %5973 = vmatprep.subr.mxu0 0.0
    %5974 = vmatpush2.msra.mxu0 0.0
    %5975 = vmatprep.subr.mxu0 0.0
    %5976 = vmatpush2.msra.mxu0 0.0
    %5977 = vmatprep.subr.mxu0 0.0
    %5978 = vmatpush2.msra.mxu0 0.0
    %5979 = vmatprep.subr.mxu0 0.0
    %5980 = vmatpush2.msra.mxu0 0.0
    %5981 = vmatprep.subr.mxu0 0.0
    %5982 = vmatpush2.msra.mxu0 0.0
    %5983 = vmatprep.subr.mxu0 0.0
    %5984 = vmatpush2.msra.mxu0 0.0
    %5985 = vmatprep.subr.mxu0 0.0
    %5986 = vmatpush2.msra.mxu0 0.0
    %5987 = vmatprep.subr.mxu0 0.0
    %5988 = vmatpush2.msra.mxu0 0.0
    %5989 = vmatprep.mubr.f32.mxu0 0.0
    %5990 = vmatmul.mubr.f32.gmra.mxu0 %v5908
    %v5991 = vpop.f32.mrf.mxu0
    %v5992 = vadd.f32 %v764, %v5991
    %v5993 = vpop.f32.mrf.mxu0
    %5994 = vdwg.mxu0
    %v5997 = vunpack.c.l.s4 1966171168
    %v5998 = vunpack.c.0.s8 %v5997
    %v5999 = vlaneseq
    %v6000 = vshrl.u32 %v5999, 7
    %v6001 = vsub.s32 %v5998, %v6000
    %v6002 = vrot.slane %v5992, %v6001
    %v6003 = vcombine.high %v6002, %v6002
    %v6005 = vunpack.c.l.s4 1966171168
    %v6006 = vunpack.c.0.s8 %v6005
    %v6007 = vlaneseq
    %v6008 = vshrl.u32 %v6007, 7
    %v6009 = vsub.s32 %v6006, %v6008
    %v6010 = vrot.slane %v6002, %v6009
    %v6012 = vunpack.c.l.s4 1966171168
    %v6013 = vunpack.c.0.s8 %v6012
    %v6014 = vlaneseq
    %v6015 = vshrl.u32 %v6014, 7
    %v6016 = vsub.s32 %v6013, %v6015
    %v6017 = vrot.slane %v6003, %v6016
    %6020 = vst [vmem:[%s8 + $0x7] sm:$0x1] %v6010
    %6021 = vst [vmem:[%s8 + $0x17] sm:$0x1] %v6017
    %v6022 = vld [vmem:[#allocation6] sm:$0xff]
    %v6023 = vld [vmem:[#allocation6 + $0x8] sm:$0xff]
    %v6024 = vld [vmem:[#allocation6 + $0x10] sm:$0xff]
    %v6025 = vld [vmem:[#allocation6 + $0x18] sm:$0xff]
    %v6026 = vld [vmem:[#allocation6 + $0x20] sm:$0xff]
    %v6027 = vld [vmem:[#allocation6 + $0x28] sm:$0xff]
    %v6028 = vld [vmem:[#allocation6 + $0x30] sm:$0xff]
    %v6029 = vld [vmem:[#allocation6 + $0x38] sm:$0xff]
    %v6030 = vld [vmem:[#allocation6 + $0x40] sm:$0xff]
    %v6031 = vld [vmem:[#allocation6 + $0x48] sm:$0xff]
    %v6032 = vld [vmem:[#allocation6 + $0x50] sm:$0xff]
    %v6033 = vld [vmem:[#allocation6 + $0x58] sm:$0xff]
    %v6034 = vld [vmem:[#allocation6 + $0x60] sm:$0xff]
    %v6035 = vld [vmem:[#allocation6 + $0x68] sm:$0xff]
    %v6036 = vld [vmem:[#allocation6 + $0x70] sm:$0xff]
    %v6037 = vld [vmem:[#allocation6 + $0x78] sm:$0xff]
    %v6038 = vld [vmem:[#allocation6 + $0x80] sm:$0xff]
    %v6039 = vld [vmem:[#allocation6 + $0x88] sm:$0xff]
    %v6040 = vld [vmem:[#allocation6 + $0x90] sm:$0xff]
    %v6041 = vld [vmem:[#allocation6 + $0x98] sm:$0xff]
    %v6042 = vld [vmem:[#allocation6 + $0xa0] sm:$0xff]
    %v6043 = vld [vmem:[#allocation6 + $0xa8] sm:$0xff]
    %v6044 = vld [vmem:[#allocation6 + $0xb0] sm:$0xff]
    %v6045 = vld [vmem:[#allocation6 + $0xb8] sm:$0xff]
    %v6046 = vld [vmem:[#allocation6 + $0xc0] sm:$0xff]
    %v6047 = vld [vmem:[#allocation6 + $0xc8] sm:$0xff]
    %v6048 = vld [vmem:[#allocation6 + $0xd0] sm:$0xff]
    %v6049 = vld [vmem:[#allocation6 + $0xd8] sm:$0xff]
    %v6050 = vld [vmem:[#allocation6 + $0xe0] sm:$0xff]
    %v6051 = vld [vmem:[#allocation6 + $0xe8] sm:$0xff]
    %v6052 = vld [vmem:[#allocation6 + $0xf0] sm:$0xff]
    %v6053 = vld [vmem:[#allocation6 + $0xf8] sm:$0xff]
    %v6054 = vld [vmem:[#allocation6 + $0x100] sm:$0xff]
    %v6055 = vld [vmem:[#allocation6 + $0x108] sm:$0xff]
    %v6056 = vld [vmem:[#allocation6 + $0x110] sm:$0xff]
    %v6057 = vld [vmem:[#allocation6 + $0x118] sm:$0xff]
    %v6058 = vld [vmem:[#allocation6 + $0x120] sm:$0xff]
    %v6059 = vld [vmem:[#allocation6 + $0x128] sm:$0xff]
    %v6060 = vld [vmem:[#allocation6 + $0x130] sm:$0xff]
    %v6061 = vld [vmem:[#allocation6 + $0x138] sm:$0xff]
    %v6062 = vld [vmem:[#allocation6 + $0x140] sm:$0xff]
    %v6063 = vld [vmem:[#allocation6 + $0x148] sm:$0xff]
    %v6064 = vld [vmem:[#allocation6 + $0x150] sm:$0xff]
    %v6065 = vld [vmem:[#allocation6 + $0x158] sm:$0xff]
    %v6066 = vld [vmem:[#allocation6 + $0x160] sm:$0xff]
    %v6067 = vld [vmem:[#allocation6 + $0x168] sm:$0xff]
    %v6068 = vld [vmem:[#allocation6 + $0x170] sm:$0xff]
    %v6069 = vld [vmem:[#allocation6 + $0x178] sm:$0xff]
    %v6070 = vld [vmem:[#allocation6 + $0x180] sm:$0xff]
    %v6071 = vld [vmem:[#allocation6 + $0x188] sm:$0xff]
    %v6072 = vld [vmem:[#allocation6 + $0x190] sm:$0xff]
    %v6073 = vld [vmem:[#allocation6 + $0x198] sm:$0xff]
    %v6074 = vld [vmem:[#allocation6 + $0x1a0] sm:$0xff]
    %v6075 = vld [vmem:[#allocation6 + $0x1a8] sm:$0xff]
    %v6076 = vld [vmem:[#allocation6 + $0x1b0] sm:$0xff]
    %v6077 = vld [vmem:[#allocation6 + $0x1b8] sm:$0xff]
    %v6078 = vld [vmem:[#allocation6 + $0x1c0] sm:$0xff]
    %v6079 = vld [vmem:[#allocation6 + $0x1c8] sm:$0xff]
    %v6080 = vld [vmem:[#allocation6 + $0x1d0] sm:$0xff]
    %v6081 = vld [vmem:[#allocation6 + $0x1d8] sm:$0xff]
    %v6082 = vld [vmem:[#allocation6 + $0x1e0] sm:$0xff]
    %v6083 = vld [vmem:[#allocation6 + $0x1e8] sm:$0xff]
    %v6084 = vld [vmem:[#allocation6 + $0x1f0] sm:$0xff]
    %v6085 = vld [vmem:[#allocation6 + $0x1f8] sm:$0xff]
    %v6086 = vld [vmem:[#allocation6 + $0x200] sm:$0xff]
    %v6087 = vld [vmem:[#allocation6 + $0x208] sm:$0xff]
    %v6088 = vld [vmem:[#allocation6 + $0x210] sm:$0xff]
    %v6089 = vld [vmem:[#allocation6 + $0x218] sm:$0xff]
    %v6090 = vld [vmem:[#allocation6 + $0x220] sm:$0xff]
    %v6091 = vld [vmem:[#allocation6 + $0x228] sm:$0xff]
    %v6092 = vld [vmem:[#allocation6 + $0x230] sm:$0xff]
    %v6093 = vld [vmem:[#allocation6 + $0x238] sm:$0xff]
    %v6094 = vld [vmem:[#allocation6 + $0x240] sm:$0xff]
    %v6095 = vld [vmem:[#allocation6 + $0x248] sm:$0xff]
    %v6096 = vld [vmem:[#allocation6 + $0x250] sm:$0xff]
    %v6097 = vld [vmem:[#allocation6 + $0x258] sm:$0xff]
    %v6098 = vld [vmem:[#allocation6 + $0x260] sm:$0xff]
    %v6099 = vld [vmem:[#allocation6 + $0x268] sm:$0xff]
    %v6100 = vld [vmem:[#allocation6 + $0x270] sm:$0xff]
    %v6101 = vld [vmem:[#allocation6 + $0x278] sm:$0xff]
    %v6102 = vld [vmem:[#allocation6 + $0x280] sm:$0xff]
    %v6103 = vld [vmem:[#allocation6 + $0x288] sm:$0xff]
    %v6104 = vld [vmem:[#allocation6 + $0x290] sm:$0xff]
    %v6105 = vld [vmem:[#allocation6 + $0x298] sm:$0xff]
    %v6106 = vld [vmem:[#allocation6 + $0x2a0] sm:$0xff]
    %v6107 = vld [vmem:[#allocation6 + $0x2a8] sm:$0xff]
    %v6108 = vld [vmem:[#allocation6 + $0x2b0] sm:$0xff]
    %v6109 = vld [vmem:[#allocation6 + $0x2b8] sm:$0xff]
    %v6110 = vld [vmem:[#allocation6 + $0x2c0] sm:$0xff]
    %v6111 = vld [vmem:[#allocation6 + $0x2c8] sm:$0xff]
    %v6112 = vld [vmem:[#allocation6 + $0x2d0] sm:$0xff]
    %v6113 = vld [vmem:[#allocation6 + $0x2d8] sm:$0xff]
    %v6114 = vld [vmem:[#allocation6 + $0x2e0] sm:$0xff]
    %v6115 = vld [vmem:[#allocation6 + $0x2e8] sm:$0xff]
    %v6116 = vld [vmem:[#allocation6 + $0x2f0] sm:$0xff]
    %v6117 = vld [vmem:[#allocation6 + $0x2f8] sm:$0xff]
    %v6118 = vld [vmem:[#allocation6 + $0x300] sm:$0xff]
    %v6119 = vld [vmem:[#allocation6 + $0x308] sm:$0xff]
    %v6120 = vld [vmem:[#allocation6 + $0x310] sm:$0xff]
    %v6121 = vld [vmem:[#allocation6 + $0x318] sm:$0xff]
    %v6122 = vld [vmem:[#allocation6 + $0x320] sm:$0xff]
    %v6123 = vld [vmem:[#allocation6 + $0x328] sm:$0xff]
    %v6124 = vld [vmem:[#allocation6 + $0x330] sm:$0xff]
    %v6125 = vld [vmem:[#allocation6 + $0x338] sm:$0xff]
    %v6126 = vld [vmem:[#allocation6 + $0x340] sm:$0xff]
    %v6127 = vld [vmem:[#allocation6 + $0x348] sm:$0xff]
    %v6128 = vld [vmem:[#allocation6 + $0x350] sm:$0xff]
    %v6129 = vld [vmem:[#allocation6 + $0x358] sm:$0xff]
    %v6130 = vld [vmem:[#allocation6 + $0x360] sm:$0xff]
    %v6131 = vld [vmem:[#allocation6 + $0x368] sm:$0xff]
    %v6132 = vld [vmem:[#allocation6 + $0x370] sm:$0xff]
    %v6133 = vld [vmem:[#allocation6 + $0x378] sm:$0xff]
    %v6134 = vld [vmem:[#allocation6 + $0x380] sm:$0xff]
    %v6135 = vld [vmem:[#allocation6 + $0x388] sm:$0xff]
    %v6136 = vld [vmem:[#allocation6 + $0x390] sm:$0xff]
    %v6137 = vld [vmem:[#allocation6 + $0x398] sm:$0xff]
    %v6138 = vld [vmem:[#allocation6 + $0x3a0] sm:$0xff]
    %v6139 = vld [vmem:[#allocation6 + $0x3a8] sm:$0xff]
    %v6140 = vld [vmem:[#allocation6 + $0x3b0] sm:$0xff]
    %v6141 = vld [vmem:[#allocation6 + $0x3b8] sm:$0xff]
    %v6142 = vld [vmem:[#allocation6 + $0x3c0] sm:$0xff]
    %v6143 = vld [vmem:[#allocation6 + $0x3c8] sm:$0xff]
    %v6144 = vld [vmem:[#allocation6 + $0x3d0] sm:$0xff]
    %v6145 = vld [vmem:[#allocation6 + $0x3d8] sm:$0xff]
    %v6146 = vld [vmem:[#allocation6 + $0x3e0] sm:$0xff]
    %v6147 = vld [vmem:[#allocation6 + $0x3e8] sm:$0xff]
    %v6148 = vld [vmem:[#allocation6 + $0x3f0] sm:$0xff]
    %v6149 = vld [vmem:[#allocation6 + $0x3f8] sm:$0xff]
    %v6151 = vlaneseq
    %v6152 = vshrl.u32 %v6151, 7
    %v6153 = vsub.s32 0, %v6152
    %v6154 = vrot.slane %v97, %v6153
    %v6155 = vlaneseq
    %v6156 = vshrl.u32 %v6155, 7
    %v6157 = vsub.s32 1, %v6156
    %v6158 = vrot.slane %v97, %v6157
    %v6159 = vlaneseq
    %v6160 = vshrl.u32 %v6159, 7
    %v6161 = vsub.s32 2, %v6160
    %v6162 = vrot.slane %v97, %v6161
    %v6163 = vlaneseq
    %v6164 = vshrl.u32 %v6163, 7
    %v6165 = vsub.s32 3, %v6164
    %v6166 = vrot.slane %v97, %v6165
    %6171 = vmatprep.subr.mxu0 %v6083
    %6172 = vmatpush1.msra.mxu0 %v6082
    %6173 = vmatprep.subr.mxu0 %v6079
    %6174 = vmatpush1.msra.mxu0 %v6078
    %6175 = vmatprep.subr.mxu0 %v6075
    %6176 = vmatpush1.msra.mxu0 %v6074
    %6177 = vmatprep.subr.mxu0 %v6071
    %6178 = vmatpush1.msra.mxu0 %v6070
    %6179 = vmatprep.subr.mxu0 %v6067
    %6180 = vmatpush1.msra.mxu0 %v6066
    %6181 = vmatprep.subr.mxu0 %v6063
    %6182 = vmatpush1.msra.mxu0 %v6062
    %6183 = vmatprep.subr.mxu0 %v6059
    %6184 = vmatpush1.msra.mxu0 %v6058
    %6185 = vmatprep.subr.mxu0 %v6055
    %6186 = vmatpush1.msra.mxu0 %v6054
    %6187 = vmatprep.subr.mxu0 %v6051
    %6188 = vmatpush1.msra.mxu0 %v6050
    %6189 = vmatprep.subr.mxu0 %v6047
    %6190 = vmatpush1.msra.mxu0 %v6046
    %6191 = vmatprep.subr.mxu0 %v6043
    %6192 = vmatpush1.msra.mxu0 %v6042
    %6193 = vmatprep.subr.mxu0 %v6039
    %6194 = vmatpush1.msra.mxu0 %v6038
    %6195 = vmatprep.subr.mxu0 %v6035
    %6196 = vmatpush1.msra.mxu0 %v6034
    %6197 = vmatprep.subr.mxu0 %v6031
    %6198 = vmatpush1.msra.mxu0 %v6030
    %6199 = vmatprep.subr.mxu0 %v6027
    %6200 = vmatpush1.msra.mxu0 %v6026
    %6201 = vmatprep.subr.mxu0 %v6023
    %6202 = vmatpush1.msra.mxu0 %v6022
    %6203 = vmatprep.subr.mxu0 %v6147
    %6204 = vmatpush2.msra.mxu0 %v6146
    %6205 = vmatprep.subr.mxu0 %v6143
    %6206 = vmatpush2.msra.mxu0 %v6142
    %6207 = vmatprep.subr.mxu0 %v6139
    %6208 = vmatpush2.msra.mxu0 %v6138
    %6209 = vmatprep.subr.mxu0 %v6135
    %6210 = vmatpush2.msra.mxu0 %v6134
    %6211 = vmatprep.subr.mxu0 %v6131
    %6212 = vmatpush2.msra.mxu0 %v6130
    %6213 = vmatprep.subr.mxu0 %v6127
    %6214 = vmatpush2.msra.mxu0 %v6126
    %6215 = vmatprep.subr.mxu0 %v6123
    %6216 = vmatpush2.msra.mxu0 %v6122
    %6217 = vmatprep.subr.mxu0 %v6119
    %6218 = vmatpush2.msra.mxu0 %v6118
    %6219 = vmatprep.subr.mxu0 %v6115
    %6220 = vmatpush2.msra.mxu0 %v6114
    %6221 = vmatprep.subr.mxu0 %v6111
    %6222 = vmatpush2.msra.mxu0 %v6110
    %6223 = vmatprep.subr.mxu0 %v6107
    %6224 = vmatpush2.msra.mxu0 %v6106
    %6225 = vmatprep.subr.mxu0 %v6103
    %6226 = vmatpush2.msra.mxu0 %v6102
    %6227 = vmatprep.subr.mxu0 %v6099
    %6228 = vmatpush2.msra.mxu0 %v6098
    %6229 = vmatprep.subr.mxu0 %v6095
    %6230 = vmatpush2.msra.mxu0 %v6094
    %6231 = vmatprep.subr.mxu0 %v6091
    %6232 = vmatpush2.msra.mxu0 %v6090
    %6233 = vmatprep.subr.mxu0 %v6087
    %6234 = vmatpush2.msra.mxu0 %v6086
    %6235 = vmatprep.mubr.f32.mxu0 %v5613
    %6236 = vmatmul.mubr.f32.gmra.mxu0 %v5908
    %v6237 = vpop.f32.mrf.mxu0
    %v6238 = vadd.f32 %v6154, %v6237
    %v6239 = vpop.f32.mrf.mxu0
    %v6240 = vadd.f32 %v6158, %v6239
    %6241 = vdwg.mxu0
    %6242 = vmatprep.subr.mxu0 %v6085
    %6243 = vmatpush1.msra.mxu0 %v6084
    %6244 = vmatprep.subr.mxu0 %v6081
    %6245 = vmatpush1.msra.mxu0 %v6080
    %6246 = vmatprep.subr.mxu0 %v6077
    %6247 = vmatpush1.msra.mxu0 %v6076
    %6248 = vmatprep.subr.mxu0 %v6073
    %6249 = vmatpush1.msra.mxu0 %v6072
    %6250 = vmatprep.subr.mxu0 %v6069
    %6251 = vmatpush1.msra.mxu0 %v6068
    %6252 = vmatprep.subr.mxu0 %v6065
    %6253 = vmatpush1.msra.mxu0 %v6064
    %6254 = vmatprep.subr.mxu0 %v6061
    %6255 = vmatpush1.msra.mxu0 %v6060
    %6256 = vmatprep.subr.mxu0 %v6057
    %6257 = vmatpush1.msra.mxu0 %v6056
    %6258 = vmatprep.subr.mxu0 %v6053
    %6259 = vmatpush1.msra.mxu0 %v6052
    %6260 = vmatprep.subr.mxu0 %v6049
    %6261 = vmatpush1.msra.mxu0 %v6048
    %6262 = vmatprep.subr.mxu0 %v6045
    %6263 = vmatpush1.msra.mxu0 %v6044
    %6264 = vmatprep.subr.mxu0 %v6041
    %6265 = vmatpush1.msra.mxu0 %v6040
    %6266 = vmatprep.subr.mxu0 %v6037
    %6267 = vmatpush1.msra.mxu0 %v6036
    %6268 = vmatprep.subr.mxu0 %v6033
    %6269 = vmatpush1.msra.mxu0 %v6032
    %6270 = vmatprep.subr.mxu0 %v6029
    %6271 = vmatpush1.msra.mxu0 %v6028
    %6272 = vmatprep.subr.mxu0 %v6025
    %6273 = vmatpush1.msra.mxu0 %v6024
    %6274 = vmatprep.subr.mxu0 %v6149
    %6275 = vmatpush2.msra.mxu0 %v6148
    %6276 = vmatprep.subr.mxu0 %v6145
    %6277 = vmatpush2.msra.mxu0 %v6144
    %6278 = vmatprep.subr.mxu0 %v6141
    %6279 = vmatpush2.msra.mxu0 %v6140
    %6280 = vmatprep.subr.mxu0 %v6137
    %6281 = vmatpush2.msra.mxu0 %v6136
    %6282 = vmatprep.subr.mxu0 %v6133
    %6283 = vmatpush2.msra.mxu0 %v6132
    %6284 = vmatprep.subr.mxu0 %v6129
    %6285 = vmatpush2.msra.mxu0 %v6128
    %6286 = vmatprep.subr.mxu0 %v6125
    %6287 = vmatpush2.msra.mxu0 %v6124
    %6288 = vmatprep.subr.mxu0 %v6121
    %6289 = vmatpush2.msra.mxu0 %v6120
    %6290 = vmatprep.subr.mxu0 %v6117
    %6291 = vmatpush2.msra.mxu0 %v6116
    %6292 = vmatprep.subr.mxu0 %v6113
    %6293 = vmatpush2.msra.mxu0 %v6112
    %6294 = vmatprep.subr.mxu0 %v6109
    %6295 = vmatpush2.msra.mxu0 %v6108
    %6296 = vmatprep.subr.mxu0 %v6105
    %6297 = vmatpush2.msra.mxu0 %v6104
    %6298 = vmatprep.subr.mxu0 %v6101
    %6299 = vmatpush2.msra.mxu0 %v6100
    %6300 = vmatprep.subr.mxu0 %v6097
    %6301 = vmatpush2.msra.mxu0 %v6096
    %6302 = vmatprep.subr.mxu0 %v6093
    %6303 = vmatpush2.msra.mxu0 %v6092
    %6304 = vmatprep.subr.mxu0 %v6089
    %6305 = vmatpush2.msra.mxu0 %v6088
    %6306 = vmatprep.mubr.f32.mxu0 %v5613
    %6307 = vmatmul.mubr.f32.gmra.mxu0 %v5908
    %v6308 = vpop.f32.mrf.mxu0
    %v6309 = vadd.f32 %v6162, %v6308
    %v6310 = vpop.f32.mrf.mxu0
    %v6311 = vadd.f32 %v6166, %v6310
    %6312 = vdwg.mxu0
    %v6313 = vxor.u32 %v6238, 2147483648
    %v6314 = vmul.f32 %v6313, 1.442695
    %v6315 = vpow.pop %v6314
    %v6316 = vadd.f32 %v6315, 1.0
    %v6317 = vrcp.pop %v6316
    %v6318 = vmul.f32 1.0, %v6317
    %v6319 = vxor.u32 %v6240, 2147483648
    %v6320 = vmul.f32 %v6319, 1.442695
    %v6321 = vpow.pop %v6320
    %v6322 = vadd.f32 %v6321, 1.0
    %v6323 = vrcp.pop %v6322
    %v6324 = vmul.f32 1.0, %v6323
    %v6325 = vtanh.pop %v6309
    %v6326 = vxor.u32 %v6311, 2147483648
    %v6327 = vmul.f32 %v6326, 1.442695
    %v6328 = vpow.pop %v6327
    %v6329 = vadd.f32 %v6328, 1.0
    %v6330 = vrcp.pop %v6329
    %v6331 = vmul.f32 1.0, %v6330
    %v6334 = vcombine.low %v5591, %v5592
    %v6336 = vunpack.c.l.s4 1966171168
    %v6337 = vunpack.c.0.s8 %v6336
    %v6338 = vlaneseq
    %v6339 = vshrl.u32 %v6338, 7
    %v6340 = vsub.s32 %v6337, %v6339
    %v6341 = vrot.slane %v6334, %v6340
    %v6343 = vunpack.c.l.s4 1966171168
    %v6344 = vunpack.c.0.s8 %v6343
    %v6345 = vlaneseq
    %v6346 = vshrl.u32 %v6345, 7
    %v6347 = vsub.s32 %v6344, %v6346
    %v6348 = vrot.slane %v6341, %v6347
    %v6350 = vmul.f32 %v6324, %v6348
    %v6351 = vmul.f32 %v6318, %v6325
    %v6352 = vadd.f32 %v6350, %v6351
    %v6353 = vtanh.pop %v6352
    %v6354 = vmul.f32 %v6331, %v6353
    %v6355 = vld [vmem:[#allocation7] sm:$0xff]
    %v6356 = vld [vmem:[#allocation7 + $0x8] sm:$0xff]
    %v6357 = vld [vmem:[#allocation7 + $0x10] sm:$0xff]
    %v6358 = vld [vmem:[#allocation7 + $0x18] sm:$0xff]
    %v6359 = vld [vmem:[#allocation7 + $0x20] sm:$0xff]
    %v6360 = vld [vmem:[#allocation7 + $0x28] sm:$0xff]
    %v6361 = vld [vmem:[#allocation7 + $0x30] sm:$0xff]
    %v6362 = vld [vmem:[#allocation7 + $0x38] sm:$0xff]
    %v6363 = vld [vmem:[#allocation7 + $0x40] sm:$0xff]
    %v6364 = vld [vmem:[#allocation7 + $0x48] sm:$0xff]
    %v6365 = vld [vmem:[#allocation7 + $0x50] sm:$0xff]
    %v6366 = vld [vmem:[#allocation7 + $0x58] sm:$0xff]
    %v6367 = vld [vmem:[#allocation7 + $0x60] sm:$0xff]
    %v6368 = vld [vmem:[#allocation7 + $0x68] sm:$0xff]
    %v6369 = vld [vmem:[#allocation7 + $0x70] sm:$0xff]
    %v6370 = vld [vmem:[#allocation7 + $0x78] sm:$0xff]
    %v6371 = vld [vmem:[#allocation7 + $0x80] sm:$0xff]
    %v6372 = vld [vmem:[#allocation7 + $0x88] sm:$0xff]
    %v6373 = vld [vmem:[#allocation7 + $0x90] sm:$0xff]
    %v6374 = vld [vmem:[#allocation7 + $0x98] sm:$0xff]
    %v6375 = vld [vmem:[#allocation7 + $0xa0] sm:$0xff]
    %v6376 = vld [vmem:[#allocation7 + $0xa8] sm:$0xff]
    %v6377 = vld [vmem:[#allocation7 + $0xb0] sm:$0xff]
    %v6378 = vld [vmem:[#allocation7 + $0xb8] sm:$0xff]
    %v6379 = vld [vmem:[#allocation7 + $0xc0] sm:$0xff]
    %v6380 = vld [vmem:[#allocation7 + $0xc8] sm:$0xff]
    %v6381 = vld [vmem:[#allocation7 + $0xd0] sm:$0xff]
    %v6382 = vld [vmem:[#allocation7 + $0xd8] sm:$0xff]
    %v6383 = vld [vmem:[#allocation7 + $0xe0] sm:$0xff]
    %v6384 = vld [vmem:[#allocation7 + $0xe8] sm:$0xff]
    %v6385 = vld [vmem:[#allocation7 + $0xf0] sm:$0xff]
    %v6386 = vld [vmem:[#allocation7 + $0xf8] sm:$0xff]
    %v6387 = vld [vmem:[#allocation7 + $0x100] sm:$0xff]
    %v6388 = vld [vmem:[#allocation7 + $0x108] sm:$0xff]
    %v6389 = vld [vmem:[#allocation7 + $0x110] sm:$0xff]
    %v6390 = vld [vmem:[#allocation7 + $0x118] sm:$0xff]
    %v6391 = vld [vmem:[#allocation7 + $0x120] sm:$0xff]
    %v6392 = vld [vmem:[#allocation7 + $0x128] sm:$0xff]
    %v6393 = vld [vmem:[#allocation7 + $0x130] sm:$0xff]
    %v6394 = vld [vmem:[#allocation7 + $0x138] sm:$0xff]
    %v6395 = vld [vmem:[#allocation7 + $0x140] sm:$0xff]
    %v6396 = vld [vmem:[#allocation7 + $0x148] sm:$0xff]
    %v6397 = vld [vmem:[#allocation7 + $0x150] sm:$0xff]
    %v6398 = vld [vmem:[#allocation7 + $0x158] sm:$0xff]
    %v6399 = vld [vmem:[#allocation7 + $0x160] sm:$0xff]
    %v6400 = vld [vmem:[#allocation7 + $0x168] sm:$0xff]
    %v6401 = vld [vmem:[#allocation7 + $0x170] sm:$0xff]
    %v6402 = vld [vmem:[#allocation7 + $0x178] sm:$0xff]
    %v6403 = vld [vmem:[#allocation7 + $0x180] sm:$0xff]
    %v6404 = vld [vmem:[#allocation7 + $0x188] sm:$0xff]
    %v6405 = vld [vmem:[#allocation7 + $0x190] sm:$0xff]
    %v6406 = vld [vmem:[#allocation7 + $0x198] sm:$0xff]
    %v6407 = vld [vmem:[#allocation7 + $0x1a0] sm:$0xff]
    %v6408 = vld [vmem:[#allocation7 + $0x1a8] sm:$0xff]
    %v6409 = vld [vmem:[#allocation7 + $0x1b0] sm:$0xff]
    %v6410 = vld [vmem:[#allocation7 + $0x1b8] sm:$0xff]
    %v6411 = vld [vmem:[#allocation7 + $0x1c0] sm:$0xff]
    %v6412 = vld [vmem:[#allocation7 + $0x1c8] sm:$0xff]
    %v6413 = vld [vmem:[#allocation7 + $0x1d0] sm:$0xff]
    %v6414 = vld [vmem:[#allocation7 + $0x1d8] sm:$0xff]
    %v6415 = vld [vmem:[#allocation7 + $0x1e0] sm:$0xff]
    %v6416 = vld [vmem:[#allocation7 + $0x1e8] sm:$0xff]
    %v6417 = vld [vmem:[#allocation7 + $0x1f0] sm:$0xff]
    %v6418 = vld [vmem:[#allocation7 + $0x1f8] sm:$0xff]
    %v6419 = vld [vmem:[#allocation7 + $0x200] sm:$0xff]
    %v6420 = vld [vmem:[#allocation7 + $0x208] sm:$0xff]
    %v6421 = vld [vmem:[#allocation7 + $0x210] sm:$0xff]
    %v6422 = vld [vmem:[#allocation7 + $0x218] sm:$0xff]
    %v6423 = vld [vmem:[#allocation7 + $0x220] sm:$0xff]
    %v6424 = vld [vmem:[#allocation7 + $0x228] sm:$0xff]
    %v6425 = vld [vmem:[#allocation7 + $0x230] sm:$0xff]
    %v6426 = vld [vmem:[#allocation7 + $0x238] sm:$0xff]
    %v6427 = vld [vmem:[#allocation7 + $0x240] sm:$0xff]
    %v6428 = vld [vmem:[#allocation7 + $0x248] sm:$0xff]
    %v6429 = vld [vmem:[#allocation7 + $0x250] sm:$0xff]
    %v6430 = vld [vmem:[#allocation7 + $0x258] sm:$0xff]
    %v6431 = vld [vmem:[#allocation7 + $0x260] sm:$0xff]
    %v6432 = vld [vmem:[#allocation7 + $0x268] sm:$0xff]
    %v6433 = vld [vmem:[#allocation7 + $0x270] sm:$0xff]
    %v6434 = vld [vmem:[#allocation7 + $0x278] sm:$0xff]
    %v6435 = vld [vmem:[#allocation7 + $0x280] sm:$0xff]
    %v6436 = vld [vmem:[#allocation7 + $0x288] sm:$0xff]
    %v6437 = vld [vmem:[#allocation7 + $0x290] sm:$0xff]
    %v6438 = vld [vmem:[#allocation7 + $0x298] sm:$0xff]
    %v6439 = vld [vmem:[#allocation7 + $0x2a0] sm:$0xff]
    %v6440 = vld [vmem:[#allocation7 + $0x2a8] sm:$0xff]
    %v6441 = vld [vmem:[#allocation7 + $0x2b0] sm:$0xff]
    %v6442 = vld [vmem:[#allocation7 + $0x2b8] sm:$0xff]
    %v6443 = vld [vmem:[#allocation7 + $0x2c0] sm:$0xff]
    %v6444 = vld [vmem:[#allocation7 + $0x2c8] sm:$0xff]
    %v6445 = vld [vmem:[#allocation7 + $0x2d0] sm:$0xff]
    %v6446 = vld [vmem:[#allocation7 + $0x2d8] sm:$0xff]
    %v6447 = vld [vmem:[#allocation7 + $0x2e0] sm:$0xff]
    %v6448 = vld [vmem:[#allocation7 + $0x2e8] sm:$0xff]
    %v6449 = vld [vmem:[#allocation7 + $0x2f0] sm:$0xff]
    %v6450 = vld [vmem:[#allocation7 + $0x2f8] sm:$0xff]
    %v6451 = vld [vmem:[#allocation7 + $0x300] sm:$0xff]
    %v6452 = vld [vmem:[#allocation7 + $0x308] sm:$0xff]
    %v6453 = vld [vmem:[#allocation7 + $0x310] sm:$0xff]
    %v6454 = vld [vmem:[#allocation7 + $0x318] sm:$0xff]
    %v6455 = vld [vmem:[#allocation7 + $0x320] sm:$0xff]
    %v6456 = vld [vmem:[#allocation7 + $0x328] sm:$0xff]
    %v6457 = vld [vmem:[#allocation7 + $0x330] sm:$0xff]
    %v6458 = vld [vmem:[#allocation7 + $0x338] sm:$0xff]
    %v6459 = vld [vmem:[#allocation7 + $0x340] sm:$0xff]
    %v6460 = vld [vmem:[#allocation7 + $0x348] sm:$0xff]
    %v6461 = vld [vmem:[#allocation7 + $0x350] sm:$0xff]
    %v6462 = vld [vmem:[#allocation7 + $0x358] sm:$0xff]
    %v6463 = vld [vmem:[#allocation7 + $0x360] sm:$0xff]
    %v6464 = vld [vmem:[#allocation7 + $0x368] sm:$0xff]
    %v6465 = vld [vmem:[#allocation7 + $0x370] sm:$0xff]
    %v6466 = vld [vmem:[#allocation7 + $0x378] sm:$0xff]
    %v6467 = vld [vmem:[#allocation7 + $0x380] sm:$0xff]
    %v6468 = vld [vmem:[#allocation7 + $0x388] sm:$0xff]
    %v6469 = vld [vmem:[#allocation7 + $0x390] sm:$0xff]
    %v6470 = vld [vmem:[#allocation7 + $0x398] sm:$0xff]
    %v6471 = vld [vmem:[#allocation7 + $0x3a0] sm:$0xff]
    %v6472 = vld [vmem:[#allocation7 + $0x3a8] sm:$0xff]
    %v6473 = vld [vmem:[#allocation7 + $0x3b0] sm:$0xff]
    %v6474 = vld [vmem:[#allocation7 + $0x3b8] sm:$0xff]
    %v6475 = vld [vmem:[#allocation7 + $0x3c0] sm:$0xff]
    %v6476 = vld [vmem:[#allocation7 + $0x3c8] sm:$0xff]
    %v6477 = vld [vmem:[#allocation7 + $0x3d0] sm:$0xff]
    %v6478 = vld [vmem:[#allocation7 + $0x3d8] sm:$0xff]
    %v6479 = vld [vmem:[#allocation7 + $0x3e0] sm:$0xff]
    %v6480 = vld [vmem:[#allocation7 + $0x3e8] sm:$0xff]
    %v6481 = vld [vmem:[#allocation7 + $0x3f0] sm:$0xff]
    %v6482 = vld [vmem:[#allocation7 + $0x3f8] sm:$0xff]
    %6483 = vmatprep.subr.mxu0 %v6416
    %6484 = vmatpush1.msra.mxu0 %v6415
    %6485 = vmatprep.subr.mxu0 %v6412
    %6486 = vmatpush1.msra.mxu0 %v6411
    %6487 = vmatprep.subr.mxu0 %v6408
    %6488 = vmatpush1.msra.mxu0 %v6407
    %6489 = vmatprep.subr.mxu0 %v6404
    %6490 = vmatpush1.msra.mxu0 %v6403
    %6491 = vmatprep.subr.mxu0 %v6400
    %6492 = vmatpush1.msra.mxu0 %v6399
    %6493 = vmatprep.subr.mxu0 %v6396
    %6494 = vmatpush1.msra.mxu0 %v6395
    %6495 = vmatprep.subr.mxu0 %v6392
    %6496 = vmatpush1.msra.mxu0 %v6391
    %6497 = vmatprep.subr.mxu0 %v6388
    %6498 = vmatpush1.msra.mxu0 %v6387
    %6499 = vmatprep.subr.mxu0 %v6384
    %6500 = vmatpush1.msra.mxu0 %v6383
    %6501 = vmatprep.subr.mxu0 %v6380
    %6502 = vmatpush1.msra.mxu0 %v6379
    %6503 = vmatprep.subr.mxu0 %v6376
    %6504 = vmatpush1.msra.mxu0 %v6375
    %6505 = vmatprep.subr.mxu0 %v6372
    %6506 = vmatpush1.msra.mxu0 %v6371
    %6507 = vmatprep.subr.mxu0 %v6368
    %6508 = vmatpush1.msra.mxu0 %v6367
    %6509 = vmatprep.subr.mxu0 %v6364
    %6510 = vmatpush1.msra.mxu0 %v6363
    %6511 = vmatprep.subr.mxu0 %v6360
    %6512 = vmatpush1.msra.mxu0 %v6359
    %6513 = vmatprep.subr.mxu0 %v6356
    %6514 = vmatpush1.msra.mxu0 %v6355
    %6515 = vmatprep.subr.mxu0 %v6480
    %6516 = vmatpush2.msra.mxu0 %v6479
    %6517 = vmatprep.subr.mxu0 %v6476
    %6518 = vmatpush2.msra.mxu0 %v6475
    %6519 = vmatprep.subr.mxu0 %v6472
    %6520 = vmatpush2.msra.mxu0 %v6471
    %6521 = vmatprep.subr.mxu0 %v6468
    %6522 = vmatpush2.msra.mxu0 %v6467
    %6523 = vmatprep.subr.mxu0 %v6464
    %6524 = vmatpush2.msra.mxu0 %v6463
    %6525 = vmatprep.subr.mxu0 %v6460
    %6526 = vmatpush2.msra.mxu0 %v6459
    %6527 = vmatprep.subr.mxu0 %v6456
    %6528 = vmatpush2.msra.mxu0 %v6455
    %6529 = vmatprep.subr.mxu0 %v6452
    %6530 = vmatpush2.msra.mxu0 %v6451
    %6531 = vmatprep.subr.mxu0 %v6448
    %6532 = vmatpush2.msra.mxu0 %v6447
    %6533 = vmatprep.subr.mxu0 %v6444
    %6534 = vmatpush2.msra.mxu0 %v6443
    %6535 = vmatprep.subr.mxu0 %v6440
    %6536 = vmatpush2.msra.mxu0 %v6439
    %6537 = vmatprep.subr.mxu0 %v6436
    %6538 = vmatpush2.msra.mxu0 %v6435
    %6539 = vmatprep.subr.mxu0 %v6432
    %6540 = vmatpush2.msra.mxu0 %v6431
    %6541 = vmatprep.subr.mxu0 %v6428
    %6542 = vmatpush2.msra.mxu0 %v6427
    %6543 = vmatprep.subr.mxu0 %v6424
    %6544 = vmatpush2.msra.mxu0 %v6423
    %6545 = vmatprep.subr.mxu0 %v6420
    %6546 = vmatpush2.msra.mxu0 %v6419
    %6547 = vmatprep.mubr.f32.mxu0 %v5908
    %6548 = vmatmul.mubr.f32.gmra.mxu0 %v6354
    %v6549 = vpop.f32.mrf.mxu0
    %v6550 = vadd.f32 %v561, %v6549
    %v6551 = vpop.f32.mrf.mxu0
    %v6552 = vadd.f32 %v565, %v6551
    %6553 = vdwg.mxu0
    %6554 = vmatprep.subr.mxu0 %v6418
    %6555 = vmatpush1.msra.mxu0 %v6417
    %6556 = vmatprep.subr.mxu0 %v6414
    %6557 = vmatpush1.msra.mxu0 %v6413
    %6558 = vmatprep.subr.mxu0 %v6410
    %6559 = vmatpush1.msra.mxu0 %v6409
    %6560 = vmatprep.subr.mxu0 %v6406
    %6561 = vmatpush1.msra.mxu0 %v6405
    %6562 = vmatprep.subr.mxu0 %v6402
    %6563 = vmatpush1.msra.mxu0 %v6401
    %6564 = vmatprep.subr.mxu0 %v6398
    %6565 = vmatpush1.msra.mxu0 %v6397
    %6566 = vmatprep.subr.mxu0 %v6394
    %6567 = vmatpush1.msra.mxu0 %v6393
    %6568 = vmatprep.subr.mxu0 %v6390
    %6569 = vmatpush1.msra.mxu0 %v6389
    %6570 = vmatprep.subr.mxu0 %v6386
    %6571 = vmatpush1.msra.mxu0 %v6385
    %6572 = vmatprep.subr.mxu0 %v6382
    %6573 = vmatpush1.msra.mxu0 %v6381
    %6574 = vmatprep.subr.mxu0 %v6378
    %6575 = vmatpush1.msra.mxu0 %v6377
    %6576 = vmatprep.subr.mxu0 %v6374
    %6577 = vmatpush1.msra.mxu0 %v6373
    %6578 = vmatprep.subr.mxu0 %v6370
    %6579 = vmatpush1.msra.mxu0 %v6369
    %6580 = vmatprep.subr.mxu0 %v6366
    %6581 = vmatpush1.msra.mxu0 %v6365
    %6582 = vmatprep.subr.mxu0 %v6362
    %6583 = vmatpush1.msra.mxu0 %v6361
    %6584 = vmatprep.subr.mxu0 %v6358
    %6585 = vmatpush1.msra.mxu0 %v6357
    %6586 = vmatprep.subr.mxu0 %v6482
    %6587 = vmatpush2.msra.mxu0 %v6481
    %6588 = vmatprep.subr.mxu0 %v6478
    %6589 = vmatpush2.msra.mxu0 %v6477
    %6590 = vmatprep.subr.mxu0 %v6474
    %6591 = vmatpush2.msra.mxu0 %v6473
    %6592 = vmatprep.subr.mxu0 %v6470
    %6593 = vmatpush2.msra.mxu0 %v6469
    %6594 = vmatprep.subr.mxu0 %v6466
    %6595 = vmatpush2.msra.mxu0 %v6465
    %6596 = vmatprep.subr.mxu0 %v6462
    %6597 = vmatpush2.msra.mxu0 %v6461
    %6598 = vmatprep.subr.mxu0 %v6458
    %6599 = vmatpush2.msra.mxu0 %v6457
    %6600 = vmatprep.subr.mxu0 %v6454
    %6601 = vmatpush2.msra.mxu0 %v6453
    %6602 = vmatprep.subr.mxu0 %v6450
    %6603 = vmatpush2.msra.mxu0 %v6449
    %6604 = vmatprep.subr.mxu0 %v6446
    %6605 = vmatpush2.msra.mxu0 %v6445
    %6606 = vmatprep.subr.mxu0 %v6442
    %6607 = vmatpush2.msra.mxu0 %v6441
    %6608 = vmatprep.subr.mxu0 %v6438
    %6609 = vmatpush2.msra.mxu0 %v6437
    %6610 = vmatprep.subr.mxu0 %v6434
    %6611 = vmatpush2.msra.mxu0 %v6433
    %6612 = vmatprep.subr.mxu0 %v6430
    %6613 = vmatpush2.msra.mxu0 %v6429
    %6614 = vmatprep.subr.mxu0 %v6426
    %6615 = vmatpush2.msra.mxu0 %v6425
    %6616 = vmatprep.subr.mxu0 %v6422
    %6617 = vmatpush2.msra.mxu0 %v6421
    %6618 = vmatprep.mubr.f32.mxu0 %v5908
    %6619 = vmatmul.mubr.f32.gmra.mxu0 %v6354
    %v6620 = vpop.f32.mrf.mxu0
    %v6621 = vadd.f32 %v569, %v6620
    %v6622 = vpop.f32.mrf.mxu0
    %v6623 = vadd.f32 %v573, %v6622
    %6624 = vdwg.mxu0
    %v6625 = vxor.u32 %v6550, 2147483648
    %v6626 = vmul.f32 %v6625, 1.442695
    %v6627 = vpow.pop %v6626
    %v6628 = vadd.f32 %v6627, 1.0
    %v6629 = vrcp.pop %v6628
    %v6630 = vmul.f32 1.0, %v6629
    %v6631 = vxor.u32 %v6552, 2147483648
    %v6632 = vmul.f32 %v6631, 1.442695
    %v6633 = vpow.pop %v6632
    %v6634 = vadd.f32 %v6633, 1.0
    %v6635 = vrcp.pop %v6634
    %v6636 = vmul.f32 1.0, %v6635
    %v6637 = vtanh.pop %v6621
    %v6638 = vxor.u32 %v6623, 2147483648
    %v6639 = vmul.f32 %v6638, 1.442695
    %v6640 = vpow.pop %v6639
    %v6641 = vadd.f32 %v6640, 1.0
    %v6642 = vrcp.pop %v6641
    %v6643 = vmul.f32 1.0, %v6642
    %v6644 = vmul.f32 %v6636, %v5906
    %v6645 = vmul.f32 %v6630, %v6637
    %v6646 = vadd.f32 %v6644, %v6645
    %v6647 = vtanh.pop %v6646
    %v6648 = vmul.f32 %v6643, %v6647
    %v6649 = vld [vmem:[#allocation9] sm:$0xff]
    %v6650 = vld [vmem:[#allocation9 + $0x8] sm:$0xff]
    %v6651 = vld [vmem:[#allocation9 + $0x10] sm:$0xff]
    %v6652 = vld [vmem:[#allocation9 + $0x18] sm:$0xff]
    %v6653 = vld [vmem:[#allocation9 + $0x20] sm:$0xff]
    %v6654 = vld [vmem:[#allocation9 + $0x28] sm:$0xff]
    %v6655 = vld [vmem:[#allocation9 + $0x30] sm:$0xff]
    %v6656 = vld [vmem:[#allocation9 + $0x38] sm:$0xff]
    %v6657 = vld [vmem:[#allocation9 + $0x40] sm:$0xff]
    %v6658 = vld [vmem:[#allocation9 + $0x48] sm:$0xff]
    %v6659 = vld [vmem:[#allocation9 + $0x50] sm:$0xff]
    %v6660 = vld [vmem:[#allocation9 + $0x58] sm:$0xff]
    %v6661 = vld [vmem:[#allocation9 + $0x60] sm:$0xff]
    %v6662 = vld [vmem:[#allocation9 + $0x68] sm:$0xff]
    %v6663 = vld [vmem:[#allocation9 + $0x70] sm:$0xff]
    %v6664 = vld [vmem:[#allocation9 + $0x78] sm:$0xff]
    %6665 = vmatprep.subr.mxu0 0.0
    %6666 = vmatpush1.msra.mxu0 %v6664
    %6667 = vmatprep.subr.mxu0 0.0
    %6668 = vmatpush1.msra.mxu0 %v6663
    %6669 = vmatprep.subr.mxu0 0.0
    %6670 = vmatpush1.msra.mxu0 %v6662
    %6671 = vmatprep.subr.mxu0 0.0
    %6672 = vmatpush1.msra.mxu0 %v6661
    %6673 = vmatprep.subr.mxu0 0.0
    %6674 = vmatpush1.msra.mxu0 %v6660
    %6675 = vmatprep.subr.mxu0 0.0
    %6676 = vmatpush1.msra.mxu0 %v6659
    %6677 = vmatprep.subr.mxu0 0.0
    %6678 = vmatpush1.msra.mxu0 %v6658
    %6679 = vmatprep.subr.mxu0 0.0
    %6680 = vmatpush1.msra.mxu0 %v6657
    %6681 = vmatprep.subr.mxu0 0.0
    %6682 = vmatpush1.msra.mxu0 %v6656
    %6683 = vmatprep.subr.mxu0 0.0
    %6684 = vmatpush1.msra.mxu0 %v6655
    %6685 = vmatprep.subr.mxu0 0.0
    %6686 = vmatpush1.msra.mxu0 %v6654
    %6687 = vmatprep.subr.mxu0 0.0
    %6688 = vmatpush1.msra.mxu0 %v6653
    %6689 = vmatprep.subr.mxu0 0.0
    %6690 = vmatpush1.msra.mxu0 %v6652
    %6691 = vmatprep.subr.mxu0 0.0
    %6692 = vmatpush1.msra.mxu0 %v6651
    %6693 = vmatprep.subr.mxu0 0.0
    %6694 = vmatpush1.msra.mxu0 %v6650
    %6695 = vmatprep.subr.mxu0 0.0
    %6696 = vmatpush1.msra.mxu0 %v6649
    %6697 = vmatprep.subr.mxu0 0.0
    %6698 = vmatpush2.msra.mxu0 0.0
    %6699 = vmatprep.subr.mxu0 0.0
    %6700 = vmatpush2.msra.mxu0 0.0
    %6701 = vmatprep.subr.mxu0 0.0
    %6702 = vmatpush2.msra.mxu0 0.0
    %6703 = vmatprep.subr.mxu0 0.0
    %6704 = vmatpush2.msra.mxu0 0.0
    %6705 = vmatprep.subr.mxu0 0.0
    %6706 = vmatpush2.msra.mxu0 0.0
    %6707 = vmatprep.subr.mxu0 0.0
    %6708 = vmatpush2.msra.mxu0 0.0
    %6709 = vmatprep.subr.mxu0 0.0
    %6710 = vmatpush2.msra.mxu0 0.0
    %6711 = vmatprep.subr.mxu0 0.0
    %6712 = vmatpush2.msra.mxu0 0.0
    %6713 = vmatprep.subr.mxu0 0.0
    %6714 = vmatpush2.msra.mxu0 0.0
    %6715 = vmatprep.subr.mxu0 0.0
    %6716 = vmatpush2.msra.mxu0 0.0
    %6717 = vmatprep.subr.mxu0 0.0
    %6718 = vmatpush2.msra.mxu0 0.0
    %6719 = vmatprep.subr.mxu0 0.0
    %6720 = vmatpush2.msra.mxu0 0.0
    %6721 = vmatprep.subr.mxu0 0.0
    %6722 = vmatpush2.msra.mxu0 0.0
    %6723 = vmatprep.subr.mxu0 0.0
    %6724 = vmatpush2.msra.mxu0 0.0
    %6725 = vmatprep.subr.mxu0 0.0
    %6726 = vmatpush2.msra.mxu0 0.0
    %6727 = vmatprep.subr.mxu0 0.0
    %6728 = vmatpush2.msra.mxu0 0.0
    %6729 = vmatprep.mubr.f32.mxu0 0.0
    %6730 = vmatmul.mubr.f32.gmra.mxu0 %v6648
    %v6731 = vpop.f32.mrf.mxu0
    %v6732 = vadd.f32 %v764, %v6731
    %v6733 = vpop.f32.mrf.mxu0
    %6734 = vdwg.mxu0
    %v6737 = vunpack.c.l.s4 1966171168
    %v6738 = vunpack.c.0.s8 %v6737
    %v6739 = vlaneseq
    %v6740 = vshrl.u32 %v6739, 7
    %v6741 = vsub.s32 %v6738, %v6740
    %v6742 = vrot.slane %v6732, %v6741
    %v6743 = vcombine.high %v6742, %v6742
    %v6745 = vunpack.c.l.s4 1966171168
    %v6746 = vunpack.c.0.s8 %v6745
    %v6747 = vlaneseq
    %v6748 = vshrl.u32 %v6747, 7
    %v6749 = vsub.s32 %v6746, %v6748
    %v6750 = vrot.slane %v6742, %v6749
    %v6752 = vunpack.c.l.s4 1966171168
    %v6753 = vunpack.c.0.s8 %v6752
    %v6754 = vlaneseq
    %v6755 = vshrl.u32 %v6754, 7
    %v6756 = vsub.s32 %v6753, %v6755
    %v6757 = vrot.slane %v6743, %v6756
    %6760 = vst [vmem:[%s8 + $0x8] sm:$0x1] %v6750
    %6761 = vst [vmem:[%s8 + $0x18] sm:$0x1] %v6757
    %v6762 = vld [vmem:[#allocation6] sm:$0xff]
    %v6763 = vld [vmem:[#allocation6 + $0x8] sm:$0xff]
    %v6764 = vld [vmem:[#allocation6 + $0x10] sm:$0xff]
    %v6765 = vld [vmem:[#allocation6 + $0x18] sm:$0xff]
    %v6766 = vld [vmem:[#allocation6 + $0x20] sm:$0xff]
    %v6767 = vld [vmem:[#allocation6 + $0x28] sm:$0xff]
    %v6768 = vld [vmem:[#allocation6 + $0x30] sm:$0xff]
    %v6769 = vld [vmem:[#allocation6 + $0x38] sm:$0xff]
    %v6770 = vld [vmem:[#allocation6 + $0x40] sm:$0xff]
    %v6771 = vld [vmem:[#allocation6 + $0x48] sm:$0xff]
    %v6772 = vld [vmem:[#allocation6 + $0x50] sm:$0xff]
    %v6773 = vld [vmem:[#allocation6 + $0x58] sm:$0xff]
    %v6774 = vld [vmem:[#allocation6 + $0x60] sm:$0xff]
    %v6775 = vld [vmem:[#allocation6 + $0x68] sm:$0xff]
    %v6776 = vld [vmem:[#allocation6 + $0x70] sm:$0xff]
    %v6777 = vld [vmem:[#allocation6 + $0x78] sm:$0xff]
    %v6778 = vld [vmem:[#allocation6 + $0x80] sm:$0xff]
    %v6779 = vld [vmem:[#allocation6 + $0x88] sm:$0xff]
    %v6780 = vld [vmem:[#allocation6 + $0x90] sm:$0xff]
    %v6781 = vld [vmem:[#allocation6 + $0x98] sm:$0xff]
    %v6782 = vld [vmem:[#allocation6 + $0xa0] sm:$0xff]
    %v6783 = vld [vmem:[#allocation6 + $0xa8] sm:$0xff]
    %v6784 = vld [vmem:[#allocation6 + $0xb0] sm:$0xff]
    %v6785 = vld [vmem:[#allocation6 + $0xb8] sm:$0xff]
    %v6786 = vld [vmem:[#allocation6 + $0xc0] sm:$0xff]
    %v6787 = vld [vmem:[#allocation6 + $0xc8] sm:$0xff]
    %v6788 = vld [vmem:[#allocation6 + $0xd0] sm:$0xff]
    %v6789 = vld [vmem:[#allocation6 + $0xd8] sm:$0xff]
    %v6790 = vld [vmem:[#allocation6 + $0xe0] sm:$0xff]
    %v6791 = vld [vmem:[#allocation6 + $0xe8] sm:$0xff]
    %v6792 = vld [vmem:[#allocation6 + $0xf0] sm:$0xff]
    %v6793 = vld [vmem:[#allocation6 + $0xf8] sm:$0xff]
    %v6794 = vld [vmem:[#allocation6 + $0x100] sm:$0xff]
    %v6795 = vld [vmem:[#allocation6 + $0x108] sm:$0xff]
    %v6796 = vld [vmem:[#allocation6 + $0x110] sm:$0xff]
    %v6797 = vld [vmem:[#allocation6 + $0x118] sm:$0xff]
    %v6798 = vld [vmem:[#allocation6 + $0x120] sm:$0xff]
    %v6799 = vld [vmem:[#allocation6 + $0x128] sm:$0xff]
    %v6800 = vld [vmem:[#allocation6 + $0x130] sm:$0xff]
    %v6801 = vld [vmem:[#allocation6 + $0x138] sm:$0xff]
    %v6802 = vld [vmem:[#allocation6 + $0x140] sm:$0xff]
    %v6803 = vld [vmem:[#allocation6 + $0x148] sm:$0xff]
    %v6804 = vld [vmem:[#allocation6 + $0x150] sm:$0xff]
    %v6805 = vld [vmem:[#allocation6 + $0x158] sm:$0xff]
    %v6806 = vld [vmem:[#allocation6 + $0x160] sm:$0xff]
    %v6807 = vld [vmem:[#allocation6 + $0x168] sm:$0xff]
    %v6808 = vld [vmem:[#allocation6 + $0x170] sm:$0xff]
    %v6809 = vld [vmem:[#allocation6 + $0x178] sm:$0xff]
    %v6810 = vld [vmem:[#allocation6 + $0x180] sm:$0xff]
    %v6811 = vld [vmem:[#allocation6 + $0x188] sm:$0xff]
    %v6812 = vld [vmem:[#allocation6 + $0x190] sm:$0xff]
    %v6813 = vld [vmem:[#allocation6 + $0x198] sm:$0xff]
    %v6814 = vld [vmem:[#allocation6 + $0x1a0] sm:$0xff]
    %v6815 = vld [vmem:[#allocation6 + $0x1a8] sm:$0xff]
    %v6816 = vld [vmem:[#allocation6 + $0x1b0] sm:$0xff]
    %v6817 = vld [vmem:[#allocation6 + $0x1b8] sm:$0xff]
    %v6818 = vld [vmem:[#allocation6 + $0x1c0] sm:$0xff]
    %v6819 = vld [vmem:[#allocation6 + $0x1c8] sm:$0xff]
    %v6820 = vld [vmem:[#allocation6 + $0x1d0] sm:$0xff]
    %v6821 = vld [vmem:[#allocation6 + $0x1d8] sm:$0xff]
    %v6822 = vld [vmem:[#allocation6 + $0x1e0] sm:$0xff]
    %v6823 = vld [vmem:[#allocation6 + $0x1e8] sm:$0xff]
    %v6824 = vld [vmem:[#allocation6 + $0x1f0] sm:$0xff]
    %v6825 = vld [vmem:[#allocation6 + $0x1f8] sm:$0xff]
    %v6826 = vld [vmem:[#allocation6 + $0x200] sm:$0xff]
    %v6827 = vld [vmem:[#allocation6 + $0x208] sm:$0xff]
    %v6828 = vld [vmem:[#allocation6 + $0x210] sm:$0xff]
    %v6829 = vld [vmem:[#allocation6 + $0x218] sm:$0xff]
    %v6830 = vld [vmem:[#allocation6 + $0x220] sm:$0xff]
    %v6831 = vld [vmem:[#allocation6 + $0x228] sm:$0xff]
    %v6832 = vld [vmem:[#allocation6 + $0x230] sm:$0xff]
    %v6833 = vld [vmem:[#allocation6 + $0x238] sm:$0xff]
    %v6834 = vld [vmem:[#allocation6 + $0x240] sm:$0xff]
    %v6835 = vld [vmem:[#allocation6 + $0x248] sm:$0xff]
    %v6836 = vld [vmem:[#allocation6 + $0x250] sm:$0xff]
    %v6837 = vld [vmem:[#allocation6 + $0x258] sm:$0xff]
    %v6838 = vld [vmem:[#allocation6 + $0x260] sm:$0xff]
    %v6839 = vld [vmem:[#allocation6 + $0x268] sm:$0xff]
    %v6840 = vld [vmem:[#allocation6 + $0x270] sm:$0xff]
    %v6841 = vld [vmem:[#allocation6 + $0x278] sm:$0xff]
    %v6842 = vld [vmem:[#allocation6 + $0x280] sm:$0xff]
    %v6843 = vld [vmem:[#allocation6 + $0x288] sm:$0xff]
    %v6844 = vld [vmem:[#allocation6 + $0x290] sm:$0xff]
    %v6845 = vld [vmem:[#allocation6 + $0x298] sm:$0xff]
    %v6846 = vld [vmem:[#allocation6 + $0x2a0] sm:$0xff]
    %v6847 = vld [vmem:[#allocation6 + $0x2a8] sm:$0xff]
    %v6848 = vld [vmem:[#allocation6 + $0x2b0] sm:$0xff]
    %v6849 = vld [vmem:[#allocation6 + $0x2b8] sm:$0xff]
    %v6850 = vld [vmem:[#allocation6 + $0x2c0] sm:$0xff]
    %v6851 = vld [vmem:[#allocation6 + $0x2c8] sm:$0xff]
    %v6852 = vld [vmem:[#allocation6 + $0x2d0] sm:$0xff]
    %v6853 = vld [vmem:[#allocation6 + $0x2d8] sm:$0xff]
    %v6854 = vld [vmem:[#allocation6 + $0x2e0] sm:$0xff]
    %v6855 = vld [vmem:[#allocation6 + $0x2e8] sm:$0xff]
    %v6856 = vld [vmem:[#allocation6 + $0x2f0] sm:$0xff]
    %v6857 = vld [vmem:[#allocation6 + $0x2f8] sm:$0xff]
    %v6858 = vld [vmem:[#allocation6 + $0x300] sm:$0xff]
    %v6859 = vld [vmem:[#allocation6 + $0x308] sm:$0xff]
    %v6860 = vld [vmem:[#allocation6 + $0x310] sm:$0xff]
    %v6861 = vld [vmem:[#allocation6 + $0x318] sm:$0xff]
    %v6862 = vld [vmem:[#allocation6 + $0x320] sm:$0xff]
    %v6863 = vld [vmem:[#allocation6 + $0x328] sm:$0xff]
    %v6864 = vld [vmem:[#allocation6 + $0x330] sm:$0xff]
    %v6865 = vld [vmem:[#allocation6 + $0x338] sm:$0xff]
    %v6866 = vld [vmem:[#allocation6 + $0x340] sm:$0xff]
    %v6867 = vld [vmem:[#allocation6 + $0x348] sm:$0xff]
    %v6868 = vld [vmem:[#allocation6 + $0x350] sm:$0xff]
    %v6869 = vld [vmem:[#allocation6 + $0x358] sm:$0xff]
    %v6870 = vld [vmem:[#allocation6 + $0x360] sm:$0xff]
    %v6871 = vld [vmem:[#allocation6 + $0x368] sm:$0xff]
    %v6872 = vld [vmem:[#allocation6 + $0x370] sm:$0xff]
    %v6873 = vld [vmem:[#allocation6 + $0x378] sm:$0xff]
    %v6874 = vld [vmem:[#allocation6 + $0x380] sm:$0xff]
    %v6875 = vld [vmem:[#allocation6 + $0x388] sm:$0xff]
    %v6876 = vld [vmem:[#allocation6 + $0x390] sm:$0xff]
    %v6877 = vld [vmem:[#allocation6 + $0x398] sm:$0xff]
    %v6878 = vld [vmem:[#allocation6 + $0x3a0] sm:$0xff]
    %v6879 = vld [vmem:[#allocation6 + $0x3a8] sm:$0xff]
    %v6880 = vld [vmem:[#allocation6 + $0x3b0] sm:$0xff]
    %v6881 = vld [vmem:[#allocation6 + $0x3b8] sm:$0xff]
    %v6882 = vld [vmem:[#allocation6 + $0x3c0] sm:$0xff]
    %v6883 = vld [vmem:[#allocation6 + $0x3c8] sm:$0xff]
    %v6884 = vld [vmem:[#allocation6 + $0x3d0] sm:$0xff]
    %v6885 = vld [vmem:[#allocation6 + $0x3d8] sm:$0xff]
    %v6886 = vld [vmem:[#allocation6 + $0x3e0] sm:$0xff]
    %v6887 = vld [vmem:[#allocation6 + $0x3e8] sm:$0xff]
    %v6888 = vld [vmem:[#allocation6 + $0x3f0] sm:$0xff]
    %v6889 = vld [vmem:[#allocation6 + $0x3f8] sm:$0xff]
    %6890 = vmatprep.subr.mxu0 %v6823
    %6891 = vmatpush1.msra.mxu0 %v6822
    %6892 = vmatprep.subr.mxu0 %v6819
    %6893 = vmatpush1.msra.mxu0 %v6818
    %6894 = vmatprep.subr.mxu0 %v6815
    %6895 = vmatpush1.msra.mxu0 %v6814
    %6896 = vmatprep.subr.mxu0 %v6811
    %6897 = vmatpush1.msra.mxu0 %v6810
    %6898 = vmatprep.subr.mxu0 %v6807
    %6899 = vmatpush1.msra.mxu0 %v6806
    %6900 = vmatprep.subr.mxu0 %v6803
    %6901 = vmatpush1.msra.mxu0 %v6802
    %6902 = vmatprep.subr.mxu0 %v6799
    %6903 = vmatpush1.msra.mxu0 %v6798
    %6904 = vmatprep.subr.mxu0 %v6795
    %6905 = vmatpush1.msra.mxu0 %v6794
    %6906 = vmatprep.subr.mxu0 %v6791
    %6907 = vmatpush1.msra.mxu0 %v6790
    %6908 = vmatprep.subr.mxu0 %v6787
    %6909 = vmatpush1.msra.mxu0 %v6786
    %6910 = vmatprep.subr.mxu0 %v6783
    %6911 = vmatpush1.msra.mxu0 %v6782
    %6912 = vmatprep.subr.mxu0 %v6779
    %6913 = vmatpush1.msra.mxu0 %v6778
    %6914 = vmatprep.subr.mxu0 %v6775
    %6915 = vmatpush1.msra.mxu0 %v6774
    %6916 = vmatprep.subr.mxu0 %v6771
    %6917 = vmatpush1.msra.mxu0 %v6770
    %6918 = vmatprep.subr.mxu0 %v6767
    %6919 = vmatpush1.msra.mxu0 %v6766
    %6920 = vmatprep.subr.mxu0 %v6763
    %6921 = vmatpush1.msra.mxu0 %v6762
    %6922 = vmatprep.subr.mxu0 %v6887
    %6923 = vmatpush2.msra.mxu0 %v6886
    %6924 = vmatprep.subr.mxu0 %v6883
    %6925 = vmatpush2.msra.mxu0 %v6882
    %6926 = vmatprep.subr.mxu0 %v6879
    %6927 = vmatpush2.msra.mxu0 %v6878
    %6928 = vmatprep.subr.mxu0 %v6875
    %6929 = vmatpush2.msra.mxu0 %v6874
    %6930 = vmatprep.subr.mxu0 %v6871
    %6931 = vmatpush2.msra.mxu0 %v6870
    %6932 = vmatprep.subr.mxu0 %v6867
    %6933 = vmatpush2.msra.mxu0 %v6866
    %6934 = vmatprep.subr.mxu0 %v6863
    %6935 = vmatpush2.msra.mxu0 %v6862
    %6936 = vmatprep.subr.mxu0 %v6859
    %6937 = vmatpush2.msra.mxu0 %v6858
    %6938 = vmatprep.subr.mxu0 %v6855
    %6939 = vmatpush2.msra.mxu0 %v6854
    %6940 = vmatprep.subr.mxu0 %v6851
    %6941 = vmatpush2.msra.mxu0 %v6850
    %6942 = vmatprep.subr.mxu0 %v6847
    %6943 = vmatpush2.msra.mxu0 %v6846
    %6944 = vmatprep.subr.mxu0 %v6843
    %6945 = vmatpush2.msra.mxu0 %v6842
    %6946 = vmatprep.subr.mxu0 %v6839
    %6947 = vmatpush2.msra.mxu0 %v6838
    %6948 = vmatprep.subr.mxu0 %v6835
    %6949 = vmatpush2.msra.mxu0 %v6834
    %6950 = vmatprep.subr.mxu0 %v6831
    %6951 = vmatpush2.msra.mxu0 %v6830
    %6952 = vmatprep.subr.mxu0 %v6827
    %6953 = vmatpush2.msra.mxu0 %v6826
    %6954 = vmatprep.mubr.f32.mxu0 %v6354
    %6955 = vmatmul.mubr.f32.gmra.mxu0 %v6648
    %v6956 = vpop.f32.mrf.mxu0
    %v6957 = vadd.f32 %v6154, %v6956
    %v6958 = vpop.f32.mrf.mxu0
    %v6959 = vadd.f32 %v6158, %v6958
    %6960 = vdwg.mxu0
    %6961 = vmatprep.subr.mxu0 %v6825
    %6962 = vmatpush1.msra.mxu0 %v6824
    %6963 = vmatprep.subr.mxu0 %v6821
    %6964 = vmatpush1.msra.mxu0 %v6820
    %6965 = vmatprep.subr.mxu0 %v6817
    %6966 = vmatpush1.msra.mxu0 %v6816
    %6967 = vmatprep.subr.mxu0 %v6813
    %6968 = vmatpush1.msra.mxu0 %v6812
    %6969 = vmatprep.subr.mxu0 %v6809
    %6970 = vmatpush1.msra.mxu0 %v6808
    %6971 = vmatprep.subr.mxu0 %v6805
    %6972 = vmatpush1.msra.mxu0 %v6804
    %6973 = vmatprep.subr.mxu0 %v6801
    %6974 = vmatpush1.msra.mxu0 %v6800
    %6975 = vmatprep.subr.mxu0 %v6797
    %6976 = vmatpush1.msra.mxu0 %v6796
    %6977 = vmatprep.subr.mxu0 %v6793
    %6978 = vmatpush1.msra.mxu0 %v6792
    %6979 = vmatprep.subr.mxu0 %v6789
    %6980 = vmatpush1.msra.mxu0 %v6788
    %6981 = vmatprep.subr.mxu0 %v6785
    %6982 = vmatpush1.msra.mxu0 %v6784
    %6983 = vmatprep.subr.mxu0 %v6781
    %6984 = vmatpush1.msra.mxu0 %v6780
    %6985 = vmatprep.subr.mxu0 %v6777
    %6986 = vmatpush1.msra.mxu0 %v6776
    %6987 = vmatprep.subr.mxu0 %v6773
    %6988 = vmatpush1.msra.mxu0 %v6772
    %6989 = vmatprep.subr.mxu0 %v6769
    %6990 = vmatpush1.msra.mxu0 %v6768
    %6991 = vmatprep.subr.mxu0 %v6765
    %6992 = vmatpush1.msra.mxu0 %v6764
    %6993 = vmatprep.subr.mxu0 %v6889
    %6994 = vmatpush2.msra.mxu0 %v6888
    %6995 = vmatprep.subr.mxu0 %v6885
    %6996 = vmatpush2.msra.mxu0 %v6884
    %6997 = vmatprep.subr.mxu0 %v6881
    %6998 = vmatpush2.msra.mxu0 %v6880
    %6999 = vmatprep.subr.mxu0 %v6877
    %7000 = vmatpush2.msra.mxu0 %v6876
    %7001 = vmatprep.subr.mxu0 %v6873
    %7002 = vmatpush2.msra.mxu0 %v6872
    %7003 = vmatprep.subr.mxu0 %v6869
    %7004 = vmatpush2.msra.mxu0 %v6868
    %7005 = vmatprep.subr.mxu0 %v6865
    %7006 = vmatpush2.msra.mxu0 %v6864
    %7007 = vmatprep.subr.mxu0 %v6861
    %7008 = vmatpush2.msra.mxu0 %v6860
    %7009 = vmatprep.subr.mxu0 %v6857
    %7010 = vmatpush2.msra.mxu0 %v6856
    %7011 = vmatprep.subr.mxu0 %v6853
    %7012 = vmatpush2.msra.mxu0 %v6852
    %7013 = vmatprep.subr.mxu0 %v6849
    %7014 = vmatpush2.msra.mxu0 %v6848
    %7015 = vmatprep.subr.mxu0 %v6845
    %7016 = vmatpush2.msra.mxu0 %v6844
    %7017 = vmatprep.subr.mxu0 %v6841
    %7018 = vmatpush2.msra.mxu0 %v6840
    %7019 = vmatprep.subr.mxu0 %v6837
    %7020 = vmatpush2.msra.mxu0 %v6836
    %7021 = vmatprep.subr.mxu0 %v6833
    %7022 = vmatpush2.msra.mxu0 %v6832
    %7023 = vmatprep.subr.mxu0 %v6829
    %7024 = vmatpush2.msra.mxu0 %v6828
    %7025 = vmatprep.mubr.f32.mxu0 %v6354
    %7026 = vmatmul.mubr.f32.gmra.mxu0 %v6648
    %v7027 = vpop.f32.mrf.mxu0
    %v7028 = vadd.f32 %v6162, %v7027
    %v7029 = vpop.f32.mrf.mxu0
    %v7030 = vadd.f32 %v6166, %v7029
    %7031 = vdwg.mxu0
    %v7032 = vxor.u32 %v6957, 2147483648
    %v7033 = vmul.f32 %v7032, 1.442695
    %v7034 = vpow.pop %v7033
    %v7035 = vadd.f32 %v7034, 1.0
    %v7036 = vrcp.pop %v7035
    %v7037 = vmul.f32 1.0, %v7036
    %v7038 = vxor.u32 %v6959, 2147483648
    %v7039 = vmul.f32 %v7038, 1.442695
    %v7040 = vpow.pop %v7039
    %v7041 = vadd.f32 %v7040, 1.0
    %v7042 = vrcp.pop %v7041
    %v7043 = vmul.f32 1.0, %v7042
    %v7044 = vtanh.pop %v7028
    %v7045 = vxor.u32 %v7030, 2147483648
    %v7046 = vmul.f32 %v7045, 1.442695
    %v7047 = vpow.pop %v7046
    %v7048 = vadd.f32 %v7047, 1.0
    %v7049 = vrcp.pop %v7048
    %v7050 = vmul.f32 1.0, %v7049
    %v7051 = vmul.f32 %v7043, %v6352
    %v7052 = vmul.f32 %v7037, %v7044
    %v7053 = vadd.f32 %v7051, %v7052
    %v7054 = vtanh.pop %v7053
    %v7055 = vmul.f32 %v7050, %v7054
    %v7056 = vld [vmem:[#allocation7] sm:$0xff]
    %v7057 = vld [vmem:[#allocation7 + $0x8] sm:$0xff]
    %v7058 = vld [vmem:[#allocation7 + $0x10] sm:$0xff]
    %v7059 = vld [vmem:[#allocation7 + $0x18] sm:$0xff]
    %v7060 = vld [vmem:[#allocation7 + $0x20] sm:$0xff]
    %v7061 = vld [vmem:[#allocation7 + $0x28] sm:$0xff]
    %v7062 = vld [vmem:[#allocation7 + $0x30] sm:$0xff]
    %v7063 = vld [vmem:[#allocation7 + $0x38] sm:$0xff]
    %v7064 = vld [vmem:[#allocation7 + $0x40] sm:$0xff]
    %v7065 = vld [vmem:[#allocation7 + $0x48] sm:$0xff]
    %v7066 = vld [vmem:[#allocation7 + $0x50] sm:$0xff]
    %v7067 = vld [vmem:[#allocation7 + $0x58] sm:$0xff]
    %v7068 = vld [vmem:[#allocation7 + $0x60] sm:$0xff]
    %v7069 = vld [vmem:[#allocation7 + $0x68] sm:$0xff]
    %v7070 = vld [vmem:[#allocation7 + $0x70] sm:$0xff]
    %v7071 = vld [vmem:[#allocation7 + $0x78] sm:$0xff]
    %v7072 = vld [vmem:[#allocation7 + $0x80] sm:$0xff]
    %v7073 = vld [vmem:[#allocation7 + $0x88] sm:$0xff]
    %v7074 = vld [vmem:[#allocation7 + $0x90] sm:$0xff]
    %v7075 = vld [vmem:[#allocation7 + $0x98] sm:$0xff]
    %v7076 = vld [vmem:[#allocation7 + $0xa0] sm:$0xff]
    %v7077 = vld [vmem:[#allocation7 + $0xa8] sm:$0xff]
    %v7078 = vld [vmem:[#allocation7 + $0xb0] sm:$0xff]
    %v7079 = vld [vmem:[#allocation7 + $0xb8] sm:$0xff]
    %v7080 = vld [vmem:[#allocation7 + $0xc0] sm:$0xff]
    %v7081 = vld [vmem:[#allocation7 + $0xc8] sm:$0xff]
    %v7082 = vld [vmem:[#allocation7 + $0xd0] sm:$0xff]
    %v7083 = vld [vmem:[#allocation7 + $0xd8] sm:$0xff]
    %v7084 = vld [vmem:[#allocation7 + $0xe0] sm:$0xff]
    %v7085 = vld [vmem:[#allocation7 + $0xe8] sm:$0xff]
    %v7086 = vld [vmem:[#allocation7 + $0xf0] sm:$0xff]
    %v7087 = vld [vmem:[#allocation7 + $0xf8] sm:$0xff]
    %v7088 = vld [vmem:[#allocation7 + $0x100] sm:$0xff]
    %v7089 = vld [vmem:[#allocation7 + $0x108] sm:$0xff]
    %v7090 = vld [vmem:[#allocation7 + $0x110] sm:$0xff]
    %v7091 = vld [vmem:[#allocation7 + $0x118] sm:$0xff]
    %v7092 = vld [vmem:[#allocation7 + $0x120] sm:$0xff]
    %v7093 = vld [vmem:[#allocation7 + $0x128] sm:$0xff]
    %v7094 = vld [vmem:[#allocation7 + $0x130] sm:$0xff]
    %v7095 = vld [vmem:[#allocation7 + $0x138] sm:$0xff]
    %v7096 = vld [vmem:[#allocation7 + $0x140] sm:$0xff]
    %v7097 = vld [vmem:[#allocation7 + $0x148] sm:$0xff]
    %v7098 = vld [vmem:[#allocation7 + $0x150] sm:$0xff]
    %v7099 = vld [vmem:[#allocation7 + $0x158] sm:$0xff]
    %v7100 = vld [vmem:[#allocation7 + $0x160] sm:$0xff]
    %v7101 = vld [vmem:[#allocation7 + $0x168] sm:$0xff]
    %v7102 = vld [vmem:[#allocation7 + $0x170] sm:$0xff]
    %v7103 = vld [vmem:[#allocation7 + $0x178] sm:$0xff]
    %v7104 = vld [vmem:[#allocation7 + $0x180] sm:$0xff]
    %v7105 = vld [vmem:[#allocation7 + $0x188] sm:$0xff]
    %v7106 = vld [vmem:[#allocation7 + $0x190] sm:$0xff]
    %v7107 = vld [vmem:[#allocation7 + $0x198] sm:$0xff]
    %v7108 = vld [vmem:[#allocation7 + $0x1a0] sm:$0xff]
    %v7109 = vld [vmem:[#allocation7 + $0x1a8] sm:$0xff]
    %v7110 = vld [vmem:[#allocation7 + $0x1b0] sm:$0xff]
    %v7111 = vld [vmem:[#allocation7 + $0x1b8] sm:$0xff]
    %v7112 = vld [vmem:[#allocation7 + $0x1c0] sm:$0xff]
    %v7113 = vld [vmem:[#allocation7 + $0x1c8] sm:$0xff]
    %v7114 = vld [vmem:[#allocation7 + $0x1d0] sm:$0xff]
    %v7115 = vld [vmem:[#allocation7 + $0x1d8] sm:$0xff]
    %v7116 = vld [vmem:[#allocation7 + $0x1e0] sm:$0xff]
    %v7117 = vld [vmem:[#allocation7 + $0x1e8] sm:$0xff]
    %v7118 = vld [vmem:[#allocation7 + $0x1f0] sm:$0xff]
    %v7119 = vld [vmem:[#allocation7 + $0x1f8] sm:$0xff]
    %v7120 = vld [vmem:[#allocation7 + $0x200] sm:$0xff]
    %v7121 = vld [vmem:[#allocation7 + $0x208] sm:$0xff]
    %v7122 = vld [vmem:[#allocation7 + $0x210] sm:$0xff]
    %v7123 = vld [vmem:[#allocation7 + $0x218] sm:$0xff]
    %v7124 = vld [vmem:[#allocation7 + $0x220] sm:$0xff]
    %v7125 = vld [vmem:[#allocation7 + $0x228] sm:$0xff]
    %v7126 = vld [vmem:[#allocation7 + $0x230] sm:$0xff]
    %v7127 = vld [vmem:[#allocation7 + $0x238] sm:$0xff]
    %v7128 = vld [vmem:[#allocation7 + $0x240] sm:$0xff]
    %v7129 = vld [vmem:[#allocation7 + $0x248] sm:$0xff]
    %v7130 = vld [vmem:[#allocation7 + $0x250] sm:$0xff]
    %v7131 = vld [vmem:[#allocation7 + $0x258] sm:$0xff]
    %v7132 = vld [vmem:[#allocation7 + $0x260] sm:$0xff]
    %v7133 = vld [vmem:[#allocation7 + $0x268] sm:$0xff]
    %v7134 = vld [vmem:[#allocation7 + $0x270] sm:$0xff]
    %v7135 = vld [vmem:[#allocation7 + $0x278] sm:$0xff]
    %v7136 = vld [vmem:[#allocation7 + $0x280] sm:$0xff]
    %v7137 = vld [vmem:[#allocation7 + $0x288] sm:$0xff]
    %v7138 = vld [vmem:[#allocation7 + $0x290] sm:$0xff]
    %v7139 = vld [vmem:[#allocation7 + $0x298] sm:$0xff]
    %v7140 = vld [vmem:[#allocation7 + $0x2a0] sm:$0xff]
    %v7141 = vld [vmem:[#allocation7 + $0x2a8] sm:$0xff]
    %v7142 = vld [vmem:[#allocation7 + $0x2b0] sm:$0xff]
    %v7143 = vld [vmem:[#allocation7 + $0x2b8] sm:$0xff]
    %v7144 = vld [vmem:[#allocation7 + $0x2c0] sm:$0xff]
    %v7145 = vld [vmem:[#allocation7 + $0x2c8] sm:$0xff]
    %v7146 = vld [vmem:[#allocation7 + $0x2d0] sm:$0xff]
    %v7147 = vld [vmem:[#allocation7 + $0x2d8] sm:$0xff]
    %v7148 = vld [vmem:[#allocation7 + $0x2e0] sm:$0xff]
    %v7149 = vld [vmem:[#allocation7 + $0x2e8] sm:$0xff]
    %v7150 = vld [vmem:[#allocation7 + $0x2f0] sm:$0xff]
    %v7151 = vld [vmem:[#allocation7 + $0x2f8] sm:$0xff]
    %v7152 = vld [vmem:[#allocation7 + $0x300] sm:$0xff]
    %v7153 = vld [vmem:[#allocation7 + $0x308] sm:$0xff]
    %v7154 = vld [vmem:[#allocation7 + $0x310] sm:$0xff]
    %v7155 = vld [vmem:[#allocation7 + $0x318] sm:$0xff]
    %v7156 = vld [vmem:[#allocation7 + $0x320] sm:$0xff]
    %v7157 = vld [vmem:[#allocation7 + $0x328] sm:$0xff]
    %v7158 = vld [vmem:[#allocation7 + $0x330] sm:$0xff]
    %v7159 = vld [vmem:[#allocation7 + $0x338] sm:$0xff]
    %v7160 = vld [vmem:[#allocation7 + $0x340] sm:$0xff]
    %v7161 = vld [vmem:[#allocation7 + $0x348] sm:$0xff]
    %v7162 = vld [vmem:[#allocation7 + $0x350] sm:$0xff]
    %v7163 = vld [vmem:[#allocation7 + $0x358] sm:$0xff]
    %v7164 = vld [vmem:[#allocation7 + $0x360] sm:$0xff]
    %v7165 = vld [vmem:[#allocation7 + $0x368] sm:$0xff]
    %v7166 = vld [vmem:[#allocation7 + $0x370] sm:$0xff]
    %v7167 = vld [vmem:[#allocation7 + $0x378] sm:$0xff]
    %v7168 = vld [vmem:[#allocation7 + $0x380] sm:$0xff]
    %v7169 = vld [vmem:[#allocation7 + $0x388] sm:$0xff]
    %v7170 = vld [vmem:[#allocation7 + $0x390] sm:$0xff]
    %v7171 = vld [vmem:[#allocation7 + $0x398] sm:$0xff]
    %v7172 = vld [vmem:[#allocation7 + $0x3a0] sm:$0xff]
    %v7173 = vld [vmem:[#allocation7 + $0x3a8] sm:$0xff]
    %v7174 = vld [vmem:[#allocation7 + $0x3b0] sm:$0xff]
    %v7175 = vld [vmem:[#allocation7 + $0x3b8] sm:$0xff]
    %v7176 = vld [vmem:[#allocation7 + $0x3c0] sm:$0xff]
    %v7177 = vld [vmem:[#allocation7 + $0x3c8] sm:$0xff]
    %v7178 = vld [vmem:[#allocation7 + $0x3d0] sm:$0xff]
    %v7179 = vld [vmem:[#allocation7 + $0x3d8] sm:$0xff]
    %v7180 = vld [vmem:[#allocation7 + $0x3e0] sm:$0xff]
    %v7181 = vld [vmem:[#allocation7 + $0x3e8] sm:$0xff]
    %v7182 = vld [vmem:[#allocation7 + $0x3f0] sm:$0xff]
    %v7183 = vld [vmem:[#allocation7 + $0x3f8] sm:$0xff]
    %7184 = vmatprep.subr.mxu0 %v7117
    %7185 = vmatpush1.msra.mxu0 %v7116
    %7186 = vmatprep.subr.mxu0 %v7113
    %7187 = vmatpush1.msra.mxu0 %v7112
    %7188 = vmatprep.subr.mxu0 %v7109
    %7189 = vmatpush1.msra.mxu0 %v7108
    %7190 = vmatprep.subr.mxu0 %v7105
    %7191 = vmatpush1.msra.mxu0 %v7104
    %7192 = vmatprep.subr.mxu0 %v7101
    %7193 = vmatpush1.msra.mxu0 %v7100
    %7194 = vmatprep.subr.mxu0 %v7097
    %7195 = vmatpush1.msra.mxu0 %v7096
    %7196 = vmatprep.subr.mxu0 %v7093
    %7197 = vmatpush1.msra.mxu0 %v7092
    %7198 = vmatprep.subr.mxu0 %v7089
    %7199 = vmatpush1.msra.mxu0 %v7088
    %7200 = vmatprep.subr.mxu0 %v7085
    %7201 = vmatpush1.msra.mxu0 %v7084
    %7202 = vmatprep.subr.mxu0 %v7081
    %7203 = vmatpush1.msra.mxu0 %v7080
    %7204 = vmatprep.subr.mxu0 %v7077
    %7205 = vmatpush1.msra.mxu0 %v7076
    %7206 = vmatprep.subr.mxu0 %v7073
    %7207 = vmatpush1.msra.mxu0 %v7072
    %7208 = vmatprep.subr.mxu0 %v7069
    %7209 = vmatpush1.msra.mxu0 %v7068
    %7210 = vmatprep.subr.mxu0 %v7065
    %7211 = vmatpush1.msra.mxu0 %v7064
    %7212 = vmatprep.subr.mxu0 %v7061
    %7213 = vmatpush1.msra.mxu0 %v7060
    %7214 = vmatprep.subr.mxu0 %v7057
    %7215 = vmatpush1.msra.mxu0 %v7056
    %7216 = vmatprep.subr.mxu0 %v7181
    %7217 = vmatpush2.msra.mxu0 %v7180
    %7218 = vmatprep.subr.mxu0 %v7177
    %7219 = vmatpush2.msra.mxu0 %v7176
    %7220 = vmatprep.subr.mxu0 %v7173
    %7221 = vmatpush2.msra.mxu0 %v7172
    %7222 = vmatprep.subr.mxu0 %v7169
    %7223 = vmatpush2.msra.mxu0 %v7168
    %7224 = vmatprep.subr.mxu0 %v7165
    %7225 = vmatpush2.msra.mxu0 %v7164
    %7226 = vmatprep.subr.mxu0 %v7161
    %7227 = vmatpush2.msra.mxu0 %v7160
    %7228 = vmatprep.subr.mxu0 %v7157
    %7229 = vmatpush2.msra.mxu0 %v7156
    %7230 = vmatprep.subr.mxu0 %v7153
    %7231 = vmatpush2.msra.mxu0 %v7152
    %7232 = vmatprep.subr.mxu0 %v7149
    %7233 = vmatpush2.msra.mxu0 %v7148
    %7234 = vmatprep.subr.mxu0 %v7145
    %7235 = vmatpush2.msra.mxu0 %v7144
    %7236 = vmatprep.subr.mxu0 %v7141
    %7237 = vmatpush2.msra.mxu0 %v7140
    %7238 = vmatprep.subr.mxu0 %v7137
    %7239 = vmatpush2.msra.mxu0 %v7136
    %7240 = vmatprep.subr.mxu0 %v7133
    %7241 = vmatpush2.msra.mxu0 %v7132
    %7242 = vmatprep.subr.mxu0 %v7129
    %7243 = vmatpush2.msra.mxu0 %v7128
    %7244 = vmatprep.subr.mxu0 %v7125
    %7245 = vmatpush2.msra.mxu0 %v7124
    %7246 = vmatprep.subr.mxu0 %v7121
    %7247 = vmatpush2.msra.mxu0 %v7120
    %7248 = vmatprep.mubr.f32.mxu0 %v6648
    %7249 = vmatmul.mubr.f32.gmra.mxu0 %v7055
    %v7250 = vpop.f32.mrf.mxu0
    %v7251 = vadd.f32 %v561, %v7250
    %v7252 = vpop.f32.mrf.mxu0
    %v7253 = vadd.f32 %v565, %v7252
    %7254 = vdwg.mxu0
    %7255 = vmatprep.subr.mxu0 %v7119
    %7256 = vmatpush1.msra.mxu0 %v7118
    %7257 = vmatprep.subr.mxu0 %v7115
    %7258 = vmatpush1.msra.mxu0 %v7114
    %7259 = vmatprep.subr.mxu0 %v7111
    %7260 = vmatpush1.msra.mxu0 %v7110
    %7261 = vmatprep.subr.mxu0 %v7107
    %7262 = vmatpush1.msra.mxu0 %v7106
    %7263 = vmatprep.subr.mxu0 %v7103
    %7264 = vmatpush1.msra.mxu0 %v7102
    %7265 = vmatprep.subr.mxu0 %v7099
    %7266 = vmatpush1.msra.mxu0 %v7098
    %7267 = vmatprep.subr.mxu0 %v7095
    %7268 = vmatpush1.msra.mxu0 %v7094
    %7269 = vmatprep.subr.mxu0 %v7091
    %7270 = vmatpush1.msra.mxu0 %v7090
    %7271 = vmatprep.subr.mxu0 %v7087
    %7272 = vmatpush1.msra.mxu0 %v7086
    %7273 = vmatprep.subr.mxu0 %v7083
    %7274 = vmatpush1.msra.mxu0 %v7082
    %7275 = vmatprep.subr.mxu0 %v7079
    %7276 = vmatpush1.msra.mxu0 %v7078
    %7277 = vmatprep.subr.mxu0 %v7075
    %7278 = vmatpush1.msra.mxu0 %v7074
    %7279 = vmatprep.subr.mxu0 %v7071
    %7280 = vmatpush1.msra.mxu0 %v7070
    %7281 = vmatprep.subr.mxu0 %v7067
    %7282 = vmatpush1.msra.mxu0 %v7066
    %7283 = vmatprep.subr.mxu0 %v7063
    %7284 = vmatpush1.msra.mxu0 %v7062
    %7285 = vmatprep.subr.mxu0 %v7059
    %7286 = vmatpush1.msra.mxu0 %v7058
    %7287 = vmatprep.subr.mxu0 %v7183
    %7288 = vmatpush2.msra.mxu0 %v7182
    %7289 = vmatprep.subr.mxu0 %v7179
    %7290 = vmatpush2.msra.mxu0 %v7178
    %7291 = vmatprep.subr.mxu0 %v7175
    %7292 = vmatpush2.msra.mxu0 %v7174
    %7293 = vmatprep.subr.mxu0 %v7171
    %7294 = vmatpush2.msra.mxu0 %v7170
    %7295 = vmatprep.subr.mxu0 %v7167
    %7296 = vmatpush2.msra.mxu0 %v7166
    %7297 = vmatprep.subr.mxu0 %v7163
    %7298 = vmatpush2.msra.mxu0 %v7162
    %7299 = vmatprep.subr.mxu0 %v7159
    %7300 = vmatpush2.msra.mxu0 %v7158
    %7301 = vmatprep.subr.mxu0 %v7155
    %7302 = vmatpush2.msra.mxu0 %v7154
    %7303 = vmatprep.subr.mxu0 %v7151
    %7304 = vmatpush2.msra.mxu0 %v7150
    %7305 = vmatprep.subr.mxu0 %v7147
    %7306 = vmatpush2.msra.mxu0 %v7146
    %7307 = vmatprep.subr.mxu0 %v7143
    %7308 = vmatpush2.msra.mxu0 %v7142
    %7309 = vmatprep.subr.mxu0 %v7139
    %7310 = vmatpush2.msra.mxu0 %v7138
    %7311 = vmatprep.subr.mxu0 %v7135
    %7312 = vmatpush2.msra.mxu0 %v7134
    %7313 = vmatprep.subr.mxu0 %v7131
    %7314 = vmatpush2.msra.mxu0 %v7130
    %7315 = vmatprep.subr.mxu0 %v7127
    %7316 = vmatpush2.msra.mxu0 %v7126
    %7317 = vmatprep.subr.mxu0 %v7123
    %7318 = vmatpush2.msra.mxu0 %v7122
    %7319 = vmatprep.mubr.f32.mxu0 %v6648
    %7320 = vmatmul.mubr.f32.gmra.mxu0 %v7055
    %v7321 = vpop.f32.mrf.mxu0
    %v7322 = vadd.f32 %v569, %v7321
    %v7323 = vpop.f32.mrf.mxu0
    %v7324 = vadd.f32 %v573, %v7323
    %7325 = vdwg.mxu0
    %v7326 = vxor.u32 %v7251, 2147483648
    %v7327 = vmul.f32 %v7326, 1.442695
    %v7328 = vpow.pop %v7327
    %v7329 = vadd.f32 %v7328, 1.0
    %v7330 = vrcp.pop %v7329
    %v7331 = vmul.f32 1.0, %v7330
    %v7332 = vxor.u32 %v7253, 2147483648
    %v7333 = vmul.f32 %v7332, 1.442695
    %v7334 = vpow.pop %v7333
    %v7335 = vadd.f32 %v7334, 1.0
    %v7336 = vrcp.pop %v7335
    %v7337 = vmul.f32 1.0, %v7336
    %v7338 = vtanh.pop %v7322
    %v7339 = vxor.u32 %v7324, 2147483648
    %v7340 = vmul.f32 %v7339, 1.442695
    %v7341 = vpow.pop %v7340
    %v7342 = vadd.f32 %v7341, 1.0
    %v7343 = vrcp.pop %v7342
    %v7344 = vmul.f32 1.0, %v7343
    %v7345 = vmul.f32 %v7337, %v6646
    %v7346 = vmul.f32 %v7331, %v7338
    %v7347 = vadd.f32 %v7345, %v7346
    %v7348 = vtanh.pop %v7347
    %v7349 = vmul.f32 %v7344, %v7348
    %v7350 = vld [vmem:[#allocation9] sm:$0xff]
    %v7351 = vld [vmem:[#allocation9 + $0x8] sm:$0xff]
    %v7352 = vld [vmem:[#allocation9 + $0x10] sm:$0xff]
    %v7353 = vld [vmem:[#allocation9 + $0x18] sm:$0xff]
    %v7354 = vld [vmem:[#allocation9 + $0x20] sm:$0xff]
    %v7355 = vld [vmem:[#allocation9 + $0x28] sm:$0xff]
    %v7356 = vld [vmem:[#allocation9 + $0x30] sm:$0xff]
    %v7357 = vld [vmem:[#allocation9 + $0x38] sm:$0xff]
    %v7358 = vld [vmem:[#allocation9 + $0x40] sm:$0xff]
    %v7359 = vld [vmem:[#allocation9 + $0x48] sm:$0xff]
    %v7360 = vld [vmem:[#allocation9 + $0x50] sm:$0xff]
    %v7361 = vld [vmem:[#allocation9 + $0x58] sm:$0xff]
    %v7362 = vld [vmem:[#allocation9 + $0x60] sm:$0xff]
    %v7363 = vld [vmem:[#allocation9 + $0x68] sm:$0xff]
    %v7364 = vld [vmem:[#allocation9 + $0x70] sm:$0xff]
    %v7365 = vld [vmem:[#allocation9 + $0x78] sm:$0xff]
    %7366 = vmatprep.subr.mxu0 0.0
    %7367 = vmatpush1.msra.mxu0 %v7365
    %7368 = vmatprep.subr.mxu0 0.0
    %7369 = vmatpush1.msra.mxu0 %v7364
    %7370 = vmatprep.subr.mxu0 0.0
    %7371 = vmatpush1.msra.mxu0 %v7363
    %7372 = vmatprep.subr.mxu0 0.0
    %7373 = vmatpush1.msra.mxu0 %v7362
    %7374 = vmatprep.subr.mxu0 0.0
    %7375 = vmatpush1.msra.mxu0 %v7361
    %7376 = vmatprep.subr.mxu0 0.0
    %7377 = vmatpush1.msra.mxu0 %v7360
    %7378 = vmatprep.subr.mxu0 0.0
    %7379 = vmatpush1.msra.mxu0 %v7359
    %7380 = vmatprep.subr.mxu0 0.0
    %7381 = vmatpush1.msra.mxu0 %v7358
    %7382 = vmatprep.subr.mxu0 0.0
    %7383 = vmatpush1.msra.mxu0 %v7357
    %7384 = vmatprep.subr.mxu0 0.0
    %7385 = vmatpush1.msra.mxu0 %v7356
    %7386 = vmatprep.subr.mxu0 0.0
    %7387 = vmatpush1.msra.mxu0 %v7355
    %7388 = vmatprep.subr.mxu0 0.0
    %7389 = vmatpush1.msra.mxu0 %v7354
    %7390 = vmatprep.subr.mxu0 0.0
    %7391 = vmatpush1.msra.mxu0 %v7353
    %7392 = vmatprep.subr.mxu0 0.0
    %7393 = vmatpush1.msra.mxu0 %v7352
    %7394 = vmatprep.subr.mxu0 0.0
    %7395 = vmatpush1.msra.mxu0 %v7351
    %7396 = vmatprep.subr.mxu0 0.0
    %7397 = vmatpush1.msra.mxu0 %v7350
    %7398 = vmatprep.subr.mxu0 0.0
    %7399 = vmatpush2.msra.mxu0 0.0
    %7400 = vmatprep.subr.mxu0 0.0
    %7401 = vmatpush2.msra.mxu0 0.0
    %7402 = vmatprep.subr.mxu0 0.0
    %7403 = vmatpush2.msra.mxu0 0.0
    %7404 = vmatprep.subr.mxu0 0.0
    %7405 = vmatpush2.msra.mxu0 0.0
    %7406 = vmatprep.subr.mxu0 0.0
    %7407 = vmatpush2.msra.mxu0 0.0
    %7408 = vmatprep.subr.mxu0 0.0
    %7409 = vmatpush2.msra.mxu0 0.0
    %7410 = vmatprep.subr.mxu0 0.0
    %7411 = vmatpush2.msra.mxu0 0.0
    %7412 = vmatprep.subr.mxu0 0.0
    %7413 = vmatpush2.msra.mxu0 0.0
    %7414 = vmatprep.subr.mxu0 0.0
    %7415 = vmatpush2.msra.mxu0 0.0
    %7416 = vmatprep.subr.mxu0 0.0
    %7417 = vmatpush2.msra.mxu0 0.0
    %7418 = vmatprep.subr.mxu0 0.0
    %7419 = vmatpush2.msra.mxu0 0.0
    %7420 = vmatprep.subr.mxu0 0.0
    %7421 = vmatpush2.msra.mxu0 0.0
    %7422 = vmatprep.subr.mxu0 0.0
    %7423 = vmatpush2.msra.mxu0 0.0
    %7424 = vmatprep.subr.mxu0 0.0
    %7425 = vmatpush2.msra.mxu0 0.0
    %7426 = vmatprep.subr.mxu0 0.0
    %7427 = vmatpush2.msra.mxu0 0.0
    %7428 = vmatprep.subr.mxu0 0.0
    %7429 = vmatpush2.msra.mxu0 0.0
    %7430 = vmatprep.mubr.f32.mxu0 0.0
    %7431 = vmatmul.mubr.f32.gmra.mxu0 %v7349
    %v7432 = vpop.f32.mrf.mxu0
    %v7433 = vadd.f32 %v764, %v7432
    %v7434 = vpop.f32.mrf.mxu0
    %7435 = vdwg.mxu0
    %v7438 = vunpack.c.l.s4 1966171168
    %v7439 = vunpack.c.0.s8 %v7438
    %v7440 = vlaneseq
    %v7441 = vshrl.u32 %v7440, 7
    %v7442 = vsub.s32 %v7439, %v7441
    %v7443 = vrot.slane %v7433, %v7442
    %v7444 = vcombine.high %v7443, %v7443
    %v7446 = vunpack.c.l.s4 1966171168
    %v7447 = vunpack.c.0.s8 %v7446
    %v7448 = vlaneseq
    %v7449 = vshrl.u32 %v7448, 7
    %v7450 = vsub.s32 %v7447, %v7449
    %v7451 = vrot.slane %v7443, %v7450
    %v7453 = vunpack.c.l.s4 1966171168
    %v7454 = vunpack.c.0.s8 %v7453
    %v7455 = vlaneseq
    %v7456 = vshrl.u32 %v7455, 7
    %v7457 = vsub.s32 %v7454, %v7456
    %v7458 = vrot.slane %v7444, %v7457
    %7461 = vst [vmem:[%s8 + $0x9] sm:$0x1] %v7451
    %7462 = vst [vmem:[%s8 + $0x19] sm:$0x1] %v7458
    %v7463 = vld [vmem:[#allocation6] sm:$0xff]
    %v7464 = vld [vmem:[#allocation6 + $0x8] sm:$0xff]
    %v7465 = vld [vmem:[#allocation6 + $0x10] sm:$0xff]
    %v7466 = vld [vmem:[#allocation6 + $0x18] sm:$0xff]
    %v7467 = vld [vmem:[#allocation6 + $0x20] sm:$0xff]
    %v7468 = vld [vmem:[#allocation6 + $0x28] sm:$0xff]
    %v7469 = vld [vmem:[#allocation6 + $0x30] sm:$0xff]
    %v7470 = vld [vmem:[#allocation6 + $0x38] sm:$0xff]
    %v7471 = vld [vmem:[#allocation6 + $0x40] sm:$0xff]
    %v7472 = vld [vmem:[#allocation6 + $0x48] sm:$0xff]
    %v7473 = vld [vmem:[#allocation6 + $0x50] sm:$0xff]
    %v7474 = vld [vmem:[#allocation6 + $0x58] sm:$0xff]
    %v7475 = vld [vmem:[#allocation6 + $0x60] sm:$0xff]
    %v7476 = vld [vmem:[#allocation6 + $0x68] sm:$0xff]
    %v7477 = vld [vmem:[#allocation6 + $0x70] sm:$0xff]
    %v7478 = vld [vmem:[#allocation6 + $0x78] sm:$0xff]
    %v7479 = vld [vmem:[#allocation6 + $0x80] sm:$0xff]
    %v7480 = vld [vmem:[#allocation6 + $0x88] sm:$0xff]
    %v7481 = vld [vmem:[#allocation6 + $0x90] sm:$0xff]
    %v7482 = vld [vmem:[#allocation6 + $0x98] sm:$0xff]
    %v7483 = vld [vmem:[#allocation6 + $0xa0] sm:$0xff]
    %v7484 = vld [vmem:[#allocation6 + $0xa8] sm:$0xff]
    %v7485 = vld [vmem:[#allocation6 + $0xb0] sm:$0xff]
    %v7486 = vld [vmem:[#allocation6 + $0xb8] sm:$0xff]
    %v7487 = vld [vmem:[#allocation6 + $0xc0] sm:$0xff]
    %v7488 = vld [vmem:[#allocation6 + $0xc8] sm:$0xff]
    %v7489 = vld [vmem:[#allocation6 + $0xd0] sm:$0xff]
    %v7490 = vld [vmem:[#allocation6 + $0xd8] sm:$0xff]
    %v7491 = vld [vmem:[#allocation6 + $0xe0] sm:$0xff]
    %v7492 = vld [vmem:[#allocation6 + $0xe8] sm:$0xff]
    %v7493 = vld [vmem:[#allocation6 + $0xf0] sm:$0xff]
    %v7494 = vld [vmem:[#allocation6 + $0xf8] sm:$0xff]
    %v7495 = vld [vmem:[#allocation6 + $0x100] sm:$0xff]
    %v7496 = vld [vmem:[#allocation6 + $0x108] sm:$0xff]
    %v7497 = vld [vmem:[#allocation6 + $0x110] sm:$0xff]
    %v7498 = vld [vmem:[#allocation6 + $0x118] sm:$0xff]
    %v7499 = vld [vmem:[#allocation6 + $0x120] sm:$0xff]
    %v7500 = vld [vmem:[#allocation6 + $0x128] sm:$0xff]
    %v7501 = vld [vmem:[#allocation6 + $0x130] sm:$0xff]
    %v7502 = vld [vmem:[#allocation6 + $0x138] sm:$0xff]
    %v7503 = vld [vmem:[#allocation6 + $0x140] sm:$0xff]
    %v7504 = vld [vmem:[#allocation6 + $0x148] sm:$0xff]
    %v7505 = vld [vmem:[#allocation6 + $0x150] sm:$0xff]
    %v7506 = vld [vmem:[#allocation6 + $0x158] sm:$0xff]
    %v7507 = vld [vmem:[#allocation6 + $0x160] sm:$0xff]
    %v7508 = vld [vmem:[#allocation6 + $0x168] sm:$0xff]
    %v7509 = vld [vmem:[#allocation6 + $0x170] sm:$0xff]
    %v7510 = vld [vmem:[#allocation6 + $0x178] sm:$0xff]
    %v7511 = vld [vmem:[#allocation6 + $0x180] sm:$0xff]
    %v7512 = vld [vmem:[#allocation6 + $0x188] sm:$0xff]
    %v7513 = vld [vmem:[#allocation6 + $0x190] sm:$0xff]
    %v7514 = vld [vmem:[#allocation6 + $0x198] sm:$0xff]
    %v7515 = vld [vmem:[#allocation6 + $0x1a0] sm:$0xff]
    %v7516 = vld [vmem:[#allocation6 + $0x1a8] sm:$0xff]
    %v7517 = vld [vmem:[#allocation6 + $0x1b0] sm:$0xff]
    %v7518 = vld [vmem:[#allocation6 + $0x1b8] sm:$0xff]
    %v7519 = vld [vmem:[#allocation6 + $0x1c0] sm:$0xff]
    %v7520 = vld [vmem:[#allocation6 + $0x1c8] sm:$0xff]
    %v7521 = vld [vmem:[#allocation6 + $0x1d0] sm:$0xff]
    %v7522 = vld [vmem:[#allocation6 + $0x1d8] sm:$0xff]
    %v7523 = vld [vmem:[#allocation6 + $0x1e0] sm:$0xff]
    %v7524 = vld [vmem:[#allocation6 + $0x1e8] sm:$0xff]
    %v7525 = vld [vmem:[#allocation6 + $0x1f0] sm:$0xff]
    %v7526 = vld [vmem:[#allocation6 + $0x1f8] sm:$0xff]
    %v7527 = vld [vmem:[#allocation6 + $0x200] sm:$0xff]
    %v7528 = vld [vmem:[#allocation6 + $0x208] sm:$0xff]
    %v7529 = vld [vmem:[#allocation6 + $0x210] sm:$0xff]
    %v7530 = vld [vmem:[#allocation6 + $0x218] sm:$0xff]
    %v7531 = vld [vmem:[#allocation6 + $0x220] sm:$0xff]
    %v7532 = vld [vmem:[#allocation6 + $0x228] sm:$0xff]
    %v7533 = vld [vmem:[#allocation6 + $0x230] sm:$0xff]
    %v7534 = vld [vmem:[#allocation6 + $0x238] sm:$0xff]
    %v7535 = vld [vmem:[#allocation6 + $0x240] sm:$0xff]
    %v7536 = vld [vmem:[#allocation6 + $0x248] sm:$0xff]
    %v7537 = vld [vmem:[#allocation6 + $0x250] sm:$0xff]
    %v7538 = vld [vmem:[#allocation6 + $0x258] sm:$0xff]
    %v7539 = vld [vmem:[#allocation6 + $0x260] sm:$0xff]
    %v7540 = vld [vmem:[#allocation6 + $0x268] sm:$0xff]
    %v7541 = vld [vmem:[#allocation6 + $0x270] sm:$0xff]
    %v7542 = vld [vmem:[#allocation6 + $0x278] sm:$0xff]
    %v7543 = vld [vmem:[#allocation6 + $0x280] sm:$0xff]
    %v7544 = vld [vmem:[#allocation6 + $0x288] sm:$0xff]
    %v7545 = vld [vmem:[#allocation6 + $0x290] sm:$0xff]
    %v7546 = vld [vmem:[#allocation6 + $0x298] sm:$0xff]
    %v7547 = vld [vmem:[#allocation6 + $0x2a0] sm:$0xff]
    %v7548 = vld [vmem:[#allocation6 + $0x2a8] sm:$0xff]
    %v7549 = vld [vmem:[#allocation6 + $0x2b0] sm:$0xff]
    %v7550 = vld [vmem:[#allocation6 + $0x2b8] sm:$0xff]
    %v7551 = vld [vmem:[#allocation6 + $0x2c0] sm:$0xff]
    %v7552 = vld [vmem:[#allocation6 + $0x2c8] sm:$0xff]
    %v7553 = vld [vmem:[#allocation6 + $0x2d0] sm:$0xff]
    %v7554 = vld [vmem:[#allocation6 + $0x2d8] sm:$0xff]
    %v7555 = vld [vmem:[#allocation6 + $0x2e0] sm:$0xff]
    %v7556 = vld [vmem:[#allocation6 + $0x2e8] sm:$0xff]
    %v7557 = vld [vmem:[#allocation6 + $0x2f0] sm:$0xff]
    %v7558 = vld [vmem:[#allocation6 + $0x2f8] sm:$0xff]
    %v7559 = vld [vmem:[#allocation6 + $0x300] sm:$0xff]
    %v7560 = vld [vmem:[#allocation6 + $0x308] sm:$0xff]
    %v7561 = vld [vmem:[#allocation6 + $0x310] sm:$0xff]
    %v7562 = vld [vmem:[#allocation6 + $0x318] sm:$0xff]
    %v7563 = vld [vmem:[#allocation6 + $0x320] sm:$0xff]
    %v7564 = vld [vmem:[#allocation6 + $0x328] sm:$0xff]
    %v7565 = vld [vmem:[#allocation6 + $0x330] sm:$0xff]
    %v7566 = vld [vmem:[#allocation6 + $0x338] sm:$0xff]
    %v7567 = vld [vmem:[#allocation6 + $0x340] sm:$0xff]
    %v7568 = vld [vmem:[#allocation6 + $0x348] sm:$0xff]
    %v7569 = vld [vmem:[#allocation6 + $0x350] sm:$0xff]
    %v7570 = vld [vmem:[#allocation6 + $0x358] sm:$0xff]
    %v7571 = vld [vmem:[#allocation6 + $0x360] sm:$0xff]
    %v7572 = vld [vmem:[#allocation6 + $0x368] sm:$0xff]
    %v7573 = vld [vmem:[#allocation6 + $0x370] sm:$0xff]
    %v7574 = vld [vmem:[#allocation6 + $0x378] sm:$0xff]
    %v7575 = vld [vmem:[#allocation6 + $0x380] sm:$0xff]
    %v7576 = vld [vmem:[#allocation6 + $0x388] sm:$0xff]
    %v7577 = vld [vmem:[#allocation6 + $0x390] sm:$0xff]
    %v7578 = vld [vmem:[#allocation6 + $0x398] sm:$0xff]
    %v7579 = vld [vmem:[#allocation6 + $0x3a0] sm:$0xff]
    %v7580 = vld [vmem:[#allocation6 + $0x3a8] sm:$0xff]
    %v7581 = vld [vmem:[#allocation6 + $0x3b0] sm:$0xff]
    %v7582 = vld [vmem:[#allocation6 + $0x3b8] sm:$0xff]
    %v7583 = vld [vmem:[#allocation6 + $0x3c0] sm:$0xff]
    %v7584 = vld [vmem:[#allocation6 + $0x3c8] sm:$0xff]
    %v7585 = vld [vmem:[#allocation6 + $0x3d0] sm:$0xff]
    %v7586 = vld [vmem:[#allocation6 + $0x3d8] sm:$0xff]
    %v7587 = vld [vmem:[#allocation6 + $0x3e0] sm:$0xff]
    %v7588 = vld [vmem:[#allocation6 + $0x3e8] sm:$0xff]
    %v7589 = vld [vmem:[#allocation6 + $0x3f0] sm:$0xff]
    %v7590 = vld [vmem:[#allocation6 + $0x3f8] sm:$0xff]
    %7591 = vmatprep.subr.mxu0 %v7524
    %7592 = vmatpush1.msra.mxu0 %v7523
    %7593 = vmatprep.subr.mxu0 %v7520
    %7594 = vmatpush1.msra.mxu0 %v7519
    %7595 = vmatprep.subr.mxu0 %v7516
    %7596 = vmatpush1.msra.mxu0 %v7515
    %7597 = vmatprep.subr.mxu0 %v7512
    %7598 = vmatpush1.msra.mxu0 %v7511
    %7599 = vmatprep.subr.mxu0 %v7508
    %7600 = vmatpush1.msra.mxu0 %v7507
    %7601 = vmatprep.subr.mxu0 %v7504
    %7602 = vmatpush1.msra.mxu0 %v7503
    %7603 = vmatprep.subr.mxu0 %v7500
    %7604 = vmatpush1.msra.mxu0 %v7499
    %7605 = vmatprep.subr.mxu0 %v7496
    %7606 = vmatpush1.msra.mxu0 %v7495
    %7607 = vmatprep.subr.mxu0 %v7492
    %7608 = vmatpush1.msra.mxu0 %v7491
    %7609 = vmatprep.subr.mxu0 %v7488
    %7610 = vmatpush1.msra.mxu0 %v7487
    %7611 = vmatprep.subr.mxu0 %v7484
    %7612 = vmatpush1.msra.mxu0 %v7483
    %7613 = vmatprep.subr.mxu0 %v7480
    %7614 = vmatpush1.msra.mxu0 %v7479
    %7615 = vmatprep.subr.mxu0 %v7476
    %7616 = vmatpush1.msra.mxu0 %v7475
    %7617 = vmatprep.subr.mxu0 %v7472
    %7618 = vmatpush1.msra.mxu0 %v7471
    %7619 = vmatprep.subr.mxu0 %v7468
    %7620 = vmatpush1.msra.mxu0 %v7467
    %7621 = vmatprep.subr.mxu0 %v7464
    %7622 = vmatpush1.msra.mxu0 %v7463
    %7623 = vmatprep.subr.mxu0 %v7588
    %7624 = vmatpush2.msra.mxu0 %v7587
    %7625 = vmatprep.subr.mxu0 %v7584
    %7626 = vmatpush2.msra.mxu0 %v7583
    %7627 = vmatprep.subr.mxu0 %v7580
    %7628 = vmatpush2.msra.mxu0 %v7579
    %7629 = vmatprep.subr.mxu0 %v7576
    %7630 = vmatpush2.msra.mxu0 %v7575
    %7631 = vmatprep.subr.mxu0 %v7572
    %7632 = vmatpush2.msra.mxu0 %v7571
    %7633 = vmatprep.subr.mxu0 %v7568
    %7634 = vmatpush2.msra.mxu0 %v7567
    %7635 = vmatprep.subr.mxu0 %v7564
    %7636 = vmatpush2.msra.mxu0 %v7563
    %7637 = vmatprep.subr.mxu0 %v7560
    %7638 = vmatpush2.msra.mxu0 %v7559
    %7639 = vmatprep.subr.mxu0 %v7556
    %7640 = vmatpush2.msra.mxu0 %v7555
    %7641 = vmatprep.subr.mxu0 %v7552
    %7642 = vmatpush2.msra.mxu0 %v7551
    %7643 = vmatprep.subr.mxu0 %v7548
    %7644 = vmatpush2.msra.mxu0 %v7547
    %7645 = vmatprep.subr.mxu0 %v7544
    %7646 = vmatpush2.msra.mxu0 %v7543
    %7647 = vmatprep.subr.mxu0 %v7540
    %7648 = vmatpush2.msra.mxu0 %v7539
    %7649 = vmatprep.subr.mxu0 %v7536
    %7650 = vmatpush2.msra.mxu0 %v7535
    %7651 = vmatprep.subr.mxu0 %v7532
    %7652 = vmatpush2.msra.mxu0 %v7531
    %7653 = vmatprep.subr.mxu0 %v7528
    %7654 = vmatpush2.msra.mxu0 %v7527
    %7655 = vmatprep.mubr.f32.mxu0 %v7055
    %7656 = vmatmul.mubr.f32.gmra.mxu0 %v7349
    %v7657 = vpop.f32.mrf.mxu0
    %v7658 = vadd.f32 %v6154, %v7657
    %v7659 = vpop.f32.mrf.mxu0
    %v7660 = vadd.f32 %v6158, %v7659
    %7661 = vdwg.mxu0
    %7662 = vmatprep.subr.mxu0 %v7526
    %7663 = vmatpush1.msra.mxu0 %v7525
    %7664 = vmatprep.subr.mxu0 %v7522
    %7665 = vmatpush1.msra.mxu0 %v7521
    %7666 = vmatprep.subr.mxu0 %v7518
    %7667 = vmatpush1.msra.mxu0 %v7517
    %7668 = vmatprep.subr.mxu0 %v7514
    %7669 = vmatpush1.msra.mxu0 %v7513
    %7670 = vmatprep.subr.mxu0 %v7510
    %7671 = vmatpush1.msra.mxu0 %v7509
    %7672 = vmatprep.subr.mxu0 %v7506
    %7673 = vmatpush1.msra.mxu0 %v7505
    %7674 = vmatprep.subr.mxu0 %v7502
    %7675 = vmatpush1.msra.mxu0 %v7501
    %7676 = vmatprep.subr.mxu0 %v7498
    %7677 = vmatpush1.msra.mxu0 %v7497
    %7678 = vmatprep.subr.mxu0 %v7494
    %7679 = vmatpush1.msra.mxu0 %v7493
    %7680 = vmatprep.subr.mxu0 %v7490
    %7681 = vmatpush1.msra.mxu0 %v7489
    %7682 = vmatprep.subr.mxu0 %v7486
    %7683 = vmatpush1.msra.mxu0 %v7485
    %7684 = vmatprep.subr.mxu0 %v7482
    %7685 = vmatpush1.msra.mxu0 %v7481
    %7686 = vmatprep.subr.mxu0 %v7478
    %7687 = vmatpush1.msra.mxu0 %v7477
    %7688 = vmatprep.subr.mxu0 %v7474
    %7689 = vmatpush1.msra.mxu0 %v7473
    %7690 = vmatprep.subr.mxu0 %v7470
    %7691 = vmatpush1.msra.mxu0 %v7469
    %7692 = vmatprep.subr.mxu0 %v7466
    %7693 = vmatpush1.msra.mxu0 %v7465
    %7694 = vmatprep.subr.mxu0 %v7590
    %7695 = vmatpush2.msra.mxu0 %v7589
    %7696 = vmatprep.subr.mxu0 %v7586
    %7697 = vmatpush2.msra.mxu0 %v7585
    %7698 = vmatprep.subr.mxu0 %v7582
    %7699 = vmatpush2.msra.mxu0 %v7581
    %7700 = vmatprep.subr.mxu0 %v7578
    %7701 = vmatpush2.msra.mxu0 %v7577
    %7702 = vmatprep.subr.mxu0 %v7574
    %7703 = vmatpush2.msra.mxu0 %v7573
    %7704 = vmatprep.subr.mxu0 %v7570
    %7705 = vmatpush2.msra.mxu0 %v7569
    %7706 = vmatprep.subr.mxu0 %v7566
    %7707 = vmatpush2.msra.mxu0 %v7565
    %7708 = vmatprep.subr.mxu0 %v7562
    %7709 = vmatpush2.msra.mxu0 %v7561
    %7710 = vmatprep.subr.mxu0 %v7558
    %7711 = vmatpush2.msra.mxu0 %v7557
    %7712 = vmatprep.subr.mxu0 %v7554
    %7713 = vmatpush2.msra.mxu0 %v7553
    %7714 = vmatprep.subr.mxu0 %v7550
    %7715 = vmatpush2.msra.mxu0 %v7549
    %7716 = vmatprep.subr.mxu0 %v7546
    %7717 = vmatpush2.msra.mxu0 %v7545
    %7718 = vmatprep.subr.mxu0 %v7542
    %7719 = vmatpush2.msra.mxu0 %v7541
    %7720 = vmatprep.subr.mxu0 %v7538
    %7721 = vmatpush2.msra.mxu0 %v7537
    %7722 = vmatprep.subr.mxu0 %v7534
    %7723 = vmatpush2.msra.mxu0 %v7533
    %7724 = vmatprep.subr.mxu0 %v7530
    %7725 = vmatpush2.msra.mxu0 %v7529
    %7726 = vmatprep.mubr.f32.mxu0 %v7055
    %7727 = vmatmul.mubr.f32.gmra.mxu0 %v7349
    %v7728 = vpop.f32.mrf.mxu0
    %v7729 = vadd.f32 %v6162, %v7728
    %v7730 = vpop.f32.mrf.mxu0
    %v7731 = vadd.f32 %v6166, %v7730
    %7732 = vdwg.mxu0
    %v7733 = vxor.u32 %v7658, 2147483648
    %v7734 = vmul.f32 %v7733, 1.442695
    %v7735 = vpow.pop %v7734
    %v7736 = vadd.f32 %v7735, 1.0
    %v7737 = vrcp.pop %v7736
    %v7738 = vmul.f32 1.0, %v7737
    %v7739 = vxor.u32 %v7660, 2147483648
    %v7740 = vmul.f32 %v7739, 1.442695
    %v7741 = vpow.pop %v7740
    %v7742 = vadd.f32 %v7741, 1.0
    %v7743 = vrcp.pop %v7742
    %v7744 = vmul.f32 1.0, %v7743
    %v7745 = vtanh.pop %v7729
    %v7746 = vxor.u32 %v7731, 2147483648
    %v7747 = vmul.f32 %v7746, 1.442695
    %v7748 = vpow.pop %v7747
    %v7749 = vadd.f32 %v7748, 1.0
    %v7750 = vrcp.pop %v7749
    %v7751 = vmul.f32 1.0, %v7750
    %v7752 = vmul.f32 %v7744, %v7053
    %v7753 = vmul.f32 %v7738, %v7745
    %v7754 = vadd.f32 %v7752, %v7753
    %v7755 = vtanh.pop %v7754
    %v7756 = vmul.f32 %v7751, %v7755
    %v7757 = vld [vmem:[#allocation7] sm:$0xff]
    %v7758 = vld [vmem:[#allocation7 + $0x8] sm:$0xff]
    %v7759 = vld [vmem:[#allocation7 + $0x10] sm:$0xff]
    %v7760 = vld [vmem:[#allocation7 + $0x18] sm:$0xff]
    %v7761 = vld [vmem:[#allocation7 + $0x20] sm:$0xff]
    %v7762 = vld [vmem:[#allocation7 + $0x28] sm:$0xff]
    %v7763 = vld [vmem:[#allocation7 + $0x30] sm:$0xff]
    %v7764 = vld [vmem:[#allocation7 + $0x38] sm:$0xff]
    %v7765 = vld [vmem:[#allocation7 + $0x40] sm:$0xff]
    %v7766 = vld [vmem:[#allocation7 + $0x48] sm:$0xff]
    %v7767 = vld [vmem:[#allocation7 + $0x50] sm:$0xff]
    %v7768 = vld [vmem:[#allocation7 + $0x58] sm:$0xff]
    %v7769 = vld [vmem:[#allocation7 + $0x60] sm:$0xff]
    %v7770 = vld [vmem:[#allocation7 + $0x68] sm:$0xff]
    %v7771 = vld [vmem:[#allocation7 + $0x70] sm:$0xff]
    %v7772 = vld [vmem:[#allocation7 + $0x78] sm:$0xff]
    %v7773 = vld [vmem:[#allocation7 + $0x80] sm:$0xff]
    %v7774 = vld [vmem:[#allocation7 + $0x88] sm:$0xff]
    %v7775 = vld [vmem:[#allocation7 + $0x90] sm:$0xff]
    %v7776 = vld [vmem:[#allocation7 + $0x98] sm:$0xff]
    %v7777 = vld [vmem:[#allocation7 + $0xa0] sm:$0xff]
    %v7778 = vld [vmem:[#allocation7 + $0xa8] sm:$0xff]
    %v7779 = vld [vmem:[#allocation7 + $0xb0] sm:$0xff]
    %v7780 = vld [vmem:[#allocation7 + $0xb8] sm:$0xff]
    %v7781 = vld [vmem:[#allocation7 + $0xc0] sm:$0xff]
    %v7782 = vld [vmem:[#allocation7 + $0xc8] sm:$0xff]
    %v7783 = vld [vmem:[#allocation7 + $0xd0] sm:$0xff]
    %v7784 = vld [vmem:[#allocation7 + $0xd8] sm:$0xff]
    %v7785 = vld [vmem:[#allocation7 + $0xe0] sm:$0xff]
    %v7786 = vld [vmem:[#allocation7 + $0xe8] sm:$0xff]
    %v7787 = vld [vmem:[#allocation7 + $0xf0] sm:$0xff]
    %v7788 = vld [vmem:[#allocation7 + $0xf8] sm:$0xff]
    %v7789 = vld [vmem:[#allocation7 + $0x100] sm:$0xff]
    %v7790 = vld [vmem:[#allocation7 + $0x108] sm:$0xff]
    %v7791 = vld [vmem:[#allocation7 + $0x110] sm:$0xff]
    %v7792 = vld [vmem:[#allocation7 + $0x118] sm:$0xff]
    %v7793 = vld [vmem:[#allocation7 + $0x120] sm:$0xff]
    %v7794 = vld [vmem:[#allocation7 + $0x128] sm:$0xff]
    %v7795 = vld [vmem:[#allocation7 + $0x130] sm:$0xff]
    %v7796 = vld [vmem:[#allocation7 + $0x138] sm:$0xff]
    %v7797 = vld [vmem:[#allocation7 + $0x140] sm:$0xff]
    %v7798 = vld [vmem:[#allocation7 + $0x148] sm:$0xff]
    %v7799 = vld [vmem:[#allocation7 + $0x150] sm:$0xff]
    %v7800 = vld [vmem:[#allocation7 + $0x158] sm:$0xff]
    %v7801 = vld [vmem:[#allocation7 + $0x160] sm:$0xff]
    %v7802 = vld [vmem:[#allocation7 + $0x168] sm:$0xff]
    %v7803 = vld [vmem:[#allocation7 + $0x170] sm:$0xff]
    %v7804 = vld [vmem:[#allocation7 + $0x178] sm:$0xff]
    %v7805 = vld [vmem:[#allocation7 + $0x180] sm:$0xff]
    %v7806 = vld [vmem:[#allocation7 + $0x188] sm:$0xff]
    %v7807 = vld [vmem:[#allocation7 + $0x190] sm:$0xff]
    %v7808 = vld [vmem:[#allocation7 + $0x198] sm:$0xff]
    %v7809 = vld [vmem:[#allocation7 + $0x1a0] sm:$0xff]
    %v7810 = vld [vmem:[#allocation7 + $0x1a8] sm:$0xff]
    %v7811 = vld [vmem:[#allocation7 + $0x1b0] sm:$0xff]
    %v7812 = vld [vmem:[#allocation7 + $0x1b8] sm:$0xff]
    %v7813 = vld [vmem:[#allocation7 + $0x1c0] sm:$0xff]
    %v7814 = vld [vmem:[#allocation7 + $0x1c8] sm:$0xff]
    %v7815 = vld [vmem:[#allocation7 + $0x1d0] sm:$0xff]
    %v7816 = vld [vmem:[#allocation7 + $0x1d8] sm:$0xff]
    %v7817 = vld [vmem:[#allocation7 + $0x1e0] sm:$0xff]
    %v7818 = vld [vmem:[#allocation7 + $0x1e8] sm:$0xff]
    %v7819 = vld [vmem:[#allocation7 + $0x1f0] sm:$0xff]
    %v7820 = vld [vmem:[#allocation7 + $0x1f8] sm:$0xff]
    %v7821 = vld [vmem:[#allocation7 + $0x200] sm:$0xff]
    %v7822 = vld [vmem:[#allocation7 + $0x208] sm:$0xff]
    %v7823 = vld [vmem:[#allocation7 + $0x210] sm:$0xff]
    %v7824 = vld [vmem:[#allocation7 + $0x218] sm:$0xff]
    %v7825 = vld [vmem:[#allocation7 + $0x220] sm:$0xff]
    %v7826 = vld [vmem:[#allocation7 + $0x228] sm:$0xff]
    %v7827 = vld [vmem:[#allocation7 + $0x230] sm:$0xff]
    %v7828 = vld [vmem:[#allocation7 + $0x238] sm:$0xff]
    %v7829 = vld [vmem:[#allocation7 + $0x240] sm:$0xff]
    %v7830 = vld [vmem:[#allocation7 + $0x248] sm:$0xff]
    %v7831 = vld [vmem:[#allocation7 + $0x250] sm:$0xff]
    %v7832 = vld [vmem:[#allocation7 + $0x258] sm:$0xff]
    %v7833 = vld [vmem:[#allocation7 + $0x260] sm:$0xff]
    %v7834 = vld [vmem:[#allocation7 + $0x268] sm:$0xff]
    %v7835 = vld [vmem:[#allocation7 + $0x270] sm:$0xff]
    %v7836 = vld [vmem:[#allocation7 + $0x278] sm:$0xff]
    %v7837 = vld [vmem:[#allocation7 + $0x280] sm:$0xff]
    %v7838 = vld [vmem:[#allocation7 + $0x288] sm:$0xff]
    %v7839 = vld [vmem:[#allocation7 + $0x290] sm:$0xff]
    %v7840 = vld [vmem:[#allocation7 + $0x298] sm:$0xff]
    %v7841 = vld [vmem:[#allocation7 + $0x2a0] sm:$0xff]
    %v7842 = vld [vmem:[#allocation7 + $0x2a8] sm:$0xff]
    %v7843 = vld [vmem:[#allocation7 + $0x2b0] sm:$0xff]
    %v7844 = vld [vmem:[#allocation7 + $0x2b8] sm:$0xff]
    %v7845 = vld [vmem:[#allocation7 + $0x2c0] sm:$0xff]
    %v7846 = vld [vmem:[#allocation7 + $0x2c8] sm:$0xff]
    %v7847 = vld [vmem:[#allocation7 + $0x2d0] sm:$0xff]
    %v7848 = vld [vmem:[#allocation7 + $0x2d8] sm:$0xff]
    %v7849 = vld [vmem:[#allocation7 + $0x2e0] sm:$0xff]
    %v7850 = vld [vmem:[#allocation7 + $0x2e8] sm:$0xff]
    %v7851 = vld [vmem:[#allocation7 + $0x2f0] sm:$0xff]
    %v7852 = vld [vmem:[#allocation7 + $0x2f8] sm:$0xff]
    %v7853 = vld [vmem:[#allocation7 + $0x300] sm:$0xff]
    %v7854 = vld [vmem:[#allocation7 + $0x308] sm:$0xff]
    %v7855 = vld [vmem:[#allocation7 + $0x310] sm:$0xff]
    %v7856 = vld [vmem:[#allocation7 + $0x318] sm:$0xff]
    %v7857 = vld [vmem:[#allocation7 + $0x320] sm:$0xff]
    %v7858 = vld [vmem:[#allocation7 + $0x328] sm:$0xff]
    %v7859 = vld [vmem:[#allocation7 + $0x330] sm:$0xff]
    %v7860 = vld [vmem:[#allocation7 + $0x338] sm:$0xff]
    %v7861 = vld [vmem:[#allocation7 + $0x340] sm:$0xff]
    %v7862 = vld [vmem:[#allocation7 + $0x348] sm:$0xff]
    %v7863 = vld [vmem:[#allocation7 + $0x350] sm:$0xff]
    %v7864 = vld [vmem:[#allocation7 + $0x358] sm:$0xff]
    %v7865 = vld [vmem:[#allocation7 + $0x360] sm:$0xff]
    %v7866 = vld [vmem:[#allocation7 + $0x368] sm:$0xff]
    %v7867 = vld [vmem:[#allocation7 + $0x370] sm:$0xff]
    %v7868 = vld [vmem:[#allocation7 + $0x378] sm:$0xff]
    %v7869 = vld [vmem:[#allocation7 + $0x380] sm:$0xff]
    %v7870 = vld [vmem:[#allocation7 + $0x388] sm:$0xff]
    %v7871 = vld [vmem:[#allocation7 + $0x390] sm:$0xff]
    %v7872 = vld [vmem:[#allocation7 + $0x398] sm:$0xff]
    %v7873 = vld [vmem:[#allocation7 + $0x3a0] sm:$0xff]
    %v7874 = vld [vmem:[#allocation7 + $0x3a8] sm:$0xff]
    %v7875 = vld [vmem:[#allocation7 + $0x3b0] sm:$0xff]
    %v7876 = vld [vmem:[#allocation7 + $0x3b8] sm:$0xff]
    %v7877 = vld [vmem:[#allocation7 + $0x3c0] sm:$0xff]
    %v7878 = vld [vmem:[#allocation7 + $0x3c8] sm:$0xff]
    %v7879 = vld [vmem:[#allocation7 + $0x3d0] sm:$0xff]
    %v7880 = vld [vmem:[#allocation7 + $0x3d8] sm:$0xff]
    %v7881 = vld [vmem:[#allocation7 + $0x3e0] sm:$0xff]
    %v7882 = vld [vmem:[#allocation7 + $0x3e8] sm:$0xff]
    %v7883 = vld [vmem:[#allocation7 + $0x3f0] sm:$0xff]
    %v7884 = vld [vmem:[#allocation7 + $0x3f8] sm:$0xff]
    %7885 = vmatprep.subr.mxu0 %v7818
    %7886 = vmatpush1.msra.mxu0 %v7817
    %7887 = vmatprep.subr.mxu0 %v7814
    %7888 = vmatpush1.msra.mxu0 %v7813
    %7889 = vmatprep.subr.mxu0 %v7810
    %7890 = vmatpush1.msra.mxu0 %v7809
    %7891 = vmatprep.subr.mxu0 %v7806
    %7892 = vmatpush1.msra.mxu0 %v7805
    %7893 = vmatprep.subr.mxu0 %v7802
    %7894 = vmatpush1.msra.mxu0 %v7801
    %7895 = vmatprep.subr.mxu0 %v7798
    %7896 = vmatpush1.msra.mxu0 %v7797
    %7897 = vmatprep.subr.mxu0 %v7794
    %7898 = vmatpush1.msra.mxu0 %v7793
    %7899 = vmatprep.subr.mxu0 %v7790
    %7900 = vmatpush1.msra.mxu0 %v7789
    %7901 = vmatprep.subr.mxu0 %v7786
    %7902 = vmatpush1.msra.mxu0 %v7785
    %7903 = vmatprep.subr.mxu0 %v7782
    %7904 = vmatpush1.msra.mxu0 %v7781
    %7905 = vmatprep.subr.mxu0 %v7778
    %7906 = vmatpush1.msra.mxu0 %v7777
    %7907 = vmatprep.subr.mxu0 %v7774
    %7908 = vmatpush1.msra.mxu0 %v7773
    %7909 = vmatprep.subr.mxu0 %v7770
    %7910 = vmatpush1.msra.mxu0 %v7769
    %7911 = vmatprep.subr.mxu0 %v7766
    %7912 = vmatpush1.msra.mxu0 %v7765
    %7913 = vmatprep.subr.mxu0 %v7762
    %7914 = vmatpush1.msra.mxu0 %v7761
    %7915 = vmatprep.subr.mxu0 %v7758
    %7916 = vmatpush1.msra.mxu0 %v7757
    %7917 = vmatprep.subr.mxu0 %v7882
    %7918 = vmatpush2.msra.mxu0 %v7881
    %7919 = vmatprep.subr.mxu0 %v7878
    %7920 = vmatpush2.msra.mxu0 %v7877
    %7921 = vmatprep.subr.mxu0 %v7874
    %7922 = vmatpush2.msra.mxu0 %v7873
    %7923 = vmatprep.subr.mxu0 %v7870
    %7924 = vmatpush2.msra.mxu0 %v7869
    %7925 = vmatprep.subr.mxu0 %v7866
    %7926 = vmatpush2.msra.mxu0 %v7865
    %7927 = vmatprep.subr.mxu0 %v7862
    %7928 = vmatpush2.msra.mxu0 %v7861
    %7929 = vmatprep.subr.mxu0 %v7858
    %7930 = vmatpush2.msra.mxu0 %v7857
    %7931 = vmatprep.subr.mxu0 %v7854
    %7932 = vmatpush2.msra.mxu0 %v7853
    %7933 = vmatprep.subr.mxu0 %v7850
    %7934 = vmatpush2.msra.mxu0 %v7849
    %7935 = vmatprep.subr.mxu0 %v7846
    %7936 = vmatpush2.msra.mxu0 %v7845
    %7937 = vmatprep.subr.mxu0 %v7842
    %7938 = vmatpush2.msra.mxu0 %v7841
    %7939 = vmatprep.subr.mxu0 %v7838
    %7940 = vmatpush2.msra.mxu0 %v7837
    %7941 = vmatprep.subr.mxu0 %v7834
    %7942 = vmatpush2.msra.mxu0 %v7833
    %7943 = vmatprep.subr.mxu0 %v7830
    %7944 = vmatpush2.msra.mxu0 %v7829
    %7945 = vmatprep.subr.mxu0 %v7826
    %7946 = vmatpush2.msra.mxu0 %v7825
    %7947 = vmatprep.subr.mxu0 %v7822
    %7948 = vmatpush2.msra.mxu0 %v7821
    %7949 = vmatprep.mubr.f32.mxu0 %v7349
    %7950 = vmatmul.mubr.f32.gmra.mxu0 %v7756
    %v7951 = vpop.f32.mrf.mxu0
    %v7952 = vadd.f32 %v561, %v7951
    %v7953 = vpop.f32.mrf.mxu0
    %v7954 = vadd.f32 %v565, %v7953
    %7955 = vdwg.mxu0
    %7956 = vmatprep.subr.mxu0 %v7820
    %7957 = vmatpush1.msra.mxu0 %v7819
    %7958 = vmatprep.subr.mxu0 %v7816
    %7959 = vmatpush1.msra.mxu0 %v7815
    %7960 = vmatprep.subr.mxu0 %v7812
    %7961 = vmatpush1.msra.mxu0 %v7811
    %7962 = vmatprep.subr.mxu0 %v7808
    %7963 = vmatpush1.msra.mxu0 %v7807
    %7964 = vmatprep.subr.mxu0 %v7804
    %7965 = vmatpush1.msra.mxu0 %v7803
    %7966 = vmatprep.subr.mxu0 %v7800
    %7967 = vmatpush1.msra.mxu0 %v7799
    %7968 = vmatprep.subr.mxu0 %v7796
    %7969 = vmatpush1.msra.mxu0 %v7795
    %7970 = vmatprep.subr.mxu0 %v7792
    %7971 = vmatpush1.msra.mxu0 %v7791
    %7972 = vmatprep.subr.mxu0 %v7788
    %7973 = vmatpush1.msra.mxu0 %v7787
    %7974 = vmatprep.subr.mxu0 %v7784
    %7975 = vmatpush1.msra.mxu0 %v7783
    %7976 = vmatprep.subr.mxu0 %v7780
    %7977 = vmatpush1.msra.mxu0 %v7779
    %7978 = vmatprep.subr.mxu0 %v7776
    %7979 = vmatpush1.msra.mxu0 %v7775
    %7980 = vmatprep.subr.mxu0 %v7772
    %7981 = vmatpush1.msra.mxu0 %v7771
    %7982 = vmatprep.subr.mxu0 %v7768
    %7983 = vmatpush1.msra.mxu0 %v7767
    %7984 = vmatprep.subr.mxu0 %v7764
    %7985 = vmatpush1.msra.mxu0 %v7763
    %7986 = vmatprep.subr.mxu0 %v7760
    %7987 = vmatpush1.msra.mxu0 %v7759
    %7988 = vmatprep.subr.mxu0 %v7884
    %7989 = vmatpush2.msra.mxu0 %v7883
    %7990 = vmatprep.subr.mxu0 %v7880
    %7991 = vmatpush2.msra.mxu0 %v7879
    %7992 = vmatprep.subr.mxu0 %v7876
    %7993 = vmatpush2.msra.mxu0 %v7875
    %7994 = vmatprep.subr.mxu0 %v7872
    %7995 = vmatpush2.msra.mxu0 %v7871
    %7996 = vmatprep.subr.mxu0 %v7868
    %7997 = vmatpush2.msra.mxu0 %v7867
    %7998 = vmatprep.subr.mxu0 %v7864
    %7999 = vmatpush2.msra.mxu0 %v7863
    %8000 = vmatprep.subr.mxu0 %v7860
    %8001 = vmatpush2.msra.mxu0 %v7859
    %8002 = vmatprep.subr.mxu0 %v7856
    %8003 = vmatpush2.msra.mxu0 %v7855
    %8004 = vmatprep.subr.mxu0 %v7852
    %8005 = vmatpush2.msra.mxu0 %v7851
    %8006 = vmatprep.subr.mxu0 %v7848
    %8007 = vmatpush2.msra.mxu0 %v7847
    %8008 = vmatprep.subr.mxu0 %v7844
    %8009 = vmatpush2.msra.mxu0 %v7843
    %8010 = vmatprep.subr.mxu0 %v7840
    %8011 = vmatpush2.msra.mxu0 %v7839
    %8012 = vmatprep.subr.mxu0 %v7836
    %8013 = vmatpush2.msra.mxu0 %v7835
    %8014 = vmatprep.subr.mxu0 %v7832
    %8015 = vmatpush2.msra.mxu0 %v7831
    %8016 = vmatprep.subr.mxu0 %v7828
    %8017 = vmatpush2.msra.mxu0 %v7827
    %8018 = vmatprep.subr.mxu0 %v7824
    %8019 = vmatpush2.msra.mxu0 %v7823
    %8020 = vmatprep.mubr.f32.mxu0 %v7349
    %8021 = vmatmul.mubr.f32.gmra.mxu0 %v7756
    %v8022 = vpop.f32.mrf.mxu0
    %v8023 = vadd.f32 %v569, %v8022
    %v8024 = vpop.f32.mrf.mxu0
    %v8025 = vadd.f32 %v573, %v8024
    %8026 = vdwg.mxu0
    %v8027 = vxor.u32 %v7952, 2147483648
    %v8028 = vmul.f32 %v8027, 1.442695
    %v8029 = vpow.pop %v8028
    %v8030 = vadd.f32 %v8029, 1.0
    %v8031 = vrcp.pop %v8030
    %v8032 = vmul.f32 1.0, %v8031
    %v8033 = vxor.u32 %v7954, 2147483648
    %v8034 = vmul.f32 %v8033, 1.442695
    %v8035 = vpow.pop %v8034
    %v8036 = vadd.f32 %v8035, 1.0
    %v8037 = vrcp.pop %v8036
    %v8038 = vmul.f32 1.0, %v8037
    %v8039 = vtanh.pop %v8023
    %v8040 = vxor.u32 %v8025, 2147483648
    %v8041 = vmul.f32 %v8040, 1.442695
    %v8042 = vpow.pop %v8041
    %v8043 = vadd.f32 %v8042, 1.0
    %v8044 = vrcp.pop %v8043
    %v8045 = vmul.f32 1.0, %v8044
    %v8046 = vmul.f32 %v8038, %v7347
    %v8047 = vmul.f32 %v8032, %v8039
    %v8048 = vadd.f32 %v8046, %v8047
    %v8049 = vtanh.pop %v8048
    %v8050 = vmul.f32 %v8045, %v8049
    %v8051 = vld [vmem:[#allocation9] sm:$0xff]
    %v8052 = vld [vmem:[#allocation9 + $0x8] sm:$0xff]
    %v8053 = vld [vmem:[#allocation9 + $0x10] sm:$0xff]
    %v8054 = vld [vmem:[#allocation9 + $0x18] sm:$0xff]
    %v8055 = vld [vmem:[#allocation9 + $0x20] sm:$0xff]
    %v8056 = vld [vmem:[#allocation9 + $0x28] sm:$0xff]
    %v8057 = vld [vmem:[#allocation9 + $0x30] sm:$0xff]
    %v8058 = vld [vmem:[#allocation9 + $0x38] sm:$0xff]
    %v8059 = vld [vmem:[#allocation9 + $0x40] sm:$0xff]
    %v8060 = vld [vmem:[#allocation9 + $0x48] sm:$0xff]
    %v8061 = vld [vmem:[#allocation9 + $0x50] sm:$0xff]
    %v8062 = vld [vmem:[#allocation9 + $0x58] sm:$0xff]
    %v8063 = vld [vmem:[#allocation9 + $0x60] sm:$0xff]
    %v8064 = vld [vmem:[#allocation9 + $0x68] sm:$0xff]
    %v8065 = vld [vmem:[#allocation9 + $0x70] sm:$0xff]
    %v8066 = vld [vmem:[#allocation9 + $0x78] sm:$0xff]
    %8067 = vmatprep.subr.mxu0 0.0
    %8068 = vmatpush1.msra.mxu0 %v8066
    %8069 = vmatprep.subr.mxu0 0.0
    %8070 = vmatpush1.msra.mxu0 %v8065
    %8071 = vmatprep.subr.mxu0 0.0
    %8072 = vmatpush1.msra.mxu0 %v8064
    %8073 = vmatprep.subr.mxu0 0.0
    %8074 = vmatpush1.msra.mxu0 %v8063
    %8075 = vmatprep.subr.mxu0 0.0
    %8076 = vmatpush1.msra.mxu0 %v8062
    %8077 = vmatprep.subr.mxu0 0.0
    %8078 = vmatpush1.msra.mxu0 %v8061
    %8079 = vmatprep.subr.mxu0 0.0
    %8080 = vmatpush1.msra.mxu0 %v8060
    %8081 = vmatprep.subr.mxu0 0.0
    %8082 = vmatpush1.msra.mxu0 %v8059
    %8083 = vmatprep.subr.mxu0 0.0
    %8084 = vmatpush1.msra.mxu0 %v8058
    %8085 = vmatprep.subr.mxu0 0.0
    %8086 = vmatpush1.msra.mxu0 %v8057
    %8087 = vmatprep.subr.mxu0 0.0
    %8088 = vmatpush1.msra.mxu0 %v8056
    %8089 = vmatprep.subr.mxu0 0.0
    %8090 = vmatpush1.msra.mxu0 %v8055
    %8091 = vmatprep.subr.mxu0 0.0
    %8092 = vmatpush1.msra.mxu0 %v8054
    %8093 = vmatprep.subr.mxu0 0.0
    %8094 = vmatpush1.msra.mxu0 %v8053
    %8095 = vmatprep.subr.mxu0 0.0
    %8096 = vmatpush1.msra.mxu0 %v8052
    %8097 = vmatprep.subr.mxu0 0.0
    %8098 = vmatpush1.msra.mxu0 %v8051
    %8099 = vmatprep.subr.mxu0 0.0
    %8100 = vmatpush2.msra.mxu0 0.0
    %8101 = vmatprep.subr.mxu0 0.0
    %8102 = vmatpush2.msra.mxu0 0.0
    %8103 = vmatprep.subr.mxu0 0.0
    %8104 = vmatpush2.msra.mxu0 0.0
    %8105 = vmatprep.subr.mxu0 0.0
    %8106 = vmatpush2.msra.mxu0 0.0
    %8107 = vmatprep.subr.mxu0 0.0
    %8108 = vmatpush2.msra.mxu0 0.0
    %8109 = vmatprep.subr.mxu0 0.0
    %8110 = vmatpush2.msra.mxu0 0.0
    %8111 = vmatprep.subr.mxu0 0.0
    %8112 = vmatpush2.msra.mxu0 0.0
    %8113 = vmatprep.subr.mxu0 0.0
    %8114 = vmatpush2.msra.mxu0 0.0
    %8115 = vmatprep.subr.mxu0 0.0
    %8116 = vmatpush2.msra.mxu0 0.0
    %8117 = vmatprep.subr.mxu0 0.0
    %8118 = vmatpush2.msra.mxu0 0.0
    %8119 = vmatprep.subr.mxu0 0.0
    %8120 = vmatpush2.msra.mxu0 0.0
    %8121 = vmatprep.subr.mxu0 0.0
    %8122 = vmatpush2.msra.mxu0 0.0
    %8123 = vmatprep.subr.mxu0 0.0
    %8124 = vmatpush2.msra.mxu0 0.0
    %8125 = vmatprep.subr.mxu0 0.0
    %8126 = vmatpush2.msra.mxu0 0.0
    %8127 = vmatprep.subr.mxu0 0.0
    %8128 = vmatpush2.msra.mxu0 0.0
    %8129 = vmatprep.subr.mxu0 0.0
    %8130 = vmatpush2.msra.mxu0 0.0
    %8131 = vmatprep.mubr.f32.mxu0 0.0
    %8132 = vmatmul.mubr.f32.gmra.mxu0 %v8050
    %v8133 = vpop.f32.mrf.mxu0
    %v8134 = vadd.f32 %v764, %v8133
    %v8135 = vpop.f32.mrf.mxu0
    %8136 = vdwg.mxu0
    %v8139 = vunpack.c.l.s4 1966171168
    %v8140 = vunpack.c.0.s8 %v8139
    %v8141 = vlaneseq
    %v8142 = vshrl.u32 %v8141, 7
    %v8143 = vsub.s32 %v8140, %v8142
    %v8144 = vrot.slane %v8134, %v8143
    %v8145 = vcombine.high %v8144, %v8144
    %v8147 = vunpack.c.l.s4 1966171168
    %v8148 = vunpack.c.0.s8 %v8147
    %v8149 = vlaneseq
    %v8150 = vshrl.u32 %v8149, 7
    %v8151 = vsub.s32 %v8148, %v8150
    %v8152 = vrot.slane %v8144, %v8151
    %v8154 = vunpack.c.l.s4 1966171168
    %v8155 = vunpack.c.0.s8 %v8154
    %v8156 = vlaneseq
    %v8157 = vshrl.u32 %v8156, 7
    %v8158 = vsub.s32 %v8155, %v8157
    %v8159 = vrot.slane %v8145, %v8158
    %8162 = vst [vmem:[%s8 + $0xa] sm:$0x1] %v8152
    %8163 = vst [vmem:[%s8 + $0x1a] sm:$0x1] %v8159
    %v8164 = vld [vmem:[#allocation6] sm:$0xff]
    %v8165 = vld [vmem:[#allocation6 + $0x8] sm:$0xff]
    %v8166 = vld [vmem:[#allocation6 + $0x10] sm:$0xff]
    %v8167 = vld [vmem:[#allocation6 + $0x18] sm:$0xff]
    %v8168 = vld [vmem:[#allocation6 + $0x20] sm:$0xff]
    %v8169 = vld [vmem:[#allocation6 + $0x28] sm:$0xff]
    %v8170 = vld [vmem:[#allocation6 + $0x30] sm:$0xff]
    %v8171 = vld [vmem:[#allocation6 + $0x38] sm:$0xff]
    %v8172 = vld [vmem:[#allocation6 + $0x40] sm:$0xff]
    %v8173 = vld [vmem:[#allocation6 + $0x48] sm:$0xff]
    %v8174 = vld [vmem:[#allocation6 + $0x50] sm:$0xff]
    %v8175 = vld [vmem:[#allocation6 + $0x58] sm:$0xff]
    %v8176 = vld [vmem:[#allocation6 + $0x60] sm:$0xff]
    %v8177 = vld [vmem:[#allocation6 + $0x68] sm:$0xff]
    %v8178 = vld [vmem:[#allocation6 + $0x70] sm:$0xff]
    %v8179 = vld [vmem:[#allocation6 + $0x78] sm:$0xff]
    %v8180 = vld [vmem:[#allocation6 + $0x80] sm:$0xff]
    %v8181 = vld [vmem:[#allocation6 + $0x88] sm:$0xff]
    %v8182 = vld [vmem:[#allocation6 + $0x90] sm:$0xff]
    %v8183 = vld [vmem:[#allocation6 + $0x98] sm:$0xff]
    %v8184 = vld [vmem:[#allocation6 + $0xa0] sm:$0xff]
    %v8185 = vld [vmem:[#allocation6 + $0xa8] sm:$0xff]
    %v8186 = vld [vmem:[#allocation6 + $0xb0] sm:$0xff]
    %v8187 = vld [vmem:[#allocation6 + $0xb8] sm:$0xff]
    %v8188 = vld [vmem:[#allocation6 + $0xc0] sm:$0xff]
    %v8189 = vld [vmem:[#allocation6 + $0xc8] sm:$0xff]
    %v8190 = vld [vmem:[#allocation6 + $0xd0] sm:$0xff]
    %v8191 = vld [vmem:[#allocation6 + $0xd8] sm:$0xff]
    %v8192 = vld [vmem:[#allocation6 + $0xe0] sm:$0xff]
    %v8193 = vld [vmem:[#allocation6 + $0xe8] sm:$0xff]
    %v8194 = vld [vmem:[#allocation6 + $0xf0] sm:$0xff]
    %v8195 = vld [vmem:[#allocation6 + $0xf8] sm:$0xff]
    %v8196 = vld [vmem:[#allocation6 + $0x100] sm:$0xff]
    %v8197 = vld [vmem:[#allocation6 + $0x108] sm:$0xff]
    %v8198 = vld [vmem:[#allocation6 + $0x110] sm:$0xff]
    %v8199 = vld [vmem:[#allocation6 + $0x118] sm:$0xff]
    %v8200 = vld [vmem:[#allocation6 + $0x120] sm:$0xff]
    %v8201 = vld [vmem:[#allocation6 + $0x128] sm:$0xff]
    %v8202 = vld [vmem:[#allocation6 + $0x130] sm:$0xff]
    %v8203 = vld [vmem:[#allocation6 + $0x138] sm:$0xff]
    %v8204 = vld [vmem:[#allocation6 + $0x140] sm:$0xff]
    %v8205 = vld [vmem:[#allocation6 + $0x148] sm:$0xff]
    %v8206 = vld [vmem:[#allocation6 + $0x150] sm:$0xff]
    %v8207 = vld [vmem:[#allocation6 + $0x158] sm:$0xff]
    %v8208 = vld [vmem:[#allocation6 + $0x160] sm:$0xff]
    %v8209 = vld [vmem:[#allocation6 + $0x168] sm:$0xff]
    %v8210 = vld [vmem:[#allocation6 + $0x170] sm:$0xff]
    %v8211 = vld [vmem:[#allocation6 + $0x178] sm:$0xff]
    %v8212 = vld [vmem:[#allocation6 + $0x180] sm:$0xff]
    %v8213 = vld [vmem:[#allocation6 + $0x188] sm:$0xff]
    %v8214 = vld [vmem:[#allocation6 + $0x190] sm:$0xff]
    %v8215 = vld [vmem:[#allocation6 + $0x198] sm:$0xff]
    %v8216 = vld [vmem:[#allocation6 + $0x1a0] sm:$0xff]
    %v8217 = vld [vmem:[#allocation6 + $0x1a8] sm:$0xff]
    %v8218 = vld [vmem:[#allocation6 + $0x1b0] sm:$0xff]
    %v8219 = vld [vmem:[#allocation6 + $0x1b8] sm:$0xff]
    %v8220 = vld [vmem:[#allocation6 + $0x1c0] sm:$0xff]
    %v8221 = vld [vmem:[#allocation6 + $0x1c8] sm:$0xff]
    %v8222 = vld [vmem:[#allocation6 + $0x1d0] sm:$0xff]
    %v8223 = vld [vmem:[#allocation6 + $0x1d8] sm:$0xff]
    %v8224 = vld [vmem:[#allocation6 + $0x1e0] sm:$0xff]
    %v8225 = vld [vmem:[#allocation6 + $0x1e8] sm:$0xff]
    %v8226 = vld [vmem:[#allocation6 + $0x1f0] sm:$0xff]
    %v8227 = vld [vmem:[#allocation6 + $0x1f8] sm:$0xff]
    %v8228 = vld [vmem:[#allocation6 + $0x200] sm:$0xff]
    %v8229 = vld [vmem:[#allocation6 + $0x208] sm:$0xff]
    %v8230 = vld [vmem:[#allocation6 + $0x210] sm:$0xff]
    %v8231 = vld [vmem:[#allocation6 + $0x218] sm:$0xff]
    %v8232 = vld [vmem:[#allocation6 + $0x220] sm:$0xff]
    %v8233 = vld [vmem:[#allocation6 + $0x228] sm:$0xff]
    %v8234 = vld [vmem:[#allocation6 + $0x230] sm:$0xff]
    %v8235 = vld [vmem:[#allocation6 + $0x238] sm:$0xff]
    %v8236 = vld [vmem:[#allocation6 + $0x240] sm:$0xff]
    %v8237 = vld [vmem:[#allocation6 + $0x248] sm:$0xff]
    %v8238 = vld [vmem:[#allocation6 + $0x250] sm:$0xff]
    %v8239 = vld [vmem:[#allocation6 + $0x258] sm:$0xff]
    %v8240 = vld [vmem:[#allocation6 + $0x260] sm:$0xff]
    %v8241 = vld [vmem:[#allocation6 + $0x268] sm:$0xff]
    %v8242 = vld [vmem:[#allocation6 + $0x270] sm:$0xff]
    %v8243 = vld [vmem:[#allocation6 + $0x278] sm:$0xff]
    %v8244 = vld [vmem:[#allocation6 + $0x280] sm:$0xff]
    %v8245 = vld [vmem:[#allocation6 + $0x288] sm:$0xff]
    %v8246 = vld [vmem:[#allocation6 + $0x290] sm:$0xff]
    %v8247 = vld [vmem:[#allocation6 + $0x298] sm:$0xff]
    %v8248 = vld [vmem:[#allocation6 + $0x2a0] sm:$0xff]
    %v8249 = vld [vmem:[#allocation6 + $0x2a8] sm:$0xff]
    %v8250 = vld [vmem:[#allocation6 + $0x2b0] sm:$0xff]
    %v8251 = vld [vmem:[#allocation6 + $0x2b8] sm:$0xff]
    %v8252 = vld [vmem:[#allocation6 + $0x2c0] sm:$0xff]
    %v8253 = vld [vmem:[#allocation6 + $0x2c8] sm:$0xff]
    %v8254 = vld [vmem:[#allocation6 + $0x2d0] sm:$0xff]
    %v8255 = vld [vmem:[#allocation6 + $0x2d8] sm:$0xff]
    %v8256 = vld [vmem:[#allocation6 + $0x2e0] sm:$0xff]
    %v8257 = vld [vmem:[#allocation6 + $0x2e8] sm:$0xff]
    %v8258 = vld [vmem:[#allocation6 + $0x2f0] sm:$0xff]
    %v8259 = vld [vmem:[#allocation6 + $0x2f8] sm:$0xff]
    %v8260 = vld [vmem:[#allocation6 + $0x300] sm:$0xff]
    %v8261 = vld [vmem:[#allocation6 + $0x308] sm:$0xff]
    %v8262 = vld [vmem:[#allocation6 + $0x310] sm:$0xff]
    %v8263 = vld [vmem:[#allocation6 + $0x318] sm:$0xff]
    %v8264 = vld [vmem:[#allocation6 + $0x320] sm:$0xff]
    %v8265 = vld [vmem:[#allocation6 + $0x328] sm:$0xff]
    %v8266 = vld [vmem:[#allocation6 + $0x330] sm:$0xff]
    %v8267 = vld [vmem:[#allocation6 + $0x338] sm:$0xff]
    %v8268 = vld [vmem:[#allocation6 + $0x340] sm:$0xff]
    %v8269 = vld [vmem:[#allocation6 + $0x348] sm:$0xff]
    %v8270 = vld [vmem:[#allocation6 + $0x350] sm:$0xff]
    %v8271 = vld [vmem:[#allocation6 + $0x358] sm:$0xff]
    %v8272 = vld [vmem:[#allocation6 + $0x360] sm:$0xff]
    %v8273 = vld [vmem:[#allocation6 + $0x368] sm:$0xff]
    %v8274 = vld [vmem:[#allocation6 + $0x370] sm:$0xff]
    %v8275 = vld [vmem:[#allocation6 + $0x378] sm:$0xff]
    %v8276 = vld [vmem:[#allocation6 + $0x380] sm:$0xff]
    %v8277 = vld [vmem:[#allocation6 + $0x388] sm:$0xff]
    %v8278 = vld [vmem:[#allocation6 + $0x390] sm:$0xff]
    %v8279 = vld [vmem:[#allocation6 + $0x398] sm:$0xff]
    %v8280 = vld [vmem:[#allocation6 + $0x3a0] sm:$0xff]
    %v8281 = vld [vmem:[#allocation6 + $0x3a8] sm:$0xff]
    %v8282 = vld [vmem:[#allocation6 + $0x3b0] sm:$0xff]
    %v8283 = vld [vmem:[#allocation6 + $0x3b8] sm:$0xff]
    %v8284 = vld [vmem:[#allocation6 + $0x3c0] sm:$0xff]
    %v8285 = vld [vmem:[#allocation6 + $0x3c8] sm:$0xff]
    %v8286 = vld [vmem:[#allocation6 + $0x3d0] sm:$0xff]
    %v8287 = vld [vmem:[#allocation6 + $0x3d8] sm:$0xff]
    %v8288 = vld [vmem:[#allocation6 + $0x3e0] sm:$0xff]
    %v8289 = vld [vmem:[#allocation6 + $0x3e8] sm:$0xff]
    %v8290 = vld [vmem:[#allocation6 + $0x3f0] sm:$0xff]
    %v8291 = vld [vmem:[#allocation6 + $0x3f8] sm:$0xff]
    %8292 = vmatprep.subr.mxu0 %v8225
    %8293 = vmatpush1.msra.mxu0 %v8224
    %8294 = vmatprep.subr.mxu0 %v8221
    %8295 = vmatpush1.msra.mxu0 %v8220
    %8296 = vmatprep.subr.mxu0 %v8217
    %8297 = vmatpush1.msra.mxu0 %v8216
    %8298 = vmatprep.subr.mxu0 %v8213
    %8299 = vmatpush1.msra.mxu0 %v8212
    %8300 = vmatprep.subr.mxu0 %v8209
    %8301 = vmatpush1.msra.mxu0 %v8208
    %8302 = vmatprep.subr.mxu0 %v8205
    %8303 = vmatpush1.msra.mxu0 %v8204
    %8304 = vmatprep.subr.mxu0 %v8201
    %8305 = vmatpush1.msra.mxu0 %v8200
    %8306 = vmatprep.subr.mxu0 %v8197
    %8307 = vmatpush1.msra.mxu0 %v8196
    %8308 = vmatprep.subr.mxu0 %v8193
    %8309 = vmatpush1.msra.mxu0 %v8192
    %8310 = vmatprep.subr.mxu0 %v8189
    %8311 = vmatpush1.msra.mxu0 %v8188
    %8312 = vmatprep.subr.mxu0 %v8185
    %8313 = vmatpush1.msra.mxu0 %v8184
    %8314 = vmatprep.subr.mxu0 %v8181
    %8315 = vmatpush1.msra.mxu0 %v8180
    %8316 = vmatprep.subr.mxu0 %v8177
    %8317 = vmatpush1.msra.mxu0 %v8176
    %8318 = vmatprep.subr.mxu0 %v8173
    %8319 = vmatpush1.msra.mxu0 %v8172
    %8320 = vmatprep.subr.mxu0 %v8169
    %8321 = vmatpush1.msra.mxu0 %v8168
    %8322 = vmatprep.subr.mxu0 %v8165
    %8323 = vmatpush1.msra.mxu0 %v8164
    %8324 = vmatprep.subr.mxu0 %v8289
    %8325 = vmatpush2.msra.mxu0 %v8288
    %8326 = vmatprep.subr.mxu0 %v8285
    %8327 = vmatpush2.msra.mxu0 %v8284
    %8328 = vmatprep.subr.mxu0 %v8281
    %8329 = vmatpush2.msra.mxu0 %v8280
    %8330 = vmatprep.subr.mxu0 %v8277
    %8331 = vmatpush2.msra.mxu0 %v8276
    %8332 = vmatprep.subr.mxu0 %v8273
    %8333 = vmatpush2.msra.mxu0 %v8272
    %8334 = vmatprep.subr.mxu0 %v8269
    %8335 = vmatpush2.msra.mxu0 %v8268
    %8336 = vmatprep.subr.mxu0 %v8265
    %8337 = vmatpush2.msra.mxu0 %v8264
    %8338 = vmatprep.subr.mxu0 %v8261
    %8339 = vmatpush2.msra.mxu0 %v8260
    %8340 = vmatprep.subr.mxu0 %v8257
    %8341 = vmatpush2.msra.mxu0 %v8256
    %8342 = vmatprep.subr.mxu0 %v8253
    %8343 = vmatpush2.msra.mxu0 %v8252
    %8344 = vmatprep.subr.mxu0 %v8249
    %8345 = vmatpush2.msra.mxu0 %v8248
    %8346 = vmatprep.subr.mxu0 %v8245
    %8347 = vmatpush2.msra.mxu0 %v8244
    %8348 = vmatprep.subr.mxu0 %v8241
    %8349 = vmatpush2.msra.mxu0 %v8240
    %8350 = vmatprep.subr.mxu0 %v8237
    %8351 = vmatpush2.msra.mxu0 %v8236
    %8352 = vmatprep.subr.mxu0 %v8233
    %8353 = vmatpush2.msra.mxu0 %v8232
    %8354 = vmatprep.subr.mxu0 %v8229
    %8355 = vmatpush2.msra.mxu0 %v8228
    %8356 = vmatprep.mubr.f32.mxu0 %v7756
    %8357 = vmatmul.mubr.f32.gmra.mxu0 %v8050
    %v8358 = vpop.f32.mrf.mxu0
    %v8359 = vadd.f32 %v6154, %v8358
    %v8360 = vpop.f32.mrf.mxu0
    %v8361 = vadd.f32 %v6158, %v8360
    %8362 = vdwg.mxu0
    %8363 = vmatprep.subr.mxu0 %v8227
    %8364 = vmatpush1.msra.mxu0 %v8226
    %8365 = vmatprep.subr.mxu0 %v8223
    %8366 = vmatpush1.msra.mxu0 %v8222
    %8367 = vmatprep.subr.mxu0 %v8219
    %8368 = vmatpush1.msra.mxu0 %v8218
    %8369 = vmatprep.subr.mxu0 %v8215
    %8370 = vmatpush1.msra.mxu0 %v8214
    %8371 = vmatprep.subr.mxu0 %v8211
    %8372 = vmatpush1.msra.mxu0 %v8210
    %8373 = vmatprep.subr.mxu0 %v8207
    %8374 = vmatpush1.msra.mxu0 %v8206
    %8375 = vmatprep.subr.mxu0 %v8203
    %8376 = vmatpush1.msra.mxu0 %v8202
    %8377 = vmatprep.subr.mxu0 %v8199
    %8378 = vmatpush1.msra.mxu0 %v8198
    %8379 = vmatprep.subr.mxu0 %v8195
    %8380 = vmatpush1.msra.mxu0 %v8194
    %8381 = vmatprep.subr.mxu0 %v8191
    %8382 = vmatpush1.msra.mxu0 %v8190
    %8383 = vmatprep.subr.mxu0 %v8187
    %8384 = vmatpush1.msra.mxu0 %v8186
    %8385 = vmatprep.subr.mxu0 %v8183
    %8386 = vmatpush1.msra.mxu0 %v8182
    %8387 = vmatprep.subr.mxu0 %v8179
    %8388 = vmatpush1.msra.mxu0 %v8178
    %8389 = vmatprep.subr.mxu0 %v8175
    %8390 = vmatpush1.msra.mxu0 %v8174
    %8391 = vmatprep.subr.mxu0 %v8171
    %8392 = vmatpush1.msra.mxu0 %v8170
    %8393 = vmatprep.subr.mxu0 %v8167
    %8394 = vmatpush1.msra.mxu0 %v8166
    %8395 = vmatprep.subr.mxu0 %v8291
    %8396 = vmatpush2.msra.mxu0 %v8290
    %8397 = vmatprep.subr.mxu0 %v8287
    %8398 = vmatpush2.msra.mxu0 %v8286
    %8399 = vmatprep.subr.mxu0 %v8283
    %8400 = vmatpush2.msra.mxu0 %v8282
    %8401 = vmatprep.subr.mxu0 %v8279
    %8402 = vmatpush2.msra.mxu0 %v8278
    %8403 = vmatprep.subr.mxu0 %v8275
    %8404 = vmatpush2.msra.mxu0 %v8274
    %8405 = vmatprep.subr.mxu0 %v8271
    %8406 = vmatpush2.msra.mxu0 %v8270
    %8407 = vmatprep.subr.mxu0 %v8267
    %8408 = vmatpush2.msra.mxu0 %v8266
    %8409 = vmatprep.subr.mxu0 %v8263
    %8410 = vmatpush2.msra.mxu0 %v8262
    %8411 = vmatprep.subr.mxu0 %v8259
    %8412 = vmatpush2.msra.mxu0 %v8258
    %8413 = vmatprep.subr.mxu0 %v8255
    %8414 = vmatpush2.msra.mxu0 %v8254
    %8415 = vmatprep.subr.mxu0 %v8251
    %8416 = vmatpush2.msra.mxu0 %v8250
    %8417 = vmatprep.subr.mxu0 %v8247
    %8418 = vmatpush2.msra.mxu0 %v8246
    %8419 = vmatprep.subr.mxu0 %v8243
    %8420 = vmatpush2.msra.mxu0 %v8242
    %8421 = vmatprep.subr.mxu0 %v8239
    %8422 = vmatpush2.msra.mxu0 %v8238
    %8423 = vmatprep.subr.mxu0 %v8235
    %8424 = vmatpush2.msra.mxu0 %v8234
    %8425 = vmatprep.subr.mxu0 %v8231
    %8426 = vmatpush2.msra.mxu0 %v8230
    %8427 = vmatprep.mubr.f32.mxu0 %v7756
    %8428 = vmatmul.mubr.f32.gmra.mxu0 %v8050
    %v8429 = vpop.f32.mrf.mxu0
    %v8430 = vadd.f32 %v6162, %v8429
    %v8431 = vpop.f32.mrf.mxu0
    %v8432 = vadd.f32 %v6166, %v8431
    %8433 = vdwg.mxu0
    %v8434 = vxor.u32 %v8359, 2147483648
    %v8435 = vmul.f32 %v8434, 1.442695
    %v8436 = vpow.pop %v8435
    %v8437 = vadd.f32 %v8436, 1.0
    %v8438 = vrcp.pop %v8437
    %v8439 = vmul.f32 1.0, %v8438
    %v8440 = vxor.u32 %v8361, 2147483648
    %v8441 = vmul.f32 %v8440, 1.442695
    %v8442 = vpow.pop %v8441
    %v8443 = vadd.f32 %v8442, 1.0
    %v8444 = vrcp.pop %v8443
    %v8445 = vmul.f32 1.0, %v8444
    %v8446 = vtanh.pop %v8430
    %v8447 = vxor.u32 %v8432, 2147483648
    %v8448 = vmul.f32 %v8447, 1.442695
    %v8449 = vpow.pop %v8448
    %v8450 = vadd.f32 %v8449, 1.0
    %v8451 = vrcp.pop %v8450
    %v8452 = vmul.f32 1.0, %v8451
    %v8453 = vmul.f32 %v8445, %v7754
    %v8454 = vmul.f32 %v8439, %v8446
    %v8455 = vadd.f32 %v8453, %v8454
    %v8456 = vtanh.pop %v8455
    %v8457 = vmul.f32 %v8452, %v8456
    %v8458 = vld [vmem:[#allocation7] sm:$0xff]
    %v8459 = vld [vmem:[#allocation7 + $0x8] sm:$0xff]
    %v8460 = vld [vmem:[#allocation7 + $0x10] sm:$0xff]
    %v8461 = vld [vmem:[#allocation7 + $0x18] sm:$0xff]
    %v8462 = vld [vmem:[#allocation7 + $0x20] sm:$0xff]
    %v8463 = vld [vmem:[#allocation7 + $0x28] sm:$0xff]
    %v8464 = vld [vmem:[#allocation7 + $0x30] sm:$0xff]
    %v8465 = vld [vmem:[#allocation7 + $0x38] sm:$0xff]
    %v8466 = vld [vmem:[#allocation7 + $0x40] sm:$0xff]
    %v8467 = vld [vmem:[#allocation7 + $0x48] sm:$0xff]
    %v8468 = vld [vmem:[#allocation7 + $0x50] sm:$0xff]
    %v8469 = vld [vmem:[#allocation7 + $0x58] sm:$0xff]
    %v8470 = vld [vmem:[#allocation7 + $0x60] sm:$0xff]
    %v8471 = vld [vmem:[#allocation7 + $0x68] sm:$0xff]
    %v8472 = vld [vmem:[#allocation7 + $0x70] sm:$0xff]
    %v8473 = vld [vmem:[#allocation7 + $0x78] sm:$0xff]
    %v8474 = vld [vmem:[#allocation7 + $0x80] sm:$0xff]
    %v8475 = vld [vmem:[#allocation7 + $0x88] sm:$0xff]
    %v8476 = vld [vmem:[#allocation7 + $0x90] sm:$0xff]
    %v8477 = vld [vmem:[#allocation7 + $0x98] sm:$0xff]
    %v8478 = vld [vmem:[#allocation7 + $0xa0] sm:$0xff]
    %v8479 = vld [vmem:[#allocation7 + $0xa8] sm:$0xff]
    %v8480 = vld [vmem:[#allocation7 + $0xb0] sm:$0xff]
    %v8481 = vld [vmem:[#allocation7 + $0xb8] sm:$0xff]
    %v8482 = vld [vmem:[#allocation7 + $0xc0] sm:$0xff]
    %v8483 = vld [vmem:[#allocation7 + $0xc8] sm:$0xff]
    %v8484 = vld [vmem:[#allocation7 + $0xd0] sm:$0xff]
    %v8485 = vld [vmem:[#allocation7 + $0xd8] sm:$0xff]
    %v8486 = vld [vmem:[#allocation7 + $0xe0] sm:$0xff]
    %v8487 = vld [vmem:[#allocation7 + $0xe8] sm:$0xff]
    %v8488 = vld [vmem:[#allocation7 + $0xf0] sm:$0xff]
    %v8489 = vld [vmem:[#allocation7 + $0xf8] sm:$0xff]
    %v8490 = vld [vmem:[#allocation7 + $0x100] sm:$0xff]
    %v8491 = vld [vmem:[#allocation7 + $0x108] sm:$0xff]
    %v8492 = vld [vmem:[#allocation7 + $0x110] sm:$0xff]
    %v8493 = vld [vmem:[#allocation7 + $0x118] sm:$0xff]
    %v8494 = vld [vmem:[#allocation7 + $0x120] sm:$0xff]
    %v8495 = vld [vmem:[#allocation7 + $0x128] sm:$0xff]
    %v8496 = vld [vmem:[#allocation7 + $0x130] sm:$0xff]
    %v8497 = vld [vmem:[#allocation7 + $0x138] sm:$0xff]
    %v8498 = vld [vmem:[#allocation7 + $0x140] sm:$0xff]
    %v8499 = vld [vmem:[#allocation7 + $0x148] sm:$0xff]
    %v8500 = vld [vmem:[#allocation7 + $0x150] sm:$0xff]
    %v8501 = vld [vmem:[#allocation7 + $0x158] sm:$0xff]
    %v8502 = vld [vmem:[#allocation7 + $0x160] sm:$0xff]
    %v8503 = vld [vmem:[#allocation7 + $0x168] sm:$0xff]
    %v8504 = vld [vmem:[#allocation7 + $0x170] sm:$0xff]
    %v8505 = vld [vmem:[#allocation7 + $0x178] sm:$0xff]
    %v8506 = vld [vmem:[#allocation7 + $0x180] sm:$0xff]
    %v8507 = vld [vmem:[#allocation7 + $0x188] sm:$0xff]
    %v8508 = vld [vmem:[#allocation7 + $0x190] sm:$0xff]
    %v8509 = vld [vmem:[#allocation7 + $0x198] sm:$0xff]
    %v8510 = vld [vmem:[#allocation7 + $0x1a0] sm:$0xff]
    %v8511 = vld [vmem:[#allocation7 + $0x1a8] sm:$0xff]
    %v8512 = vld [vmem:[#allocation7 + $0x1b0] sm:$0xff]
    %v8513 = vld [vmem:[#allocation7 + $0x1b8] sm:$0xff]
    %v8514 = vld [vmem:[#allocation7 + $0x1c0] sm:$0xff]
    %v8515 = vld [vmem:[#allocation7 + $0x1c8] sm:$0xff]
    %v8516 = vld [vmem:[#allocation7 + $0x1d0] sm:$0xff]
    %v8517 = vld [vmem:[#allocation7 + $0x1d8] sm:$0xff]
    %v8518 = vld [vmem:[#allocation7 + $0x1e0] sm:$0xff]
    %v8519 = vld [vmem:[#allocation7 + $0x1e8] sm:$0xff]
    %v8520 = vld [vmem:[#allocation7 + $0x1f0] sm:$0xff]
    %v8521 = vld [vmem:[#allocation7 + $0x1f8] sm:$0xff]
    %v8522 = vld [vmem:[#allocation7 + $0x200] sm:$0xff]
    %v8523 = vld [vmem:[#allocation7 + $0x208] sm:$0xff]
    %v8524 = vld [vmem:[#allocation7 + $0x210] sm:$0xff]
    %v8525 = vld [vmem:[#allocation7 + $0x218] sm:$0xff]
    %v8526 = vld [vmem:[#allocation7 + $0x220] sm:$0xff]
    %v8527 = vld [vmem:[#allocation7 + $0x228] sm:$0xff]
    %v8528 = vld [vmem:[#allocation7 + $0x230] sm:$0xff]
    %v8529 = vld [vmem:[#allocation7 + $0x238] sm:$0xff]
    %v8530 = vld [vmem:[#allocation7 + $0x240] sm:$0xff]
    %v8531 = vld [vmem:[#allocation7 + $0x248] sm:$0xff]
    %v8532 = vld [vmem:[#allocation7 + $0x250] sm:$0xff]
    %v8533 = vld [vmem:[#allocation7 + $0x258] sm:$0xff]
    %v8534 = vld [vmem:[#allocation7 + $0x260] sm:$0xff]
    %v8535 = vld [vmem:[#allocation7 + $0x268] sm:$0xff]
    %v8536 = vld [vmem:[#allocation7 + $0x270] sm:$0xff]
    %v8537 = vld [vmem:[#allocation7 + $0x278] sm:$0xff]
    %v8538 = vld [vmem:[#allocation7 + $0x280] sm:$0xff]
    %v8539 = vld [vmem:[#allocation7 + $0x288] sm:$0xff]
    %v8540 = vld [vmem:[#allocation7 + $0x290] sm:$0xff]
    %v8541 = vld [vmem:[#allocation7 + $0x298] sm:$0xff]
    %v8542 = vld [vmem:[#allocation7 + $0x2a0] sm:$0xff]
    %v8543 = vld [vmem:[#allocation7 + $0x2a8] sm:$0xff]
    %v8544 = vld [vmem:[#allocation7 + $0x2b0] sm:$0xff]
    %v8545 = vld [vmem:[#allocation7 + $0x2b8] sm:$0xff]
    %v8546 = vld [vmem:[#allocation7 + $0x2c0] sm:$0xff]
    %v8547 = vld [vmem:[#allocation7 + $0x2c8] sm:$0xff]
    %v8548 = vld [vmem:[#allocation7 + $0x2d0] sm:$0xff]
    %v8549 = vld [vmem:[#allocation7 + $0x2d8] sm:$0xff]
    %v8550 = vld [vmem:[#allocation7 + $0x2e0] sm:$0xff]
    %v8551 = vld [vmem:[#allocation7 + $0x2e8] sm:$0xff]
    %v8552 = vld [vmem:[#allocation7 + $0x2f0] sm:$0xff]
    %v8553 = vld [vmem:[#allocation7 + $0x2f8] sm:$0xff]
    %v8554 = vld [vmem:[#allocation7 + $0x300] sm:$0xff]
    %v8555 = vld [vmem:[#allocation7 + $0x308] sm:$0xff]
    %v8556 = vld [vmem:[#allocation7 + $0x310] sm:$0xff]
    %v8557 = vld [vmem:[#allocation7 + $0x318] sm:$0xff]
    %v8558 = vld [vmem:[#allocation7 + $0x320] sm:$0xff]
    %v8559 = vld [vmem:[#allocation7 + $0x328] sm:$0xff]
    %v8560 = vld [vmem:[#allocation7 + $0x330] sm:$0xff]
    %v8561 = vld [vmem:[#allocation7 + $0x338] sm:$0xff]
    %v8562 = vld [vmem:[#allocation7 + $0x340] sm:$0xff]
    %v8563 = vld [vmem:[#allocation7 + $0x348] sm:$0xff]
    %v8564 = vld [vmem:[#allocation7 + $0x350] sm:$0xff]
    %v8565 = vld [vmem:[#allocation7 + $0x358] sm:$0xff]
    %v8566 = vld [vmem:[#allocation7 + $0x360] sm:$0xff]
    %v8567 = vld [vmem:[#allocation7 + $0x368] sm:$0xff]
    %v8568 = vld [vmem:[#allocation7 + $0x370] sm:$0xff]
    %v8569 = vld [vmem:[#allocation7 + $0x378] sm:$0xff]
    %v8570 = vld [vmem:[#allocation7 + $0x380] sm:$0xff]
    %v8571 = vld [vmem:[#allocation7 + $0x388] sm:$0xff]
    %v8572 = vld [vmem:[#allocation7 + $0x390] sm:$0xff]
    %v8573 = vld [vmem:[#allocation7 + $0x398] sm:$0xff]
    %v8574 = vld [vmem:[#allocation7 + $0x3a0] sm:$0xff]
    %v8575 = vld [vmem:[#allocation7 + $0x3a8] sm:$0xff]
    %v8576 = vld [vmem:[#allocation7 + $0x3b0] sm:$0xff]
    %v8577 = vld [vmem:[#allocation7 + $0x3b8] sm:$0xff]
    %v8578 = vld [vmem:[#allocation7 + $0x3c0] sm:$0xff]
    %v8579 = vld [vmem:[#allocation7 + $0x3c8] sm:$0xff]
    %v8580 = vld [vmem:[#allocation7 + $0x3d0] sm:$0xff]
    %v8581 = vld [vmem:[#allocation7 + $0x3d8] sm:$0xff]
    %v8582 = vld [vmem:[#allocation7 + $0x3e0] sm:$0xff]
    %v8583 = vld [vmem:[#allocation7 + $0x3e8] sm:$0xff]
    %v8584 = vld [vmem:[#allocation7 + $0x3f0] sm:$0xff]
    %v8585 = vld [vmem:[#allocation7 + $0x3f8] sm:$0xff]
    %8586 = vmatprep.subr.mxu0 %v8519
    %8587 = vmatpush1.msra.mxu0 %v8518
    %8588 = vmatprep.subr.mxu0 %v8515
    %8589 = vmatpush1.msra.mxu0 %v8514
    %8590 = vmatprep.subr.mxu0 %v8511
    %8591 = vmatpush1.msra.mxu0 %v8510
    %8592 = vmatprep.subr.mxu0 %v8507
    %8593 = vmatpush1.msra.mxu0 %v8506
    %8594 = vmatprep.subr.mxu0 %v8503
    %8595 = vmatpush1.msra.mxu0 %v8502
    %8596 = vmatprep.subr.mxu0 %v8499
    %8597 = vmatpush1.msra.mxu0 %v8498
    %8598 = vmatprep.subr.mxu0 %v8495
    %8599 = vmatpush1.msra.mxu0 %v8494
    %8600 = vmatprep.subr.mxu0 %v8491
    %8601 = vmatpush1.msra.mxu0 %v8490
    %8602 = vmatprep.subr.mxu0 %v8487
    %8603 = vmatpush1.msra.mxu0 %v8486
    %8604 = vmatprep.subr.mxu0 %v8483
    %8605 = vmatpush1.msra.mxu0 %v8482
    %8606 = vmatprep.subr.mxu0 %v8479
    %8607 = vmatpush1.msra.mxu0 %v8478
    %8608 = vmatprep.subr.mxu0 %v8475
    %8609 = vmatpush1.msra.mxu0 %v8474
    %8610 = vmatprep.subr.mxu0 %v8471
    %8611 = vmatpush1.msra.mxu0 %v8470
    %8612 = vmatprep.subr.mxu0 %v8467
    %8613 = vmatpush1.msra.mxu0 %v8466
    %8614 = vmatprep.subr.mxu0 %v8463
    %8615 = vmatpush1.msra.mxu0 %v8462
    %8616 = vmatprep.subr.mxu0 %v8459
    %8617 = vmatpush1.msra.mxu0 %v8458
    %8618 = vmatprep.subr.mxu0 %v8583
    %8619 = vmatpush2.msra.mxu0 %v8582
    %8620 = vmatprep.subr.mxu0 %v8579
    %8621 = vmatpush2.msra.mxu0 %v8578
    %8622 = vmatprep.subr.mxu0 %v8575
    %8623 = vmatpush2.msra.mxu0 %v8574
    %8624 = vmatprep.subr.mxu0 %v8571
    %8625 = vmatpush2.msra.mxu0 %v8570
    %8626 = vmatprep.subr.mxu0 %v8567
    %8627 = vmatpush2.msra.mxu0 %v8566
    %8628 = vmatprep.subr.mxu0 %v8563
    %8629 = vmatpush2.msra.mxu0 %v8562
    %8630 = vmatprep.subr.mxu0 %v8559
    %8631 = vmatpush2.msra.mxu0 %v8558
    %8632 = vmatprep.subr.mxu0 %v8555
    %8633 = vmatpush2.msra.mxu0 %v8554
    %8634 = vmatprep.subr.mxu0 %v8551
    %8635 = vmatpush2.msra.mxu0 %v8550
    %8636 = vmatprep.subr.mxu0 %v8547
    %8637 = vmatpush2.msra.mxu0 %v8546
    %8638 = vmatprep.subr.mxu0 %v8543
    %8639 = vmatpush2.msra.mxu0 %v8542
    %8640 = vmatprep.subr.mxu0 %v8539
    %8641 = vmatpush2.msra.mxu0 %v8538
    %8642 = vmatprep.subr.mxu0 %v8535
    %8643 = vmatpush2.msra.mxu0 %v8534
    %8644 = vmatprep.subr.mxu0 %v8531
    %8645 = vmatpush2.msra.mxu0 %v8530
    %8646 = vmatprep.subr.mxu0 %v8527
    %8647 = vmatpush2.msra.mxu0 %v8526
    %8648 = vmatprep.subr.mxu0 %v8523
    %8649 = vmatpush2.msra.mxu0 %v8522
    %8650 = vmatprep.mubr.f32.mxu0 %v8050
    %8651 = vmatmul.mubr.f32.gmra.mxu0 %v8457
    %v8652 = vpop.f32.mrf.mxu0
    %v8653 = vadd.f32 %v561, %v8652
    %v8654 = vpop.f32.mrf.mxu0
    %v8655 = vadd.f32 %v565, %v8654
    %8656 = vdwg.mxu0
    %8657 = vmatprep.subr.mxu0 %v8521
    %8658 = vmatpush1.msra.mxu0 %v8520
    %8659 = vmatprep.subr.mxu0 %v8517
    %8660 = vmatpush1.msra.mxu0 %v8516
    %8661 = vmatprep.subr.mxu0 %v8513
    %8662 = vmatpush1.msra.mxu0 %v8512
    %8663 = vmatprep.subr.mxu0 %v8509
    %8664 = vmatpush1.msra.mxu0 %v8508
    %8665 = vmatprep.subr.mxu0 %v8505
    %8666 = vmatpush1.msra.mxu0 %v8504
    %8667 = vmatprep.subr.mxu0 %v8501
    %8668 = vmatpush1.msra.mxu0 %v8500
    %8669 = vmatprep.subr.mxu0 %v8497
    %8670 = vmatpush1.msra.mxu0 %v8496
    %8671 = vmatprep.subr.mxu0 %v8493
    %8672 = vmatpush1.msra.mxu0 %v8492
    %8673 = vmatprep.subr.mxu0 %v8489
    %8674 = vmatpush1.msra.mxu0 %v8488
    %8675 = vmatprep.subr.mxu0 %v8485
    %8676 = vmatpush1.msra.mxu0 %v8484
    %8677 = vmatprep.subr.mxu0 %v8481
    %8678 = vmatpush1.msra.mxu0 %v8480
    %8679 = vmatprep.subr.mxu0 %v8477
    %8680 = vmatpush1.msra.mxu0 %v8476
    %8681 = vmatprep.subr.mxu0 %v8473
    %8682 = vmatpush1.msra.mxu0 %v8472
    %8683 = vmatprep.subr.mxu0 %v8469
    %8684 = vmatpush1.msra.mxu0 %v8468
    %8685 = vmatprep.subr.mxu0 %v8465
    %8686 = vmatpush1.msra.mxu0 %v8464
    %8687 = vmatprep.subr.mxu0 %v8461
    %8688 = vmatpush1.msra.mxu0 %v8460
    %8689 = vmatprep.subr.mxu0 %v8585
    %8690 = vmatpush2.msra.mxu0 %v8584
    %8691 = vmatprep.subr.mxu0 %v8581
    %8692 = vmatpush2.msra.mxu0 %v8580
    %8693 = vmatprep.subr.mxu0 %v8577
    %8694 = vmatpush2.msra.mxu0 %v8576
    %8695 = vmatprep.subr.mxu0 %v8573
    %8696 = vmatpush2.msra.mxu0 %v8572
    %8697 = vmatprep.subr.mxu0 %v8569
    %8698 = vmatpush2.msra.mxu0 %v8568
    %8699 = vmatprep.subr.mxu0 %v8565
    %8700 = vmatpush2.msra.mxu0 %v8564
    %8701 = vmatprep.subr.mxu0 %v8561
    %8702 = vmatpush2.msra.mxu0 %v8560
    %8703 = vmatprep.subr.mxu0 %v8557
    %8704 = vmatpush2.msra.mxu0 %v8556
    %8705 = vmatprep.subr.mxu0 %v8553
    %8706 = vmatpush2.msra.mxu0 %v8552
    %8707 = vmatprep.subr.mxu0 %v8549
    %8708 = vmatpush2.msra.mxu0 %v8548
    %8709 = vmatprep.subr.mxu0 %v8545
    %8710 = vmatpush2.msra.mxu0 %v8544
    %8711 = vmatprep.subr.mxu0 %v8541
    %8712 = vmatpush2.msra.mxu0 %v8540
    %8713 = vmatprep.subr.mxu0 %v8537
    %8714 = vmatpush2.msra.mxu0 %v8536
    %8715 = vmatprep.subr.mxu0 %v8533
    %8716 = vmatpush2.msra.mxu0 %v8532
    %8717 = vmatprep.subr.mxu0 %v8529
    %8718 = vmatpush2.msra.mxu0 %v8528
    %8719 = vmatprep.subr.mxu0 %v8525
    %8720 = vmatpush2.msra.mxu0 %v8524
    %8721 = vmatprep.mubr.f32.mxu0 %v8050
    %8722 = vmatmul.mubr.f32.gmra.mxu0 %v8457
    %v8723 = vpop.f32.mrf.mxu0
    %v8724 = vadd.f32 %v569, %v8723
    %v8725 = vpop.f32.mrf.mxu0
    %v8726 = vadd.f32 %v573, %v8725
    %8727 = vdwg.mxu0
    %v8728 = vxor.u32 %v8653, 2147483648
    %v8729 = vmul.f32 %v8728, 1.442695
    %v8730 = vpow.pop %v8729
    %v8731 = vadd.f32 %v8730, 1.0
    %v8732 = vrcp.pop %v8731
    %v8733 = vmul.f32 1.0, %v8732
    %v8734 = vxor.u32 %v8655, 2147483648
    %v8735 = vmul.f32 %v8734, 1.442695
    %v8736 = vpow.pop %v8735
    %v8737 = vadd.f32 %v8736, 1.0
    %v8738 = vrcp.pop %v8737
    %v8739 = vmul.f32 1.0, %v8738
    %v8740 = vtanh.pop %v8724
    %v8741 = vxor.u32 %v8726, 2147483648
    %v8742 = vmul.f32 %v8741, 1.442695
    %v8743 = vpow.pop %v8742
    %v8744 = vadd.f32 %v8743, 1.0
    %v8745 = vrcp.pop %v8744
    %v8746 = vmul.f32 1.0, %v8745
    %v8747 = vmul.f32 %v8739, %v8048
    %v8748 = vmul.f32 %v8733, %v8740
    %v8749 = vadd.f32 %v8747, %v8748
    %v8750 = vtanh.pop %v8749
    %v8751 = vmul.f32 %v8746, %v8750
    %v8752 = vld [vmem:[#allocation9] sm:$0xff]
    %v8753 = vld [vmem:[#allocation9 + $0x8] sm:$0xff]
    %v8754 = vld [vmem:[#allocation9 + $0x10] sm:$0xff]
    %v8755 = vld [vmem:[#allocation9 + $0x18] sm:$0xff]
    %v8756 = vld [vmem:[#allocation9 + $0x20] sm:$0xff]
    %v8757 = vld [vmem:[#allocation9 + $0x28] sm:$0xff]
    %v8758 = vld [vmem:[#allocation9 + $0x30] sm:$0xff]
    %v8759 = vld [vmem:[#allocation9 + $0x38] sm:$0xff]
    %v8760 = vld [vmem:[#allocation9 + $0x40] sm:$0xff]
    %v8761 = vld [vmem:[#allocation9 + $0x48] sm:$0xff]
    %v8762 = vld [vmem:[#allocation9 + $0x50] sm:$0xff]
    %v8763 = vld [vmem:[#allocation9 + $0x58] sm:$0xff]
    %v8764 = vld [vmem:[#allocation9 + $0x60] sm:$0xff]
    %v8765 = vld [vmem:[#allocation9 + $0x68] sm:$0xff]
    %v8766 = vld [vmem:[#allocation9 + $0x70] sm:$0xff]
    %v8767 = vld [vmem:[#allocation9 + $0x78] sm:$0xff]
    %8768 = vmatprep.subr.mxu0 0.0
    %8769 = vmatpush1.msra.mxu0 %v8767
    %8770 = vmatprep.subr.mxu0 0.0
    %8771 = vmatpush1.msra.mxu0 %v8766
    %8772 = vmatprep.subr.mxu0 0.0
    %8773 = vmatpush1.msra.mxu0 %v8765
    %8774 = vmatprep.subr.mxu0 0.0
    %8775 = vmatpush1.msra.mxu0 %v8764
    %8776 = vmatprep.subr.mxu0 0.0
    %8777 = vmatpush1.msra.mxu0 %v8763
    %8778 = vmatprep.subr.mxu0 0.0
    %8779 = vmatpush1.msra.mxu0 %v8762
    %8780 = vmatprep.subr.mxu0 0.0
    %8781 = vmatpush1.msra.mxu0 %v8761
    %8782 = vmatprep.subr.mxu0 0.0
    %8783 = vmatpush1.msra.mxu0 %v8760
    %8784 = vmatprep.subr.mxu0 0.0
    %8785 = vmatpush1.msra.mxu0 %v8759
    %8786 = vmatprep.subr.mxu0 0.0
    %8787 = vmatpush1.msra.mxu0 %v8758
    %8788 = vmatprep.subr.mxu0 0.0
    %8789 = vmatpush1.msra.mxu0 %v8757
    %8790 = vmatprep.subr.mxu0 0.0
    %8791 = vmatpush1.msra.mxu0 %v8756
    %8792 = vmatprep.subr.mxu0 0.0
    %8793 = vmatpush1.msra.mxu0 %v8755
    %8794 = vmatprep.subr.mxu0 0.0
    %8795 = vmatpush1.msra.mxu0 %v8754
    %8796 = vmatprep.subr.mxu0 0.0
    %8797 = vmatpush1.msra.mxu0 %v8753
    %8798 = vmatprep.subr.mxu0 0.0
    %8799 = vmatpush1.msra.mxu0 %v8752
    %8800 = vmatprep.subr.mxu0 0.0
    %8801 = vmatpush2.msra.mxu0 0.0
    %8802 = vmatprep.subr.mxu0 0.0
    %8803 = vmatpush2.msra.mxu0 0.0
    %8804 = vmatprep.subr.mxu0 0.0
    %8805 = vmatpush2.msra.mxu0 0.0
    %8806 = vmatprep.subr.mxu0 0.0
    %8807 = vmatpush2.msra.mxu0 0.0
    %8808 = vmatprep.subr.mxu0 0.0
    %8809 = vmatpush2.msra.mxu0 0.0
    %8810 = vmatprep.subr.mxu0 0.0
    %8811 = vmatpush2.msra.mxu0 0.0
    %8812 = vmatprep.subr.mxu0 0.0
    %8813 = vmatpush2.msra.mxu0 0.0
    %8814 = vmatprep.subr.mxu0 0.0
    %8815 = vmatpush2.msra.mxu0 0.0
    %8816 = vmatprep.subr.mxu0 0.0
    %8817 = vmatpush2.msra.mxu0 0.0
    %8818 = vmatprep.subr.mxu0 0.0
    %8819 = vmatpush2.msra.mxu0 0.0
    %8820 = vmatprep.subr.mxu0 0.0
    %8821 = vmatpush2.msra.mxu0 0.0
    %8822 = vmatprep.subr.mxu0 0.0
    %8823 = vmatpush2.msra.mxu0 0.0
    %8824 = vmatprep.subr.mxu0 0.0
    %8825 = vmatpush2.msra.mxu0 0.0
    %8826 = vmatprep.subr.mxu0 0.0
    %8827 = vmatpush2.msra.mxu0 0.0
    %8828 = vmatprep.subr.mxu0 0.0
    %8829 = vmatpush2.msra.mxu0 0.0
    %8830 = vmatprep.subr.mxu0 0.0
    %8831 = vmatpush2.msra.mxu0 0.0
    %8832 = vmatprep.mubr.f32.mxu0 0.0
    %8833 = vmatmul.mubr.f32.gmra.mxu0 %v8751
    %v8834 = vpop.f32.mrf.mxu0
    %v8835 = vadd.f32 %v764, %v8834
    %v8836 = vpop.f32.mrf.mxu0
    %8837 = vdwg.mxu0
    %v8840 = vunpack.c.l.s4 1966171168
    %v8841 = vunpack.c.0.s8 %v8840
    %v8842 = vlaneseq
    %v8843 = vshrl.u32 %v8842, 7
    %v8844 = vsub.s32 %v8841, %v8843
    %v8845 = vrot.slane %v8835, %v8844
    %v8846 = vcombine.high %v8845, %v8845
    %v8848 = vunpack.c.l.s4 1966171168
    %v8849 = vunpack.c.0.s8 %v8848
    %v8850 = vlaneseq
    %v8851 = vshrl.u32 %v8850, 7
    %v8852 = vsub.s32 %v8849, %v8851
    %v8853 = vrot.slane %v8845, %v8852
    %v8855 = vunpack.c.l.s4 1966171168
    %v8856 = vunpack.c.0.s8 %v8855
    %v8857 = vlaneseq
    %v8858 = vshrl.u32 %v8857, 7
    %v8859 = vsub.s32 %v8856, %v8858
    %v8860 = vrot.slane %v8846, %v8859
    %8863 = vst [vmem:[%s8 + $0xb] sm:$0x1] %v8853
    %8864 = vst [vmem:[%s8 + $0x1b] sm:$0x1] %v8860
    // Predicated region
    $region54: #{tpu_custom_call.1} parent=1 // pred_check
      _
    $region55: #{tpu_custom_call.1} parent=1 // pred_check_branch
      %8866 = sbr.rel (0) target = $region57
    $region56: #{tpu_custom_call.1} parent=1 // pred_region
      _
    $region57: #{tpu_custom_call.1} parent=1 // pred_fallthru
      _
    // Predicated region
    $region58: #{tpu_custom_call.1} parent=1 // pred_check
      _
    $region59: #{tpu_custom_call.1} parent=1 // pred_check_branch
      %8868 = sbr.rel (0) target = $region61
    $region60: #{tpu_custom_call.1} parent=1 // pred_region
      _
    $region61: #{tpu_custom_call.1} parent=1 // pred_fallthru
      _
    %8869 = vsyncpa [#allocation3], 1
    %8870 = vsyncpa [#allocation5], 1
    %8871 = vsyncpa [#allocation8], 1

</llo_original>
